<compile_context>
chip_gen: v7x
topology: tpu7x:2x2x1
jax: 0.10.0
libtpu: 0.0.40
codegen_flags: <defaults>
</compile_context>

<pallas_src>
import functools

import jax
import jax.numpy as jnp
from jax import lax
from jax.experimental import pallas as pl
from jax.experimental.pallas import tpu as pltpu

K_SIZE = 3
P_SIZE = 1
_CIN_PAD = 8                      # conv1 RGB channels zero-padded 3 -> 8
_NC_PAD = 128                     # FC output padded to a full lane group
_VMEM_LIMIT = 32 * 1024 * 1024


# ----------------------------------------------------------------------------
# Fused whole-network kernel (one grid step per image)
# ----------------------------------------------------------------------------
def _basic_cnn_kernel(x1_ref, w1_ref, b1_ref, w2_ref, b2_ref, w3_ref, b3_ref,
                      w4_ref, b4_ref, wfc_ref, bfc_ref, out_ref,
                      p2_ref, p3_ref, p4_ref, *, H, W):
    """Whole BasicCNN forward for one image.

    Inter-layer activations use a zero-padded flat f32 scratch layout of shape
    ((h+3)*(w+2), C) with flat[r] = padded[r // (w+2), r % (w+2)] (1 top / 2
    bottom extra halo rows keep every 3x3 tap slice in bounds).  Each conv is
    computed as even-/odd-output-column halves so MaxPool2d(2)'s W-reduction is
    an elementwise max of the halves and its H-reduction is two contiguous row
    slices per pooled row.
    """
    f32 = jnp.float32
    bf16 = jnp.bfloat16

    # The conv halo must read zeros (scratch persists across grid steps).
    p2_ref[...] = jnp.zeros_like(p2_ref)
    p3_ref[...] = jnp.zeros_like(p3_ref)
    p4_ref[...] = jnp.zeros_like(p4_ref)

    def pool_rows_into(wmax, h_in, w_in, row_w, dst_ref):
        """wmax: (h_in*row_w, C) f32, rows ordered (y, xo); entries already hold
        the max over the output-column pair (valid xo < w_in//2).  Reduce over
        H-pairs and scatter into dst_ref's zero-padded flat layout."""
        wo = w_in // 2
        wpn = wo + 2
        for yo in range(h_in // 2):
            top = wmax[(2 * yo) * row_w:(2 * yo) * row_w + wo, :]
            bot = wmax[(2 * yo + 1) * row_w:(2 * yo + 1) * row_w + wo, :]
            dst_ref[(yo + 1) * wpn + 1:(yo + 1) * wpn + 1 + wo, :] = (
                jnp.maximum(top, bot).astype(dst_ref.dtype))

    # ---- conv1: one K = 9*Cin matmul per column parity (im2col LHS built by
    #      the wrapper, rows grouped even-x then odd-x), bias + ReLU, fused
    #      2x2 max-pool, written into conv2's padded layout.
    half1 = (H * W) // 2
    w1 = w1_ref[...]
    b1 = b1_ref[...]
    a_even = jnp.maximum(
        jnp.dot(x1_ref[0:half1, :], w1, preferred_element_type=f32) + b1, 0.0)
    a_odd = jnp.maximum(
        jnp.dot(x1_ref[half1:2 * half1, :], w1,
                preferred_element_type=f32) + b1, 0.0)
    pool_rows_into(jnp.maximum(a_even, a_odd), H, W, W // 2, p2_ref)

    # ---- conv2 / conv3: 9 taps x 2 column parities, each tap a stride-2 row
    #      slice of the flat padded input (bf16 MXU feeds, f32 accumulation),
    #      bias + ReLU + fused 2x2 max-pool into the next padded buffer.
    def conv_pool(src_ref, w_ref, b_ref, h_in, w_in, dst_ref):
        wp = w_in + 2                        # even because w_in is even
        half = (h_in * wp) // 2
        cout = w_ref.shape[-1]
        b = b_ref[...]
        halves = []
        for parity in (0, 1):
            acc = jnp.zeros((half, cout), f32)
            for dy in range(K_SIZE):
                for dx in range(K_SIZE):
                    lhs = src_ref[pl.ds(dy * wp + dx + parity, half, 2), :]
                    acc = acc + jnp.dot(lhs.astype(bf16), w_ref[dy, dx],
                                        preferred_element_type=f32)
            halves.append(jnp.maximum(acc + b, 0.0))
        pool_rows_into(jnp.maximum(halves[0], halves[1]), h_in, w_in, wp // 2,
                       dst_ref)

    H1, W1 = H // 2, W // 2
    conv_pool(p2_ref, w2_ref, b2_ref, H1, W1, p3_ref)
    H2, W2 = H1 // 2, W1 // 2
    conv_pool(p3_ref, w3_ref, b3_ref, H2, W2, p4_ref)
    H3, W3 = H2 // 2, W2 // 2

    # ---- conv4 + ReLU + AdaptiveAvgPool2d(1) + Linear, all fused (the conv4
    #      activation and the pooled vector never leave VMEM).
    wp4 = W3 + 2
    rows4 = H3 * wp4
    c4 = w4_ref.shape[-1]
    acc4 = jnp.zeros((rows4, c4), f32)
    for dy in range(K_SIZE):
        for dx in range(K_SIZE):
            lhs = p4_ref[dy * wp4 + dx:dy * wp4 + dx + rows4, :]
            acc4 = acc4 + jnp.dot(lhs.astype(bf16), w4_ref[dy, dx],
                                  preferred_element_type=f32)
    acc4 = jnp.maximum(acc4 + b4_ref[...], 0.0)
    # Mask the (wp4 - W3) junk columns of the flat layout, average the valid
    # H3*W3 positions, then run the FC right here.
    col = lax.broadcasted_iota(jnp.int32, (rows4, 1), 0) % wp4
    pooled = jnp.sum(jnp.where(col < W3, acc4, 0.0), axis=0,
                     keepdims=True) * (1.0 / (H3 * W3))            # (1, c4)
    logits = jnp.dot(pooled.astype(bf16), wfc_ref[...],
                     preferred_element_type=f32) + bfc_ref[...]
    out_ref[...] = logits.reshape(out_ref.shape)


# ----------------------------------------------------------------------------
# Wrapper
# ----------------------------------------------------------------------------
def _conv1_im2col(x_nhwc):
    """3x3 / pad-1 patches for conv1, grouped by output-column parity: rows
    [0, HW/2) are the even output columns, rows [HW/2, HW) the odd ones, each
    ordered (y, xo).  One-time XLA prep on the tiny input tensor."""
    N, H, W, C = x_nhwc.shape
    xp = jnp.pad(x_nhwc, ((0, 0), (1, 1), (1, 1), (0, 0)))
    taps = [xp[:, dy:dy + H, dx:dx + W, :]
            for dy in range(K_SIZE) for dx in range(K_SIZE)]
    patches = jnp.concatenate(taps, axis=-1)                   # (N, H, W, 9C)
    even = patches[:, :, 0::2, :].reshape(N, (H * W) // 2, K_SIZE * K_SIZE * C)
    odd = patches[:, :, 1::2, :].reshape(N, (H * W) // 2, K_SIZE * K_SIZE * C)
    return jnp.concatenate([even, odd], axis=1).reshape(
        N * H * W, K_SIZE * K_SIZE * C)


def basic_cnn_forward(x_nchw, params, num_classes):
    N, C, H, W = x_nchw.shape
    assert C == 3, "BasicCNN expects RGB input"
    assert H % 8 == 0 and W % 8 == 0, \
        "three MaxPool2d(2) stages need H, W divisible by 8"
    # NCHW (PyTorch) -> NHWC bf16; zero-pad channels 3 -> 8 to match the
    # zero-padded conv1 weight rows (no numeric effect).
    x = jnp.transpose(x_nchw, (0, 2, 3, 1)).astype(jnp.bfloat16)
    x = jnp.pad(x, ((0, 0), (0, 0), (0, 0), (0, _CIN_PAD - C)))
    x1 = _conv1_im2col(x)                                      # (N*H*W, 72)

    (w1, b1), (w2, b2), (w3, b3), (w4, b4) = params["convs"]
    w1m = w1.reshape(K_SIZE * K_SIZE * w1.shape[2], w1.shape[3])   # (72, 64)
    wfc, bfc = params["fc"]
    ncp = wfc.shape[1]

    c1, c2, c3 = w2.shape[2], w3.shape[2], w4.shape[2]
    H1, W1 = H // 2, W // 2
    H2, W2 = H1 // 2, W1 // 2
    H3, W3 = H2 // 2, W2 // 2

    # TODO(synk): this whole-network fusion keeps each padded activation in
    # VMEM and is sized for small spatial inputs; for large H*W, split back
    # into per-layer pallas_calls with H-striping + halo handling (re-check the
    # budget against v7x's 64 MiB VMEM).
    kernel = functools.partial(_basic_cnn_kernel, H=H, W=W)
    out = pl.pallas_call(
        kernel,
        out_shape=jax.ShapeDtypeStruct((N, 1, ncp), jnp.float32),
        grid=(N,),
        in_specs=[
            pl.BlockSpec((H * W, K_SIZE * K_SIZE * _CIN_PAD),
                         lambda n: (n, 0)),
            pl.BlockSpec(w1m.shape, lambda n: (0, 0)),
            pl.BlockSpec(b1.shape, lambda n: (0, 0)),
            pl.BlockSpec(w2.shape, lambda n: (0, 0, 0, 0)),
            pl.BlockSpec(b2.shape, lambda n: (0, 0)),
            pl.BlockSpec(w3.shape, lambda n: (0, 0, 0, 0)),
            pl.BlockSpec(b3.shape, lambda n: (0, 0)),
            pl.BlockSpec(w4.shape, lambda n: (0, 0, 0, 0)),
            pl.BlockSpec(b4.shape, lambda n: (0, 0)),
            pl.BlockSpec(wfc.shape, lambda n: (0, 0)),
            pl.BlockSpec(bfc.shape, lambda n: (0, 0)),
        ],
        out_specs=pl.BlockSpec((1, 1, ncp), lambda n: (n, 0, 0)),
        scratch_shapes=[
            pltpu.VMEM(((H1 + 3) * (W1 + 2), c1), jnp.float32),
            pltpu.VMEM(((H2 + 3) * (W2 + 2), c2), jnp.float32),
            pltpu.VMEM(((H3 + 3) * (W3 + 2), c3), jnp.float32),
        ],
        compiler_params=pltpu.CompilerParams(
            dimension_semantics=("parallel",),
            vmem_limit_bytes=_VMEM_LIMIT),
    )(x1, w1m, b1, w2, b2, w3, b3, w4, b4, wfc, bfc)
    return out[:, 0, :num_classes]


# ----------------------------------------------------------------------------
# Parameters (deterministic, synthetic) and pure-XLA f32 reference
# ----------------------------------------------------------------------------
def init_params(num_classes, key):
    """Conv weights stored (kH, kW, Cin, Cout) bf16 (a PyTorch
    (Cout, Cin, kH, kW) tensor maps via permute(2, 3, 1, 0)); biases f32.
    conv1 Cin and the FC output are zero-padded for lane alignment."""
    assert num_classes <= _NC_PAD  # TODO(synk): tile the FC for num_classes > 128
    specs = [(3, 64), (64, 128), (128, 256), (256, 512)]
    convs = []
    for cin, cout in specs:
        key, kw, kb = jax.random.split(key, 3)
        scale = 1.0 / (K_SIZE * K_SIZE * cin) ** 0.5
        w = jax.random.uniform(kw, (K_SIZE, K_SIZE, cin, cout), jnp.float32,
                               -scale, scale)
        b = jax.random.uniform(kb, (1, cout), jnp.float32, -scale, scale)
        if cin == 3:
            w = jnp.pad(w, ((0, 0), (0, 0), (0, _CIN_PAD - cin), (0, 0)))
        convs.append((w.astype(jnp.bfloat16), b))
    key, kw, kb = jax.random.split(key, 3)
    scale = 1.0 / 512.0 ** 0.5
    wfc = jax.random.uniform(kw, (512, num_classes), jnp.float32, -scale, scale)
    bfc = jax.random.uniform(kb, (1, num_classes), jnp.float32, -scale, scale)
    wfc = jnp.pad(wfc, ((0, 0), (0, _NC_PAD - num_classes))).astype(jnp.bfloat16)
    bfc = jnp.pad(bfc, ((0, 0), (0, _NC_PAD - num_classes)))
    return {"convs": convs, "fc": (wfc, bfc)}


def reference_forward(x_nchw, params, num_classes):
    """Pure-XLA reference (same bf16-rounded weights, f32 activations)."""
    x = jnp.transpose(x_nchw, (0, 2, 3, 1)).astype(jnp.bfloat16)
    x = jnp.pad(x, ((0, 0), (0, 0), (0, 0), (0, _CIN_PAD - x.shape[-1])))
    x = x.astype(jnp.float32)
    for i, (w, b) in enumerate(params["convs"]):
        x = lax.conv_general_dilated(
            x, w.astype(jnp.float32), window_strides=(1, 1),
            padding=((P_SIZE, P_SIZE), (P_SIZE, P_SIZE)),
            dimension_numbers=("NHWC", "HWIO", "NHWC"))
        x = jnp.maximum(x + b.reshape(1, 1, 1, -1), 0.0)
        if i < 3:
            n, h, w_, c = x.shape
            x = x.reshape(n, h // 2, 2, w_ // 2, 2, c).max(axis=(2, 4))
    pooled = x.mean(axis=(1, 2))
    wfc, bfc = params["fc"]
    logits = pooled @ wfc.astype(jnp.float32) + bfc
    return logits[:, :num_classes]


if __name__ == "__main__":
    num_classes = 10
    key = jax.random.PRNGKey(0)
    k_x, k_p = jax.random.split(key)

    # Small shapes consistent with the module: batch=2, RGB, 16x16 spatial.
    x = jax.random.normal(k_x, (2, 3, 16, 16), dtype=jnp.float32)
    params = init_params(num_classes, k_p)

    forward = jax.jit(functools.partial(basic_cnn_forward,
                                        num_classes=num_classes))
    out = jax.block_until_ready(forward(x, params))
    assert out.shape == (2, num_classes), out.shape
    assert bool(jnp.all(jnp.isfinite(out)))

    ref = reference_forward(x, params, num_classes)
    max_err = float(jnp.max(jnp.abs(out - ref)))
    assert max_err < 3e-2, f"max |pallas - reference| = {max_err}"
    print("KERNEL_OK")
</pallas_src>

<mosaic_0001>
module attributes {stable_mosaic.version = 11 : i64} {
  func.func @_basic_cnn_kernel(%arg0: i32, %arg1: memref<256x72xbf16, #tpu.memory_space<vmem>>, %arg2: memref<72x64xbf16, #tpu.memory_space<vmem>>, %arg3: memref<1x64xf32, #tpu.memory_space<vmem>>, %arg4: memref<3x3x64x128xbf16, #tpu.memory_space<vmem>>, %arg5: memref<1x128xf32, #tpu.memory_space<vmem>>, %arg6: memref<3x3x128x256xbf16, #tpu.memory_space<vmem>>, %arg7: memref<1x256xf32, #tpu.memory_space<vmem>>, %arg8: memref<3x3x256x512xbf16, #tpu.memory_space<vmem>>, %arg9: memref<1x512xf32, #tpu.memory_space<vmem>>, %arg10: memref<512x128xbf16, #tpu.memory_space<vmem>>, %arg11: memref<1x128xf32, #tpu.memory_space<vmem>>, %arg12: memref<1x1x128xf32, #tpu.memory_space<vmem>>, %arg13: memref<110x64xf32, #tpu.memory_space<vmem>>, %arg14: memref<42x128xf32, #tpu.memory_space<vmem>>, %arg15: memref<20x256xf32, #tpu.memory_space<vmem>>) attributes {dimension_semantics = [#tpu.dimension_semantics<parallel>], iteration_bounds = array<i64: 2>, scalar_prefetch = 0 : i64, scratch_operands = 3 : i64, tpu.core_type = #tpu.core_type<tc>, window_params = [{transform_indices = @transform_0, window_bounds = array<i64: 256, 72>}, {pipeline_mode = #tpu.pipeline_mode<synchronous>, transform_indices = @transform_1, window_bounds = array<i64: 72, 64>}, {pipeline_mode = #tpu.pipeline_mode<synchronous>, transform_indices = @transform_2, window_bounds = array<i64: 1, 64>}, {pipeline_mode = #tpu.pipeline_mode<synchronous>, transform_indices = @transform_3, window_bounds = array<i64: 3, 3, 64, 128>}, {pipeline_mode = #tpu.pipeline_mode<synchronous>, transform_indices = @transform_4, window_bounds = array<i64: 1, 128>}, {pipeline_mode = #tpu.pipeline_mode<synchronous>, transform_indices = @transform_5, window_bounds = array<i64: 3, 3, 128, 256>}, {pipeline_mode = #tpu.pipeline_mode<synchronous>, transform_indices = @transform_6, window_bounds = array<i64: 1, 256>}, {pipeline_mode = #tpu.pipeline_mode<synchronous>, transform_indices = @transform_7, window_bounds = array<i64: 3, 3, 256, 512>}, {pipeline_mode = #tpu.pipeline_mode<synchronous>, transform_indices = @transform_8, window_bounds = array<i64: 1, 512>}, {pipeline_mode = #tpu.pipeline_mode<synchronous>, transform_indices = @transform_9, window_bounds = array<i64: 512, 128>}, {pipeline_mode = #tpu.pipeline_mode<synchronous>, transform_indices = @transform_10, window_bounds = array<i64: 1, 128>}, {transform_indices = @transform_11, window_bounds = array<i64: 1, 1, 128>}]} {
    %cst = arith.constant 0.000000e+00 : f32
    %0 = vector.broadcast %cst : f32 to vector<110x64xf32>
    %c0 = arith.constant 0 : index
    %c0_0 = arith.constant 0 : index
    %1 = vector.load %arg13[%c0, %c0_0] : memref<110x64xf32, #tpu.memory_space<vmem>>, vector<110x64xf32>
    tpu.vector_store %arg13[%c0, %c0_0], %0 {strides = array<i32>} : memref<110x64xf32, #tpu.memory_space<vmem>>, vector<110x64xf32>,
    %cst_1 = arith.constant 0.000000e+00 : f32
    %2 = vector.broadcast %cst_1 : f32 to vector<42x128xf32>
    %c0_2 = arith.constant 0 : index
    %c0_3 = arith.constant 0 : index
    %3 = vector.load %arg14[%c0_2, %c0_3] : memref<42x128xf32, #tpu.memory_space<vmem>>, vector<42x128xf32>
    tpu.vector_store %arg14[%c0_2, %c0_3], %2 {strides = array<i32>} : memref<42x128xf32, #tpu.memory_space<vmem>>, vector<42x128xf32>,
    %cst_4 = arith.constant 0.000000e+00 : f32
    %4 = vector.broadcast %cst_4 : f32 to vector<20x256xf32>
    %c0_5 = arith.constant 0 : index
    %c0_6 = arith.constant 0 : index
    %5 = vector.load %arg15[%c0_5, %c0_6] : memref<20x256xf32, #tpu.memory_space<vmem>>, vector<20x256xf32>
    tpu.vector_store %arg15[%c0_5, %c0_6], %4 {strides = array<i32>} : memref<20x256xf32, #tpu.memory_space<vmem>>, vector<20x256xf32>,
    %c0_7 = arith.constant 0 : index
    %c0_8 = arith.constant 0 : index
    %6 = vector.load %arg2[%c0_7, %c0_8] : memref<72x64xbf16, #tpu.memory_space<vmem>>, vector<72x64xbf16>
    %c0_9 = arith.constant 0 : index
    %c0_10 = arith.constant 0 : index
    %7 = vector.load %arg3[%c0_9, %c0_10] : memref<1x64xf32, #tpu.memory_space<vmem>>, vector<1x64xf32>
    %c0_11 = arith.constant 0 : index
    %c0_12 = arith.constant 0 : index
    %8 = vector.load %arg1[%c0_11, %c0_12] : memref<256x72xbf16, #tpu.memory_space<vmem>>, vector<128x72xbf16>
    %cst_13 = arith.constant dense<0.000000e+00> : vector<128x64xf32>
    %9 = tpu.matmul %8, %6, %cst_13 {dimension_numbers = #tpu.dot_dimension_numbers<[1], [0], [0], [1], [0, 0, 1, 1], [], []>} : vector<128x72xbf16>, vector<72x64xbf16>, vector<128x64xf32> -> vector<128x64xf32>
    %10 = vector.broadcast %7 : vector<1x64xf32> to vector<128x64xf32>
    %11 = arith.addf %9, %10 : vector<128x64xf32>
    %cst_14 = arith.constant 0.000000e+00 : f32
    %12 = vector.broadcast %cst_14 : f32 to vector<128x64xf32>
    %13 = arith.maximumf %11, %12 : vector<128x64xf32>
    %c128 = arith.constant 128 : index
    %c0_15 = arith.constant 0 : index
    %14 = vector.load %arg1[%c128, %c0_15] : memref<256x72xbf16, #tpu.memory_space<vmem>>, vector<128x72xbf16>
    %cst_16 = arith.constant dense<0.000000e+00> : vector<128x64xf32>
    %15 = tpu.matmul %14, %6, %cst_16 {dimension_numbers = #tpu.dot_dimension_numbers<[1], [0], [0], [1], [0, 0, 1, 1], [], []>} : vector<128x72xbf16>, vector<72x64xbf16>, vector<128x64xf32> -> vector<128x64xf32>
    %16 = vector.broadcast %7 : vector<1x64xf32> to vector<128x64xf32>
    %17 = arith.addf %15, %16 : vector<128x64xf32>
    %cst_17 = arith.constant 0.000000e+00 : f32
    %18 = vector.broadcast %cst_17 : f32 to vector<128x64xf32>
    %19 = arith.maximumf %17, %18 : vector<128x64xf32>
    %20 = arith.maximumf %13, %19 : vector<128x64xf32>
    %21 = vector.extract_strided_slice %20 {offsets = [0, 0], sizes = [8, 64], strides = [1, 1]} : vector<128x64xf32> to vector<8x64xf32>
    %22 = vector.extract_strided_slice %20 {offsets = [8, 0], sizes = [8, 64], strides = [1, 1]} : vector<128x64xf32> to vector<8x64xf32>
    %23 = arith.maximumf %21, %22 : vector<8x64xf32>
    %c11 = arith.constant 11 : index
    %c0_18 = arith.constant 0 : index
    %24 = vector.load %arg13[%c11, %c0_18] : memref<110x64xf32, #tpu.memory_space<vmem>>, vector<8x64xf32>
    tpu.vector_store %arg13[%c11, %c0_18], %23 {strides = array<i32>} : memref<110x64xf32, #tpu.memory_space<vmem>>, vector<8x64xf32>,
    %25 = vector.extract_strided_slice %20 {offsets = [16, 0], sizes = [8, 64], strides = [1, 1]} : vector<128x64xf32> to vector<8x64xf32>
    %26 = vector.extract_strided_slice %20 {offsets = [24, 0], sizes = [8, 64], strides = [1, 1]} : vector<128x64xf32> to vector<8x64xf32>
    %27 = arith.maximumf %25, %26 : vector<8x64xf32>
    %c21 = arith.constant 21 : index
    %c0_19 = arith.constant 0 : index
    %28 = vector.load %arg13[%c21, %c0_19] : memref<110x64xf32, #tpu.memory_space<vmem>>, vector<8x64xf32>
    tpu.vector_store %arg13[%c21, %c0_19], %27 {strides = array<i32>} : memref<110x64xf32, #tpu.memory_space<vmem>>, vector<8x64xf32>,
    %29 = vector.extract_strided_slice %20 {offsets = [32, 0], sizes = [8, 64], strides = [1, 1]} : vector<128x64xf32> to vector<8x64xf32>
    %30 = vector.extract_strided_slice %20 {offsets = [40, 0], sizes = [8, 64], strides = [1, 1]} : vector<128x64xf32> to vector<8x64xf32>
    %31 = arith.maximumf %29, %30 : vector<8x64xf32>
    %c31 = arith.constant 31 : index
    %c0_20 = arith.constant 0 : index
    %32 = vector.load %arg13[%c31, %c0_20] : memref<110x64xf32, #tpu.memory_space<vmem>>, vector<8x64xf32>
    tpu.vector_store %arg13[%c31, %c0_20], %31 {strides = array<i32>} : memref<110x64xf32, #tpu.memory_space<vmem>>, vector<8x64xf32>,
    %33 = vector.extract_strided_slice %20 {offsets = [48, 0], sizes = [8, 64], strides = [1, 1]} : vector<128x64xf32> to vector<8x64xf32>
    %34 = vector.extract_strided_slice %20 {offsets = [56, 0], sizes = [8, 64], strides = [1, 1]} : vector<128x64xf32> to vector<8x64xf32>
    %35 = arith.maximumf %33, %34 : vector<8x64xf32>
    %c41 = arith.constant 41 : index
    %c0_21 = arith.constant 0 : index
    %36 = vector.load %arg13[%c41, %c0_21] : memref<110x64xf32, #tpu.memory_space<vmem>>, vector<8x64xf32>
    tpu.vector_store %arg13[%c41, %c0_21], %35 {strides = array<i32>} : memref<110x64xf32, #tpu.memory_space<vmem>>, vector<8x64xf32>,
    %37 = vector.extract_strided_slice %20 {offsets = [64, 0], sizes = [8, 64], strides = [1, 1]} : vector<128x64xf32> to vector<8x64xf32>
    %38 = vector.extract_strided_slice %20 {offsets = [72, 0], sizes = [8, 64], strides = [1, 1]} : vector<128x64xf32> to vector<8x64xf32>
    %39 = arith.maximumf %37, %38 : vector<8x64xf32>
    %c51 = arith.constant 51 : index
    %c0_22 = arith.constant 0 : index
    %40 = vector.load %arg13[%c51, %c0_22] : memref<110x64xf32, #tpu.memory_space<vmem>>, vector<8x64xf32>
    tpu.vector_store %arg13[%c51, %c0_22], %39 {strides = array<i32>} : memref<110x64xf32, #tpu.memory_space<vmem>>, vector<8x64xf32>,
    %41 = vector.extract_strided_slice %20 {offsets = [80, 0], sizes = [8, 64], strides = [1, 1]} : vector<128x64xf32> to vector<8x64xf32>
    %42 = vector.extract_strided_slice %20 {offsets = [88, 0], sizes = [8, 64], strides = [1, 1]} : vector<128x64xf32> to vector<8x64xf32>
    %43 = arith.maximumf %41, %42 : vector<8x64xf32>
    %c61 = arith.constant 61 : index
    %c0_23 = arith.constant 0 : index
    %44 = vector.load %arg13[%c61, %c0_23] : memref<110x64xf32, #tpu.memory_space<vmem>>, vector<8x64xf32>
    tpu.vector_store %arg13[%c61, %c0_23], %43 {strides = array<i32>} : memref<110x64xf32, #tpu.memory_space<vmem>>, vector<8x64xf32>,
    %45 = vector.extract_strided_slice %20 {offsets = [96, 0], sizes = [8, 64], strides = [1, 1]} : vector<128x64xf32> to vector<8x64xf32>
    %46 = vector.extract_strided_slice %20 {offsets = [104, 0], sizes = [8, 64], strides = [1, 1]} : vector<128x64xf32> to vector<8x64xf32>
    %47 = arith.maximumf %45, %46 : vector<8x64xf32>
    %c71 = arith.constant 71 : index
    %c0_24 = arith.constant 0 : index
    %48 = vector.load %arg13[%c71, %c0_24] : memref<110x64xf32, #tpu.memory_space<vmem>>, vector<8x64xf32>
    tpu.vector_store %arg13[%c71, %c0_24], %47 {strides = array<i32>} : memref<110x64xf32, #tpu.memory_space<vmem>>, vector<8x64xf32>,
    %49 = vector.extract_strided_slice %20 {offsets = [112, 0], sizes = [8, 64], strides = [1, 1]} : vector<128x64xf32> to vector<8x64xf32>
    %50 = vector.extract_strided_slice %20 {offsets = [120, 0], sizes = [8, 64], strides = [1, 1]} : vector<128x64xf32> to vector<8x64xf32>
    %51 = arith.maximumf %49, %50 : vector<8x64xf32>
    %c81 = arith.constant 81 : index
    %c0_25 = arith.constant 0 : index
    %52 = vector.load %arg13[%c81, %c0_25] : memref<110x64xf32, #tpu.memory_space<vmem>>, vector<8x64xf32>
    tpu.vector_store %arg13[%c81, %c0_25], %51 {strides = array<i32>} : memref<110x64xf32, #tpu.memory_space<vmem>>, vector<8x64xf32>,
    %c0_26 = arith.constant 0 : index
    %c0_27 = arith.constant 0 : index
    %53 = vector.load %arg5[%c0_26, %c0_27] : memref<1x128xf32, #tpu.memory_space<vmem>>, vector<1x128xf32>
    %cst_28 = arith.constant 0.000000e+00 : f32
    %54 = vector.broadcast %cst_28 : f32 to vector<40x128xf32>
    %c0_29 = arith.constant 0 : index
    %c0_30 = arith.constant 0 : index
    %55 = tpu.strided_load %arg13[%c0_29, %c0_30] {strides = array<i32: 2, 1>} : memref<110x64xf32, #tpu.memory_space<vmem>>, vector<40x64xf32>
    %56 = arith.truncf %55 : vector<40x64xf32> to vector<40x64xbf16>
    %c0_31 = arith.constant 0 : index
    %c0_32 = arith.constant 0 : index
    %c0_33 = arith.constant 0 : index
    %c0_34 = arith.constant 0 : index
    %57 = vector.load %arg4[%c0_31, %c0_32, %c0_33, %c0_34] : memref<3x3x64x128xbf16, #tpu.memory_space<vmem>>, vector<1x1x64x128xbf16>
    %58 = vector.shape_cast %57 : vector<1x1x64x128xbf16> to vector<64x128xbf16>
    %cst_35 = arith.constant dense<0.000000e+00> : vector<40x128xf32>
    %59 = tpu.matmul %56, %58, %cst_35 {dimension_numbers = #tpu.dot_dimension_numbers<[1], [0], [0], [1], [0, 0, 1, 1], [], []>} : vector<40x64xbf16>, vector<64x128xbf16>, vector<40x128xf32> -> vector<40x128xf32>
    %60 = arith.addf %54, %59 : vector<40x128xf32>
    %c1 = arith.constant 1 : index
    %c0_36 = arith.constant 0 : index
    %61 = tpu.strided_load %arg13[%c1, %c0_36] {strides = array<i32: 2, 1>} : memref<110x64xf32, #tpu.memory_space<vmem>>, vector<40x64xf32>
    %62 = arith.truncf %61 : vector<40x64xf32> to vector<40x64xbf16>
    %c0_37 = arith.constant 0 : index
    %c1_38 = arith.constant 1 : index
    %c0_39 = arith.constant 0 : index
    %c0_40 = arith.constant 0 : index
    %63 = vector.load %arg4[%c0_37, %c1_38, %c0_39, %c0_40] : memref<3x3x64x128xbf16, #tpu.memory_space<vmem>>, vector<1x1x64x128xbf16>
    %64 = vector.shape_cast %63 : vector<1x1x64x128xbf16> to vector<64x128xbf16>
    %cst_41 = arith.constant dense<0.000000e+00> : vector<40x128xf32>
    %65 = tpu.matmul %62, %64, %cst_41 {dimension_numbers = #tpu.dot_dimension_numbers<[1], [0], [0], [1], [0, 0, 1, 1], [], []>} : vector<40x64xbf16>, vector<64x128xbf16>, vector<40x128xf32> -> vector<40x128xf32>
    %66 = arith.addf %60, %65 : vector<40x128xf32>
    %c2 = arith.constant 2 : index
    %c0_42 = arith.constant 0 : index
    %67 = tpu.strided_load %arg13[%c2, %c0_42] {strides = array<i32: 2, 1>} : memref<110x64xf32, #tpu.memory_space<vmem>>, vector<40x64xf32>
    %68 = arith.truncf %67 : vector<40x64xf32> to vector<40x64xbf16>
    %c0_43 = arith.constant 0 : index
    %c2_44 = arith.constant 2 : index
    %c0_45 = arith.constant 0 : index
    %c0_46 = arith.constant 0 : index
    %69 = vector.load %arg4[%c0_43, %c2_44, %c0_45, %c0_46] : memref<3x3x64x128xbf16, #tpu.memory_space<vmem>>, vector<1x1x64x128xbf16>
    %70 = vector.shape_cast %69 : vector<1x1x64x128xbf16> to vector<64x128xbf16>
    %cst_47 = arith.constant dense<0.000000e+00> : vector<40x128xf32>
    %71 = tpu.matmul %68, %70, %cst_47 {dimension_numbers = #tpu.dot_dimension_numbers<[1], [0], [0], [1], [0, 0, 1, 1], [], []>} : vector<40x64xbf16>, vector<64x128xbf16>, vector<40x128xf32> -> vector<40x128xf32>
    %72 = arith.addf %66, %71 : vector<40x128xf32>
    %c10 = arith.constant 10 : index
    %c0_48 = arith.constant 0 : index
    %73 = tpu.strided_load %arg13[%c10, %c0_48] {strides = array<i32: 2, 1>} : memref<110x64xf32, #tpu.memory_space<vmem>>, vector<40x64xf32>
    %74 = arith.truncf %73 : vector<40x64xf32> to vector<40x64xbf16>
    %c1_49 = arith.constant 1 : index
    %c0_50 = arith.constant 0 : index
    %c0_51 = arith.constant 0 : index
    %c0_52 = arith.constant 0 : index
    %75 = vector.load %arg4[%c1_49, %c0_50, %c0_51, %c0_52] : memref<3x3x64x128xbf16, #tpu.memory_space<vmem>>, vector<1x1x64x128xbf16>
    %76 = vector.shape_cast %75 : vector<1x1x64x128xbf16> to vector<64x128xbf16>
    %cst_53 = arith.constant dense<0.000000e+00> : vector<40x128xf32>
    %77 = tpu.matmul %74, %76, %cst_53 {dimension_numbers = #tpu.dot_dimension_numbers<[1], [0], [0], [1], [0, 0, 1, 1], [], []>} : vector<40x64xbf16>, vector<64x128xbf16>, vector<40x128xf32> -> vector<40x128xf32>
    %78 = arith.addf %72, %77 : vector<40x128xf32>
    %c11_54 = arith.constant 11 : index
    %c0_55 = arith.constant 0 : index
    %79 = tpu.strided_load %arg13[%c11_54, %c0_55] {strides = array<i32: 2, 1>} : memref<110x64xf32, #tpu.memory_space<vmem>>, vector<40x64xf32>
    %80 = arith.truncf %79 : vector<40x64xf32> to vector<40x64xbf16>
    %c1_56 = arith.constant 1 : index
    %c1_57 = arith.constant 1 : index
    %c0_58 = arith.constant 0 : index
    %c0_59 = arith.constant 0 : index
    %81 = vector.load %arg4[%c1_56, %c1_57, %c0_58, %c0_59] : memref<3x3x64x128xbf16, #tpu.memory_space<vmem>>, vector<1x1x64x128xbf16>
    %82 = vector.shape_cast %81 : vector<1x1x64x128xbf16> to vector<64x128xbf16>
    %cst_60 = arith.constant dense<0.000000e+00> : vector<40x128xf32>
    %83 = tpu.matmul %80, %82, %cst_60 {dimension_numbers = #tpu.dot_dimension_numbers<[1], [0], [0], [1], [0, 0, 1, 1], [], []>} : vector<40x64xbf16>, vector<64x128xbf16>, vector<40x128xf32> -> vector<40x128xf32>
    %84 = arith.addf %78, %83 : vector<40x128xf32>
    %c12 = arith.constant 12 : index
    %c0_61 = arith.constant 0 : index
    %85 = tpu.strided_load %arg13[%c12, %c0_61] {strides = array<i32: 2, 1>} : memref<110x64xf32, #tpu.memory_space<vmem>>, vector<40x64xf32>
    %86 = arith.truncf %85 : vector<40x64xf32> to vector<40x64xbf16>
    %c1_62 = arith.constant 1 : index
    %c2_63 = arith.constant 2 : index
    %c0_64 = arith.constant 0 : index
    %c0_65 = arith.constant 0 : index
    %87 = vector.load %arg4[%c1_62, %c2_63, %c0_64, %c0_65] : memref<3x3x64x128xbf16, #tpu.memory_space<vmem>>, vector<1x1x64x128xbf16>
    %88 = vector.shape_cast %87 : vector<1x1x64x128xbf16> to vector<64x128xbf16>
    %cst_66 = arith.constant dense<0.000000e+00> : vector<40x128xf32>
    %89 = tpu.matmul %86, %88, %cst_66 {dimension_numbers = #tpu.dot_dimension_numbers<[1], [0], [0], [1], [0, 0, 1, 1], [], []>} : vector<40x64xbf16>, vector<64x128xbf16>, vector<40x128xf32> -> vector<40x128xf32>
    %90 = arith.addf %84, %89 : vector<40x128xf32>
    %c20 = arith.constant 20 : index
    %c0_67 = arith.constant 0 : index
    %91 = tpu.strided_load %arg13[%c20, %c0_67] {strides = array<i32: 2, 1>} : memref<110x64xf32, #tpu.memory_space<vmem>>, vector<40x64xf32>
    %92 = arith.truncf %91 : vector<40x64xf32> to vector<40x64xbf16>
    %c2_68 = arith.constant 2 : index
    %c0_69 = arith.constant 0 : index
    %c0_70 = arith.constant 0 : index
    %c0_71 = arith.constant 0 : index
    %93 = vector.load %arg4[%c2_68, %c0_69, %c0_70, %c0_71] : memref<3x3x64x128xbf16, #tpu.memory_space<vmem>>, vector<1x1x64x128xbf16>
    %94 = vector.shape_cast %93 : vector<1x1x64x128xbf16> to vector<64x128xbf16>
    %cst_72 = arith.constant dense<0.000000e+00> : vector<40x128xf32>
    %95 = tpu.matmul %92, %94, %cst_72 {dimension_numbers = #tpu.dot_dimension_numbers<[1], [0], [0], [1], [0, 0, 1, 1], [], []>} : vector<40x64xbf16>, vector<64x128xbf16>, vector<40x128xf32> -> vector<40x128xf32>
    %96 = arith.addf %90, %95 : vector<40x128xf32>
    %c21_73 = arith.constant 21 : index
    %c0_74 = arith.constant 0 : index
    %97 = tpu.strided_load %arg13[%c21_73, %c0_74] {strides = array<i32: 2, 1>} : memref<110x64xf32, #tpu.memory_space<vmem>>, vector<40x64xf32>
    %98 = arith.truncf %97 : vector<40x64xf32> to vector<40x64xbf16>
    %c2_75 = arith.constant 2 : index
    %c1_76 = arith.constant 1 : index
    %c0_77 = arith.constant 0 : index
    %c0_78 = arith.constant 0 : index
    %99 = vector.load %arg4[%c2_75, %c1_76, %c0_77, %c0_78] : memref<3x3x64x128xbf16, #tpu.memory_space<vmem>>, vector<1x1x64x128xbf16>
    %100 = vector.shape_cast %99 : vector<1x1x64x128xbf16> to vector<64x128xbf16>
    %cst_79 = arith.constant dense<0.000000e+00> : vector<40x128xf32>
    %101 = tpu.matmul %98, %100, %cst_79 {dimension_numbers = #tpu.dot_dimension_numbers<[1], [0], [0], [1], [0, 0, 1, 1], [], []>} : vector<40x64xbf16>, vector<64x128xbf16>, vector<40x128xf32> -> vector<40x128xf32>
    %102 = arith.addf %96, %101 : vector<40x128xf32>
    %c22 = arith.constant 22 : index
    %c0_80 = arith.constant 0 : index
    %103 = tpu.strided_load %arg13[%c22, %c0_80] {strides = array<i32: 2, 1>} : memref<110x64xf32, #tpu.memory_space<vmem>>, vector<40x64xf32>
    %104 = arith.truncf %103 : vector<40x64xf32> to vector<40x64xbf16>
    %c2_81 = arith.constant 2 : index
    %c2_82 = arith.constant 2 : index
    %c0_83 = arith.constant 0 : index
    %c0_84 = arith.constant 0 : index
    %105 = vector.load %arg4[%c2_81, %c2_82, %c0_83, %c0_84] : memref<3x3x64x128xbf16, #tpu.memory_space<vmem>>, vector<1x1x64x128xbf16>
    %106 = vector.shape_cast %105 : vector<1x1x64x128xbf16> to vector<64x128xbf16>
    %cst_85 = arith.constant dense<0.000000e+00> : vector<40x128xf32>
    %107 = tpu.matmul %104, %106, %cst_85 {dimension_numbers = #tpu.dot_dimension_numbers<[1], [0], [0], [1], [0, 0, 1, 1], [], []>} : vector<40x64xbf16>, vector<64x128xbf16>, vector<40x128xf32> -> vector<40x128xf32>
    %108 = arith.addf %102, %107 : vector<40x128xf32>
    %109 = vector.broadcast %53 : vector<1x128xf32> to vector<40x128xf32>
    %110 = arith.addf %108, %109 : vector<40x128xf32>
    %cst_86 = arith.constant 0.000000e+00 : f32
    %111 = vector.broadcast %cst_86 : f32 to vector<40x128xf32>
    %112 = arith.maximumf %110, %111 : vector<40x128xf32>
    %cst_87 = arith.constant 0.000000e+00 : f32
    %113 = vector.broadcast %cst_87 : f32 to vector<40x128xf32>
    %c1_88 = arith.constant 1 : index
    %c0_89 = arith.constant 0 : index
    %114 = tpu.strided_load %arg13[%c1_88, %c0_89] {strides = array<i32: 2, 1>} : memref<110x64xf32, #tpu.memory_space<vmem>>, vector<40x64xf32>
    %115 = arith.truncf %114 : vector<40x64xf32> to vector<40x64xbf16>
    %c0_90 = arith.constant 0 : index
    %c0_91 = arith.constant 0 : index
    %c0_92 = arith.constant 0 : index
    %c0_93 = arith.constant 0 : index
    %116 = vector.load %arg4[%c0_90, %c0_91, %c0_92, %c0_93] : memref<3x3x64x128xbf16, #tpu.memory_space<vmem>>, vector<1x1x64x128xbf16>
    %117 = vector.shape_cast %116 : vector<1x1x64x128xbf16> to vector<64x128xbf16>
    %cst_94 = arith.constant dense<0.000000e+00> : vector<40x128xf32>
    %118 = tpu.matmul %115, %117, %cst_94 {dimension_numbers = #tpu.dot_dimension_numbers<[1], [0], [0], [1], [0, 0, 1, 1], [], []>} : vector<40x64xbf16>, vector<64x128xbf16>, vector<40x128xf32> -> vector<40x128xf32>
    %119 = arith.addf %113, %118 : vector<40x128xf32>
    %c2_95 = arith.constant 2 : index
    %c0_96 = arith.constant 0 : index
    %120 = tpu.strided_load %arg13[%c2_95, %c0_96] {strides = array<i32: 2, 1>} : memref<110x64xf32, #tpu.memory_space<vmem>>, vector<40x64xf32>
    %121 = arith.truncf %120 : vector<40x64xf32> to vector<40x64xbf16>
    %c0_97 = arith.constant 0 : index
    %c1_98 = arith.constant 1 : index
    %c0_99 = arith.constant 0 : index
    %c0_100 = arith.constant 0 : index
    %122 = vector.load %arg4[%c0_97, %c1_98, %c0_99, %c0_100] : memref<3x3x64x128xbf16, #tpu.memory_space<vmem>>, vector<1x1x64x128xbf16>
    %123 = vector.shape_cast %122 : vector<1x1x64x128xbf16> to vector<64x128xbf16>
    %cst_101 = arith.constant dense<0.000000e+00> : vector<40x128xf32>
    %124 = tpu.matmul %121, %123, %cst_101 {dimension_numbers = #tpu.dot_dimension_numbers<[1], [0], [0], [1], [0, 0, 1, 1], [], []>} : vector<40x64xbf16>, vector<64x128xbf16>, vector<40x128xf32> -> vector<40x128xf32>
    %125 = arith.addf %119, %124 : vector<40x128xf32>
    %c3 = arith.constant 3 : index
    %c0_102 = arith.constant 0 : index
    %126 = tpu.strided_load %arg13[%c3, %c0_102] {strides = array<i32: 2, 1>} : memref<110x64xf32, #tpu.memory_space<vmem>>, vector<40x64xf32>
    %127 = arith.truncf %126 : vector<40x64xf32> to vector<40x64xbf16>
    %c0_103 = arith.constant 0 : index
    %c2_104 = arith.constant 2 : index
    %c0_105 = arith.constant 0 : index
    %c0_106 = arith.constant 0 : index
    %128 = vector.load %arg4[%c0_103, %c2_104, %c0_105, %c0_106] : memref<3x3x64x128xbf16, #tpu.memory_space<vmem>>, vector<1x1x64x128xbf16>
    %129 = vector.shape_cast %128 : vector<1x1x64x128xbf16> to vector<64x128xbf16>
    %cst_107 = arith.constant dense<0.000000e+00> : vector<40x128xf32>
    %130 = tpu.matmul %127, %129, %cst_107 {dimension_numbers = #tpu.dot_dimension_numbers<[1], [0], [0], [1], [0, 0, 1, 1], [], []>} : vector<40x64xbf16>, vector<64x128xbf16>, vector<40x128xf32> -> vector<40x128xf32>
    %131 = arith.addf %125, %130 : vector<40x128xf32>
    %c11_108 = arith.constant 11 : index
    %c0_109 = arith.constant 0 : index
    %132 = tpu.strided_load %arg13[%c11_108, %c0_109] {strides = array<i32: 2, 1>} : memref<110x64xf32, #tpu.memory_space<vmem>>, vector<40x64xf32>
    %133 = arith.truncf %132 : vector<40x64xf32> to vector<40x64xbf16>
    %c1_110 = arith.constant 1 : index
    %c0_111 = arith.constant 0 : index
    %c0_112 = arith.constant 0 : index
    %c0_113 = arith.constant 0 : index
    %134 = vector.load %arg4[%c1_110, %c0_111, %c0_112, %c0_113] : memref<3x3x64x128xbf16, #tpu.memory_space<vmem>>, vector<1x1x64x128xbf16>
    %135 = vector.shape_cast %134 : vector<1x1x64x128xbf16> to vector<64x128xbf16>
    %cst_114 = arith.constant dense<0.000000e+00> : vector<40x128xf32>
    %136 = tpu.matmul %133, %135, %cst_114 {dimension_numbers = #tpu.dot_dimension_numbers<[1], [0], [0], [1], [0, 0, 1, 1], [], []>} : vector<40x64xbf16>, vector<64x128xbf16>, vector<40x128xf32> -> vector<40x128xf32>
    %137 = arith.addf %131, %136 : vector<40x128xf32>
    %c12_115 = arith.constant 12 : index
    %c0_116 = arith.constant 0 : index
    %138 = tpu.strided_load %arg13[%c12_115, %c0_116] {strides = array<i32: 2, 1>} : memref<110x64xf32, #tpu.memory_space<vmem>>, vector<40x64xf32>
    %139 = arith.truncf %138 : vector<40x64xf32> to vector<40x64xbf16>
    %c1_117 = arith.constant 1 : index
    %c1_118 = arith.constant 1 : index
    %c0_119 = arith.constant 0 : index
    %c0_120 = arith.constant 0 : index
    %140 = vector.load %arg4[%c1_117, %c1_118, %c0_119, %c0_120] : memref<3x3x64x128xbf16, #tpu.memory_space<vmem>>, vector<1x1x64x128xbf16>
    %141 = vector.shape_cast %140 : vector<1x1x64x128xbf16> to vector<64x128xbf16>
    %cst_121 = arith.constant dense<0.000000e+00> : vector<40x128xf32>
    %142 = tpu.matmul %139, %141, %cst_121 {dimension_numbers = #tpu.dot_dimension_numbers<[1], [0], [0], [1], [0, 0, 1, 1], [], []>} : vector<40x64xbf16>, vector<64x128xbf16>, vector<40x128xf32> -> vector<40x128xf32>
    %143 = arith.addf %137, %142 : vector<40x128xf32>
    %c13 = arith.constant 13 : index
    %c0_122 = arith.constant 0 : index
    %144 = tpu.strided_load %arg13[%c13, %c0_122] {strides = array<i32: 2, 1>} : memref<110x64xf32, #tpu.memory_space<vmem>>, vector<40x64xf32>
    %145 = arith.truncf %144 : vector<40x64xf32> to vector<40x64xbf16>
    %c1_123 = arith.constant 1 : index
    %c2_124 = arith.constant 2 : index
    %c0_125 = arith.constant 0 : index
    %c0_126 = arith.constant 0 : index
    %146 = vector.load %arg4[%c1_123, %c2_124, %c0_125, %c0_126] : memref<3x3x64x128xbf16, #tpu.memory_space<vmem>>, vector<1x1x64x128xbf16>
    %147 = vector.shape_cast %146 : vector<1x1x64x128xbf16> to vector<64x128xbf16>
    %cst_127 = arith.constant dense<0.000000e+00> : vector<40x128xf32>
    %148 = tpu.matmul %145, %147, %cst_127 {dimension_numbers = #tpu.dot_dimension_numbers<[1], [0], [0], [1], [0, 0, 1, 1], [], []>} : vector<40x64xbf16>, vector<64x128xbf16>, vector<40x128xf32> -> vector<40x128xf32>
    %149 = arith.addf %143, %148 : vector<40x128xf32>
    %c21_128 = arith.constant 21 : index
    %c0_129 = arith.constant 0 : index
    %150 = tpu.strided_load %arg13[%c21_128, %c0_129] {strides = array<i32: 2, 1>} : memref<110x64xf32, #tpu.memory_space<vmem>>, vector<40x64xf32>
    %151 = arith.truncf %150 : vector<40x64xf32> to vector<40x64xbf16>
    %c2_130 = arith.constant 2 : index
    %c0_131 = arith.constant 0 : index
    %c0_132 = arith.constant 0 : index
    %c0_133 = arith.constant 0 : index
    %152 = vector.load %arg4[%c2_130, %c0_131, %c0_132, %c0_133] : memref<3x3x64x128xbf16, #tpu.memory_space<vmem>>, vector<1x1x64x128xbf16>
    %153 = vector.shape_cast %152 : vector<1x1x64x128xbf16> to vector<64x128xbf16>
    %cst_134 = arith.constant dense<0.000000e+00> : vector<40x128xf32>
    %154 = tpu.matmul %151, %153, %cst_134 {dimension_numbers = #tpu.dot_dimension_numbers<[1], [0], [0], [1], [0, 0, 1, 1], [], []>} : vector<40x64xbf16>, vector<64x128xbf16>, vector<40x128xf32> -> vector<40x128xf32>
    %155 = arith.addf %149, %154 : vector<40x128xf32>
    %c22_135 = arith.constant 22 : index
    %c0_136 = arith.constant 0 : index
    %156 = tpu.strided_load %arg13[%c22_135, %c0_136] {strides = array<i32: 2, 1>} : memref<110x64xf32, #tpu.memory_space<vmem>>, vector<40x64xf32>
    %157 = arith.truncf %156 : vector<40x64xf32> to vector<40x64xbf16>
    %c2_137 = arith.constant 2 : index
    %c1_138 = arith.constant 1 : index
    %c0_139 = arith.constant 0 : index
    %c0_140 = arith.constant 0 : index
    %158 = vector.load %arg4[%c2_137, %c1_138, %c0_139, %c0_140] : memref<3x3x64x128xbf16, #tpu.memory_space<vmem>>, vector<1x1x64x128xbf16>
    %159 = vector.shape_cast %158 : vector<1x1x64x128xbf16> to vector<64x128xbf16>
    %cst_141 = arith.constant dense<0.000000e+00> : vector<40x128xf32>
    %160 = tpu.matmul %157, %159, %cst_141 {dimension_numbers = #tpu.dot_dimension_numbers<[1], [0], [0], [1], [0, 0, 1, 1], [], []>} : vector<40x64xbf16>, vector<64x128xbf16>, vector<40x128xf32> -> vector<40x128xf32>
    %161 = arith.addf %155, %160 : vector<40x128xf32>
    %c23 = arith.constant 23 : index
    %c0_142 = arith.constant 0 : index
    %162 = tpu.strided_load %arg13[%c23, %c0_142] {strides = array<i32: 2, 1>} : memref<110x64xf32, #tpu.memory_space<vmem>>, vector<40x64xf32>
    %163 = arith.truncf %162 : vector<40x64xf32> to vector<40x64xbf16>
    %c2_143 = arith.constant 2 : index
    %c2_144 = arith.constant 2 : index
    %c0_145 = arith.constant 0 : index
    %c0_146 = arith.constant 0 : index
    %164 = vector.load %arg4[%c2_143, %c2_144, %c0_145, %c0_146] : memref<3x3x64x128xbf16, #tpu.memory_space<vmem>>, vector<1x1x64x128xbf16>
    %165 = vector.shape_cast %164 : vector<1x1x64x128xbf16> to vector<64x128xbf16>
    %cst_147 = arith.constant dense<0.000000e+00> : vector<40x128xf32>
    %166 = tpu.matmul %163, %165, %cst_147 {dimension_numbers = #tpu.dot_dimension_numbers<[1], [0], [0], [1], [0, 0, 1, 1], [], []>} : vector<40x64xbf16>, vector<64x128xbf16>, vector<40x128xf32> -> vector<40x128xf32>
    %167 = arith.addf %161, %166 : vector<40x128xf32>
    %168 = vector.broadcast %53 : vector<1x128xf32> to vector<40x128xf32>
    %169 = arith.addf %167, %168 : vector<40x128xf32>
    %cst_148 = arith.constant 0.000000e+00 : f32
    %170 = vector.broadcast %cst_148 : f32 to vector<40x128xf32>
    %171 = arith.maximumf %169, %170 : vector<40x128xf32>
    %172 = arith.maximumf %112, %171 : vector<40x128xf32>
    %173 = vector.extract_strided_slice %172 {offsets = [0, 0], sizes = [4, 128], strides = [1, 1]} : vector<40x128xf32> to vector<4x128xf32>
    %174 = vector.extract_strided_slice %172 {offsets = [5, 0], sizes = [4, 128], strides = [1, 1]} : vector<40x128xf32> to vector<4x128xf32>
    %175 = arith.maximumf %173, %174 : vector<4x128xf32>
    %c7 = arith.constant 7 : index
    %c0_149 = arith.constant 0 : index
    %176 = vector.load %arg14[%c7, %c0_149] : memref<42x128xf32, #tpu.memory_space<vmem>>, vector<4x128xf32>
    tpu.vector_store %arg14[%c7, %c0_149], %175 {strides = array<i32>} : memref<42x128xf32, #tpu.memory_space<vmem>>, vector<4x128xf32>,
    %177 = vector.extract_strided_slice %172 {offsets = [10, 0], sizes = [4, 128], strides = [1, 1]} : vector<40x128xf32> to vector<4x128xf32>
    %178 = vector.extract_strided_slice %172 {offsets = [15, 0], sizes = [4, 128], strides = [1, 1]} : vector<40x128xf32> to vector<4x128xf32>
    %179 = arith.maximumf %177, %178 : vector<4x128xf32>
    %c13_150 = arith.constant 13 : index
    %c0_151 = arith.constant 0 : index
    %180 = vector.load %arg14[%c13_150, %c0_151] : memref<42x128xf32, #tpu.memory_space<vmem>>, vector<4x128xf32>
    tpu.vector_store %arg14[%c13_150, %c0_151], %179 {strides = array<i32>} : memref<42x128xf32, #tpu.memory_space<vmem>>, vector<4x128xf32>,
    %181 = vector.extract_strided_slice %172 {offsets = [20, 0], sizes = [4, 128], strides = [1, 1]} : vector<40x128xf32> to vector<4x128xf32>
    %182 = vector.extract_strided_slice %172 {offsets = [25, 0], sizes = [4, 128], strides = [1, 1]} : vector<40x128xf32> to vector<4x128xf32>
    %183 = arith.maximumf %181, %182 : vector<4x128xf32>
    %c19 = arith.constant 19 : index
    %c0_152 = arith.constant 0 : index
    %184 = vector.load %arg14[%c19, %c0_152] : memref<42x128xf32, #tpu.memory_space<vmem>>, vector<4x128xf32>
    tpu.vector_store %arg14[%c19, %c0_152], %183 {strides = array<i32>} : memref<42x128xf32, #tpu.memory_space<vmem>>, vector<4x128xf32>,
    %185 = vector.extract_strided_slice %172 {offsets = [30, 0], sizes = [4, 128], strides = [1, 1]} : vector<40x128xf32> to vector<4x128xf32>
    %186 = vector.extract_strided_slice %172 {offsets = [35, 0], sizes = [4, 128], strides = [1, 1]} : vector<40x128xf32> to vector<4x128xf32>
    %187 = arith.maximumf %185, %186 : vector<4x128xf32>
    %c25 = arith.constant 25 : index
    %c0_153 = arith.constant 0 : index
    %188 = vector.load %arg14[%c25, %c0_153] : memref<42x128xf32, #tpu.memory_space<vmem>>, vector<4x128xf32>
    tpu.vector_store %arg14[%c25, %c0_153], %187 {strides = array<i32>} : memref<42x128xf32, #tpu.memory_space<vmem>>, vector<4x128xf32>,
    %c0_154 = arith.constant 0 : index
    %c0_155 = arith.constant 0 : index
    %189 = vector.load %arg7[%c0_154, %c0_155] : memref<1x256xf32, #tpu.memory_space<vmem>>, vector<1x256xf32>
    %cst_156 = arith.constant 0.000000e+00 : f32
    %190 = vector.broadcast %cst_156 : f32 to vector<12x256xf32>
    %c0_157 = arith.constant 0 : index
    %c0_158 = arith.constant 0 : index
    %191 = tpu.strided_load %arg14[%c0_157, %c0_158] {strides = array<i32: 2, 1>} : memref<42x128xf32, #tpu.memory_space<vmem>>, vector<12x128xf32>
    %192 = arith.truncf %191 : vector<12x128xf32> to vector<12x128xbf16>
    %c0_159 = arith.constant 0 : index
    %c0_160 = arith.constant 0 : index
    %c0_161 = arith.constant 0 : index
    %c0_162 = arith.constant 0 : index
    %193 = vector.load %arg6[%c0_159, %c0_160, %c0_161, %c0_162] : memref<3x3x128x256xbf16, #tpu.memory_space<vmem>>, vector<1x1x128x256xbf16>
    %194 = vector.shape_cast %193 : vector<1x1x128x256xbf16> to vector<128x256xbf16>
    %cst_163 = arith.constant dense<0.000000e+00> : vector<12x256xf32>
    %195 = tpu.matmul %192, %194, %cst_163 {dimension_numbers = #tpu.dot_dimension_numbers<[1], [0], [0], [1], [0, 0, 1, 1], [], []>} : vector<12x128xbf16>, vector<128x256xbf16>, vector<12x256xf32> -> vector<12x256xf32>
    %196 = arith.addf %190, %195 : vector<12x256xf32>
    %c1_164 = arith.constant 1 : index
    %c0_165 = arith.constant 0 : index
    %197 = tpu.strided_load %arg14[%c1_164, %c0_165] {strides = array<i32: 2, 1>} : memref<42x128xf32, #tpu.memory_space<vmem>>, vector<12x128xf32>
    %198 = arith.truncf %197 : vector<12x128xf32> to vector<12x128xbf16>
    %c0_166 = arith.constant 0 : index
    %c1_167 = arith.constant 1 : index
    %c0_168 = arith.constant 0 : index
    %c0_169 = arith.constant 0 : index
    %199 = vector.load %arg6[%c0_166, %c1_167, %c0_168, %c0_169] : memref<3x3x128x256xbf16, #tpu.memory_space<vmem>>, vector<1x1x128x256xbf16>
    %200 = vector.shape_cast %199 : vector<1x1x128x256xbf16> to vector<128x256xbf16>
    %cst_170 = arith.constant dense<0.000000e+00> : vector<12x256xf32>
    %201 = tpu.matmul %198, %200, %cst_170 {dimension_numbers = #tpu.dot_dimension_numbers<[1], [0], [0], [1], [0, 0, 1, 1], [], []>} : vector<12x128xbf16>, vector<128x256xbf16>, vector<12x256xf32> -> vector<12x256xf32>
    %202 = arith.addf %196, %201 : vector<12x256xf32>
    %c2_171 = arith.constant 2 : index
    %c0_172 = arith.constant 0 : index
    %203 = tpu.strided_load %arg14[%c2_171, %c0_172] {strides = array<i32: 2, 1>} : memref<42x128xf32, #tpu.memory_space<vmem>>, vector<12x128xf32>
    %204 = arith.truncf %203 : vector<12x128xf32> to vector<12x128xbf16>
    %c0_173 = arith.constant 0 : index
    %c2_174 = arith.constant 2 : index
    %c0_175 = arith.constant 0 : index
    %c0_176 = arith.constant 0 : index
    %205 = vector.load %arg6[%c0_173, %c2_174, %c0_175, %c0_176] : memref<3x3x128x256xbf16, #tpu.memory_space<vmem>>, vector<1x1x128x256xbf16>
    %206 = vector.shape_cast %205 : vector<1x1x128x256xbf16> to vector<128x256xbf16>
    %cst_177 = arith.constant dense<0.000000e+00> : vector<12x256xf32>
    %207 = tpu.matmul %204, %206, %cst_177 {dimension_numbers = #tpu.dot_dimension_numbers<[1], [0], [0], [1], [0, 0, 1, 1], [], []>} : vector<12x128xbf16>, vector<128x256xbf16>, vector<12x256xf32> -> vector<12x256xf32>
    %208 = arith.addf %202, %207 : vector<12x256xf32>
    %c6 = arith.constant 6 : index
    %c0_178 = arith.constant 0 : index
    %209 = tpu.strided_load %arg14[%c6, %c0_178] {strides = array<i32: 2, 1>} : memref<42x128xf32, #tpu.memory_space<vmem>>, vector<12x128xf32>
    %210 = arith.truncf %209 : vector<12x128xf32> to vector<12x128xbf16>
    %c1_179 = arith.constant 1 : index
    %c0_180 = arith.constant 0 : index
    %c0_181 = arith.constant 0 : index
    %c0_182 = arith.constant 0 : index
    %211 = vector.load %arg6[%c1_179, %c0_180, %c0_181, %c0_182] : memref<3x3x128x256xbf16, #tpu.memory_space<vmem>>, vector<1x1x128x256xbf16>
    %212 = vector.shape_cast %211 : vector<1x1x128x256xbf16> to vector<128x256xbf16>
    %cst_183 = arith.constant dense<0.000000e+00> : vector<12x256xf32>
    %213 = tpu.matmul %210, %212, %cst_183 {dimension_numbers = #tpu.dot_dimension_numbers<[1], [0], [0], [1], [0, 0, 1, 1], [], []>} : vector<12x128xbf16>, vector<128x256xbf16>, vector<12x256xf32> -> vector<12x256xf32>
    %214 = arith.addf %208, %213 : vector<12x256xf32>
    %c7_184 = arith.constant 7 : index
    %c0_185 = arith.constant 0 : index
    %215 = tpu.strided_load %arg14[%c7_184, %c0_185] {strides = array<i32: 2, 1>} : memref<42x128xf32, #tpu.memory_space<vmem>>, vector<12x128xf32>
    %216 = arith.truncf %215 : vector<12x128xf32> to vector<12x128xbf16>
    %c1_186 = arith.constant 1 : index
    %c1_187 = arith.constant 1 : index
    %c0_188 = arith.constant 0 : index
    %c0_189 = arith.constant 0 : index
    %217 = vector.load %arg6[%c1_186, %c1_187, %c0_188, %c0_189] : memref<3x3x128x256xbf16, #tpu.memory_space<vmem>>, vector<1x1x128x256xbf16>
    %218 = vector.shape_cast %217 : vector<1x1x128x256xbf16> to vector<128x256xbf16>
    %cst_190 = arith.constant dense<0.000000e+00> : vector<12x256xf32>
    %219 = tpu.matmul %216, %218, %cst_190 {dimension_numbers = #tpu.dot_dimension_numbers<[1], [0], [0], [1], [0, 0, 1, 1], [], []>} : vector<12x128xbf16>, vector<128x256xbf16>, vector<12x256xf32> -> vector<12x256xf32>
    %220 = arith.addf %214, %219 : vector<12x256xf32>
    %c8 = arith.constant 8 : index
    %c0_191 = arith.constant 0 : index
    %221 = tpu.strided_load %arg14[%c8, %c0_191] {strides = array<i32: 2, 1>} : memref<42x128xf32, #tpu.memory_space<vmem>>, vector<12x128xf32>
    %222 = arith.truncf %221 : vector<12x128xf32> to vector<12x128xbf16>
    %c1_192 = arith.constant 1 : index
    %c2_193 = arith.constant 2 : index
    %c0_194 = arith.constant 0 : index
    %c0_195 = arith.constant 0 : index
    %223 = vector.load %arg6[%c1_192, %c2_193, %c0_194, %c0_195] : memref<3x3x128x256xbf16, #tpu.memory_space<vmem>>, vector<1x1x128x256xbf16>
    %224 = vector.shape_cast %223 : vector<1x1x128x256xbf16> to vector<128x256xbf16>
    %cst_196 = arith.constant dense<0.000000e+00> : vector<12x256xf32>
    %225 = tpu.matmul %222, %224, %cst_196 {dimension_numbers = #tpu.dot_dimension_numbers<[1], [0], [0], [1], [0, 0, 1, 1], [], []>} : vector<12x128xbf16>, vector<128x256xbf16>, vector<12x256xf32> -> vector<12x256xf32>
    %226 = arith.addf %220, %225 : vector<12x256xf32>
    %c12_197 = arith.constant 12 : index
    %c0_198 = arith.constant 0 : index
    %227 = tpu.strided_load %arg14[%c12_197, %c0_198] {strides = array<i32: 2, 1>} : memref<42x128xf32, #tpu.memory_space<vmem>>, vector<12x128xf32>
    %228 = arith.truncf %227 : vector<12x128xf32> to vector<12x128xbf16>
    %c2_199 = arith.constant 2 : index
    %c0_200 = arith.constant 0 : index
    %c0_201 = arith.constant 0 : index
    %c0_202 = arith.constant 0 : index
    %229 = vector.load %arg6[%c2_199, %c0_200, %c0_201, %c0_202] : memref<3x3x128x256xbf16, #tpu.memory_space<vmem>>, vector<1x1x128x256xbf16>
    %230 = vector.shape_cast %229 : vector<1x1x128x256xbf16> to vector<128x256xbf16>
    %cst_203 = arith.constant dense<0.000000e+00> : vector<12x256xf32>
    %231 = tpu.matmul %228, %230, %cst_203 {dimension_numbers = #tpu.dot_dimension_numbers<[1], [0], [0], [1], [0, 0, 1, 1], [], []>} : vector<12x128xbf16>, vector<128x256xbf16>, vector<12x256xf32> -> vector<12x256xf32>
    %232 = arith.addf %226, %231 : vector<12x256xf32>
    %c13_204 = arith.constant 13 : index
    %c0_205 = arith.constant 0 : index
    %233 = tpu.strided_load %arg14[%c13_204, %c0_205] {strides = array<i32: 2, 1>} : memref<42x128xf32, #tpu.memory_space<vmem>>, vector<12x128xf32>
    %234 = arith.truncf %233 : vector<12x128xf32> to vector<12x128xbf16>
    %c2_206 = arith.constant 2 : index
    %c1_207 = arith.constant 1 : index
    %c0_208 = arith.constant 0 : index
    %c0_209 = arith.constant 0 : index
    %235 = vector.load %arg6[%c2_206, %c1_207, %c0_208, %c0_209] : memref<3x3x128x256xbf16, #tpu.memory_space<vmem>>, vector<1x1x128x256xbf16>
    %236 = vector.shape_cast %235 : vector<1x1x128x256xbf16> to vector<128x256xbf16>
    %cst_210 = arith.constant dense<0.000000e+00> : vector<12x256xf32>
    %237 = tpu.matmul %234, %236, %cst_210 {dimension_numbers = #tpu.dot_dimension_numbers<[1], [0], [0], [1], [0, 0, 1, 1], [], []>} : vector<12x128xbf16>, vector<128x256xbf16>, vector<12x256xf32> -> vector<12x256xf32>
    %238 = arith.addf %232, %237 : vector<12x256xf32>
    %c14 = arith.constant 14 : index
    %c0_211 = arith.constant 0 : index
    %239 = tpu.strided_load %arg14[%c14, %c0_211] {strides = array<i32: 2, 1>} : memref<42x128xf32, #tpu.memory_space<vmem>>, vector<12x128xf32>
    %240 = arith.truncf %239 : vector<12x128xf32> to vector<12x128xbf16>
    %c2_212 = arith.constant 2 : index
    %c2_213 = arith.constant 2 : index
    %c0_214 = arith.constant 0 : index
    %c0_215 = arith.constant 0 : index
    %241 = vector.load %arg6[%c2_212, %c2_213, %c0_214, %c0_215] : memref<3x3x128x256xbf16, #tpu.memory_space<vmem>>, vector<1x1x128x256xbf16>
    %242 = vector.shape_cast %241 : vector<1x1x128x256xbf16> to vector<128x256xbf16>
    %cst_216 = arith.constant dense<0.000000e+00> : vector<12x256xf32>
    %243 = tpu.matmul %240, %242, %cst_216 {dimension_numbers = #tpu.dot_dimension_numbers<[1], [0], [0], [1], [0, 0, 1, 1], [], []>} : vector<12x128xbf16>, vector<128x256xbf16>, vector<12x256xf32> -> vector<12x256xf32>
    %244 = arith.addf %238, %243 : vector<12x256xf32>
    %245 = vector.broadcast %189 : vector<1x256xf32> to vector<12x256xf32>
    %246 = arith.addf %244, %245 : vector<12x256xf32>
    %cst_217 = arith.constant 0.000000e+00 : f32
    %247 = vector.broadcast %cst_217 : f32 to vector<12x256xf32>
    %248 = arith.maximumf %246, %247 : vector<12x256xf32>
    %cst_218 = arith.constant 0.000000e+00 : f32
    %249 = vector.broadcast %cst_218 : f32 to vector<12x256xf32>
    %c1_219 = arith.constant 1 : index
    %c0_220 = arith.constant 0 : index
    %250 = tpu.strided_load %arg14[%c1_219, %c0_220] {strides = array<i32: 2, 1>} : memref<42x128xf32, #tpu.memory_space<vmem>>, vector<12x128xf32>
    %251 = arith.truncf %250 : vector<12x128xf32> to vector<12x128xbf16>
    %c0_221 = arith.constant 0 : index
    %c0_222 = arith.constant 0 : index
    %c0_223 = arith.constant 0 : index
    %c0_224 = arith.constant 0 : index
    %252 = vector.load %arg6[%c0_221, %c0_222, %c0_223, %c0_224] : memref<3x3x128x256xbf16, #tpu.memory_space<vmem>>, vector<1x1x128x256xbf16>
    %253 = vector.shape_cast %252 : vector<1x1x128x256xbf16> to vector<128x256xbf16>
    %cst_225 = arith.constant dense<0.000000e+00> : vector<12x256xf32>
    %254 = tpu.matmul %251, %253, %cst_225 {dimension_numbers = #tpu.dot_dimension_numbers<[1], [0], [0], [1], [0, 0, 1, 1], [], []>} : vector<12x128xbf16>, vector<128x256xbf16>, vector<12x256xf32> -> vector<12x256xf32>
    %255 = arith.addf %249, %254 : vector<12x256xf32>
    %c2_226 = arith.constant 2 : index
    %c0_227 = arith.constant 0 : index
    %256 = tpu.strided_load %arg14[%c2_226, %c0_227] {strides = array<i32: 2, 1>} : memref<42x128xf32, #tpu.memory_space<vmem>>, vector<12x128xf32>
    %257 = arith.truncf %256 : vector<12x128xf32> to vector<12x128xbf16>
    %c0_228 = arith.constant 0 : index
    %c1_229 = arith.constant 1 : index
    %c0_230 = arith.constant 0 : index
    %c0_231 = arith.constant 0 : index
    %258 = vector.load %arg6[%c0_228, %c1_229, %c0_230, %c0_231] : memref<3x3x128x256xbf16, #tpu.memory_space<vmem>>, vector<1x1x128x256xbf16>
    %259 = vector.shape_cast %258 : vector<1x1x128x256xbf16> to vector<128x256xbf16>
    %cst_232 = arith.constant dense<0.000000e+00> : vector<12x256xf32>
    %260 = tpu.matmul %257, %259, %cst_232 {dimension_numbers = #tpu.dot_dimension_numbers<[1], [0], [0], [1], [0, 0, 1, 1], [], []>} : vector<12x128xbf16>, vector<128x256xbf16>, vector<12x256xf32> -> vector<12x256xf32>
    %261 = arith.addf %255, %260 : vector<12x256xf32>
    %c3_233 = arith.constant 3 : index
    %c0_234 = arith.constant 0 : index
    %262 = tpu.strided_load %arg14[%c3_233, %c0_234] {strides = array<i32: 2, 1>} : memref<42x128xf32, #tpu.memory_space<vmem>>, vector<12x128xf32>
    %263 = arith.truncf %262 : vector<12x128xf32> to vector<12x128xbf16>
    %c0_235 = arith.constant 0 : index
    %c2_236 = arith.constant 2 : index
    %c0_237 = arith.constant 0 : index
    %c0_238 = arith.constant 0 : index
    %264 = vector.load %arg6[%c0_235, %c2_236, %c0_237, %c0_238] : memref<3x3x128x256xbf16, #tpu.memory_space<vmem>>, vector<1x1x128x256xbf16>
    %265 = vector.shape_cast %264 : vector<1x1x128x256xbf16> to vector<128x256xbf16>
    %cst_239 = arith.constant dense<0.000000e+00> : vector<12x256xf32>
    %266 = tpu.matmul %263, %265, %cst_239 {dimension_numbers = #tpu.dot_dimension_numbers<[1], [0], [0], [1], [0, 0, 1, 1], [], []>} : vector<12x128xbf16>, vector<128x256xbf16>, vector<12x256xf32> -> vector<12x256xf32>
    %267 = arith.addf %261, %266 : vector<12x256xf32>
    %c7_240 = arith.constant 7 : index
    %c0_241 = arith.constant 0 : index
    %268 = tpu.strided_load %arg14[%c7_240, %c0_241] {strides = array<i32: 2, 1>} : memref<42x128xf32, #tpu.memory_space<vmem>>, vector<12x128xf32>
    %269 = arith.truncf %268 : vector<12x128xf32> to vector<12x128xbf16>
    %c1_242 = arith.constant 1 : index
    %c0_243 = arith.constant 0 : index
    %c0_244 = arith.constant 0 : index
    %c0_245 = arith.constant 0 : index
    %270 = vector.load %arg6[%c1_242, %c0_243, %c0_244, %c0_245] : memref<3x3x128x256xbf16, #tpu.memory_space<vmem>>, vector<1x1x128x256xbf16>
    %271 = vector.shape_cast %270 : vector<1x1x128x256xbf16> to vector<128x256xbf16>
    %cst_246 = arith.constant dense<0.000000e+00> : vector<12x256xf32>
    %272 = tpu.matmul %269, %271, %cst_246 {dimension_numbers = #tpu.dot_dimension_numbers<[1], [0], [0], [1], [0, 0, 1, 1], [], []>} : vector<12x128xbf16>, vector<128x256xbf16>, vector<12x256xf32> -> vector<12x256xf32>
    %273 = arith.addf %267, %272 : vector<12x256xf32>
    %c8_247 = arith.constant 8 : index
    %c0_248 = arith.constant 0 : index
    %274 = tpu.strided_load %arg14[%c8_247, %c0_248] {strides = array<i32: 2, 1>} : memref<42x128xf32, #tpu.memory_space<vmem>>, vector<12x128xf32>
    %275 = arith.truncf %274 : vector<12x128xf32> to vector<12x128xbf16>
    %c1_249 = arith.constant 1 : index
    %c1_250 = arith.constant 1 : index
    %c0_251 = arith.constant 0 : index
    %c0_252 = arith.constant 0 : index
    %276 = vector.load %arg6[%c1_249, %c1_250, %c0_251, %c0_252] : memref<3x3x128x256xbf16, #tpu.memory_space<vmem>>, vector<1x1x128x256xbf16>
    %277 = vector.shape_cast %276 : vector<1x1x128x256xbf16> to vector<128x256xbf16>
    %cst_253 = arith.constant dense<0.000000e+00> : vector<12x256xf32>
    %278 = tpu.matmul %275, %277, %cst_253 {dimension_numbers = #tpu.dot_dimension_numbers<[1], [0], [0], [1], [0, 0, 1, 1], [], []>} : vector<12x128xbf16>, vector<128x256xbf16>, vector<12x256xf32> -> vector<12x256xf32>
    %279 = arith.addf %273, %278 : vector<12x256xf32>
    %c9 = arith.constant 9 : index
    %c0_254 = arith.constant 0 : index
    %280 = tpu.strided_load %arg14[%c9, %c0_254] {strides = array<i32: 2, 1>} : memref<42x128xf32, #tpu.memory_space<vmem>>, vector<12x128xf32>
    %281 = arith.truncf %280 : vector<12x128xf32> to vector<12x128xbf16>
    %c1_255 = arith.constant 1 : index
    %c2_256 = arith.constant 2 : index
    %c0_257 = arith.constant 0 : index
    %c0_258 = arith.constant 0 : index
    %282 = vector.load %arg6[%c1_255, %c2_256, %c0_257, %c0_258] : memref<3x3x128x256xbf16, #tpu.memory_space<vmem>>, vector<1x1x128x256xbf16>
    %283 = vector.shape_cast %282 : vector<1x1x128x256xbf16> to vector<128x256xbf16>
    %cst_259 = arith.constant dense<0.000000e+00> : vector<12x256xf32>
    %284 = tpu.matmul %281, %283, %cst_259 {dimension_numbers = #tpu.dot_dimension_numbers<[1], [0], [0], [1], [0, 0, 1, 1], [], []>} : vector<12x128xbf16>, vector<128x256xbf16>, vector<12x256xf32> -> vector<12x256xf32>
    %285 = arith.addf %279, %284 : vector<12x256xf32>
    %c13_260 = arith.constant 13 : index
    %c0_261 = arith.constant 0 : index
    %286 = tpu.strided_load %arg14[%c13_260, %c0_261] {strides = array<i32: 2, 1>} : memref<42x128xf32, #tpu.memory_space<vmem>>, vector<12x128xf32>
    %287 = arith.truncf %286 : vector<12x128xf32> to vector<12x128xbf16>
    %c2_262 = arith.constant 2 : index
    %c0_263 = arith.constant 0 : index
    %c0_264 = arith.constant 0 : index
    %c0_265 = arith.constant 0 : index
    %288 = vector.load %arg6[%c2_262, %c0_263, %c0_264, %c0_265] : memref<3x3x128x256xbf16, #tpu.memory_space<vmem>>, vector<1x1x128x256xbf16>
    %289 = vector.shape_cast %288 : vector<1x1x128x256xbf16> to vector<128x256xbf16>
    %cst_266 = arith.constant dense<0.000000e+00> : vector<12x256xf32>
    %290 = tpu.matmul %287, %289, %cst_266 {dimension_numbers = #tpu.dot_dimension_numbers<[1], [0], [0], [1], [0, 0, 1, 1], [], []>} : vector<12x128xbf16>, vector<128x256xbf16>, vector<12x256xf32> -> vector<12x256xf32>
    %291 = arith.addf %285, %290 : vector<12x256xf32>
    %c14_267 = arith.constant 14 : index
    %c0_268 = arith.constant 0 : index
    %292 = tpu.strided_load %arg14[%c14_267, %c0_268] {strides = array<i32: 2, 1>} : memref<42x128xf32, #tpu.memory_space<vmem>>, vector<12x128xf32>
    %293 = arith.truncf %292 : vector<12x128xf32> to vector<12x128xbf16>
    %c2_269 = arith.constant 2 : index
    %c1_270 = arith.constant 1 : index
    %c0_271 = arith.constant 0 : index
    %c0_272 = arith.constant 0 : index
    %294 = vector.load %arg6[%c2_269, %c1_270, %c0_271, %c0_272] : memref<3x3x128x256xbf16, #tpu.memory_space<vmem>>, vector<1x1x128x256xbf16>
    %295 = vector.shape_cast %294 : vector<1x1x128x256xbf16> to vector<128x256xbf16>
    %cst_273 = arith.constant dense<0.000000e+00> : vector<12x256xf32>
    %296 = tpu.matmul %293, %295, %cst_273 {dimension_numbers = #tpu.dot_dimension_numbers<[1], [0], [0], [1], [0, 0, 1, 1], [], []>} : vector<12x128xbf16>, vector<128x256xbf16>, vector<12x256xf32> -> vector<12x256xf32>
    %297 = arith.addf %291, %296 : vector<12x256xf32>
    %c15 = arith.constant 15 : index
    %c0_274 = arith.constant 0 : index
    %298 = tpu.strided_load %arg14[%c15, %c0_274] {strides = array<i32: 2, 1>} : memref<42x128xf32, #tpu.memory_space<vmem>>, vector<12x128xf32>
    %299 = arith.truncf %298 : vector<12x128xf32> to vector<12x128xbf16>
    %c2_275 = arith.constant 2 : index
    %c2_276 = arith.constant 2 : index
    %c0_277 = arith.constant 0 : index
    %c0_278 = arith.constant 0 : index
    %300 = vector.load %arg6[%c2_275, %c2_276, %c0_277, %c0_278] : memref<3x3x128x256xbf16, #tpu.memory_space<vmem>>, vector<1x1x128x256xbf16>
    %301 = vector.shape_cast %300 : vector<1x1x128x256xbf16> to vector<128x256xbf16>
    %cst_279 = arith.constant dense<0.000000e+00> : vector<12x256xf32>
    %302 = tpu.matmul %299, %301, %cst_279 {dimension_numbers = #tpu.dot_dimension_numbers<[1], [0], [0], [1], [0, 0, 1, 1], [], []>} : vector<12x128xbf16>, vector<128x256xbf16>, vector<12x256xf32> -> vector<12x256xf32>
    %303 = arith.addf %297, %302 : vector<12x256xf32>
    %304 = vector.broadcast %189 : vector<1x256xf32> to vector<12x256xf32>
    %305 = arith.addf %303, %304 : vector<12x256xf32>
    %cst_280 = arith.constant 0.000000e+00 : f32
    %306 = vector.broadcast %cst_280 : f32 to vector<12x256xf32>
    %307 = arith.maximumf %305, %306 : vector<12x256xf32>
    %308 = arith.maximumf %248, %307 : vector<12x256xf32>
    %309 = vector.extract_strided_slice %308 {offsets = [0, 0], sizes = [2, 256], strides = [1, 1]} : vector<12x256xf32> to vector<2x256xf32>
    %310 = vector.extract_strided_slice %308 {offsets = [3, 0], sizes = [2, 256], strides = [1, 1]} : vector<12x256xf32> to vector<2x256xf32>
    %311 = arith.maximumf %309, %310 : vector<2x256xf32>
    %c5 = arith.constant 5 : index
    %c0_281 = arith.constant 0 : index
    %312 = vector.load %arg15[%c5, %c0_281] : memref<20x256xf32, #tpu.memory_space<vmem>>, vector<2x256xf32>
    tpu.vector_store %arg15[%c5, %c0_281], %311 {strides = array<i32>} : memref<20x256xf32, #tpu.memory_space<vmem>>, vector<2x256xf32>,
    %313 = vector.extract_strided_slice %308 {offsets = [6, 0], sizes = [2, 256], strides = [1, 1]} : vector<12x256xf32> to vector<2x256xf32>
    %314 = vector.extract_strided_slice %308 {offsets = [9, 0], sizes = [2, 256], strides = [1, 1]} : vector<12x256xf32> to vector<2x256xf32>
    %315 = arith.maximumf %313, %314 : vector<2x256xf32>
    %c9_282 = arith.constant 9 : index
    %c0_283 = arith.constant 0 : index
    %316 = vector.load %arg15[%c9_282, %c0_283] : memref<20x256xf32, #tpu.memory_space<vmem>>, vector<2x256xf32>
    tpu.vector_store %arg15[%c9_282, %c0_283], %315 {strides = array<i32>} : memref<20x256xf32, #tpu.memory_space<vmem>>, vector<2x256xf32>,
    %cst_284 = arith.constant 0.000000e+00 : f32
    %317 = vector.broadcast %cst_284 : f32 to vector<8x512xf32>
    %c0_285 = arith.constant 0 : index
    %c0_286 = arith.constant 0 : index
    %318 = vector.load %arg15[%c0_285, %c0_286] : memref<20x256xf32, #tpu.memory_space<vmem>>, vector<8x256xf32>
    %319 = arith.truncf %318 : vector<8x256xf32> to vector<8x256xbf16>
    %c0_287 = arith.constant 0 : index
    %c0_288 = arith.constant 0 : index
    %c0_289 = arith.constant 0 : index
    %c0_290 = arith.constant 0 : index
    %320 = vector.load %arg8[%c0_287, %c0_288, %c0_289, %c0_290] : memref<3x3x256x512xbf16, #tpu.memory_space<vmem>>, vector<1x1x256x512xbf16>
    %321 = vector.shape_cast %320 : vector<1x1x256x512xbf16> to vector<256x512xbf16>
    %cst_291 = arith.constant dense<0.000000e+00> : vector<8x512xf32>
    %322 = tpu.matmul %319, %321, %cst_291 {dimension_numbers = #tpu.dot_dimension_numbers<[1], [0], [0], [1], [0, 0, 1, 1], [], []>} : vector<8x256xbf16>, vector<256x512xbf16>, vector<8x512xf32> -> vector<8x512xf32>
    %323 = arith.addf %317, %322 : vector<8x512xf32>
    %c1_292 = arith.constant 1 : index
    %c0_293 = arith.constant 0 : index
    %324 = vector.load %arg15[%c1_292, %c0_293] : memref<20x256xf32, #tpu.memory_space<vmem>>, vector<8x256xf32>
    %325 = arith.truncf %324 : vector<8x256xf32> to vector<8x256xbf16>
    %c0_294 = arith.constant 0 : index
    %c1_295 = arith.constant 1 : index
    %c0_296 = arith.constant 0 : index
    %c0_297 = arith.constant 0 : index
    %326 = vector.load %arg8[%c0_294, %c1_295, %c0_296, %c0_297] : memref<3x3x256x512xbf16, #tpu.memory_space<vmem>>, vector<1x1x256x512xbf16>
    %327 = vector.shape_cast %326 : vector<1x1x256x512xbf16> to vector<256x512xbf16>
    %cst_298 = arith.constant dense<0.000000e+00> : vector<8x512xf32>
    %328 = tpu.matmul %325, %327, %cst_298 {dimension_numbers = #tpu.dot_dimension_numbers<[1], [0], [0], [1], [0, 0, 1, 1], [], []>} : vector<8x256xbf16>, vector<256x512xbf16>, vector<8x512xf32> -> vector<8x512xf32>
    %329 = arith.addf %323, %328 : vector<8x512xf32>
    %c2_299 = arith.constant 2 : index
    %c0_300 = arith.constant 0 : index
    %330 = vector.load %arg15[%c2_299, %c0_300] : memref<20x256xf32, #tpu.memory_space<vmem>>, vector<8x256xf32>
    %331 = arith.truncf %330 : vector<8x256xf32> to vector<8x256xbf16>
    %c0_301 = arith.constant 0 : index
    %c2_302 = arith.constant 2 : index
    %c0_303 = arith.constant 0 : index
    %c0_304 = arith.constant 0 : index
    %332 = vector.load %arg8[%c0_301, %c2_302, %c0_303, %c0_304] : memref<3x3x256x512xbf16, #tpu.memory_space<vmem>>, vector<1x1x256x512xbf16>
    %333 = vector.shape_cast %332 : vector<1x1x256x512xbf16> to vector<256x512xbf16>
    %cst_305 = arith.constant dense<0.000000e+00> : vector<8x512xf32>
    %334 = tpu.matmul %331, %333, %cst_305 {dimension_numbers = #tpu.dot_dimension_numbers<[1], [0], [0], [1], [0, 0, 1, 1], [], []>} : vector<8x256xbf16>, vector<256x512xbf16>, vector<8x512xf32> -> vector<8x512xf32>
    %335 = arith.addf %329, %334 : vector<8x512xf32>
    %c4 = arith.constant 4 : index
    %c0_306 = arith.constant 0 : index
    %336 = vector.load %arg15[%c4, %c0_306] : memref<20x256xf32, #tpu.memory_space<vmem>>, vector<8x256xf32>
    %337 = arith.truncf %336 : vector<8x256xf32> to vector<8x256xbf16>
    %c1_307 = arith.constant 1 : index
    %c0_308 = arith.constant 0 : index
    %c0_309 = arith.constant 0 : index
    %c0_310 = arith.constant 0 : index
    %338 = vector.load %arg8[%c1_307, %c0_308, %c0_309, %c0_310] : memref<3x3x256x512xbf16, #tpu.memory_space<vmem>>, vector<1x1x256x512xbf16>
    %339 = vector.shape_cast %338 : vector<1x1x256x512xbf16> to vector<256x512xbf16>
    %cst_311 = arith.constant dense<0.000000e+00> : vector<8x512xf32>
    %340 = tpu.matmul %337, %339, %cst_311 {dimension_numbers = #tpu.dot_dimension_numbers<[1], [0], [0], [1], [0, 0, 1, 1], [], []>} : vector<8x256xbf16>, vector<256x512xbf16>, vector<8x512xf32> -> vector<8x512xf32>
    %341 = arith.addf %335, %340 : vector<8x512xf32>
    %c5_312 = arith.constant 5 : index
    %c0_313 = arith.constant 0 : index
    %342 = vector.load %arg15[%c5_312, %c0_313] : memref<20x256xf32, #tpu.memory_space<vmem>>, vector<8x256xf32>
    %343 = arith.truncf %342 : vector<8x256xf32> to vector<8x256xbf16>
    %c1_314 = arith.constant 1 : index
    %c1_315 = arith.constant 1 : index
    %c0_316 = arith.constant 0 : index
    %c0_317 = arith.constant 0 : index
    %344 = vector.load %arg8[%c1_314, %c1_315, %c0_316, %c0_317] : memref<3x3x256x512xbf16, #tpu.memory_space<vmem>>, vector<1x1x256x512xbf16>
    %345 = vector.shape_cast %344 : vector<1x1x256x512xbf16> to vector<256x512xbf16>
    %cst_318 = arith.constant dense<0.000000e+00> : vector<8x512xf32>
    %346 = tpu.matmul %343, %345, %cst_318 {dimension_numbers = #tpu.dot_dimension_numbers<[1], [0], [0], [1], [0, 0, 1, 1], [], []>} : vector<8x256xbf16>, vector<256x512xbf16>, vector<8x512xf32> -> vector<8x512xf32>
    %347 = arith.addf %341, %346 : vector<8x512xf32>
    %c6_319 = arith.constant 6 : index
    %c0_320 = arith.constant 0 : index
    %348 = vector.load %arg15[%c6_319, %c0_320] : memref<20x256xf32, #tpu.memory_space<vmem>>, vector<8x256xf32>
    %349 = arith.truncf %348 : vector<8x256xf32> to vector<8x256xbf16>
    %c1_321 = arith.constant 1 : index
    %c2_322 = arith.constant 2 : index
    %c0_323 = arith.constant 0 : index
    %c0_324 = arith.constant 0 : index
    %350 = vector.load %arg8[%c1_321, %c2_322, %c0_323, %c0_324] : memref<3x3x256x512xbf16, #tpu.memory_space<vmem>>, vector<1x1x256x512xbf16>
    %351 = vector.shape_cast %350 : vector<1x1x256x512xbf16> to vector<256x512xbf16>
    %cst_325 = arith.constant dense<0.000000e+00> : vector<8x512xf32>
    %352 = tpu.matmul %349, %351, %cst_325 {dimension_numbers = #tpu.dot_dimension_numbers<[1], [0], [0], [1], [0, 0, 1, 1], [], []>} : vector<8x256xbf16>, vector<256x512xbf16>, vector<8x512xf32> -> vector<8x512xf32>
    %353 = arith.addf %347, %352 : vector<8x512xf32>
    %c8_326 = arith.constant 8 : index
    %c0_327 = arith.constant 0 : index
    %354 = vector.load %arg15[%c8_326, %c0_327] : memref<20x256xf32, #tpu.memory_space<vmem>>, vector<8x256xf32>
    %355 = arith.truncf %354 : vector<8x256xf32> to vector<8x256xbf16>
    %c2_328 = arith.constant 2 : index
    %c0_329 = arith.constant 0 : index
    %c0_330 = arith.constant 0 : index
    %c0_331 = arith.constant 0 : index
    %356 = vector.load %arg8[%c2_328, %c0_329, %c0_330, %c0_331] : memref<3x3x256x512xbf16, #tpu.memory_space<vmem>>, vector<1x1x256x512xbf16>
    %357 = vector.shape_cast %356 : vector<1x1x256x512xbf16> to vector<256x512xbf16>
    %cst_332 = arith.constant dense<0.000000e+00> : vector<8x512xf32>
    %358 = tpu.matmul %355, %357, %cst_332 {dimension_numbers = #tpu.dot_dimension_numbers<[1], [0], [0], [1], [0, 0, 1, 1], [], []>} : vector<8x256xbf16>, vector<256x512xbf16>, vector<8x512xf32> -> vector<8x512xf32>
    %359 = arith.addf %353, %358 : vector<8x512xf32>
    %c9_333 = arith.constant 9 : index
    %c0_334 = arith.constant 0 : index
    %360 = vector.load %arg15[%c9_333, %c0_334] : memref<20x256xf32, #tpu.memory_space<vmem>>, vector<8x256xf32>
    %361 = arith.truncf %360 : vector<8x256xf32> to vector<8x256xbf16>
    %c2_335 = arith.constant 2 : index
    %c1_336 = arith.constant 1 : index
    %c0_337 = arith.constant 0 : index
    %c0_338 = arith.constant 0 : index
    %362 = vector.load %arg8[%c2_335, %c1_336, %c0_337, %c0_338] : memref<3x3x256x512xbf16, #tpu.memory_space<vmem>>, vector<1x1x256x512xbf16>
    %363 = vector.shape_cast %362 : vector<1x1x256x512xbf16> to vector<256x512xbf16>
    %cst_339 = arith.constant dense<0.000000e+00> : vector<8x512xf32>
    %364 = tpu.matmul %361, %363, %cst_339 {dimension_numbers = #tpu.dot_dimension_numbers<[1], [0], [0], [1], [0, 0, 1, 1], [], []>} : vector<8x256xbf16>, vector<256x512xbf16>, vector<8x512xf32> -> vector<8x512xf32>
    %365 = arith.addf %359, %364 : vector<8x512xf32>
    %c10_340 = arith.constant 10 : index
    %c0_341 = arith.constant 0 : index
    %366 = vector.load %arg15[%c10_340, %c0_341] : memref<20x256xf32, #tpu.memory_space<vmem>>, vector<8x256xf32>
    %367 = arith.truncf %366 : vector<8x256xf32> to vector<8x256xbf16>
    %c2_342 = arith.constant 2 : index
    %c2_343 = arith.constant 2 : index
    %c0_344 = arith.constant 0 : index
    %c0_345 = arith.constant 0 : index
    %368 = vector.load %arg8[%c2_342, %c2_343, %c0_344, %c0_345] : memref<3x3x256x512xbf16, #tpu.memory_space<vmem>>, vector<1x1x256x512xbf16>
    %369 = vector.shape_cast %368 : vector<1x1x256x512xbf16> to vector<256x512xbf16>
    %cst_346 = arith.constant dense<0.000000e+00> : vector<8x512xf32>
    %370 = tpu.matmul %367, %369, %cst_346 {dimension_numbers = #tpu.dot_dimension_numbers<[1], [0], [0], [1], [0, 0, 1, 1], [], []>} : vector<8x256xbf16>, vector<256x512xbf16>, vector<8x512xf32> -> vector<8x512xf32>
    %371 = arith.addf %365, %370 : vector<8x512xf32>
    %c0_347 = arith.constant 0 : index
    %c0_348 = arith.constant 0 : index
    %372 = vector.load %arg9[%c0_347, %c0_348] : memref<1x512xf32, #tpu.memory_space<vmem>>, vector<1x512xf32>
    %373 = vector.broadcast %372 : vector<1x512xf32> to vector<8x512xf32>
    %374 = arith.addf %371, %373 : vector<8x512xf32>
    %cst_349 = arith.constant 0.000000e+00 : f32
    %375 = vector.broadcast %cst_349 : f32 to vector<8x512xf32>
    %376 = arith.maximumf %374, %375 : vector<8x512xf32>
    %377 = tpu.iota {dimensions = array<i32: 0>} : vector<8x1xi32>
    %c4_i32 = arith.constant 4 : i32
    %c0_i32 = arith.constant 0 : i32
    %378 = arith.cmpi eq, %c4_i32, %c0_i32 : i32
    %c1_i32 = arith.constant 1 : i32
    %379 = arith.select %378, %c1_i32, %c4_i32 : i32
    %380 = vector.broadcast %379 : i32 to vector<8x1xi32>
    %381 = arith.remsi %377, %380 : vector<8x1xi32>
    %c0_i32_350 = arith.constant 0 : i32
    %382 = vector.broadcast %c0_i32_350 : i32 to vector<8x1xi32>
    %383 = arith.cmpi ne, %381, %382 : vector<8x1xi32>
    %c0_i32_351 = arith.constant 0 : i32
    %384 = vector.broadcast %c0_i32_351 : i32 to vector<8x1xi32>
    %385 = arith.cmpi slt, %381, %384 : vector<8x1xi32>
    %c0_i32_352 = arith.constant 0 : i32
    %386 = arith.cmpi slt, %379, %c0_i32_352 : i32
    %387 = vector.broadcast %386 : i1 to vector<8x1xi1>
    %388 = vector.broadcast %387 : vector<8x1xi1> to vector<8x1xi1>
    %389 = arith.xori %385, %388 : vector<8x1xi1>
    %390 = arith.andi %389, %383 : vector<8x1xi1>
    %391 = vector.broadcast %379 : i32 to vector<8x1xi32>
    %392 = arith.addi %381, %391 : vector<8x1xi32>
    %393 = arith.select %390, %392, %381 : vector<8x1xi1>, vector<8x1xi32>
    %c2_i32 = arith.constant 2 : i32
    %394 = vector.broadcast %c2_i32 : i32 to vector<8x1xi32>
    %395 = arith.cmpi slt, %393, %394 : vector<8x1xi32>
    %cst_353 = arith.constant 0.000000e+00 : f32
    %396 = vector.shape_cast %395 : vector<8x1xi1> to vector<8x1xi1>
    %397 = vector.broadcast %396 : vector<8x1xi1> to vector<8x512xi1>
    %398 = vector.broadcast %cst_353 : f32 to vector<8x512xf32>
    %399 = arith.select %397, %376, %398 : vector<8x512xi1>, vector<8x512xf32>
    %cst_354 = arith.constant dense<0.000000e+00> : vector<512xf32>
    %400 = vector.multi_reduction <add>, %399, %cst_354 [0] : vector<8x512xf32> to vector<512xf32>
    %401 = vector.shape_cast %400 : vector<512xf32> to vector<1x512xf32>
    %cst_355 = arith.constant 2.500000e-01 : f32
    %402 = vector.broadcast %cst_355 : f32 to vector<1x512xf32>
    %403 = arith.mulf %401, %402 : vector<1x512xf32>
    %404 = arith.truncf %403 : vector<1x512xf32> to vector<1x512xbf16>
    %c0_356 = arith.constant 0 : index
    %c0_357 = arith.constant 0 : index
    %405 = vector.load %arg10[%c0_356, %c0_357] : memref<512x128xbf16, #tpu.memory_space<vmem>>, vector<512x128xbf16>
    %cst_358 = arith.constant dense<0.000000e+00> : vector<1x128xf32>
    %406 = tpu.matmul %404, %405, %cst_358 {dimension_numbers = #tpu.dot_dimension_numbers<[1], [0], [0], [1], [0, 0, 1, 1], [], []>} : vector<1x512xbf16>, vector<512x128xbf16>, vector<1x128xf32> -> vector<1x128xf32>
    %c0_359 = arith.constant 0 : index
    %c0_360 = arith.constant 0 : index
    %407 = vector.load %arg11[%c0_359, %c0_360] : memref<1x128xf32, #tpu.memory_space<vmem>>, vector<1x128xf32>
    %408 = arith.addf %406, %407 : vector<1x128xf32>
    %409 = vector.shape_cast %408 : vector<1x128xf32> to vector<1x1x128xf32>
    %c0_361 = arith.constant 0 : index
    %c0_362 = arith.constant 0 : index
    %c0_363 = arith.constant 0 : index
    %410 = vector.load %arg12[%c0_361, %c0_362, %c0_363] : memref<1x1x128xf32, #tpu.memory_space<vmem>>, vector<1x1x128xf32>
    tpu.vector_store %arg12[%c0_361, %c0_362, %c0_363], %409 {strides = array<i32>} : memref<1x1x128xf32, #tpu.memory_space<vmem>>, vector<1x1x128xf32>,
    return
  }
  func.func @transform_0(%arg0: i32) -> (i32, i32) {
    %c0_i32 = arith.constant 0 : i32
    %c0_i32_0 = arith.constant 0 : i32
    return %arg0, %c0_i32 : i32, i32
  }
  func.func @transform_1(%arg0: i32) -> (i32, i32) {
    %c0_i32 = arith.constant 0 : i32
    %c0_i32_0 = arith.constant 0 : i32
    %c0_i32_1 = arith.constant 0 : i32
    return %c0_i32, %c0_i32_0 : i32, i32
  }
  func.func @transform_2(%arg0: i32) -> (i32, i32) {
    %c0_i32 = arith.constant 0 : i32
    %c0_i32_0 = arith.constant 0 : i32
    %c0_i32_1 = arith.constant 0 : i32
    return %c0_i32, %c0_i32_0 : i32, i32
  }
  func.func @transform_3(%arg0: i32) -> (i32, i32, i32, i32) {
    %c0_i32 = arith.constant 0 : i32
    %c0_i32_0 = arith.constant 0 : i32
    %c0_i32_1 = arith.constant 0 : i32
    %c0_i32_2 = arith.constant 0 : i32
    %c0_i32_3 = arith.constant 0 : i32
    return %c0_i32, %c0_i32_0, %c0_i32_1, %c0_i32_2 : i32, i32, i32, i32
  }
  func.func @transform_4(%arg0: i32) -> (i32, i32) {
    %c0_i32 = arith.constant 0 : i32
    %c0_i32_0 = arith.constant 0 : i32
    %c0_i32_1 = arith.constant 0 : i32
    return %c0_i32, %c0_i32_0 : i32, i32
  }
  func.func @transform_5(%arg0: i32) -> (i32, i32, i32, i32) {
    %c0_i32 = arith.constant 0 : i32
    %c0_i32_0 = arith.constant 0 : i32
    %c0_i32_1 = arith.constant 0 : i32
    %c0_i32_2 = arith.constant 0 : i32
    %c0_i32_3 = arith.constant 0 : i32
    return %c0_i32, %c0_i32_0, %c0_i32_1, %c0_i32_2 : i32, i32, i32, i32
  }
  func.func @transform_6(%arg0: i32) -> (i32, i32) {
    %c0_i32 = arith.constant 0 : i32
    %c0_i32_0 = arith.constant 0 : i32
    %c0_i32_1 = arith.constant 0 : i32
    return %c0_i32, %c0_i32_0 : i32, i32
  }
  func.func @transform_7(%arg0: i32) -> (i32, i32, i32, i32) {
    %c0_i32 = arith.constant 0 : i32
    %c0_i32_0 = arith.constant 0 : i32
    %c0_i32_1 = arith.constant 0 : i32
    %c0_i32_2 = arith.constant 0 : i32
    %c0_i32_3 = arith.constant 0 : i32
    return %c0_i32, %c0_i32_0, %c0_i32_1, %c0_i32_2 : i32, i32, i32, i32
  }
  func.func @transform_8(%arg0: i32) -> (i32, i32) {
    %c0_i32 = arith.constant 0 : i32
    %c0_i32_0 = arith.constant 0 : i32
    %c0_i32_1 = arith.constant 0 : i32
    return %c0_i32, %c0_i32_0 : i32, i32
  }
  func.func @transform_9(%arg0: i32) -> (i32, i32) {
    %c0_i32 = arith.constant 0 : i32
    %c0_i32_0 = arith.constant 0 : i32
    %c0_i32_1 = arith.constant 0 : i32
    return %c0_i32, %c0_i32_0 : i32, i32
  }
  func.func @transform_10(%arg0: i32) -> (i32, i32) {
    %c0_i32 = arith.constant 0 : i32
    %c0_i32_0 = arith.constant 0 : i32
    %c0_i32_1 = arith.constant 0 : i32
    return %c0_i32, %c0_i32_0 : i32, i32
  }
  func.func @transform_11(%arg0: i32) -> (i32, i32, i32) {
    %c0_i32 = arith.constant 0 : i32
    %c0_i32_0 = arith.constant 0 : i32
    %c0_i32_1 = arith.constant 0 : i32
    return %arg0, %c0_i32, %c0_i32_0 : i32, i32, i32
  }
}

</mosaic_0001>

<llo_original>
// kernel: basic_cnn_forward.1
$region0: #{basic_cnn_forward.1}
  #allocation0 [shape = 'u32[]', space=smem, size = 0x4, offset = 0x4, fixed_abs, tag = 'smem constant byte address 0x4 - core index']
  #allocation1 [shape = 'u32[144,128]{1,0:T(1,128)}', space=vmem, size = 0x12000, scoped, tag = 'internal scratch']
  #allocation2 [shape = 'f32[110,64]{1,0:T(8,128)}', space=vmem, size = 0xe000, scoped, tag = 'scratch operand']
  #allocation3 [shape = 'f32[42,128]{1,0:T(8,128)}', space=vmem, size = 0x6000, scoped, tag = 'scratch operand']
  #allocation4 [shape = 'f32[20,256]{1,0:T(8,128)}', space=vmem, size = 0x6000, scoped, tag = 'scratch operand']
  %s0 = inlined_call_operand.vmem [shape: bf16[512,72], index: 0, kind: input, shape index: {}]
  %s1 = inlined_call_operand.vmem [shape: bf16[72,64], index: 1, kind: input, shape index: {}]
  %s2 = inlined_call_operand.vmem [shape: f32[1,64], index: 2, kind: input, shape index: {}]
  %s3 = inlined_call_operand.vmem [shape: bf16[3,3,64,128], index: 3, kind: input, shape index: {}]
  %s4 = inlined_call_operand.vmem [shape: f32[1,128], index: 4, kind: input, shape index: {}]
  %s5 = inlined_call_operand.vmem [shape: bf16[3,3,128,256], index: 5, kind: input, shape index: {}]
  %s6 = inlined_call_operand.vmem [shape: f32[1,256], index: 6, kind: input, shape index: {}]
  %s7 = inlined_call_operand.vmem [shape: bf16[3,3,256,512], index: 7, kind: input, shape index: {}]
  %s8 = inlined_call_operand.vmem [shape: f32[1,512], index: 8, kind: input, shape index: {}]
  %s9 = inlined_call_operand.vmem [shape: bf16[512,128], index: 9, kind: input, shape index: {}]
  %s10 = inlined_call_operand.vmem [shape: f32[1,128], index: 10, kind: input, shape index: {}]
  %s11 = inlined_call_operand.hbm [shape: f32[2,1,128], index: 11, kind: output, shape index: {}]
  %s12 = sld [smem:[#allocation0]]
  $region77: #{basic_cnn_forward.1} parent=0
    _
  %s14 = ssub.s32 1, %s12
  %s15 = scalar_select 0, %s14, %s12
  $region1: #{basic_cnn_forward.1} parent=0
    #allocation5 [shape = 'u8[1024]{0}', space=vmem, size = 0x400, scoped, tag = 'output window, operand 0']
    #allocation6 [shape = 's32[2]{0}', space=sflag, size = 0x8, scoped, tag = 'scoped memory for basic_cnn_forward.1']
    %16 = vsyncpa [#allocation6], 0
    %s17 = scalar_lea.sflag [#allocation6], 1
    %18 = vsyncpa %s17, 0
    loop: start=0, step=1, limit=4
    $region2: #{basic_cnn_forward.1} parent=1 // loop_pre_header
      _
    $region3: #{basic_cnn_forward.1} parent=1 // loop_header
      %s20 = sphi 0, %s24
      %p21 = scmp.ge.s32.totalorder %s20, 4
      %s30 = sphi 0, %s32
      %s33 = sphi 0, %s30
      %s34 = sphi 0, %s33
      %s50 = sphi 0, %s34
      %s54 = sphi 0, %s54
      %s56 = sphi 0, %s54
      %s57 = sphi 0, %s56
      %s71 = sphi 0, %s57
      %s75 = sphi 0, %s75
      %s77 = sphi 0, %s75
      %s78 = sphi 0, %s77
      %s92 = sphi 0, %s78
      %s96 = sphi 0, %s96
      %s98 = sphi 0, %s96
      %s99 = sphi 0, %s98
      %s113 = sphi 0, %s99
      %s117 = sphi 0, %s117
      %s119 = sphi 0, %s117
      %s120 = sphi 0, %s119
      %s134 = sphi 0, %s120
      %s138 = sphi 0, %s138
      %s140 = sphi 0, %s138
      %s141 = sphi 0, %s140
      %s155 = sphi 0, %s141
      %s159 = sphi 0, %s159
      %s161 = sphi 0, %s159
      %s162 = sphi 0, %s161
      %s176 = sphi 0, %s162
      %s180 = sphi 0, %s180
      %s182 = sphi 0, %s180
      %s183 = sphi 0, %s182
      %s197 = sphi 0, %s183
      %s201 = sphi 0, %s201
      %s203 = sphi 0, %s201
      %s204 = sphi 0, %s203
      %s218 = sphi 0, %s204
      %s222 = sphi 0, %s222
      %s224 = sphi 0, %s222
      %s225 = sphi 0, %s224
      %s239 = sphi 0, %s225
      %s243 = sphi 0, %s243
      %s245 = sphi 0, %s243
      %s246 = sphi 0, %s245
      %s260 = sphi 0, %s246
      %s266 = sphi 0, %s268
      %s269 = sphi 0, %s266
      %s270 = sphi 0, %s269
      %s286 = sphi 0, %s270
    $region4: #{basic_cnn_forward.1} parent=1 // loop_header_branch
      %23 = sbr.rel (%p21) target = $region8
    $region5: #{basic_cnn_forward.1} parent=1 // loop_body
      %s25 = ssub.s32 %s20, 1
      %s26 = ssub.s32 %s20, 2
      %s27 = sadd.s32 %s20, 1
      %s28 = ssub.s32 %s20, %s27
      %p29 = scmp.eq.s32.totalorder %s28, 0
      %s31 = sadd.s32 %s30, 1
      %s32 = scalar_select %p29, %s30, %s31
      %p35 = pneg %p29
      %p36 = scmp.eq.s32.totalorder %s20, 1
      %p37 = por %p35, %p36
      %p38 = scmp.ne.s32.totalorder %s30, %s33
      %p39 = scmp.eq.s32.totalorder %s20, 0
      %p40 = por %p38, %p39
      %p41 = scmp.ne.s32.totalorder %s30, %s33
      %p42 = scmp.eq.s32.totalorder %s25, 1
      %p43 = por %p41, %p42
      %p44 = scmp.ne.s32.totalorder %s33, %s34
      %p45 = scmp.eq.s32.totalorder %s25, 0
      %p46 = por %p44, %p45
      %p47 = scmp.ne.s32.totalorder %s33, %s34
      %p48 = scmp.eq.s32.totalorder %s26, 1
      %p49 = por %p47, %p48
      %p51 = scmp.ne.s32.totalorder %s34, %s50
      %p52 = scmp.eq.s32.totalorder %s26, 0
      %p53 = por %p51, %p52
      %s55 = sadd.s32 %s54, 1
      %p58 = scmp.eq.s32.totalorder %s20, 1
      %p59 = scmp.ne.s32.totalorder %s54, %s56
      %p60 = scmp.eq.s32.totalorder %s20, 0
      %p61 = por %p59, %p60
      %p62 = scmp.ne.s32.totalorder %s54, %s56
      %p63 = scmp.eq.s32.totalorder %s25, 1
      %p64 = por %p62, %p63
      %p65 = scmp.ne.s32.totalorder %s56, %s57
      %p66 = scmp.eq.s32.totalorder %s25, 0
      %p67 = por %p65, %p66
      %p68 = scmp.ne.s32.totalorder %s56, %s57
      %p69 = scmp.eq.s32.totalorder %s26, 1
      %p70 = por %p68, %p69
      %p72 = scmp.ne.s32.totalorder %s57, %s71
      %p73 = scmp.eq.s32.totalorder %s26, 0
      %p74 = por %p72, %p73
      %s76 = sadd.s32 %s75, 1
      %p79 = scmp.eq.s32.totalorder %s20, 1
      %p80 = scmp.ne.s32.totalorder %s75, %s77
      %p81 = scmp.eq.s32.totalorder %s20, 0
      %p82 = por %p80, %p81
      %p83 = scmp.ne.s32.totalorder %s75, %s77
      %p84 = scmp.eq.s32.totalorder %s25, 1
      %p85 = por %p83, %p84
      %p86 = scmp.ne.s32.totalorder %s77, %s78
      %p87 = scmp.eq.s32.totalorder %s25, 0
      %p88 = por %p86, %p87
      %p89 = scmp.ne.s32.totalorder %s77, %s78
      %p90 = scmp.eq.s32.totalorder %s26, 1
      %p91 = por %p89, %p90
      %p93 = scmp.ne.s32.totalorder %s78, %s92
      %p94 = scmp.eq.s32.totalorder %s26, 0
      %p95 = por %p93, %p94
      %s97 = sadd.s32 %s96, 1
      %p100 = scmp.eq.s32.totalorder %s20, 1
      %p101 = scmp.ne.s32.totalorder %s96, %s98
      %p102 = scmp.eq.s32.totalorder %s20, 0
      %p103 = por %p101, %p102
      %p104 = scmp.ne.s32.totalorder %s96, %s98
      %p105 = scmp.eq.s32.totalorder %s25, 1
      %p106 = por %p104, %p105
      %p107 = scmp.ne.s32.totalorder %s98, %s99
      %p108 = scmp.eq.s32.totalorder %s25, 0
      %p109 = por %p107, %p108
      %p110 = scmp.ne.s32.totalorder %s98, %s99
      %p111 = scmp.eq.s32.totalorder %s26, 1
      %p112 = por %p110, %p111
      %p114 = scmp.ne.s32.totalorder %s99, %s113
      %p115 = scmp.eq.s32.totalorder %s26, 0
      %p116 = por %p114, %p115
      %s118 = sadd.s32 %s117, 1
      %p121 = scmp.eq.s32.totalorder %s20, 1
      %p122 = scmp.ne.s32.totalorder %s117, %s119
      %p123 = scmp.eq.s32.totalorder %s20, 0
      %p124 = por %p122, %p123
      %p125 = scmp.ne.s32.totalorder %s117, %s119
      %p126 = scmp.eq.s32.totalorder %s25, 1
      %p127 = por %p125, %p126
      %p128 = scmp.ne.s32.totalorder %s119, %s120
      %p129 = scmp.eq.s32.totalorder %s25, 0
      %p130 = por %p128, %p129
      %p131 = scmp.ne.s32.totalorder %s119, %s120
      %p132 = scmp.eq.s32.totalorder %s26, 1
      %p133 = por %p131, %p132
      %p135 = scmp.ne.s32.totalorder %s120, %s134
      %p136 = scmp.eq.s32.totalorder %s26, 0
      %p137 = por %p135, %p136
      %s139 = sadd.s32 %s138, 1
      %p142 = scmp.eq.s32.totalorder %s20, 1
      %p143 = scmp.ne.s32.totalorder %s138, %s140
      %p144 = scmp.eq.s32.totalorder %s20, 0
      %p145 = por %p143, %p144
      %p146 = scmp.ne.s32.totalorder %s138, %s140
      %p147 = scmp.eq.s32.totalorder %s25, 1
      %p148 = por %p146, %p147
      %p149 = scmp.ne.s32.totalorder %s140, %s141
      %p150 = scmp.eq.s32.totalorder %s25, 0
      %p151 = por %p149, %p150
      %p152 = scmp.ne.s32.totalorder %s140, %s141
      %p153 = scmp.eq.s32.totalorder %s26, 1
      %p154 = por %p152, %p153
      %p156 = scmp.ne.s32.totalorder %s141, %s155
      %p157 = scmp.eq.s32.totalorder %s26, 0
      %p158 = por %p156, %p157
      %s160 = sadd.s32 %s159, 1
      %p163 = scmp.eq.s32.totalorder %s20, 1
      %p164 = scmp.ne.s32.totalorder %s159, %s161
      %p165 = scmp.eq.s32.totalorder %s20, 0
      %p166 = por %p164, %p165
      %p167 = scmp.ne.s32.totalorder %s159, %s161
      %p168 = scmp.eq.s32.totalorder %s25, 1
      %p169 = por %p167, %p168
      %p170 = scmp.ne.s32.totalorder %s161, %s162
      %p171 = scmp.eq.s32.totalorder %s25, 0
      %p172 = por %p170, %p171
      %p173 = scmp.ne.s32.totalorder %s161, %s162
      %p174 = scmp.eq.s32.totalorder %s26, 1
      %p175 = por %p173, %p174
      %p177 = scmp.ne.s32.totalorder %s162, %s176
      %p178 = scmp.eq.s32.totalorder %s26, 0
      %p179 = por %p177, %p178
      %s181 = sadd.s32 %s180, 1
      %p184 = scmp.eq.s32.totalorder %s20, 1
      %p185 = scmp.ne.s32.totalorder %s180, %s182
      %p186 = scmp.eq.s32.totalorder %s20, 0
      %p187 = por %p185, %p186
      %p188 = scmp.ne.s32.totalorder %s180, %s182
      %p189 = scmp.eq.s32.totalorder %s25, 1
      %p190 = por %p188, %p189
      %p191 = scmp.ne.s32.totalorder %s182, %s183
      %p192 = scmp.eq.s32.totalorder %s25, 0
      %p193 = por %p191, %p192
      %p194 = scmp.ne.s32.totalorder %s182, %s183
      %p195 = scmp.eq.s32.totalorder %s26, 1
      %p196 = por %p194, %p195
      %p198 = scmp.ne.s32.totalorder %s183, %s197
      %p199 = scmp.eq.s32.totalorder %s26, 0
      %p200 = por %p198, %p199
      %s202 = sadd.s32 %s201, 1
      %p205 = scmp.eq.s32.totalorder %s20, 1
      %p206 = scmp.ne.s32.totalorder %s201, %s203
      %p207 = scmp.eq.s32.totalorder %s20, 0
      %p208 = por %p206, %p207
      %p209 = scmp.ne.s32.totalorder %s201, %s203
      %p210 = scmp.eq.s32.totalorder %s25, 1
      %p211 = por %p209, %p210
      %p212 = scmp.ne.s32.totalorder %s203, %s204
      %p213 = scmp.eq.s32.totalorder %s25, 0
      %p214 = por %p212, %p213
      %p215 = scmp.ne.s32.totalorder %s203, %s204
      %p216 = scmp.eq.s32.totalorder %s26, 1
      %p217 = por %p215, %p216
      %p219 = scmp.ne.s32.totalorder %s204, %s218
      %p220 = scmp.eq.s32.totalorder %s26, 0
      %p221 = por %p219, %p220
      %s223 = sadd.s32 %s222, 1
      %p226 = scmp.eq.s32.totalorder %s20, 1
      %p227 = scmp.ne.s32.totalorder %s222, %s224
      %p228 = scmp.eq.s32.totalorder %s20, 0
      %p229 = por %p227, %p228
      %p230 = scmp.ne.s32.totalorder %s222, %s224
      %p231 = scmp.eq.s32.totalorder %s25, 1
      %p232 = por %p230, %p231
      %p233 = scmp.ne.s32.totalorder %s224, %s225
      %p234 = scmp.eq.s32.totalorder %s25, 0
      %p235 = por %p233, %p234
      %p236 = scmp.ne.s32.totalorder %s224, %s225
      %p237 = scmp.eq.s32.totalorder %s26, 1
      %p238 = por %p236, %p237
      %p240 = scmp.ne.s32.totalorder %s225, %s239
      %p241 = scmp.eq.s32.totalorder %s26, 0
      %p242 = por %p240, %p241
      %s244 = sadd.s32 %s243, 1
      %p247 = scmp.eq.s32.totalorder %s20, 1
      %p248 = scmp.ne.s32.totalorder %s243, %s245
      %p249 = scmp.eq.s32.totalorder %s20, 0
      %p250 = por %p248, %p249
      %p251 = scmp.ne.s32.totalorder %s243, %s245
      %p252 = scmp.eq.s32.totalorder %s25, 1
      %p253 = por %p251, %p252
      %p254 = scmp.ne.s32.totalorder %s245, %s246
      %p255 = scmp.eq.s32.totalorder %s25, 0
      %p256 = por %p254, %p255
      %p257 = scmp.ne.s32.totalorder %s245, %s246
      %p258 = scmp.eq.s32.totalorder %s26, 1
      %p259 = por %p257, %p258
      %p261 = scmp.ne.s32.totalorder %s246, %s260
      %p262 = scmp.eq.s32.totalorder %s26, 0
      %p263 = por %p261, %p262
      %s264 = ssub.s32 %s20, %s27
      %p265 = scmp.eq.s32.totalorder %s264, 0
      %s267 = sadd.s32 %s266, 1
      %s268 = scalar_select %p265, %s266, %s267
      %p271 = pneg %p265
      %p272 = scmp.eq.s32.totalorder %s20, 1
      %p273 = por %p271, %p272
      %p274 = scmp.ne.s32.totalorder %s266, %s269
      %p275 = scmp.eq.s32.totalorder %s20, 0
      %p276 = por %p274, %p275
      %p277 = scmp.ne.s32.totalorder %s266, %s269
      %p278 = scmp.eq.s32.totalorder %s25, 1
      %p279 = por %p277, %p278
      %p280 = scmp.ne.s32.totalorder %s269, %s270
      %p281 = scmp.eq.s32.totalorder %s25, 0
      %p282 = por %p280, %p281
      %p283 = scmp.ne.s32.totalorder %s269, %s270
      %p284 = scmp.eq.s32.totalorder %s26, 1
      %p285 = por %p283, %p284
      %p287 = scmp.ne.s32.totalorder %s270, %s286
      %p288 = scmp.eq.s32.totalorder %s26, 0
      %p289 = por %p287, %p288
      %p290 = scmp.le.s32.totalorder 1, %s20
      %p291 = scmp.lt.s32.totalorder %s20, 3
      %p292 = pnand %p290, %p291
      %p293 = pneg %p292
      // Predicated region
      $region9: #{basic_cnn_forward.1} parent=5 // pred_check
        _
      $region10: #{basic_cnn_forward.1} parent=5 // pred_check_branch
        %295 = sbr.rel (%p292) target = $region12
      $region11: #{basic_cnn_forward.1} parent=5 // pred_region
        %s296 = ssub.s32 %s20, 1
        // Predicated region
        $region13: #{basic_cnn_forward.1} parent=11 // pred_check
          %p297 = pneg %p67
        $region14: #{basic_cnn_forward.1} parent=11 // pred_check_branch
          %299 = sbr.rel (%p297) target = $region16
        $region15: #{basic_cnn_forward.1} parent=11 // pred_region
          _
        $region16: #{basic_cnn_forward.1} parent=11 // pred_fallthru
          _
        // Predicated region
        $region17: #{basic_cnn_forward.1} parent=11 // pred_check
          %p300 = pneg %p88
        $region18: #{basic_cnn_forward.1} parent=11 // pred_check_branch
          %302 = sbr.rel (%p300) target = $region20
        $region19: #{basic_cnn_forward.1} parent=11 // pred_region
          _
        $region20: #{basic_cnn_forward.1} parent=11 // pred_fallthru
          _
        // Predicated region
        $region21: #{basic_cnn_forward.1} parent=11 // pred_check
          %p303 = pneg %p109
        $region22: #{basic_cnn_forward.1} parent=11 // pred_check_branch
          %305 = sbr.rel (%p303) target = $region24
        $region23: #{basic_cnn_forward.1} parent=11 // pred_region
          _
        $region24: #{basic_cnn_forward.1} parent=11 // pred_fallthru
          _
        // Predicated region
        $region25: #{basic_cnn_forward.1} parent=11 // pred_check
          %p306 = pneg %p130
        $region26: #{basic_cnn_forward.1} parent=11 // pred_check_branch
          %308 = sbr.rel (%p306) target = $region28
        $region27: #{basic_cnn_forward.1} parent=11 // pred_region
          _
        $region28: #{basic_cnn_forward.1} parent=11 // pred_fallthru
          _
        // Predicated region
        $region29: #{basic_cnn_forward.1} parent=11 // pred_check
          %p309 = pneg %p151
        $region30: #{basic_cnn_forward.1} parent=11 // pred_check_branch
          %311 = sbr.rel (%p309) target = $region32
        $region31: #{basic_cnn_forward.1} parent=11 // pred_region
          _
        $region32: #{basic_cnn_forward.1} parent=11 // pred_fallthru
          _
        // Predicated region
        $region33: #{basic_cnn_forward.1} parent=11 // pred_check
          %p312 = pneg %p172
        $region34: #{basic_cnn_forward.1} parent=11 // pred_check_branch
          %314 = sbr.rel (%p312) target = $region36
        $region35: #{basic_cnn_forward.1} parent=11 // pred_region
          _
        $region36: #{basic_cnn_forward.1} parent=11 // pred_fallthru
          _
        // Predicated region
        $region37: #{basic_cnn_forward.1} parent=11 // pred_check
          %p315 = pneg %p193
        $region38: #{basic_cnn_forward.1} parent=11 // pred_check_branch
          %317 = sbr.rel (%p315) target = $region40
        $region39: #{basic_cnn_forward.1} parent=11 // pred_region
          _
        $region40: #{basic_cnn_forward.1} parent=11 // pred_fallthru
          _
        // Predicated region
        $region41: #{basic_cnn_forward.1} parent=11 // pred_check
          %p318 = pneg %p214
        $region42: #{basic_cnn_forward.1} parent=11 // pred_check_branch
          %320 = sbr.rel (%p318) target = $region44
        $region43: #{basic_cnn_forward.1} parent=11 // pred_region
          _
        $region44: #{basic_cnn_forward.1} parent=11 // pred_fallthru
          _
        // Predicated region
        $region45: #{basic_cnn_forward.1} parent=11 // pred_check
          %p321 = pneg %p235
        $region46: #{basic_cnn_forward.1} parent=11 // pred_check_branch
          %323 = sbr.rel (%p321) target = $region48
        $region47: #{basic_cnn_forward.1} parent=11 // pred_region
          _
        $region48: #{basic_cnn_forward.1} parent=11 // pred_fallthru
          _
        // Predicated region
        $region49: #{basic_cnn_forward.1} parent=11 // pred_check
          %p324 = pneg %p256
        $region50: #{basic_cnn_forward.1} parent=11 // pred_check_branch
          %326 = sbr.rel (%p324) target = $region52
        $region51: #{basic_cnn_forward.1} parent=11 // pred_region
          _
        $region52: #{basic_cnn_forward.1} parent=11 // pred_fallthru
          _
      $region12: #{basic_cnn_forward.1} parent=5 // pred_fallthru
        _
      %p327 = scmp.lt.s32.totalorder %s20, 2
      // Predicated region
      $region53: #{basic_cnn_forward.1} parent=5 // pred_check
        %p328 = pneg %p327
      $region54: #{basic_cnn_forward.1} parent=5 // pred_check_branch
        %330 = sbr.rel (%p328) target = $region56
      $region55: #{basic_cnn_forward.1} parent=5 // pred_region
        // Predicated region
        $region57: #{basic_cnn_forward.1} parent=55 // pred_check
          %p331 = pneg %p40
        $region58: #{basic_cnn_forward.1} parent=55 // pred_check_branch
          %333 = sbr.rel (%p331) target = $region60
        $region59: #{basic_cnn_forward.1} parent=55 // pred_region
          %s334 = smul.u32 32, %s20
          %p335 = scmp.lt.s32.totalorder %s334, 63
          %s336 = scalar_select %p335, %s334, 63
          %s337 = smul.addr %s336, 4
          %s338 = scalar_lea.vmem %s0, %s337
          %s339 = smul.u32 32, %s20
        $region60: #{basic_cnn_forward.1} parent=55 // pred_fallthru
          _
      $region56: #{basic_cnn_forward.1} parent=5 // pred_fallthru
        _
      %p340 = scmp.le.s32.totalorder 1, %s20
      %p341 = scmp.lt.s32.totalorder %s20, 3
      %p342 = pnand %p340, %p341
      %p343 = pneg %p342
      // Predicated region
      $region61: #{basic_cnn_forward.1} parent=5 // pred_check
        _
      $region62: #{basic_cnn_forward.1} parent=5 // pred_check_branch
        %345 = sbr.rel (%p342) target = $region64
      $region63: #{basic_cnn_forward.1} parent=5 // pred_region
        %s346 = ssub.s32 %s20, 1
        %s347 = smul.u32 32, %s25
        %p348 = scmp.lt.s32.totalorder %s347, 63
        %s349 = scalar_select %p348, %s347, 63
        %s350 = smul.addr %s349, 4
        %s351 = scalar_lea.vmem %s0, %s350
        %p352 = pneg %p46
        %p353 = pneg %p43
        %p354 = pneg %p67
        %p355 = pneg %p64
        %p356 = pneg %p88
        %p357 = pneg %p85
        %p358 = pneg %p109
        %p359 = pneg %p106
        %p360 = pneg %p130
        %p361 = pneg %p127
        %p362 = pneg %p151
        %p363 = pneg %p148
        %p364 = pneg %p172
        %p365 = pneg %p169
        %p366 = pneg %p193
        %p367 = pneg %p190
        %p368 = pneg %p214
        %p369 = pneg %p211
        %p370 = pneg %p235
        %p371 = pneg %p232
        %p372 = pneg %p256
        %p373 = pneg %p253
        %p374 = pneg %p282
        %p375 = pneg %p279
        %s376 = sand.u32 %s269, 1
        %s377 = scalar_lea.sflag [#allocation6], %s376
        %s378 = sand.u32 %s269, 1
        %s379 = scalar_lea.vmem [#allocation5], %s378
        %s380 = smul.u32 32, %s25
        %p381 = scmp.lt.s32.totalorder %s380, 63
        %s382 = scalar_select %p381, %s380, 63
        %s383 = smul.addr %s382, 4
        %s384 = scalar_lea.vmem %s0, %s383
        %s385 = smul.u32 32, %s25
        %vm387 = vcmask 523264
        %388 = vst.msk [vmem:[#allocation2] sm:$0xff] %vm387, 0.0
        %389 = vst.msk [vmem:[#allocation2 + $0x8] sm:$0xff] %vm387, 0.0
        %390 = vst.msk [vmem:[#allocation2 + $0x10] sm:$0xff] %vm387, 0.0
        %391 = vst.msk [vmem:[#allocation2 + $0x18] sm:$0xff] %vm387, 0.0
        %392 = vst.msk [vmem:[#allocation2 + $0x20] sm:$0xff] %vm387, 0.0
        %393 = vst.msk [vmem:[#allocation2 + $0x28] sm:$0xff] %vm387, 0.0
        %394 = vst.msk [vmem:[#allocation2 + $0x30] sm:$0xff] %vm387, 0.0
        %395 = vst.msk [vmem:[#allocation2 + $0x38] sm:$0xff] %vm387, 0.0
        %396 = vst.msk [vmem:[#allocation2 + $0x40] sm:$0xff] %vm387, 0.0
        %397 = vst.msk [vmem:[#allocation2 + $0x48] sm:$0xff] %vm387, 0.0
        %398 = vst.msk [vmem:[#allocation2 + $0x50] sm:$0xff] %vm387, 0.0
        %399 = vst.msk [vmem:[#allocation2 + $0x58] sm:$0xff] %vm387, 0.0
        %400 = vst.msk [vmem:[#allocation2 + $0x60] sm:$0xff] %vm387, 0.0
        %vm401 = vcmask 521216
        %402 = vst.msk [vmem:[#allocation2 + $0x68] sm:$0x3f] %vm401, 0.0
        %403 = vst [vmem:[#allocation3] sm:$0xff] 0.0
        %404 = vst [vmem:[#allocation3 + $0x8] sm:$0xff] 0.0
        %405 = vst [vmem:[#allocation3 + $0x10] sm:$0xff] 0.0
        %406 = vst [vmem:[#allocation3 + $0x18] sm:$0xff] 0.0
        %407 = vst [vmem:[#allocation3 + $0x20] sm:$0xff] 0.0
        %408 = vst [vmem:[#allocation3 + $0x28] sm:$0x3] 0.0
        %409 = vst [vmem:[#allocation4] sm:$0xff] 0.0
        %410 = vst [vmem:[#allocation4 + $0x8] sm:$0xff] 0.0
        %411 = vst [vmem:[#allocation4 + $0x10] sm:$0xff] 0.0
        %412 = vst [vmem:[#allocation4 + $0x18] sm:$0xff] 0.0
        %413 = vst [vmem:[#allocation4 + $0x20] sm:$0xf] 0.0
        %414 = vst [vmem:[#allocation4 + $0x28] sm:$0xf] 0.0
        %v415 = vld [vmem:[%s1] sm:$0xf]
        %v416 = vld [vmem:[%s1 + $0x4] sm:$0xf]
        %v417 = vld [vmem:[%s1 + $0x8] sm:$0xf]
        %v418 = vld [vmem:[%s1 + $0xc] sm:$0xf]
        %v419 = vld [vmem:[%s1 + $0x10] sm:$0xf]
        %v420 = vld [vmem:[%s1 + $0x14] sm:$0xf]
        %v421 = vld [vmem:[%s1 + $0x18] sm:$0xf]
        %v422 = vld [vmem:[%s1 + $0x1c] sm:$0xf]
        %v423 = vld [vmem:[%s1 + $0x20] sm:$0xf]
        %v424 = vld [vmem:[%s2] sm:$0x1]
        %v425 = vld [vmem:[%s384] sm:$0xf]
        %v426 = vld [vmem:[%s384 + $0x4] sm:$0xf]
        %v427 = vld [vmem:[%s384 + $0x8] sm:$0xf]
        %v428 = vld [vmem:[%s384 + $0xc] sm:$0xf]
        %v429 = vld [vmem:[%s384 + $0x10] sm:$0xf]
        %v430 = vld [vmem:[%s384 + $0x14] sm:$0xf]
        %v431 = vld [vmem:[%s384 + $0x18] sm:$0xf]
        %v432 = vld [vmem:[%s384 + $0x1c] sm:$0xf]
        %v433 = vld [vmem:[%s384 + $0x20] sm:$0xf]
        %v434 = vld [vmem:[%s384 + $0x24] sm:$0xf]
        %v435 = vld [vmem:[%s384 + $0x28] sm:$0xf]
        %v436 = vld [vmem:[%s384 + $0x2c] sm:$0xf]
        %v437 = vld [vmem:[%s384 + $0x30] sm:$0xf]
        %v438 = vld [vmem:[%s384 + $0x34] sm:$0xf]
        %v439 = vld [vmem:[%s384 + $0x38] sm:$0xf]
        %v440 = vld [vmem:[%s384 + $0x3c] sm:$0xf]
        %v442 = vlaneseq
        %v443 = vshrl.u32 %v442, 7
        %v444 = vsub.s32 0, %v443
        %v445 = vrot.slane %v424, %v444
        %v463 = vunpack.c.l.b16 %v425
        %v464 = vunpack.c.l.b16 %v426
        %v465 = vunpack.c.l.b16 %v427
        %v466 = vunpack.c.l.b16 %v428
        %v467 = vunpack.c.l.b16 %v429
        %v468 = vunpack.c.l.b16 %v430
        %v469 = vunpack.c.l.b16 %v431
        %v470 = vunpack.c.l.b16 %v432
        %v471 = vunpack.c.l.b16 %v433
        %v472 = vunpack.c.l.b16 %v434
        %v473 = vunpack.c.l.b16 %v435
        %v474 = vunpack.c.l.b16 %v436
        %v475 = vunpack.c.l.b16 %v437
        %v476 = vunpack.c.l.b16 %v438
        %v477 = vunpack.c.l.b16 %v439
        %v478 = vunpack.c.l.b16 %v440
        %v479 = vpack.c.b16 %v464, %v463
        %v480 = vpack.c.b16 %v466, %v465
        %v481 = vpack.c.b16 %v468, %v467
        %v482 = vpack.c.b16 %v470, %v469
        %v483 = vpack.c.b16 %v472, %v471
        %v484 = vpack.c.b16 %v474, %v473
        %v485 = vpack.c.b16 %v476, %v475
        %v486 = vpack.c.b16 %v478, %v477
        %v496 = vunpack.c.l.b16 %v415
        %v497 = vunpack.c.l.b16 %v416
        %v498 = vunpack.c.l.b16 %v417
        %v499 = vunpack.c.l.b16 %v418
        %v500 = vunpack.c.l.b16 %v419
        %v501 = vunpack.c.l.b16 %v420
        %v502 = vunpack.c.l.b16 %v421
        %v503 = vunpack.c.l.b16 %v422
        %v504 = vunpack.c.l.b16 %v423
        %v505 = vpack.c.b16 %v497, %v496
        %v506 = vpack.c.b16 %v499, %v498
        %v507 = vpack.c.b16 %v501, %v500
        %v508 = vpack.c.b16 %v503, %v502
        %v509 = vpack.c.b16 %v504, %v504
        %vm514 = vcmask 588800
        %v516 = vsel %vm514, %v479, 0
        %v519 = vsel %vm514, %v480, 0
        %v522 = vsel %vm514, %v481, 0
        %v525 = vsel %vm514, %v482, 0
        %v528 = vsel %vm514, %v483, 0
        %v531 = vsel %vm514, %v484, 0
        %v534 = vsel %vm514, %v485, 0
        %v537 = vsel %vm514, %v486, 0
        %vm539 = vcmask 1043456
        %v541 = vsel %vm539, %v509, 0
        %543 = vmatprep.subr.bf16.mxu0 0
        %544 = vmatpush1.bf16.msra.mxu0 %v505
        %545 = vmatprep.subr.bf16.mxu0 0
        %546 = vmatpush1.bf16.msra.mxu0 %v506
        %547 = vmatprep.subr.bf16.mxu0 0
        %548 = vmatpush1.bf16.msra.mxu0 %v507
        %549 = vmatprep.subr.bf16.mxu0 0
        %550 = vmatpush1.bf16.msra.mxu0 %v508
        %551 = vmatprep.subr.bf16.mxu0 0
        %552 = vmatpush1.bf16.msra.mxu0 %v541
        %553 = vmatprep.subr.bf16.mxu0 0
        %554 = vmatpush1.bf16.msra.mxu0 0
        %555 = vmatprep.subr.bf16.mxu0 0
        %556 = vmatpush1.bf16.msra.mxu0 0
        %557 = vmatprep.subr.bf16.mxu0 0
        %558 = vmatpush1.bf16.msra.mxu0 0
        %559 = vmatprep.subr.bf16.mxu0 0
        %560 = vmatpush1.bf16.msra.mxu0 0
        %561 = vmatprep.subr.bf16.mxu0 0
        %562 = vmatpush1.bf16.msra.mxu0 0
        %563 = vmatprep.subr.bf16.mxu0 0
        %564 = vmatpush1.bf16.msra.mxu0 0
        %565 = vmatprep.subr.bf16.mxu0 0
        %566 = vmatpush1.bf16.msra.mxu0 0
        %567 = vmatprep.subr.bf16.mxu0 0
        %568 = vmatpush1.bf16.msra.mxu0 0
        %569 = vmatprep.subr.bf16.mxu0 0
        %570 = vmatpush1.bf16.msra.mxu0 0
        %571 = vmatprep.subr.bf16.mxu0 0
        %572 = vmatpush1.bf16.msra.mxu0 0
        %573 = vmatprep.subr.bf16.mxu0 0
        %574 = vmatpush1.bf16.msra.mxu0 0
        %575 = vmatprep.mubr.bf16.mxu0 0
        %576 = vmatmul.mubr.bf16.gmra.mrb[0].mxu0 %v516
        %v577 = vpop.f32.mrb[0].mxu0
        %v578 = vadd.f32 %v445, %v577
        %v579 = vpop.f32.mrb[0].mxu0
        %v580 = vpop.f32.mrb[0].mxu0
        %v581 = vadd.f32 %v445, %v580
        %v582 = vpop.f32.mrb[0].mxu0
        %583 = vmatprep.mubr.bf16.mxu0 0
        %584 = vmatmul.mubr.bf16.gmra.mrb[0].mxu0 %v519
        %v585 = vpop.f32.mrb[0].mxu0
        %v586 = vadd.f32 %v445, %v585
        %v587 = vpop.f32.mrb[0].mxu0
        %v588 = vpop.f32.mrb[0].mxu0
        %v589 = vadd.f32 %v445, %v588
        %v590 = vpop.f32.mrb[0].mxu0
        %591 = vmatprep.mubr.bf16.mxu0 0
        %592 = vmatmul.mubr.bf16.gmra.mrb[0].mxu0 %v522
        %v593 = vpop.f32.mrb[0].mxu0
        %v594 = vadd.f32 %v445, %v593
        %v595 = vpop.f32.mrb[0].mxu0
        %v596 = vpop.f32.mrb[0].mxu0
        %v597 = vadd.f32 %v445, %v596
        %v598 = vpop.f32.mrb[0].mxu0
        %599 = vmatprep.mubr.bf16.mxu0 0
        %600 = vmatmul.mubr.bf16.gmra.mrb[0].mxu0 %v525
        %v601 = vpop.f32.mrb[0].mxu0
        %v602 = vadd.f32 %v445, %v601
        %v603 = vpop.f32.mrb[0].mxu0
        %v604 = vpop.f32.mrb[0].mxu0
        %v605 = vadd.f32 %v445, %v604
        %v606 = vpop.f32.mrb[0].mxu0
        %607 = vmatprep.mubr.bf16.mxu0 0
        %608 = vmatmul.mubr.bf16.gmra.mrb[0].mxu0 %v528
        %v609 = vpop.f32.mrb[0].mxu0
        %v610 = vadd.f32 %v445, %v609
        %v611 = vpop.f32.mrb[0].mxu0
        %v612 = vpop.f32.mrb[0].mxu0
        %v613 = vadd.f32 %v445, %v612
        %v614 = vpop.f32.mrb[0].mxu0
        %615 = vmatprep.mubr.bf16.mxu0 0
        %616 = vmatmul.mubr.bf16.gmra.mrb[0].mxu0 %v531
        %v617 = vpop.f32.mrb[0].mxu0
        %v618 = vadd.f32 %v445, %v617
        %v619 = vpop.f32.mrb[0].mxu0
        %v620 = vpop.f32.mrb[0].mxu0
        %v621 = vadd.f32 %v445, %v620
        %v622 = vpop.f32.mrb[0].mxu0
        %623 = vmatprep.mubr.bf16.mxu0 0
        %624 = vmatmul.mubr.bf16.gmra.mrb[0].mxu0 %v534
        %v625 = vpop.f32.mrb[0].mxu0
        %v626 = vadd.f32 %v445, %v625
        %v627 = vpop.f32.mrb[0].mxu0
        %v628 = vpop.f32.mrb[0].mxu0
        %v629 = vadd.f32 %v445, %v628
        %v630 = vpop.f32.mrb[0].mxu0
        %631 = vmatprep.mubr.bf16.mxu0 0
        %632 = vmatmul.mubr.bf16.gmra.mrb[0].mxu0 %v537
        %v633 = vpop.f32.mrb[0].mxu0
        %v634 = vadd.f32 %v445, %v633
        %v635 = vpop.f32.mrb[0].mxu0
        %v636 = vpop.f32.mrb[0].mxu0
        %v637 = vadd.f32 %v445, %v636
        %v638 = vpop.f32.mrb[0].mxu0
        %639 = vdwg.mxu0
        %v640 = vmax.f32 %v578, 0.0
        %v641 = vmax.f32 %v581, 0.0
        %v642 = vmax.f32 %v586, 0.0
        %v643 = vmax.f32 %v589, 0.0
        %v644 = vmax.f32 %v594, 0.0
        %v645 = vmax.f32 %v597, 0.0
        %v646 = vmax.f32 %v602, 0.0
        %v647 = vmax.f32 %v605, 0.0
        %v648 = vmax.f32 %v610, 0.0
        %v649 = vmax.f32 %v613, 0.0
        %v650 = vmax.f32 %v618, 0.0
        %v651 = vmax.f32 %v621, 0.0
        %v652 = vmax.f32 %v626, 0.0
        %v653 = vmax.f32 %v629, 0.0
        %v654 = vmax.f32 %v634, 0.0
        %v655 = vmax.f32 %v637, 0.0
        %v656 = vld [vmem:[%s384 + $0x40] sm:$0xf]
        %v657 = vld [vmem:[%s384 + $0x44] sm:$0xf]
        %v658 = vld [vmem:[%s384 + $0x48] sm:$0xf]
        %v659 = vld [vmem:[%s384 + $0x4c] sm:$0xf]
        %v660 = vld [vmem:[%s384 + $0x50] sm:$0xf]
        %v661 = vld [vmem:[%s384 + $0x54] sm:$0xf]
        %v662 = vld [vmem:[%s384 + $0x58] sm:$0xf]
        %v663 = vld [vmem:[%s384 + $0x5c] sm:$0xf]
        %v664 = vld [vmem:[%s384 + $0x60] sm:$0xf]
        %v665 = vld [vmem:[%s384 + $0x64] sm:$0xf]
        %v666 = vld [vmem:[%s384 + $0x68] sm:$0xf]
        %v667 = vld [vmem:[%s384 + $0x6c] sm:$0xf]
        %v668 = vld [vmem:[%s384 + $0x70] sm:$0xf]
        %v669 = vld [vmem:[%s384 + $0x74] sm:$0xf]
        %v670 = vld [vmem:[%s384 + $0x78] sm:$0xf]
        %v671 = vld [vmem:[%s384 + $0x7c] sm:$0xf]
        %v688 = vunpack.c.l.b16 %v656
        %v689 = vunpack.c.l.b16 %v657
        %v690 = vunpack.c.l.b16 %v658
        %v691 = vunpack.c.l.b16 %v659
        %v692 = vunpack.c.l.b16 %v660
        %v693 = vunpack.c.l.b16 %v661
        %v694 = vunpack.c.l.b16 %v662
        %v695 = vunpack.c.l.b16 %v663
        %v696 = vunpack.c.l.b16 %v664
        %v697 = vunpack.c.l.b16 %v665
        %v698 = vunpack.c.l.b16 %v666
        %v699 = vunpack.c.l.b16 %v667
        %v700 = vunpack.c.l.b16 %v668
        %v701 = vunpack.c.l.b16 %v669
        %v702 = vunpack.c.l.b16 %v670
        %v703 = vunpack.c.l.b16 %v671
        %v704 = vpack.c.b16 %v689, %v688
        %v705 = vpack.c.b16 %v691, %v690
        %v706 = vpack.c.b16 %v693, %v692
        %v707 = vpack.c.b16 %v695, %v694
        %v708 = vpack.c.b16 %v697, %v696
        %v709 = vpack.c.b16 %v699, %v698
        %v710 = vpack.c.b16 %v701, %v700
        %v711 = vpack.c.b16 %v703, %v702
        %v713 = vsel %vm514, %v704, 0
        %v716 = vsel %vm514, %v705, 0
        %v719 = vsel %vm514, %v706, 0
        %v722 = vsel %vm514, %v707, 0
        %v725 = vsel %vm514, %v708, 0
        %v728 = vsel %vm514, %v709, 0
        %v731 = vsel %vm514, %v710, 0
        %v734 = vsel %vm514, %v711, 0
        %736 = vmatprep.subr.bf16.mxu0 0
        %737 = vmatpush1.bf16.msra.mxu0 %v505
        %738 = vmatprep.subr.bf16.mxu0 0
        %739 = vmatpush1.bf16.msra.mxu0 %v506
        %740 = vmatprep.subr.bf16.mxu0 0
        %741 = vmatpush1.bf16.msra.mxu0 %v507
        %742 = vmatprep.subr.bf16.mxu0 0
        %743 = vmatpush1.bf16.msra.mxu0 %v508
        %744 = vmatprep.subr.bf16.mxu0 0
        %745 = vmatpush1.bf16.msra.mxu0 %v541
        %746 = vmatprep.subr.bf16.mxu0 0
        %747 = vmatpush1.bf16.msra.mxu0 0
        %748 = vmatprep.subr.bf16.mxu0 0
        %749 = vmatpush1.bf16.msra.mxu0 0
        %750 = vmatprep.subr.bf16.mxu0 0
        %751 = vmatpush1.bf16.msra.mxu0 0
        %752 = vmatprep.subr.bf16.mxu0 0
        %753 = vmatpush1.bf16.msra.mxu0 0
        %754 = vmatprep.subr.bf16.mxu0 0
        %755 = vmatpush1.bf16.msra.mxu0 0
        %756 = vmatprep.subr.bf16.mxu0 0
        %757 = vmatpush1.bf16.msra.mxu0 0
        %758 = vmatprep.subr.bf16.mxu0 0
        %759 = vmatpush1.bf16.msra.mxu0 0
        %760 = vmatprep.subr.bf16.mxu0 0
        %761 = vmatpush1.bf16.msra.mxu0 0
        %762 = vmatprep.subr.bf16.mxu0 0
        %763 = vmatpush1.bf16.msra.mxu0 0
        %764 = vmatprep.subr.bf16.mxu0 0
        %765 = vmatpush1.bf16.msra.mxu0 0
        %766 = vmatprep.subr.bf16.mxu0 0
        %767 = vmatpush1.bf16.msra.mxu0 0
        %768 = vmatprep.mubr.bf16.mxu0 0
        %769 = vmatmul.mubr.bf16.gmra.mrb[0].mxu0 %v713
        %v770 = vpop.f32.mrb[0].mxu0
        %v771 = vadd.f32 %v445, %v770
        %v772 = vpop.f32.mrb[0].mxu0
        %v773 = vpop.f32.mrb[0].mxu0
        %v774 = vadd.f32 %v445, %v773
        %v775 = vpop.f32.mrb[0].mxu0
        %776 = vmatprep.mubr.bf16.mxu0 0
        %777 = vmatmul.mubr.bf16.gmra.mrb[0].mxu0 %v716
        %v778 = vpop.f32.mrb[0].mxu0
        %v779 = vadd.f32 %v445, %v778
        %v780 = vpop.f32.mrb[0].mxu0
        %v781 = vpop.f32.mrb[0].mxu0
        %v782 = vadd.f32 %v445, %v781
        %v783 = vpop.f32.mrb[0].mxu0
        %784 = vmatprep.mubr.bf16.mxu0 0
        %785 = vmatmul.mubr.bf16.gmra.mrb[0].mxu0 %v719
        %v786 = vpop.f32.mrb[0].mxu0
        %v787 = vadd.f32 %v445, %v786
        %v788 = vpop.f32.mrb[0].mxu0
        %v789 = vpop.f32.mrb[0].mxu0
        %v790 = vadd.f32 %v445, %v789
        %v791 = vpop.f32.mrb[0].mxu0
        %792 = vmatprep.mubr.bf16.mxu0 0
        %793 = vmatmul.mubr.bf16.gmra.mrb[0].mxu0 %v722
        %v794 = vpop.f32.mrb[0].mxu0
        %v795 = vadd.f32 %v445, %v794
        %v796 = vpop.f32.mrb[0].mxu0
        %v797 = vpop.f32.mrb[0].mxu0
        %v798 = vadd.f32 %v445, %v797
        %v799 = vpop.f32.mrb[0].mxu0
        %800 = vmatprep.mubr.bf16.mxu0 0
        %801 = vmatmul.mubr.bf16.gmra.mrb[0].mxu0 %v725
        %v802 = vpop.f32.mrb[0].mxu0
        %v803 = vadd.f32 %v445, %v802
        %v804 = vpop.f32.mrb[0].mxu0
        %v805 = vpop.f32.mrb[0].mxu0
        %v806 = vadd.f32 %v445, %v805
        %v807 = vpop.f32.mrb[0].mxu0
        %808 = vmatprep.mubr.bf16.mxu0 0
        %809 = vmatmul.mubr.bf16.gmra.mrb[0].mxu0 %v728
        %v810 = vpop.f32.mrb[0].mxu0
        %v811 = vadd.f32 %v445, %v810
        %v812 = vpop.f32.mrb[0].mxu0
        %v813 = vpop.f32.mrb[0].mxu0
        %v814 = vadd.f32 %v445, %v813
        %v815 = vpop.f32.mrb[0].mxu0
        %816 = vmatprep.mubr.bf16.mxu0 0
        %817 = vmatmul.mubr.bf16.gmra.mrb[0].mxu0 %v731
        %v818 = vpop.f32.mrb[0].mxu0
        %v819 = vadd.f32 %v445, %v818
        %v820 = vpop.f32.mrb[0].mxu0
        %v821 = vpop.f32.mrb[0].mxu0
        %v822 = vadd.f32 %v445, %v821
        %v823 = vpop.f32.mrb[0].mxu0
        %824 = vmatprep.mubr.bf16.mxu0 0
        %825 = vmatmul.mubr.bf16.gmra.mrb[0].mxu0 %v734
        %v826 = vpop.f32.mrb[0].mxu0
        %v827 = vadd.f32 %v445, %v826
        %v828 = vpop.f32.mrb[0].mxu0
        %v829 = vpop.f32.mrb[0].mxu0
        %v830 = vadd.f32 %v445, %v829
        %v831 = vpop.f32.mrb[0].mxu0
        %832 = vdwg.mxu0
        %v833 = vmax.f32 %v771, 0.0
        %v834 = vmax.f32 %v774, 0.0
        %v835 = vmax.f32 %v779, 0.0
        %v836 = vmax.f32 %v782, 0.0
        %v837 = vmax.f32 %v787, 0.0
        %v838 = vmax.f32 %v790, 0.0
        %v839 = vmax.f32 %v795, 0.0
        %v840 = vmax.f32 %v798, 0.0
        %v841 = vmax.f32 %v803, 0.0
        %v842 = vmax.f32 %v806, 0.0
        %v843 = vmax.f32 %v811, 0.0
        %v844 = vmax.f32 %v814, 0.0
        %v845 = vmax.f32 %v819, 0.0
        %v846 = vmax.f32 %v822, 0.0
        %v847 = vmax.f32 %v827, 0.0
        %v848 = vmax.f32 %v830, 0.0
        %v849 = vmax.f32 %v640, %v833
        %v850 = vmax.f32 %v641, %v834
        %v851 = vmax.f32 %v642, %v835
        %v852 = vmax.f32 %v643, %v836
        %v853 = vmax.f32 %v644, %v837
        %v854 = vmax.f32 %v645, %v838
        %v855 = vmax.f32 %v646, %v839
        %v856 = vmax.f32 %v647, %v840
        %v857 = vmax.f32 %v648, %v841
        %v858 = vmax.f32 %v649, %v842
        %v859 = vmax.f32 %v650, %v843
        %v860 = vmax.f32 %v651, %v844
        %v861 = vmax.f32 %v652, %v845
        %v862 = vmax.f32 %v653, %v846
        %v863 = vmax.f32 %v654, %v847
        %v864 = vmax.f32 %v655, %v848
        %v865 = vmax.f32 %v849, %v850
        %866 = vst.msk [vmem:[#allocation2 + $0xb] sm:$0xff] %vm387, %v865
        %v867 = vmax.f32 %v851, %v852
        %868 = vst.msk [vmem:[#allocation2 + $0x15] sm:$0xff] %vm387, %v867
        %v869 = vmax.f32 %v853, %v854
        %870 = vst.msk [vmem:[#allocation2 + $0x1f] sm:$0xff] %vm387, %v869
        %v871 = vmax.f32 %v855, %v856
        %872 = vst.msk [vmem:[#allocation2 + $0x29] sm:$0xff] %vm387, %v871
        %v873 = vmax.f32 %v857, %v858
        %874 = vst.msk [vmem:[#allocation2 + $0x33] sm:$0xff] %vm387, %v873
        %v875 = vmax.f32 %v859, %v860
        %876 = vst.msk [vmem:[#allocation2 + $0x3d] sm:$0xff] %vm387, %v875
        %v877 = vmax.f32 %v861, %v862
        %878 = vst.msk [vmem:[#allocation2 + $0x47] sm:$0xff] %vm387, %v877
        %v879 = vmax.f32 %v863, %v864
        %880 = vst.msk [vmem:[#allocation2 + $0x51] sm:$0xff] %vm387, %v879
        %v881 = vld [vmem:[%s4] sm:$0x1]
        %v882 = vld [vmem:[#allocation2] ss:$2 sm:$0xff]
        %s883 = scalar_lea.vmem [#allocation2], 16
        %v884 = vld [vmem:[%s883] ss:$2 sm:$0xff]
        %s885 = scalar_lea.vmem [#allocation2], 32
        %v886 = vld [vmem:[%s885] ss:$2 sm:$0xff]
        %s887 = scalar_lea.vmem [#allocation2], 48
        %v888 = vld [vmem:[%s887] ss:$2 sm:$0xff]
        %s889 = scalar_lea.vmem [#allocation2], 64
        %v890 = vld [vmem:[%s889] ss:$2 sm:$0xff]
        %v891 = vpack.c.bf16 %v884, %v882
        %v892 = vpack.c.bf16 %v888, %v886
        %v893 = vpack.c.bf16 %v890, %v890
        %v894 = vld [vmem:[%s3] sm:$0xf]
        %v895 = vld [vmem:[%s3 + $0x4] sm:$0xf]
        %v896 = vld [vmem:[%s3 + $0x8] sm:$0xf]
        %v897 = vld [vmem:[%s3 + $0xc] sm:$0xf]
        %v898 = vld [vmem:[%s3 + $0x10] sm:$0xf]
        %v899 = vld [vmem:[%s3 + $0x14] sm:$0xf]
        %v900 = vld [vmem:[%s3 + $0x18] sm:$0xf]
        %v901 = vld [vmem:[%s3 + $0x1c] sm:$0xf]
        %s902 = scalar_lea.vmem [#allocation2], 1
        %v903 = vld [vmem:[%s902] ss:$2 sm:$0xff]
        %s904 = scalar_lea.vmem [#allocation2], 17
        %v905 = vld [vmem:[%s904] ss:$2 sm:$0xff]
        %s906 = scalar_lea.vmem [#allocation2], 33
        %v907 = vld [vmem:[%s906] ss:$2 sm:$0xff]
        %s908 = scalar_lea.vmem [#allocation2], 49
        %v909 = vld [vmem:[%s908] ss:$2 sm:$0xff]
        %s910 = scalar_lea.vmem [#allocation2], 65
        %v911 = vld [vmem:[%s910] ss:$2 sm:$0xff]
        %v912 = vpack.c.bf16 %v905, %v903
        %v913 = vpack.c.bf16 %v909, %v907
        %v914 = vpack.c.bf16 %v911, %v911
        %s915 = scalar_lea.vmem %s3, 32
        %v916 = vld [vmem:[%s915] sm:$0xf]
        %v917 = vld [vmem:[%s915 + $0x4] sm:$0xf]
        %v918 = vld [vmem:[%s915 + $0x8] sm:$0xf]
        %v919 = vld [vmem:[%s915 + $0xc] sm:$0xf]
        %v920 = vld [vmem:[%s915 + $0x10] sm:$0xf]
        %v921 = vld [vmem:[%s915 + $0x14] sm:$0xf]
        %v922 = vld [vmem:[%s915 + $0x18] sm:$0xf]
        %v923 = vld [vmem:[%s915 + $0x1c] sm:$0xf]
        %v932 = vunpack.c.l.b16 %v916
        %v933 = vunpack.c.l.b16 %v917
        %v934 = vunpack.c.l.b16 %v918
        %v935 = vunpack.c.l.b16 %v919
        %v936 = vunpack.c.l.b16 %v920
        %v937 = vunpack.c.l.b16 %v921
        %v938 = vunpack.c.l.b16 %v922
        %v939 = vunpack.c.l.b16 %v923
        %v940 = vpack.c.b16 %v933, %v932
        %v941 = vpack.c.b16 %v935, %v934
        %v942 = vpack.c.b16 %v937, %v936
        %v943 = vpack.c.b16 %v939, %v938
        %v949 = vsel %vm387, %v912, 0
        %v952 = vsel %vm387, %v913, 0
        %v955 = vsel %vm387, %v914, 0
        %957 = vmatprep.subr.bf16.mxu0 0
        %958 = vmatpush1.bf16.msra.mxu0 %v940
        %959 = vmatprep.subr.bf16.mxu0 0
        %960 = vmatpush1.bf16.msra.mxu0 %v941
        %961 = vmatprep.subr.bf16.mxu0 0
        %962 = vmatpush1.bf16.msra.mxu0 %v942
        %963 = vmatprep.subr.bf16.mxu0 0
        %964 = vmatpush1.bf16.msra.mxu0 %v943
        %965 = vmatprep.subr.bf16.mxu0 0
        %966 = vmatpush1.bf16.msra.mxu0 0
        %967 = vmatprep.subr.bf16.mxu0 0
        %968 = vmatpush1.bf16.msra.mxu0 0
        %969 = vmatprep.subr.bf16.mxu0 0
        %970 = vmatpush1.bf16.msra.mxu0 0
        %971 = vmatprep.subr.bf16.mxu0 0
        %972 = vmatpush1.bf16.msra.mxu0 0
        %973 = vmatprep.subr.bf16.mxu0 0
        %974 = vmatpush1.bf16.msra.mxu0 0
        %975 = vmatprep.subr.bf16.mxu0 0
        %976 = vmatpush1.bf16.msra.mxu0 0
        %977 = vmatprep.subr.bf16.mxu0 0
        %978 = vmatpush1.bf16.msra.mxu0 0
        %979 = vmatprep.subr.bf16.mxu0 0
        %980 = vmatpush1.bf16.msra.mxu0 0
        %981 = vmatprep.subr.bf16.mxu0 0
        %982 = vmatpush1.bf16.msra.mxu0 0
        %983 = vmatprep.subr.bf16.mxu0 0
        %984 = vmatpush1.bf16.msra.mxu0 0
        %985 = vmatprep.subr.bf16.mxu0 0
        %986 = vmatpush1.bf16.msra.mxu0 0
        %987 = vmatprep.subr.bf16.mxu0 0
        %988 = vmatpush1.bf16.msra.mxu0 0
        %989 = vmatprep.mubr.bf16.mxu0 0
        %990 = vmatmul.mubr.bf16.gmra.mrb[0].mxu0 %v949
        %v991 = vpop.f32.mrb[0].mxu0
        %v992 = vadd.f32 0.0, %v991
        %v993 = vpop.f32.mrb[0].mxu0
        %v994 = vpop.f32.mrb[0].mxu0
        %v995 = vadd.f32 0.0, %v994
        %v996 = vpop.f32.mrb[0].mxu0
        %997 = vmatprep.mubr.bf16.mxu0 0
        %998 = vmatmul.mubr.bf16.gmra.mrb[0].mxu0 %v952
        %v999 = vpop.f32.mrb[0].mxu0
        %v1000 = vadd.f32 0.0, %v999
        %v1001 = vpop.f32.mrb[0].mxu0
        %v1002 = vpop.f32.mrb[0].mxu0
        %v1003 = vadd.f32 0.0, %v1002
        %v1004 = vpop.f32.mrb[0].mxu0
        %1005 = vmatprep.mubr.bf16.mxu0 0
        %1006 = vmatmul.mubr.bf16.gmra.mrb[0].mxu0 %v955
        %v1007 = vpop.f32.mrb[0].mxu0
        %v1008 = vadd.f32 0.0, %v1007
        %v1009 = vpop.f32.mrb[0].mxu0
        %v1010 = vpop.f32.mrb[0].mxu0
        %v1011 = vpop.f32.mrb[0].mxu0
        %1012 = vdwg.mxu0
        %v1021 = vunpack.c.l.b16 %v894
        %v1022 = vunpack.c.l.b16 %v895
        %v1023 = vunpack.c.l.b16 %v896
        %v1024 = vunpack.c.l.b16 %v897
        %v1025 = vunpack.c.l.b16 %v898
        %v1026 = vunpack.c.l.b16 %v899
        %v1027 = vunpack.c.l.b16 %v900
        %v1028 = vunpack.c.l.b16 %v901
        %v1029 = vpack.c.b16 %v1022, %v1021
        %v1030 = vpack.c.b16 %v1024, %v1023
        %v1031 = vpack.c.b16 %v1026, %v1025
        %v1032 = vpack.c.b16 %v1028, %v1027
        %v1038 = vsel %vm387, %v891, 0
        %v1041 = vsel %vm387, %v892, 0
        %v1044 = vsel %vm387, %v893, 0
        %1046 = vmatprep.subr.bf16.mxu0 0
        %1047 = vmatpush1.bf16.msra.mxu0 %v1029
        %1048 = vmatprep.subr.bf16.mxu0 0
        %1049 = vmatpush1.bf16.msra.mxu0 %v1030
        %1050 = vmatprep.subr.bf16.mxu0 0
        %1051 = vmatpush1.bf16.msra.mxu0 %v1031
        %1052 = vmatprep.subr.bf16.mxu0 0
        %1053 = vmatpush1.bf16.msra.mxu0 %v1032
        %1054 = vmatprep.subr.bf16.mxu0 0
        %1055 = vmatpush1.bf16.msra.mxu0 0
        %1056 = vmatprep.subr.bf16.mxu0 0
        %1057 = vmatpush1.bf16.msra.mxu0 0
        %1058 = vmatprep.subr.bf16.mxu0 0
        %1059 = vmatpush1.bf16.msra.mxu0 0
        %1060 = vmatprep.subr.bf16.mxu0 0
        %1061 = vmatpush1.bf16.msra.mxu0 0
        %1062 = vmatprep.subr.bf16.mxu0 0
        %1063 = vmatpush1.bf16.msra.mxu0 0
        %1064 = vmatprep.subr.bf16.mxu0 0
        %1065 = vmatpush1.bf16.msra.mxu0 0
        %1066 = vmatprep.subr.bf16.mxu0 0
        %1067 = vmatpush1.bf16.msra.mxu0 0
        %1068 = vmatprep.subr.bf16.mxu0 0
        %1069 = vmatpush1.bf16.msra.mxu0 0
        %1070 = vmatprep.subr.bf16.mxu0 0
        %1071 = vmatpush1.bf16.msra.mxu0 0
        %1072 = vmatprep.subr.bf16.mxu0 0
        %1073 = vmatpush1.bf16.msra.mxu0 0
        %1074 = vmatprep.subr.bf16.mxu0 0
        %1075 = vmatpush1.bf16.msra.mxu0 0
        %1076 = vmatprep.subr.bf16.mxu0 0
        %1077 = vmatpush1.bf16.msra.mxu0 0
        %1078 = vmatprep.mubr.bf16.mxu0 0
        %1079 = vmatmul.mubr.bf16.gmra.mrb[0].mxu0 %v1038
        %v1080 = vpop.f32.mrb[0].mxu0
        %v1081 = vadd.f32 %v992, %v1080
        %v1082 = vpop.f32.mrb[0].mxu0
        %v1083 = vpop.f32.mrb[0].mxu0
        %v1084 = vadd.f32 %v995, %v1083
        %v1085 = vpop.f32.mrb[0].mxu0
        %1086 = vmatprep.mubr.bf16.mxu0 0
        %1087 = vmatmul.mubr.bf16.gmra.mrb[0].mxu0 %v1041
        %v1088 = vpop.f32.mrb[0].mxu0
        %v1089 = vadd.f32 %v1000, %v1088
        %v1090 = vpop.f32.mrb[0].mxu0
        %v1091 = vpop.f32.mrb[0].mxu0
        %v1092 = vadd.f32 %v1003, %v1091
        %v1093 = vpop.f32.mrb[0].mxu0
        %1094 = vmatprep.mubr.bf16.mxu0 0
        %1095 = vmatmul.mubr.bf16.gmra.mrb[0].mxu0 %v1044
        %v1096 = vpop.f32.mrb[0].mxu0
        %v1097 = vadd.f32 %v1008, %v1096
        %v1098 = vpop.f32.mrb[0].mxu0
        %v1099 = vpop.f32.mrb[0].mxu0
        %v1100 = vpop.f32.mrb[0].mxu0
        %1101 = vdwg.mxu0
        %s1102 = scalar_lea.vmem [#allocation2], 2
        %v1103 = vld [vmem:[%s1102] ss:$2 sm:$0xff]
        %s1104 = scalar_lea.vmem [#allocation2], 18
        %v1105 = vld [vmem:[%s1104] ss:$2 sm:$0xff]
        %s1106 = scalar_lea.vmem [#allocation2], 34
        %v1107 = vld [vmem:[%s1106] ss:$2 sm:$0xff]
        %s1108 = scalar_lea.vmem [#allocation2], 50
        %v1109 = vld [vmem:[%s1108] ss:$2 sm:$0xff]
        %s1110 = scalar_lea.vmem [#allocation2], 66
        %v1111 = vld [vmem:[%s1110] ss:$2 sm:$0xff]
        %v1112 = vpack.c.bf16 %v1105, %v1103
        %v1113 = vpack.c.bf16 %v1109, %v1107
        %v1114 = vpack.c.bf16 %v1111, %v1111
        %s1115 = scalar_lea.vmem %s3, 64
        %v1116 = vld [vmem:[%s1115] sm:$0xf]
        %v1117 = vld [vmem:[%s1115 + $0x4] sm:$0xf]
        %v1118 = vld [vmem:[%s1115 + $0x8] sm:$0xf]
        %v1119 = vld [vmem:[%s1115 + $0xc] sm:$0xf]
        %v1120 = vld [vmem:[%s1115 + $0x10] sm:$0xf]
        %v1121 = vld [vmem:[%s1115 + $0x14] sm:$0xf]
        %v1122 = vld [vmem:[%s1115 + $0x18] sm:$0xf]
        %v1123 = vld [vmem:[%s1115 + $0x1c] sm:$0xf]
        %v1132 = vunpack.c.l.b16 %v1116
        %v1133 = vunpack.c.l.b16 %v1117
        %v1134 = vunpack.c.l.b16 %v1118
        %v1135 = vunpack.c.l.b16 %v1119
        %v1136 = vunpack.c.l.b16 %v1120
        %v1137 = vunpack.c.l.b16 %v1121
        %v1138 = vunpack.c.l.b16 %v1122
        %v1139 = vunpack.c.l.b16 %v1123
        %v1140 = vpack.c.b16 %v1133, %v1132
        %v1141 = vpack.c.b16 %v1135, %v1134
        %v1142 = vpack.c.b16 %v1137, %v1136
        %v1143 = vpack.c.b16 %v1139, %v1138
        %v1149 = vsel %vm387, %v1112, 0
        %v1152 = vsel %vm387, %v1113, 0
        %v1155 = vsel %vm387, %v1114, 0
        %1157 = vmatprep.subr.bf16.mxu0 0
        %1158 = vmatpush1.bf16.msra.mxu0 %v1140
        %1159 = vmatprep.subr.bf16.mxu0 0
        %1160 = vmatpush1.bf16.msra.mxu0 %v1141
        %1161 = vmatprep.subr.bf16.mxu0 0
        %1162 = vmatpush1.bf16.msra.mxu0 %v1142
        %1163 = vmatprep.subr.bf16.mxu0 0
        %1164 = vmatpush1.bf16.msra.mxu0 %v1143
        %1165 = vmatprep.subr.bf16.mxu0 0
        %1166 = vmatpush1.bf16.msra.mxu0 0
        %1167 = vmatprep.subr.bf16.mxu0 0
        %1168 = vmatpush1.bf16.msra.mxu0 0
        %1169 = vmatprep.subr.bf16.mxu0 0
        %1170 = vmatpush1.bf16.msra.mxu0 0
        %1171 = vmatprep.subr.bf16.mxu0 0
        %1172 = vmatpush1.bf16.msra.mxu0 0
        %1173 = vmatprep.subr.bf16.mxu0 0
        %1174 = vmatpush1.bf16.msra.mxu0 0
        %1175 = vmatprep.subr.bf16.mxu0 0
        %1176 = vmatpush1.bf16.msra.mxu0 0
        %1177 = vmatprep.subr.bf16.mxu0 0
        %1178 = vmatpush1.bf16.msra.mxu0 0
        %1179 = vmatprep.subr.bf16.mxu0 0
        %1180 = vmatpush1.bf16.msra.mxu0 0
        %1181 = vmatprep.subr.bf16.mxu0 0
        %1182 = vmatpush1.bf16.msra.mxu0 0
        %1183 = vmatprep.subr.bf16.mxu0 0
        %1184 = vmatpush1.bf16.msra.mxu0 0
        %1185 = vmatprep.subr.bf16.mxu0 0
        %1186 = vmatpush1.bf16.msra.mxu0 0
        %1187 = vmatprep.subr.bf16.mxu0 0
        %1188 = vmatpush1.bf16.msra.mxu0 0
        %1189 = vmatprep.mubr.bf16.mxu0 0
        %1190 = vmatmul.mubr.bf16.gmra.mrb[0].mxu0 %v1149
        %v1191 = vpop.f32.mrb[0].mxu0
        %v1192 = vadd.f32 0.0, %v1191
        %v1193 = vpop.f32.mrb[0].mxu0
        %v1194 = vpop.f32.mrb[0].mxu0
        %v1195 = vadd.f32 0.0, %v1194
        %v1196 = vpop.f32.mrb[0].mxu0
        %1197 = vmatprep.mubr.bf16.mxu0 0
        %1198 = vmatmul.mubr.bf16.gmra.mrb[0].mxu0 %v1152
        %v1199 = vpop.f32.mrb[0].mxu0
        %v1200 = vadd.f32 0.0, %v1199
        %v1201 = vpop.f32.mrb[0].mxu0
        %v1202 = vpop.f32.mrb[0].mxu0
        %v1203 = vadd.f32 0.0, %v1202
        %v1204 = vpop.f32.mrb[0].mxu0
        %1205 = vmatprep.mubr.bf16.mxu0 0
        %1206 = vmatmul.mubr.bf16.gmra.mrb[0].mxu0 %v1155
        %v1207 = vpop.f32.mrb[0].mxu0
        %v1208 = vadd.f32 0.0, %v1207
        %v1209 = vpop.f32.mrb[0].mxu0
        %v1210 = vpop.f32.mrb[0].mxu0
        %v1211 = vpop.f32.mrb[0].mxu0
        %1212 = vdwg.mxu0
        %v1213 = vadd.f32 %v1081, %v1192
        %v1214 = vadd.f32 %v1084, %v1195
        %v1215 = vadd.f32 %v1089, %v1200
        %v1216 = vadd.f32 %v1092, %v1203
        %v1217 = vadd.f32 %v1097, %v1208
        %s1218 = scalar_lea.vmem [#allocation2], 10
        %v1219 = vld [vmem:[%s1218] ss:$2 sm:$0xff]
        %s1220 = scalar_lea.vmem [#allocation2], 26
        %v1221 = vld [vmem:[%s1220] ss:$2 sm:$0xff]
        %s1222 = scalar_lea.vmem [#allocation2], 42
        %v1223 = vld [vmem:[%s1222] ss:$2 sm:$0xff]
        %s1224 = scalar_lea.vmem [#allocation2], 58
        %v1225 = vld [vmem:[%s1224] ss:$2 sm:$0xff]
        %s1226 = scalar_lea.vmem [#allocation2], 74
        %v1227 = vld [vmem:[%s1226] ss:$2 sm:$0xff]
        %v1228 = vpack.c.bf16 %v1221, %v1219
        %v1229 = vpack.c.bf16 %v1225, %v1223
        %v1230 = vpack.c.bf16 %v1227, %v1227
        %s1231 = scalar_lea.vmem %s3, 96
        %v1232 = vld [vmem:[%s1231] sm:$0xf]
        %v1233 = vld [vmem:[%s1231 + $0x4] sm:$0xf]
        %v1234 = vld [vmem:[%s1231 + $0x8] sm:$0xf]
        %v1235 = vld [vmem:[%s1231 + $0xc] sm:$0xf]
        %v1236 = vld [vmem:[%s1231 + $0x10] sm:$0xf]
        %v1237 = vld [vmem:[%s1231 + $0x14] sm:$0xf]
        %v1238 = vld [vmem:[%s1231 + $0x18] sm:$0xf]
        %v1239 = vld [vmem:[%s1231 + $0x1c] sm:$0xf]
        %v1248 = vunpack.c.l.b16 %v1232
        %v1249 = vunpack.c.l.b16 %v1233
        %v1250 = vunpack.c.l.b16 %v1234
        %v1251 = vunpack.c.l.b16 %v1235
        %v1252 = vunpack.c.l.b16 %v1236
        %v1253 = vunpack.c.l.b16 %v1237
        %v1254 = vunpack.c.l.b16 %v1238
        %v1255 = vunpack.c.l.b16 %v1239
        %v1256 = vpack.c.b16 %v1249, %v1248
        %v1257 = vpack.c.b16 %v1251, %v1250
        %v1258 = vpack.c.b16 %v1253, %v1252
        %v1259 = vpack.c.b16 %v1255, %v1254
        %v1265 = vsel %vm387, %v1228, 0
        %v1268 = vsel %vm387, %v1229, 0
        %v1271 = vsel %vm387, %v1230, 0
        %1273 = vmatprep.subr.bf16.mxu0 0
        %1274 = vmatpush1.bf16.msra.mxu0 %v1256
        %1275 = vmatprep.subr.bf16.mxu0 0
        %1276 = vmatpush1.bf16.msra.mxu0 %v1257
        %1277 = vmatprep.subr.bf16.mxu0 0
        %1278 = vmatpush1.bf16.msra.mxu0 %v1258
        %1279 = vmatprep.subr.bf16.mxu0 0
        %1280 = vmatpush1.bf16.msra.mxu0 %v1259
        %1281 = vmatprep.subr.bf16.mxu0 0
        %1282 = vmatpush1.bf16.msra.mxu0 0
        %1283 = vmatprep.subr.bf16.mxu0 0
        %1284 = vmatpush1.bf16.msra.mxu0 0
        %1285 = vmatprep.subr.bf16.mxu0 0
        %1286 = vmatpush1.bf16.msra.mxu0 0
        %1287 = vmatprep.subr.bf16.mxu0 0
        %1288 = vmatpush1.bf16.msra.mxu0 0
        %1289 = vmatprep.subr.bf16.mxu0 0
        %1290 = vmatpush1.bf16.msra.mxu0 0
        %1291 = vmatprep.subr.bf16.mxu0 0
        %1292 = vmatpush1.bf16.msra.mxu0 0
        %1293 = vmatprep.subr.bf16.mxu0 0
        %1294 = vmatpush1.bf16.msra.mxu0 0
        %1295 = vmatprep.subr.bf16.mxu0 0
        %1296 = vmatpush1.bf16.msra.mxu0 0
        %1297 = vmatprep.subr.bf16.mxu0 0
        %1298 = vmatpush1.bf16.msra.mxu0 0
        %1299 = vmatprep.subr.bf16.mxu0 0
        %1300 = vmatpush1.bf16.msra.mxu0 0
        %1301 = vmatprep.subr.bf16.mxu0 0
        %1302 = vmatpush1.bf16.msra.mxu0 0
        %1303 = vmatprep.subr.bf16.mxu0 0
        %1304 = vmatpush1.bf16.msra.mxu0 0
        %1305 = vmatprep.mubr.bf16.mxu0 0
        %1306 = vmatmul.mubr.bf16.gmra.mrb[0].mxu0 %v1265
        %v1307 = vpop.f32.mrb[0].mxu0
        %v1308 = vadd.f32 0.0, %v1307
        %v1309 = vpop.f32.mrb[0].mxu0
        %v1310 = vpop.f32.mrb[0].mxu0
        %v1311 = vadd.f32 0.0, %v1310
        %v1312 = vpop.f32.mrb[0].mxu0
        %1313 = vmatprep.mubr.bf16.mxu0 0
        %1314 = vmatmul.mubr.bf16.gmra.mrb[0].mxu0 %v1268
        %v1315 = vpop.f32.mrb[0].mxu0
        %v1316 = vadd.f32 0.0, %v1315
        %v1317 = vpop.f32.mrb[0].mxu0
        %v1318 = vpop.f32.mrb[0].mxu0
        %v1319 = vadd.f32 0.0, %v1318
        %v1320 = vpop.f32.mrb[0].mxu0
        %1321 = vmatprep.mubr.bf16.mxu0 0
        %1322 = vmatmul.mubr.bf16.gmra.mrb[0].mxu0 %v1271
        %v1323 = vpop.f32.mrb[0].mxu0
        %v1324 = vadd.f32 0.0, %v1323
        %v1325 = vpop.f32.mrb[0].mxu0
        %v1326 = vpop.f32.mrb[0].mxu0
        %v1327 = vpop.f32.mrb[0].mxu0
        %1328 = vdwg.mxu0
        %v1329 = vadd.f32 %v1213, %v1308
        %v1330 = vadd.f32 %v1214, %v1311
        %v1331 = vadd.f32 %v1215, %v1316
        %v1332 = vadd.f32 %v1216, %v1319
        %v1333 = vadd.f32 %v1217, %v1324
        %s1334 = scalar_lea.vmem [#allocation2], 11
        %v1335 = vld [vmem:[%s1334] ss:$2 sm:$0xff]
        %s1336 = scalar_lea.vmem [#allocation2], 27
        %v1337 = vld [vmem:[%s1336] ss:$2 sm:$0xff]
        %s1338 = scalar_lea.vmem [#allocation2], 43
        %v1339 = vld [vmem:[%s1338] ss:$2 sm:$0xff]
        %s1340 = scalar_lea.vmem [#allocation2], 59
        %v1341 = vld [vmem:[%s1340] ss:$2 sm:$0xff]
        %s1342 = scalar_lea.vmem [#allocation2], 75
        %v1343 = vld [vmem:[%s1342] ss:$2 sm:$0xff]
        %v1344 = vpack.c.bf16 %v1337, %v1335
        %v1345 = vpack.c.bf16 %v1341, %v1339
        %v1346 = vpack.c.bf16 %v1343, %v1343
        %s1347 = scalar_lea.vmem %s3, 128
        %v1348 = vld [vmem:[%s1347] sm:$0xf]
        %v1349 = vld [vmem:[%s1347 + $0x4] sm:$0xf]
        %v1350 = vld [vmem:[%s1347 + $0x8] sm:$0xf]
        %v1351 = vld [vmem:[%s1347 + $0xc] sm:$0xf]
        %v1352 = vld [vmem:[%s1347 + $0x10] sm:$0xf]
        %v1353 = vld [vmem:[%s1347 + $0x14] sm:$0xf]
        %v1354 = vld [vmem:[%s1347 + $0x18] sm:$0xf]
        %v1355 = vld [vmem:[%s1347 + $0x1c] sm:$0xf]
        %v1364 = vunpack.c.l.b16 %v1348
        %v1365 = vunpack.c.l.b16 %v1349
        %v1366 = vunpack.c.l.b16 %v1350
        %v1367 = vunpack.c.l.b16 %v1351
        %v1368 = vunpack.c.l.b16 %v1352
        %v1369 = vunpack.c.l.b16 %v1353
        %v1370 = vunpack.c.l.b16 %v1354
        %v1371 = vunpack.c.l.b16 %v1355
        %v1372 = vpack.c.b16 %v1365, %v1364
        %v1373 = vpack.c.b16 %v1367, %v1366
        %v1374 = vpack.c.b16 %v1369, %v1368
        %v1375 = vpack.c.b16 %v1371, %v1370
        %v1381 = vsel %vm387, %v1344, 0
        %v1384 = vsel %vm387, %v1345, 0
        %v1387 = vsel %vm387, %v1346, 0
        %1389 = vmatprep.subr.bf16.mxu0 0
        %1390 = vmatpush1.bf16.msra.mxu0 %v1372
        %1391 = vmatprep.subr.bf16.mxu0 0
        %1392 = vmatpush1.bf16.msra.mxu0 %v1373
        %1393 = vmatprep.subr.bf16.mxu0 0
        %1394 = vmatpush1.bf16.msra.mxu0 %v1374
        %1395 = vmatprep.subr.bf16.mxu0 0
        %1396 = vmatpush1.bf16.msra.mxu0 %v1375
        %1397 = vmatprep.subr.bf16.mxu0 0
        %1398 = vmatpush1.bf16.msra.mxu0 0
        %1399 = vmatprep.subr.bf16.mxu0 0
        %1400 = vmatpush1.bf16.msra.mxu0 0
        %1401 = vmatprep.subr.bf16.mxu0 0
        %1402 = vmatpush1.bf16.msra.mxu0 0
        %1403 = vmatprep.subr.bf16.mxu0 0
        %1404 = vmatpush1.bf16.msra.mxu0 0
        %1405 = vmatprep.subr.bf16.mxu0 0
        %1406 = vmatpush1.bf16.msra.mxu0 0
        %1407 = vmatprep.subr.bf16.mxu0 0
        %1408 = vmatpush1.bf16.msra.mxu0 0
        %1409 = vmatprep.subr.bf16.mxu0 0
        %1410 = vmatpush1.bf16.msra.mxu0 0
        %1411 = vmatprep.subr.bf16.mxu0 0
        %1412 = vmatpush1.bf16.msra.mxu0 0
        %1413 = vmatprep.subr.bf16.mxu0 0
        %1414 = vmatpush1.bf16.msra.mxu0 0
        %1415 = vmatprep.subr.bf16.mxu0 0
        %1416 = vmatpush1.bf16.msra.mxu0 0
        %1417 = vmatprep.subr.bf16.mxu0 0
        %1418 = vmatpush1.bf16.msra.mxu0 0
        %1419 = vmatprep.subr.bf16.mxu0 0
        %1420 = vmatpush1.bf16.msra.mxu0 0
        %1421 = vmatprep.mubr.bf16.mxu0 0
        %1422 = vmatmul.mubr.bf16.gmra.mrb[0].mxu0 %v1381
        %v1423 = vpop.f32.mrb[0].mxu0
        %v1424 = vadd.f32 0.0, %v1423
        %v1425 = vpop.f32.mrb[0].mxu0
        %v1426 = vpop.f32.mrb[0].mxu0
        %v1427 = vadd.f32 0.0, %v1426
        %v1428 = vpop.f32.mrb[0].mxu0
        %1429 = vmatprep.mubr.bf16.mxu0 0
        %1430 = vmatmul.mubr.bf16.gmra.mrb[0].mxu0 %v1384
        %v1431 = vpop.f32.mrb[0].mxu0
        %v1432 = vadd.f32 0.0, %v1431
        %v1433 = vpop.f32.mrb[0].mxu0
        %v1434 = vpop.f32.mrb[0].mxu0
        %v1435 = vadd.f32 0.0, %v1434
        %v1436 = vpop.f32.mrb[0].mxu0
        %1437 = vmatprep.mubr.bf16.mxu0 0
        %1438 = vmatmul.mubr.bf16.gmra.mrb[0].mxu0 %v1387
        %v1439 = vpop.f32.mrb[0].mxu0
        %v1440 = vadd.f32 0.0, %v1439
        %v1441 = vpop.f32.mrb[0].mxu0
        %v1442 = vpop.f32.mrb[0].mxu0
        %v1443 = vpop.f32.mrb[0].mxu0
        %1444 = vdwg.mxu0
        %v1445 = vadd.f32 %v1329, %v1424
        %v1446 = vadd.f32 %v1330, %v1427
        %v1447 = vadd.f32 %v1331, %v1432
        %v1448 = vadd.f32 %v1332, %v1435
        %v1449 = vadd.f32 %v1333, %v1440
        %s1450 = scalar_lea.vmem [#allocation2], 12
        %v1451 = vld [vmem:[%s1450] ss:$2 sm:$0xff]
        %s1452 = scalar_lea.vmem [#allocation2], 28
        %v1453 = vld [vmem:[%s1452] ss:$2 sm:$0xff]
        %s1454 = scalar_lea.vmem [#allocation2], 44
        %v1455 = vld [vmem:[%s1454] ss:$2 sm:$0xff]
        %s1456 = scalar_lea.vmem [#allocation2], 60
        %v1457 = vld [vmem:[%s1456] ss:$2 sm:$0xff]
        %s1458 = scalar_lea.vmem [#allocation2], 76
        %v1459 = vld [vmem:[%s1458] ss:$2 sm:$0xff]
        %v1460 = vpack.c.bf16 %v1453, %v1451
        %v1461 = vpack.c.bf16 %v1457, %v1455
        %v1462 = vpack.c.bf16 %v1459, %v1459
        %s1463 = scalar_lea.vmem %s3, 160
        %v1464 = vld [vmem:[%s1463] sm:$0xf]
        %v1465 = vld [vmem:[%s1463 + $0x4] sm:$0xf]
        %v1466 = vld [vmem:[%s1463 + $0x8] sm:$0xf]
        %v1467 = vld [vmem:[%s1463 + $0xc] sm:$0xf]
        %v1468 = vld [vmem:[%s1463 + $0x10] sm:$0xf]
        %v1469 = vld [vmem:[%s1463 + $0x14] sm:$0xf]
        %v1470 = vld [vmem:[%s1463 + $0x18] sm:$0xf]
        %v1471 = vld [vmem:[%s1463 + $0x1c] sm:$0xf]
        %v1480 = vunpack.c.l.b16 %v1464
        %v1481 = vunpack.c.l.b16 %v1465
        %v1482 = vunpack.c.l.b16 %v1466
        %v1483 = vunpack.c.l.b16 %v1467
        %v1484 = vunpack.c.l.b16 %v1468
        %v1485 = vunpack.c.l.b16 %v1469
        %v1486 = vunpack.c.l.b16 %v1470
        %v1487 = vunpack.c.l.b16 %v1471
        %v1488 = vpack.c.b16 %v1481, %v1480
        %v1489 = vpack.c.b16 %v1483, %v1482
        %v1490 = vpack.c.b16 %v1485, %v1484
        %v1491 = vpack.c.b16 %v1487, %v1486
        %v1497 = vsel %vm387, %v1460, 0
        %v1500 = vsel %vm387, %v1461, 0
        %v1503 = vsel %vm387, %v1462, 0
        %1505 = vmatprep.subr.bf16.mxu0 0
        %1506 = vmatpush1.bf16.msra.mxu0 %v1488
        %1507 = vmatprep.subr.bf16.mxu0 0
        %1508 = vmatpush1.bf16.msra.mxu0 %v1489
        %1509 = vmatprep.subr.bf16.mxu0 0
        %1510 = vmatpush1.bf16.msra.mxu0 %v1490
        %1511 = vmatprep.subr.bf16.mxu0 0
        %1512 = vmatpush1.bf16.msra.mxu0 %v1491
        %1513 = vmatprep.subr.bf16.mxu0 0
        %1514 = vmatpush1.bf16.msra.mxu0 0
        %1515 = vmatprep.subr.bf16.mxu0 0
        %1516 = vmatpush1.bf16.msra.mxu0 0
        %1517 = vmatprep.subr.bf16.mxu0 0
        %1518 = vmatpush1.bf16.msra.mxu0 0
        %1519 = vmatprep.subr.bf16.mxu0 0
        %1520 = vmatpush1.bf16.msra.mxu0 0
        %1521 = vmatprep.subr.bf16.mxu0 0
        %1522 = vmatpush1.bf16.msra.mxu0 0
        %1523 = vmatprep.subr.bf16.mxu0 0
        %1524 = vmatpush1.bf16.msra.mxu0 0
        %1525 = vmatprep.subr.bf16.mxu0 0
        %1526 = vmatpush1.bf16.msra.mxu0 0
        %1527 = vmatprep.subr.bf16.mxu0 0
        %1528 = vmatpush1.bf16.msra.mxu0 0
        %1529 = vmatprep.subr.bf16.mxu0 0
        %1530 = vmatpush1.bf16.msra.mxu0 0
        %1531 = vmatprep.subr.bf16.mxu0 0
        %1532 = vmatpush1.bf16.msra.mxu0 0
        %1533 = vmatprep.subr.bf16.mxu0 0
        %1534 = vmatpush1.bf16.msra.mxu0 0
        %1535 = vmatprep.subr.bf16.mxu0 0
        %1536 = vmatpush1.bf16.msra.mxu0 0
        %1537 = vmatprep.mubr.bf16.mxu0 0
        %1538 = vmatmul.mubr.bf16.gmra.mrb[0].mxu0 %v1497
        %v1539 = vpop.f32.mrb[0].mxu0
        %v1540 = vadd.f32 0.0, %v1539
        %v1541 = vpop.f32.mrb[0].mxu0
        %v1542 = vpop.f32.mrb[0].mxu0
        %v1543 = vadd.f32 0.0, %v1542
        %v1544 = vpop.f32.mrb[0].mxu0
        %1545 = vmatprep.mubr.bf16.mxu0 0
        %1546 = vmatmul.mubr.bf16.gmra.mrb[0].mxu0 %v1500
        %v1547 = vpop.f32.mrb[0].mxu0
        %v1548 = vadd.f32 0.0, %v1547
        %v1549 = vpop.f32.mrb[0].mxu0
        %v1550 = vpop.f32.mrb[0].mxu0
        %v1551 = vadd.f32 0.0, %v1550
        %v1552 = vpop.f32.mrb[0].mxu0
        %1553 = vmatprep.mubr.bf16.mxu0 0
        %1554 = vmatmul.mubr.bf16.gmra.mrb[0].mxu0 %v1503
        %v1555 = vpop.f32.mrb[0].mxu0
        %v1556 = vadd.f32 0.0, %v1555
        %v1557 = vpop.f32.mrb[0].mxu0
        %v1558 = vpop.f32.mrb[0].mxu0
        %v1559 = vpop.f32.mrb[0].mxu0
        %1560 = vdwg.mxu0
        %v1561 = vadd.f32 %v1445, %v1540
        %v1562 = vadd.f32 %v1446, %v1543
        %v1563 = vadd.f32 %v1447, %v1548
        %v1564 = vadd.f32 %v1448, %v1551
        %v1565 = vadd.f32 %v1449, %v1556
        %s1566 = scalar_lea.vmem [#allocation2], 20
        %v1567 = vld [vmem:[%s1566] ss:$2 sm:$0xff]
        %s1568 = scalar_lea.vmem [#allocation2], 36
        %v1569 = vld [vmem:[%s1568] ss:$2 sm:$0xff]
        %s1570 = scalar_lea.vmem [#allocation2], 52
        %v1571 = vld [vmem:[%s1570] ss:$2 sm:$0xff]
        %s1572 = scalar_lea.vmem [#allocation2], 68
        %v1573 = vld [vmem:[%s1572] ss:$2 sm:$0xff]
        %s1574 = scalar_lea.vmem [#allocation2], 84
        %v1575 = vld [vmem:[%s1574] ss:$2 sm:$0xff]
        %v1576 = vpack.c.bf16 %v1569, %v1567
        %v1577 = vpack.c.bf16 %v1573, %v1571
        %v1578 = vpack.c.bf16 %v1575, %v1575
        %s1579 = scalar_lea.vmem %s3, 192
        %v1580 = vld [vmem:[%s1579] sm:$0xf]
        %v1581 = vld [vmem:[%s1579 + $0x4] sm:$0xf]
        %v1582 = vld [vmem:[%s1579 + $0x8] sm:$0xf]
        %v1583 = vld [vmem:[%s1579 + $0xc] sm:$0xf]
        %v1584 = vld [vmem:[%s1579 + $0x10] sm:$0xf]
        %v1585 = vld [vmem:[%s1579 + $0x14] sm:$0xf]
        %v1586 = vld [vmem:[%s1579 + $0x18] sm:$0xf]
        %v1587 = vld [vmem:[%s1579 + $0x1c] sm:$0xf]
        %v1596 = vunpack.c.l.b16 %v1580
        %v1597 = vunpack.c.l.b16 %v1581
        %v1598 = vunpack.c.l.b16 %v1582
        %v1599 = vunpack.c.l.b16 %v1583
        %v1600 = vunpack.c.l.b16 %v1584
        %v1601 = vunpack.c.l.b16 %v1585
        %v1602 = vunpack.c.l.b16 %v1586
        %v1603 = vunpack.c.l.b16 %v1587
        %v1604 = vpack.c.b16 %v1597, %v1596
        %v1605 = vpack.c.b16 %v1599, %v1598
        %v1606 = vpack.c.b16 %v1601, %v1600
        %v1607 = vpack.c.b16 %v1603, %v1602
        %v1613 = vsel %vm387, %v1576, 0
        %v1616 = vsel %vm387, %v1577, 0
        %v1619 = vsel %vm387, %v1578, 0
        %1621 = vmatprep.subr.bf16.mxu0 0
        %1622 = vmatpush1.bf16.msra.mxu0 %v1604
        %1623 = vmatprep.subr.bf16.mxu0 0
        %1624 = vmatpush1.bf16.msra.mxu0 %v1605
        %1625 = vmatprep.subr.bf16.mxu0 0
        %1626 = vmatpush1.bf16.msra.mxu0 %v1606
        %1627 = vmatprep.subr.bf16.mxu0 0
        %1628 = vmatpush1.bf16.msra.mxu0 %v1607
        %1629 = vmatprep.subr.bf16.mxu0 0
        %1630 = vmatpush1.bf16.msra.mxu0 0
        %1631 = vmatprep.subr.bf16.mxu0 0
        %1632 = vmatpush1.bf16.msra.mxu0 0
        %1633 = vmatprep.subr.bf16.mxu0 0
        %1634 = vmatpush1.bf16.msra.mxu0 0
        %1635 = vmatprep.subr.bf16.mxu0 0
        %1636 = vmatpush1.bf16.msra.mxu0 0
        %1637 = vmatprep.subr.bf16.mxu0 0
        %1638 = vmatpush1.bf16.msra.mxu0 0
        %1639 = vmatprep.subr.bf16.mxu0 0
        %1640 = vmatpush1.bf16.msra.mxu0 0
        %1641 = vmatprep.subr.bf16.mxu0 0
        %1642 = vmatpush1.bf16.msra.mxu0 0
        %1643 = vmatprep.subr.bf16.mxu0 0
        %1644 = vmatpush1.bf16.msra.mxu0 0
        %1645 = vmatprep.subr.bf16.mxu0 0
        %1646 = vmatpush1.bf16.msra.mxu0 0
        %1647 = vmatprep.subr.bf16.mxu0 0
        %1648 = vmatpush1.bf16.msra.mxu0 0
        %1649 = vmatprep.subr.bf16.mxu0 0
        %1650 = vmatpush1.bf16.msra.mxu0 0
        %1651 = vmatprep.subr.bf16.mxu0 0
        %1652 = vmatpush1.bf16.msra.mxu0 0
        %1653 = vmatprep.mubr.bf16.mxu0 0
        %1654 = vmatmul.mubr.bf16.gmra.mrb[0].mxu0 %v1613
        %v1655 = vpop.f32.mrb[0].mxu0
        %v1656 = vadd.f32 0.0, %v1655
        %v1657 = vpop.f32.mrb[0].mxu0
        %v1658 = vpop.f32.mrb[0].mxu0
        %v1659 = vadd.f32 0.0, %v1658
        %v1660 = vpop.f32.mrb[0].mxu0
        %1661 = vmatprep.mubr.bf16.mxu0 0
        %1662 = vmatmul.mubr.bf16.gmra.mrb[0].mxu0 %v1616
        %v1663 = vpop.f32.mrb[0].mxu0
        %v1664 = vadd.f32 0.0, %v1663
        %v1665 = vpop.f32.mrb[0].mxu0
        %v1666 = vpop.f32.mrb[0].mxu0
        %v1667 = vadd.f32 0.0, %v1666
        %v1668 = vpop.f32.mrb[0].mxu0
        %1669 = vmatprep.mubr.bf16.mxu0 0
        %1670 = vmatmul.mubr.bf16.gmra.mrb[0].mxu0 %v1619
        %v1671 = vpop.f32.mrb[0].mxu0
        %v1672 = vadd.f32 0.0, %v1671
        %v1673 = vpop.f32.mrb[0].mxu0
        %v1674 = vpop.f32.mrb[0].mxu0
        %v1675 = vpop.f32.mrb[0].mxu0
        %1676 = vdwg.mxu0
        %v1677 = vadd.f32 %v1561, %v1656
        %v1678 = vadd.f32 %v1562, %v1659
        %v1679 = vadd.f32 %v1563, %v1664
        %v1680 = vadd.f32 %v1564, %v1667
        %v1681 = vadd.f32 %v1565, %v1672
        %s1682 = scalar_lea.vmem [#allocation2], 21
        %v1683 = vld [vmem:[%s1682] ss:$2 sm:$0xff]
        %s1684 = scalar_lea.vmem [#allocation2], 37
        %v1685 = vld [vmem:[%s1684] ss:$2 sm:$0xff]
        %s1686 = scalar_lea.vmem [#allocation2], 53
        %v1687 = vld [vmem:[%s1686] ss:$2 sm:$0xff]
        %s1688 = scalar_lea.vmem [#allocation2], 69
        %v1689 = vld [vmem:[%s1688] ss:$2 sm:$0xff]
        %s1690 = scalar_lea.vmem [#allocation2], 85
        %v1691 = vld [vmem:[%s1690] ss:$2 sm:$0xff]
        %v1692 = vpack.c.bf16 %v1685, %v1683
        %v1693 = vpack.c.bf16 %v1689, %v1687
        %v1694 = vpack.c.bf16 %v1691, %v1691
        %s1695 = scalar_lea.vmem %s3, 224
        %v1696 = vld [vmem:[%s1695] sm:$0xf]
        %v1697 = vld [vmem:[%s1695 + $0x4] sm:$0xf]
        %v1698 = vld [vmem:[%s1695 + $0x8] sm:$0xf]
        %v1699 = vld [vmem:[%s1695 + $0xc] sm:$0xf]
        %v1700 = vld [vmem:[%s1695 + $0x10] sm:$0xf]
        %v1701 = vld [vmem:[%s1695 + $0x14] sm:$0xf]
        %v1702 = vld [vmem:[%s1695 + $0x18] sm:$0xf]
        %v1703 = vld [vmem:[%s1695 + $0x1c] sm:$0xf]
        %v1712 = vunpack.c.l.b16 %v1696
        %v1713 = vunpack.c.l.b16 %v1697
        %v1714 = vunpack.c.l.b16 %v1698
        %v1715 = vunpack.c.l.b16 %v1699
        %v1716 = vunpack.c.l.b16 %v1700
        %v1717 = vunpack.c.l.b16 %v1701
        %v1718 = vunpack.c.l.b16 %v1702
        %v1719 = vunpack.c.l.b16 %v1703
        %v1720 = vpack.c.b16 %v1713, %v1712
        %v1721 = vpack.c.b16 %v1715, %v1714
        %v1722 = vpack.c.b16 %v1717, %v1716
        %v1723 = vpack.c.b16 %v1719, %v1718
        %v1729 = vsel %vm387, %v1692, 0
        %v1732 = vsel %vm387, %v1693, 0
        %v1735 = vsel %vm387, %v1694, 0
        %1737 = vmatprep.subr.bf16.mxu0 0
        %1738 = vmatpush1.bf16.msra.mxu0 %v1720
        %1739 = vmatprep.subr.bf16.mxu0 0
        %1740 = vmatpush1.bf16.msra.mxu0 %v1721
        %1741 = vmatprep.subr.bf16.mxu0 0
        %1742 = vmatpush1.bf16.msra.mxu0 %v1722
        %1743 = vmatprep.subr.bf16.mxu0 0
        %1744 = vmatpush1.bf16.msra.mxu0 %v1723
        %1745 = vmatprep.subr.bf16.mxu0 0
        %1746 = vmatpush1.bf16.msra.mxu0 0
        %1747 = vmatprep.subr.bf16.mxu0 0
        %1748 = vmatpush1.bf16.msra.mxu0 0
        %1749 = vmatprep.subr.bf16.mxu0 0
        %1750 = vmatpush1.bf16.msra.mxu0 0
        %1751 = vmatprep.subr.bf16.mxu0 0
        %1752 = vmatpush1.bf16.msra.mxu0 0
        %1753 = vmatprep.subr.bf16.mxu0 0
        %1754 = vmatpush1.bf16.msra.mxu0 0
        %1755 = vmatprep.subr.bf16.mxu0 0
        %1756 = vmatpush1.bf16.msra.mxu0 0
        %1757 = vmatprep.subr.bf16.mxu0 0
        %1758 = vmatpush1.bf16.msra.mxu0 0
        %1759 = vmatprep.subr.bf16.mxu0 0
        %1760 = vmatpush1.bf16.msra.mxu0 0
        %1761 = vmatprep.subr.bf16.mxu0 0
        %1762 = vmatpush1.bf16.msra.mxu0 0
        %1763 = vmatprep.subr.bf16.mxu0 0
        %1764 = vmatpush1.bf16.msra.mxu0 0
        %1765 = vmatprep.subr.bf16.mxu0 0
        %1766 = vmatpush1.bf16.msra.mxu0 0
        %1767 = vmatprep.subr.bf16.mxu0 0
        %1768 = vmatpush1.bf16.msra.mxu0 0
        %1769 = vmatprep.mubr.bf16.mxu0 0
        %1770 = vmatmul.mubr.bf16.gmra.mrb[0].mxu0 %v1729
        %v1771 = vpop.f32.mrb[0].mxu0
        %v1772 = vadd.f32 0.0, %v1771
        %v1773 = vpop.f32.mrb[0].mxu0
        %v1774 = vpop.f32.mrb[0].mxu0
        %v1775 = vadd.f32 0.0, %v1774
        %v1776 = vpop.f32.mrb[0].mxu0
        %1777 = vmatprep.mubr.bf16.mxu0 0
        %1778 = vmatmul.mubr.bf16.gmra.mrb[0].mxu0 %v1732
        %v1779 = vpop.f32.mrb[0].mxu0
        %v1780 = vadd.f32 0.0, %v1779
        %v1781 = vpop.f32.mrb[0].mxu0
        %v1782 = vpop.f32.mrb[0].mxu0
        %v1783 = vadd.f32 0.0, %v1782
        %v1784 = vpop.f32.mrb[0].mxu0
        %1785 = vmatprep.mubr.bf16.mxu0 0
        %1786 = vmatmul.mubr.bf16.gmra.mrb[0].mxu0 %v1735
        %v1787 = vpop.f32.mrb[0].mxu0
        %v1788 = vadd.f32 0.0, %v1787
        %v1789 = vpop.f32.mrb[0].mxu0
        %v1790 = vpop.f32.mrb[0].mxu0
        %v1791 = vpop.f32.mrb[0].mxu0
        %1792 = vdwg.mxu0
        %v1793 = vadd.f32 %v1677, %v1772
        %v1794 = vadd.f32 %v1678, %v1775
        %v1795 = vadd.f32 %v1679, %v1780
        %v1796 = vadd.f32 %v1680, %v1783
        %v1797 = vadd.f32 %v1681, %v1788
        %s1798 = scalar_lea.vmem [#allocation2], 22
        %v1799 = vld [vmem:[%s1798] ss:$2 sm:$0xff]
        %s1800 = scalar_lea.vmem [#allocation2], 38
        %v1801 = vld [vmem:[%s1800] ss:$2 sm:$0xff]
        %s1802 = scalar_lea.vmem [#allocation2], 54
        %v1803 = vld [vmem:[%s1802] ss:$2 sm:$0xff]
        %s1804 = scalar_lea.vmem [#allocation2], 70
        %v1805 = vld [vmem:[%s1804] ss:$2 sm:$0xff]
        %s1806 = scalar_lea.vmem [#allocation2], 86
        %v1807 = vld [vmem:[%s1806] ss:$2 sm:$0xff]
        %v1808 = vpack.c.bf16 %v1801, %v1799
        %v1809 = vpack.c.bf16 %v1805, %v1803
        %v1810 = vpack.c.bf16 %v1807, %v1807
        %s1811 = scalar_lea.vmem %s3, 256
        %v1812 = vld [vmem:[%s1811] sm:$0xf]
        %v1813 = vld [vmem:[%s1811 + $0x4] sm:$0xf]
        %v1814 = vld [vmem:[%s1811 + $0x8] sm:$0xf]
        %v1815 = vld [vmem:[%s1811 + $0xc] sm:$0xf]
        %v1816 = vld [vmem:[%s1811 + $0x10] sm:$0xf]
        %v1817 = vld [vmem:[%s1811 + $0x14] sm:$0xf]
        %v1818 = vld [vmem:[%s1811 + $0x18] sm:$0xf]
        %v1819 = vld [vmem:[%s1811 + $0x1c] sm:$0xf]
        %v1828 = vunpack.c.l.b16 %v1812
        %v1829 = vunpack.c.l.b16 %v1813
        %v1830 = vunpack.c.l.b16 %v1814
        %v1831 = vunpack.c.l.b16 %v1815
        %v1832 = vunpack.c.l.b16 %v1816
        %v1833 = vunpack.c.l.b16 %v1817
        %v1834 = vunpack.c.l.b16 %v1818
        %v1835 = vunpack.c.l.b16 %v1819
        %v1836 = vpack.c.b16 %v1829, %v1828
        %v1837 = vpack.c.b16 %v1831, %v1830
        %v1838 = vpack.c.b16 %v1833, %v1832
        %v1839 = vpack.c.b16 %v1835, %v1834
        %v1845 = vsel %vm387, %v1808, 0
        %v1848 = vsel %vm387, %v1809, 0
        %v1851 = vsel %vm387, %v1810, 0
        %1853 = vmatprep.subr.bf16.mxu0 0
        %1854 = vmatpush1.bf16.msra.mxu0 %v1836
        %1855 = vmatprep.subr.bf16.mxu0 0
        %1856 = vmatpush1.bf16.msra.mxu0 %v1837
        %1857 = vmatprep.subr.bf16.mxu0 0
        %1858 = vmatpush1.bf16.msra.mxu0 %v1838
        %1859 = vmatprep.subr.bf16.mxu0 0
        %1860 = vmatpush1.bf16.msra.mxu0 %v1839
        %1861 = vmatprep.subr.bf16.mxu0 0
        %1862 = vmatpush1.bf16.msra.mxu0 0
        %1863 = vmatprep.subr.bf16.mxu0 0
        %1864 = vmatpush1.bf16.msra.mxu0 0
        %1865 = vmatprep.subr.bf16.mxu0 0
        %1866 = vmatpush1.bf16.msra.mxu0 0
        %1867 = vmatprep.subr.bf16.mxu0 0
        %1868 = vmatpush1.bf16.msra.mxu0 0
        %1869 = vmatprep.subr.bf16.mxu0 0
        %1870 = vmatpush1.bf16.msra.mxu0 0
        %1871 = vmatprep.subr.bf16.mxu0 0
        %1872 = vmatpush1.bf16.msra.mxu0 0
        %1873 = vmatprep.subr.bf16.mxu0 0
        %1874 = vmatpush1.bf16.msra.mxu0 0
        %1875 = vmatprep.subr.bf16.mxu0 0
        %1876 = vmatpush1.bf16.msra.mxu0 0
        %1877 = vmatprep.subr.bf16.mxu0 0
        %1878 = vmatpush1.bf16.msra.mxu0 0
        %1879 = vmatprep.subr.bf16.mxu0 0
        %1880 = vmatpush1.bf16.msra.mxu0 0
        %1881 = vmatprep.subr.bf16.mxu0 0
        %1882 = vmatpush1.bf16.msra.mxu0 0
        %1883 = vmatprep.subr.bf16.mxu0 0
        %1884 = vmatpush1.bf16.msra.mxu0 0
        %1885 = vmatprep.mubr.bf16.mxu0 0
        %1886 = vmatmul.mubr.bf16.gmra.mrb[0].mxu0 %v1845
        %v1887 = vpop.f32.mrb[0].mxu0
        %v1888 = vadd.f32 0.0, %v1887
        %v1889 = vpop.f32.mrb[0].mxu0
        %v1890 = vpop.f32.mrb[0].mxu0
        %v1891 = vadd.f32 0.0, %v1890
        %v1892 = vpop.f32.mrb[0].mxu0
        %1893 = vmatprep.mubr.bf16.mxu0 0
        %1894 = vmatmul.mubr.bf16.gmra.mrb[0].mxu0 %v1848
        %v1895 = vpop.f32.mrb[0].mxu0
        %v1896 = vadd.f32 0.0, %v1895
        %v1897 = vpop.f32.mrb[0].mxu0
        %v1898 = vpop.f32.mrb[0].mxu0
        %v1899 = vadd.f32 0.0, %v1898
        %v1900 = vpop.f32.mrb[0].mxu0
        %1901 = vmatprep.mubr.bf16.mxu0 0
        %1902 = vmatmul.mubr.bf16.gmra.mrb[0].mxu0 %v1851
        %v1903 = vpop.f32.mrb[0].mxu0
        %v1904 = vadd.f32 0.0, %v1903
        %v1905 = vpop.f32.mrb[0].mxu0
        %v1906 = vpop.f32.mrb[0].mxu0
        %v1907 = vpop.f32.mrb[0].mxu0
        %1908 = vdwg.mxu0
        %v1909 = vadd.f32 %v1793, %v1888
        %v1910 = vadd.f32 %v1794, %v1891
        %v1911 = vadd.f32 %v1795, %v1896
        %v1912 = vadd.f32 %v1796, %v1899
        %v1913 = vadd.f32 %v1797, %v1904
        %v1915 = vlaneseq
        %v1916 = vshrl.u32 %v1915, 7
        %v1917 = vsub.s32 0, %v1916
        %v1918 = vrot.slane %v881, %v1917
        %v1920 = vadd.f32 %v1909, %v1918
        %v1921 = vadd.f32 %v1910, %v1918
        %v1922 = vadd.f32 %v1911, %v1918
        %v1923 = vadd.f32 %v1912, %v1918
        %v1924 = vadd.f32 %v1913, %v1918
        %v1925 = vmax.f32 %v1920, 0.0
        %v1926 = vmax.f32 %v1921, 0.0
        %v1927 = vmax.f32 %v1922, 0.0
        %v1928 = vmax.f32 %v1923, 0.0
        %v1929 = vmax.f32 %v1924, 0.0
        %1930 = vmatprep.subr.bf16.mxu0 0
        %1931 = vmatpush1.bf16.msra.mxu0 %v940
        %1932 = vmatprep.subr.bf16.mxu0 0
        %1933 = vmatpush1.bf16.msra.mxu0 %v941
        %1934 = vmatprep.subr.bf16.mxu0 0
        %1935 = vmatpush1.bf16.msra.mxu0 %v942
        %1936 = vmatprep.subr.bf16.mxu0 0
        %1937 = vmatpush1.bf16.msra.mxu0 %v943
        %1938 = vmatprep.subr.bf16.mxu0 0
        %1939 = vmatpush1.bf16.msra.mxu0 0
        %1940 = vmatprep.subr.bf16.mxu0 0
        %1941 = vmatpush1.bf16.msra.mxu0 0
        %1942 = vmatprep.subr.bf16.mxu0 0
        %1943 = vmatpush1.bf16.msra.mxu0 0
        %1944 = vmatprep.subr.bf16.mxu0 0
        %1945 = vmatpush1.bf16.msra.mxu0 0
        %1946 = vmatprep.subr.bf16.mxu0 0
        %1947 = vmatpush1.bf16.msra.mxu0 0
        %1948 = vmatprep.subr.bf16.mxu0 0
        %1949 = vmatpush1.bf16.msra.mxu0 0
        %1950 = vmatprep.subr.bf16.mxu0 0
        %1951 = vmatpush1.bf16.msra.mxu0 0
        %1952 = vmatprep.subr.bf16.mxu0 0
        %1953 = vmatpush1.bf16.msra.mxu0 0
        %1954 = vmatprep.subr.bf16.mxu0 0
        %1955 = vmatpush1.bf16.msra.mxu0 0
        %1956 = vmatprep.subr.bf16.mxu0 0
        %1957 = vmatpush1.bf16.msra.mxu0 0
        %1958 = vmatprep.subr.bf16.mxu0 0
        %1959 = vmatpush1.bf16.msra.mxu0 0
        %1960 = vmatprep.subr.bf16.mxu0 0
        %1961 = vmatpush1.bf16.msra.mxu0 0
        %1962 = vmatprep.mubr.bf16.mxu0 0
        %1963 = vmatmul.mubr.bf16.gmra.mrb[0].mxu0 %v1149
        %v1964 = vpop.f32.mrb[0].mxu0
        %v1965 = vadd.f32 0.0, %v1964
        %v1966 = vpop.f32.mrb[0].mxu0
        %v1967 = vpop.f32.mrb[0].mxu0
        %v1968 = vadd.f32 0.0, %v1967
        %v1969 = vpop.f32.mrb[0].mxu0
        %1970 = vmatprep.mubr.bf16.mxu0 0
        %1971 = vmatmul.mubr.bf16.gmra.mrb[0].mxu0 %v1152
        %v1972 = vpop.f32.mrb[0].mxu0
        %v1973 = vadd.f32 0.0, %v1972
        %v1974 = vpop.f32.mrb[0].mxu0
        %v1975 = vpop.f32.mrb[0].mxu0
        %v1976 = vadd.f32 0.0, %v1975
        %v1977 = vpop.f32.mrb[0].mxu0
        %1978 = vmatprep.mubr.bf16.mxu0 0
        %1979 = vmatmul.mubr.bf16.gmra.mrb[0].mxu0 %v1155
        %v1980 = vpop.f32.mrb[0].mxu0
        %v1981 = vadd.f32 0.0, %v1980
        %v1982 = vpop.f32.mrb[0].mxu0
        %v1983 = vpop.f32.mrb[0].mxu0
        %v1984 = vpop.f32.mrb[0].mxu0
        %1985 = vdwg.mxu0
        %1986 = vmatprep.subr.bf16.mxu0 0
        %1987 = vmatpush1.bf16.msra.mxu0 %v1029
        %1988 = vmatprep.subr.bf16.mxu0 0
        %1989 = vmatpush1.bf16.msra.mxu0 %v1030
        %1990 = vmatprep.subr.bf16.mxu0 0
        %1991 = vmatpush1.bf16.msra.mxu0 %v1031
        %1992 = vmatprep.subr.bf16.mxu0 0
        %1993 = vmatpush1.bf16.msra.mxu0 %v1032
        %1994 = vmatprep.subr.bf16.mxu0 0
        %1995 = vmatpush1.bf16.msra.mxu0 0
        %1996 = vmatprep.subr.bf16.mxu0 0
        %1997 = vmatpush1.bf16.msra.mxu0 0
        %1998 = vmatprep.subr.bf16.mxu0 0
        %1999 = vmatpush1.bf16.msra.mxu0 0
        %2000 = vmatprep.subr.bf16.mxu0 0
        %2001 = vmatpush1.bf16.msra.mxu0 0
        %2002 = vmatprep.subr.bf16.mxu0 0
        %2003 = vmatpush1.bf16.msra.mxu0 0
        %2004 = vmatprep.subr.bf16.mxu0 0
        %2005 = vmatpush1.bf16.msra.mxu0 0
        %2006 = vmatprep.subr.bf16.mxu0 0
        %2007 = vmatpush1.bf16.msra.mxu0 0
        %2008 = vmatprep.subr.bf16.mxu0 0
        %2009 = vmatpush1.bf16.msra.mxu0 0
        %2010 = vmatprep.subr.bf16.mxu0 0
        %2011 = vmatpush1.bf16.msra.mxu0 0
        %2012 = vmatprep.subr.bf16.mxu0 0
        %2013 = vmatpush1.bf16.msra.mxu0 0
        %2014 = vmatprep.subr.bf16.mxu0 0
        %2015 = vmatpush1.bf16.msra.mxu0 0
        %2016 = vmatprep.subr.bf16.mxu0 0
        %2017 = vmatpush1.bf16.msra.mxu0 0
        %2018 = vmatprep.mubr.bf16.mxu0 0
        %2019 = vmatmul.mubr.bf16.gmra.mrb[0].mxu0 %v949
        %v2020 = vpop.f32.mrb[0].mxu0
        %v2021 = vadd.f32 %v1965, %v2020
        %v2022 = vpop.f32.mrb[0].mxu0
        %v2023 = vpop.f32.mrb[0].mxu0
        %v2024 = vadd.f32 %v1968, %v2023
        %v2025 = vpop.f32.mrb[0].mxu0
        %2026 = vmatprep.mubr.bf16.mxu0 0
        %2027 = vmatmul.mubr.bf16.gmra.mrb[0].mxu0 %v952
        %v2028 = vpop.f32.mrb[0].mxu0
        %v2029 = vadd.f32 %v1973, %v2028
        %v2030 = vpop.f32.mrb[0].mxu0
        %v2031 = vpop.f32.mrb[0].mxu0
        %v2032 = vadd.f32 %v1976, %v2031
        %v2033 = vpop.f32.mrb[0].mxu0
        %2034 = vmatprep.mubr.bf16.mxu0 0
        %2035 = vmatmul.mubr.bf16.gmra.mrb[0].mxu0 %v955
        %v2036 = vpop.f32.mrb[0].mxu0
        %v2037 = vadd.f32 %v1981, %v2036
        %v2038 = vpop.f32.mrb[0].mxu0
        %v2039 = vpop.f32.mrb[0].mxu0
        %v2040 = vpop.f32.mrb[0].mxu0
        %2041 = vdwg.mxu0
        %s2042 = scalar_lea.vmem [#allocation2], 3
        %v2043 = vld [vmem:[%s2042] ss:$2 sm:$0xff]
        %s2044 = scalar_lea.vmem [#allocation2], 19
        %v2045 = vld [vmem:[%s2044] ss:$2 sm:$0xff]
        %s2046 = scalar_lea.vmem [#allocation2], 35
        %v2047 = vld [vmem:[%s2046] ss:$2 sm:$0xff]
        %s2048 = scalar_lea.vmem [#allocation2], 51
        %v2049 = vld [vmem:[%s2048] ss:$2 sm:$0xff]
        %s2050 = scalar_lea.vmem [#allocation2], 67
        %v2051 = vld [vmem:[%s2050] ss:$2 sm:$0xff]
        %v2052 = vpack.c.bf16 %v2045, %v2043
        %v2053 = vpack.c.bf16 %v2049, %v2047
        %v2054 = vpack.c.bf16 %v2051, %v2051
        %v2056 = vsel %vm387, %v2052, 0
        %v2059 = vsel %vm387, %v2053, 0
        %v2062 = vsel %vm387, %v2054, 0
        %2064 = vmatprep.subr.bf16.mxu0 0
        %2065 = vmatpush1.bf16.msra.mxu0 %v1140
        %2066 = vmatprep.subr.bf16.mxu0 0
        %2067 = vmatpush1.bf16.msra.mxu0 %v1141
        %2068 = vmatprep.subr.bf16.mxu0 0
        %2069 = vmatpush1.bf16.msra.mxu0 %v1142
        %2070 = vmatprep.subr.bf16.mxu0 0
        %2071 = vmatpush1.bf16.msra.mxu0 %v1143
        %2072 = vmatprep.subr.bf16.mxu0 0
        %2073 = vmatpush1.bf16.msra.mxu0 0
        %2074 = vmatprep.subr.bf16.mxu0 0
        %2075 = vmatpush1.bf16.msra.mxu0 0
        %2076 = vmatprep.subr.bf16.mxu0 0
        %2077 = vmatpush1.bf16.msra.mxu0 0
        %2078 = vmatprep.subr.bf16.mxu0 0
        %2079 = vmatpush1.bf16.msra.mxu0 0
        %2080 = vmatprep.subr.bf16.mxu0 0
        %2081 = vmatpush1.bf16.msra.mxu0 0
        %2082 = vmatprep.subr.bf16.mxu0 0
        %2083 = vmatpush1.bf16.msra.mxu0 0
        %2084 = vmatprep.subr.bf16.mxu0 0
        %2085 = vmatpush1.bf16.msra.mxu0 0
        %2086 = vmatprep.subr.bf16.mxu0 0
        %2087 = vmatpush1.bf16.msra.mxu0 0
        %2088 = vmatprep.subr.bf16.mxu0 0
        %2089 = vmatpush1.bf16.msra.mxu0 0
        %2090 = vmatprep.subr.bf16.mxu0 0
        %2091 = vmatpush1.bf16.msra.mxu0 0
        %2092 = vmatprep.subr.bf16.mxu0 0
        %2093 = vmatpush1.bf16.msra.mxu0 0
        %2094 = vmatprep.subr.bf16.mxu0 0
        %2095 = vmatpush1.bf16.msra.mxu0 0
        %2096 = vmatprep.mubr.bf16.mxu0 0
        %2097 = vmatmul.mubr.bf16.gmra.mrb[0].mxu0 %v2056
        %v2098 = vpop.f32.mrb[0].mxu0
        %v2099 = vadd.f32 0.0, %v2098
        %v2100 = vpop.f32.mrb[0].mxu0
        %v2101 = vpop.f32.mrb[0].mxu0
        %v2102 = vadd.f32 0.0, %v2101
        %v2103 = vpop.f32.mrb[0].mxu0
        %2104 = vmatprep.mubr.bf16.mxu0 0
        %2105 = vmatmul.mubr.bf16.gmra.mrb[0].mxu0 %v2059
        %v2106 = vpop.f32.mrb[0].mxu0
        %v2107 = vadd.f32 0.0, %v2106
        %v2108 = vpop.f32.mrb[0].mxu0
        %v2109 = vpop.f32.mrb[0].mxu0
        %v2110 = vadd.f32 0.0, %v2109
        %v2111 = vpop.f32.mrb[0].mxu0
        %2112 = vmatprep.mubr.bf16.mxu0 0
        %2113 = vmatmul.mubr.bf16.gmra.mrb[0].mxu0 %v2062
        %v2114 = vpop.f32.mrb[0].mxu0
        %v2115 = vadd.f32 0.0, %v2114
        %v2116 = vpop.f32.mrb[0].mxu0
        %v2117 = vpop.f32.mrb[0].mxu0
        %v2118 = vpop.f32.mrb[0].mxu0
        %2119 = vdwg.mxu0
        %v2120 = vadd.f32 %v2021, %v2099
        %v2121 = vadd.f32 %v2024, %v2102
        %v2122 = vadd.f32 %v2029, %v2107
        %v2123 = vadd.f32 %v2032, %v2110
        %v2124 = vadd.f32 %v2037, %v2115
        %2125 = vmatprep.subr.bf16.mxu0 0
        %2126 = vmatpush1.bf16.msra.mxu0 %v1256
        %2127 = vmatprep.subr.bf16.mxu0 0
        %2128 = vmatpush1.bf16.msra.mxu0 %v1257
        %2129 = vmatprep.subr.bf16.mxu0 0
        %2130 = vmatpush1.bf16.msra.mxu0 %v1258
        %2131 = vmatprep.subr.bf16.mxu0 0
        %2132 = vmatpush1.bf16.msra.mxu0 %v1259
        %2133 = vmatprep.subr.bf16.mxu0 0
        %2134 = vmatpush1.bf16.msra.mxu0 0
        %2135 = vmatprep.subr.bf16.mxu0 0
        %2136 = vmatpush1.bf16.msra.mxu0 0
        %2137 = vmatprep.subr.bf16.mxu0 0
        %2138 = vmatpush1.bf16.msra.mxu0 0
        %2139 = vmatprep.subr.bf16.mxu0 0
        %2140 = vmatpush1.bf16.msra.mxu0 0
        %2141 = vmatprep.subr.bf16.mxu0 0
        %2142 = vmatpush1.bf16.msra.mxu0 0
        %2143 = vmatprep.subr.bf16.mxu0 0
        %2144 = vmatpush1.bf16.msra.mxu0 0
        %2145 = vmatprep.subr.bf16.mxu0 0
        %2146 = vmatpush1.bf16.msra.mxu0 0
        %2147 = vmatprep.subr.bf16.mxu0 0
        %2148 = vmatpush1.bf16.msra.mxu0 0
        %2149 = vmatprep.subr.bf16.mxu0 0
        %2150 = vmatpush1.bf16.msra.mxu0 0
        %2151 = vmatprep.subr.bf16.mxu0 0
        %2152 = vmatpush1.bf16.msra.mxu0 0
        %2153 = vmatprep.subr.bf16.mxu0 0
        %2154 = vmatpush1.bf16.msra.mxu0 0
        %2155 = vmatprep.subr.bf16.mxu0 0
        %2156 = vmatpush1.bf16.msra.mxu0 0
        %2157 = vmatprep.mubr.bf16.mxu0 0
        %2158 = vmatmul.mubr.bf16.gmra.mrb[0].mxu0 %v1381
        %v2159 = vpop.f32.mrb[0].mxu0
        %v2160 = vadd.f32 0.0, %v2159
        %v2161 = vpop.f32.mrb[0].mxu0
        %v2162 = vpop.f32.mrb[0].mxu0
        %v2163 = vadd.f32 0.0, %v2162
        %v2164 = vpop.f32.mrb[0].mxu0
        %2165 = vmatprep.mubr.bf16.mxu0 0
        %2166 = vmatmul.mubr.bf16.gmra.mrb[0].mxu0 %v1384
        %v2167 = vpop.f32.mrb[0].mxu0
        %v2168 = vadd.f32 0.0, %v2167
        %v2169 = vpop.f32.mrb[0].mxu0
        %v2170 = vpop.f32.mrb[0].mxu0
        %v2171 = vadd.f32 0.0, %v2170
        %v2172 = vpop.f32.mrb[0].mxu0
        %2173 = vmatprep.mubr.bf16.mxu0 0
        %2174 = vmatmul.mubr.bf16.gmra.mrb[0].mxu0 %v1387
        %v2175 = vpop.f32.mrb[0].mxu0
        %v2176 = vadd.f32 0.0, %v2175
        %v2177 = vpop.f32.mrb[0].mxu0
        %v2178 = vpop.f32.mrb[0].mxu0
        %v2179 = vpop.f32.mrb[0].mxu0
        %2180 = vdwg.mxu0
        %v2181 = vadd.f32 %v2120, %v2160
        %v2182 = vadd.f32 %v2121, %v2163
        %v2183 = vadd.f32 %v2122, %v2168
        %v2184 = vadd.f32 %v2123, %v2171
        %v2185 = vadd.f32 %v2124, %v2176
        %2186 = vmatprep.subr.bf16.mxu0 0
        %2187 = vmatpush1.bf16.msra.mxu0 %v1372
        %2188 = vmatprep.subr.bf16.mxu0 0
        %2189 = vmatpush1.bf16.msra.mxu0 %v1373
        %2190 = vmatprep.subr.bf16.mxu0 0
        %2191 = vmatpush1.bf16.msra.mxu0 %v1374
        %2192 = vmatprep.subr.bf16.mxu0 0
        %2193 = vmatpush1.bf16.msra.mxu0 %v1375
        %2194 = vmatprep.subr.bf16.mxu0 0
        %2195 = vmatpush1.bf16.msra.mxu0 0
        %2196 = vmatprep.subr.bf16.mxu0 0
        %2197 = vmatpush1.bf16.msra.mxu0 0
        %2198 = vmatprep.subr.bf16.mxu0 0
        %2199 = vmatpush1.bf16.msra.mxu0 0
        %2200 = vmatprep.subr.bf16.mxu0 0
        %2201 = vmatpush1.bf16.msra.mxu0 0
        %2202 = vmatprep.subr.bf16.mxu0 0
        %2203 = vmatpush1.bf16.msra.mxu0 0
        %2204 = vmatprep.subr.bf16.mxu0 0
        %2205 = vmatpush1.bf16.msra.mxu0 0
        %2206 = vmatprep.subr.bf16.mxu0 0
        %2207 = vmatpush1.bf16.msra.mxu0 0
        %2208 = vmatprep.subr.bf16.mxu0 0
        %2209 = vmatpush1.bf16.msra.mxu0 0
        %2210 = vmatprep.subr.bf16.mxu0 0
        %2211 = vmatpush1.bf16.msra.mxu0 0
        %2212 = vmatprep.subr.bf16.mxu0 0
        %2213 = vmatpush1.bf16.msra.mxu0 0
        %2214 = vmatprep.subr.bf16.mxu0 0
        %2215 = vmatpush1.bf16.msra.mxu0 0
        %2216 = vmatprep.subr.bf16.mxu0 0
        %2217 = vmatpush1.bf16.msra.mxu0 0
        %2218 = vmatprep.mubr.bf16.mxu0 0
        %2219 = vmatmul.mubr.bf16.gmra.mrb[0].mxu0 %v1497
        %v2220 = vpop.f32.mrb[0].mxu0
        %v2221 = vadd.f32 0.0, %v2220
        %v2222 = vpop.f32.mrb[0].mxu0
        %v2223 = vpop.f32.mrb[0].mxu0
        %v2224 = vadd.f32 0.0, %v2223
        %v2225 = vpop.f32.mrb[0].mxu0
        %2226 = vmatprep.mubr.bf16.mxu0 0
        %2227 = vmatmul.mubr.bf16.gmra.mrb[0].mxu0 %v1500
        %v2228 = vpop.f32.mrb[0].mxu0
        %v2229 = vadd.f32 0.0, %v2228
        %v2230 = vpop.f32.mrb[0].mxu0
        %v2231 = vpop.f32.mrb[0].mxu0
        %v2232 = vadd.f32 0.0, %v2231
        %v2233 = vpop.f32.mrb[0].mxu0
        %2234 = vmatprep.mubr.bf16.mxu0 0
        %2235 = vmatmul.mubr.bf16.gmra.mrb[0].mxu0 %v1503
        %v2236 = vpop.f32.mrb[0].mxu0
        %v2237 = vadd.f32 0.0, %v2236
        %v2238 = vpop.f32.mrb[0].mxu0
        %v2239 = vpop.f32.mrb[0].mxu0
        %v2240 = vpop.f32.mrb[0].mxu0
        %2241 = vdwg.mxu0
        %v2242 = vadd.f32 %v2181, %v2221
        %v2243 = vadd.f32 %v2182, %v2224
        %v2244 = vadd.f32 %v2183, %v2229
        %v2245 = vadd.f32 %v2184, %v2232
        %v2246 = vadd.f32 %v2185, %v2237
        %s2247 = scalar_lea.vmem [#allocation2], 13
        %v2248 = vld [vmem:[%s2247] ss:$2 sm:$0xff]
        %s2249 = scalar_lea.vmem [#allocation2], 29
        %v2250 = vld [vmem:[%s2249] ss:$2 sm:$0xff]
        %s2251 = scalar_lea.vmem [#allocation2], 45
        %v2252 = vld [vmem:[%s2251] ss:$2 sm:$0xff]
        %s2253 = scalar_lea.vmem [#allocation2], 61
        %v2254 = vld [vmem:[%s2253] ss:$2 sm:$0xff]
        %s2255 = scalar_lea.vmem [#allocation2], 77
        %v2256 = vld [vmem:[%s2255] ss:$2 sm:$0xff]
        %v2257 = vpack.c.bf16 %v2250, %v2248
        %v2258 = vpack.c.bf16 %v2254, %v2252
        %v2259 = vpack.c.bf16 %v2256, %v2256
        %v2261 = vsel %vm387, %v2257, 0
        %v2264 = vsel %vm387, %v2258, 0
        %v2267 = vsel %vm387, %v2259, 0
        %2269 = vmatprep.subr.bf16.mxu0 0
        %2270 = vmatpush1.bf16.msra.mxu0 %v1488
        %2271 = vmatprep.subr.bf16.mxu0 0
        %2272 = vmatpush1.bf16.msra.mxu0 %v1489
        %2273 = vmatprep.subr.bf16.mxu0 0
        %2274 = vmatpush1.bf16.msra.mxu0 %v1490
        %2275 = vmatprep.subr.bf16.mxu0 0
        %2276 = vmatpush1.bf16.msra.mxu0 %v1491
        %2277 = vmatprep.subr.bf16.mxu0 0
        %2278 = vmatpush1.bf16.msra.mxu0 0
        %2279 = vmatprep.subr.bf16.mxu0 0
        %2280 = vmatpush1.bf16.msra.mxu0 0
        %2281 = vmatprep.subr.bf16.mxu0 0
        %2282 = vmatpush1.bf16.msra.mxu0 0
        %2283 = vmatprep.subr.bf16.mxu0 0
        %2284 = vmatpush1.bf16.msra.mxu0 0
        %2285 = vmatprep.subr.bf16.mxu0 0
        %2286 = vmatpush1.bf16.msra.mxu0 0
        %2287 = vmatprep.subr.bf16.mxu0 0
        %2288 = vmatpush1.bf16.msra.mxu0 0
        %2289 = vmatprep.subr.bf16.mxu0 0
        %2290 = vmatpush1.bf16.msra.mxu0 0
        %2291 = vmatprep.subr.bf16.mxu0 0
        %2292 = vmatpush1.bf16.msra.mxu0 0
        %2293 = vmatprep.subr.bf16.mxu0 0
        %2294 = vmatpush1.bf16.msra.mxu0 0
        %2295 = vmatprep.subr.bf16.mxu0 0
        %2296 = vmatpush1.bf16.msra.mxu0 0
        %2297 = vmatprep.subr.bf16.mxu0 0
        %2298 = vmatpush1.bf16.msra.mxu0 0
        %2299 = vmatprep.subr.bf16.mxu0 0
        %2300 = vmatpush1.bf16.msra.mxu0 0
        %2301 = vmatprep.mubr.bf16.mxu0 0
        %2302 = vmatmul.mubr.bf16.gmra.mrb[0].mxu0 %v2261
        %v2303 = vpop.f32.mrb[0].mxu0
        %v2304 = vadd.f32 0.0, %v2303
        %v2305 = vpop.f32.mrb[0].mxu0
        %v2306 = vpop.f32.mrb[0].mxu0
        %v2307 = vadd.f32 0.0, %v2306
        %v2308 = vpop.f32.mrb[0].mxu0
        %2309 = vmatprep.mubr.bf16.mxu0 0
        %2310 = vmatmul.mubr.bf16.gmra.mrb[0].mxu0 %v2264
        %v2311 = vpop.f32.mrb[0].mxu0
        %v2312 = vadd.f32 0.0, %v2311
        %v2313 = vpop.f32.mrb[0].mxu0
        %v2314 = vpop.f32.mrb[0].mxu0
        %v2315 = vadd.f32 0.0, %v2314
        %v2316 = vpop.f32.mrb[0].mxu0
        %2317 = vmatprep.mubr.bf16.mxu0 0
        %2318 = vmatmul.mubr.bf16.gmra.mrb[0].mxu0 %v2267
        %v2319 = vpop.f32.mrb[0].mxu0
        %v2320 = vadd.f32 0.0, %v2319
        %v2321 = vpop.f32.mrb[0].mxu0
        %v2322 = vpop.f32.mrb[0].mxu0
        %v2323 = vpop.f32.mrb[0].mxu0
        %2324 = vdwg.mxu0
        %v2325 = vadd.f32 %v2242, %v2304
        %v2326 = vadd.f32 %v2243, %v2307
        %v2327 = vadd.f32 %v2244, %v2312
        %v2328 = vadd.f32 %v2245, %v2315
        %v2329 = vadd.f32 %v2246, %v2320
        %2330 = vmatprep.subr.bf16.mxu0 0
        %2331 = vmatpush1.bf16.msra.mxu0 %v1604
        %2332 = vmatprep.subr.bf16.mxu0 0
        %2333 = vmatpush1.bf16.msra.mxu0 %v1605
        %2334 = vmatprep.subr.bf16.mxu0 0
        %2335 = vmatpush1.bf16.msra.mxu0 %v1606
        %2336 = vmatprep.subr.bf16.mxu0 0
        %2337 = vmatpush1.bf16.msra.mxu0 %v1607
        %2338 = vmatprep.subr.bf16.mxu0 0
        %2339 = vmatpush1.bf16.msra.mxu0 0
        %2340 = vmatprep.subr.bf16.mxu0 0
        %2341 = vmatpush1.bf16.msra.mxu0 0
        %2342 = vmatprep.subr.bf16.mxu0 0
        %2343 = vmatpush1.bf16.msra.mxu0 0
        %2344 = vmatprep.subr.bf16.mxu0 0
        %2345 = vmatpush1.bf16.msra.mxu0 0
        %2346 = vmatprep.subr.bf16.mxu0 0
        %2347 = vmatpush1.bf16.msra.mxu0 0
        %2348 = vmatprep.subr.bf16.mxu0 0
        %2349 = vmatpush1.bf16.msra.mxu0 0
        %2350 = vmatprep.subr.bf16.mxu0 0
        %2351 = vmatpush1.bf16.msra.mxu0 0
        %2352 = vmatprep.subr.bf16.mxu0 0
        %2353 = vmatpush1.bf16.msra.mxu0 0
        %2354 = vmatprep.subr.bf16.mxu0 0
        %2355 = vmatpush1.bf16.msra.mxu0 0
        %2356 = vmatprep.subr.bf16.mxu0 0
        %2357 = vmatpush1.bf16.msra.mxu0 0
        %2358 = vmatprep.subr.bf16.mxu0 0
        %2359 = vmatpush1.bf16.msra.mxu0 0
        %2360 = vmatprep.subr.bf16.mxu0 0
        %2361 = vmatpush1.bf16.msra.mxu0 0
        %2362 = vmatprep.mubr.bf16.mxu0 0
        %2363 = vmatmul.mubr.bf16.gmra.mrb[0].mxu0 %v1729
        %v2364 = vpop.f32.mrb[0].mxu0
        %v2365 = vadd.f32 0.0, %v2364
        %v2366 = vpop.f32.mrb[0].mxu0
        %v2367 = vpop.f32.mrb[0].mxu0
        %v2368 = vadd.f32 0.0, %v2367
        %v2369 = vpop.f32.mrb[0].mxu0
        %2370 = vmatprep.mubr.bf16.mxu0 0
        %2371 = vmatmul.mubr.bf16.gmra.mrb[0].mxu0 %v1732
        %v2372 = vpop.f32.mrb[0].mxu0
        %v2373 = vadd.f32 0.0, %v2372
        %v2374 = vpop.f32.mrb[0].mxu0
        %v2375 = vpop.f32.mrb[0].mxu0
        %v2376 = vadd.f32 0.0, %v2375
        %v2377 = vpop.f32.mrb[0].mxu0
        %2378 = vmatprep.mubr.bf16.mxu0 0
        %2379 = vmatmul.mubr.bf16.gmra.mrb[0].mxu0 %v1735
        %v2380 = vpop.f32.mrb[0].mxu0
        %v2381 = vadd.f32 0.0, %v2380
        %v2382 = vpop.f32.mrb[0].mxu0
        %v2383 = vpop.f32.mrb[0].mxu0
        %v2384 = vpop.f32.mrb[0].mxu0
        %2385 = vdwg.mxu0
        %v2386 = vadd.f32 %v2325, %v2365
        %v2387 = vadd.f32 %v2326, %v2368
        %v2388 = vadd.f32 %v2327, %v2373
        %v2389 = vadd.f32 %v2328, %v2376
        %v2390 = vadd.f32 %v2329, %v2381
        %2391 = vmatprep.subr.bf16.mxu0 0
        %2392 = vmatpush1.bf16.msra.mxu0 %v1720
        %2393 = vmatprep.subr.bf16.mxu0 0
        %2394 = vmatpush1.bf16.msra.mxu0 %v1721
        %2395 = vmatprep.subr.bf16.mxu0 0
        %2396 = vmatpush1.bf16.msra.mxu0 %v1722
        %2397 = vmatprep.subr.bf16.mxu0 0
        %2398 = vmatpush1.bf16.msra.mxu0 %v1723
        %2399 = vmatprep.subr.bf16.mxu0 0
        %2400 = vmatpush1.bf16.msra.mxu0 0
        %2401 = vmatprep.subr.bf16.mxu0 0
        %2402 = vmatpush1.bf16.msra.mxu0 0
        %2403 = vmatprep.subr.bf16.mxu0 0
        %2404 = vmatpush1.bf16.msra.mxu0 0
        %2405 = vmatprep.subr.bf16.mxu0 0
        %2406 = vmatpush1.bf16.msra.mxu0 0
        %2407 = vmatprep.subr.bf16.mxu0 0
        %2408 = vmatpush1.bf16.msra.mxu0 0
        %2409 = vmatprep.subr.bf16.mxu0 0
        %2410 = vmatpush1.bf16.msra.mxu0 0
        %2411 = vmatprep.subr.bf16.mxu0 0
        %2412 = vmatpush1.bf16.msra.mxu0 0
        %2413 = vmatprep.subr.bf16.mxu0 0
        %2414 = vmatpush1.bf16.msra.mxu0 0
        %2415 = vmatprep.subr.bf16.mxu0 0
        %2416 = vmatpush1.bf16.msra.mxu0 0
        %2417 = vmatprep.subr.bf16.mxu0 0
        %2418 = vmatpush1.bf16.msra.mxu0 0
        %2419 = vmatprep.subr.bf16.mxu0 0
        %2420 = vmatpush1.bf16.msra.mxu0 0
        %2421 = vmatprep.subr.bf16.mxu0 0
        %2422 = vmatpush1.bf16.msra.mxu0 0
        %2423 = vmatprep.mubr.bf16.mxu0 0
        %2424 = vmatmul.mubr.bf16.gmra.mrb[0].mxu0 %v1845
        %v2425 = vpop.f32.mrb[0].mxu0
        %v2426 = vadd.f32 0.0, %v2425
        %v2427 = vpop.f32.mrb[0].mxu0
        %v2428 = vpop.f32.mrb[0].mxu0
        %v2429 = vadd.f32 0.0, %v2428
        %v2430 = vpop.f32.mrb[0].mxu0
        %2431 = vmatprep.mubr.bf16.mxu0 0
        %2432 = vmatmul.mubr.bf16.gmra.mrb[0].mxu0 %v1848
        %v2433 = vpop.f32.mrb[0].mxu0
        %v2434 = vadd.f32 0.0, %v2433
        %v2435 = vpop.f32.mrb[0].mxu0
        %v2436 = vpop.f32.mrb[0].mxu0
        %v2437 = vadd.f32 0.0, %v2436
        %v2438 = vpop.f32.mrb[0].mxu0
        %2439 = vmatprep.mubr.bf16.mxu0 0
        %2440 = vmatmul.mubr.bf16.gmra.mrb[0].mxu0 %v1851
        %v2441 = vpop.f32.mrb[0].mxu0
        %v2442 = vadd.f32 0.0, %v2441
        %v2443 = vpop.f32.mrb[0].mxu0
        %v2444 = vpop.f32.mrb[0].mxu0
        %v2445 = vpop.f32.mrb[0].mxu0
        %2446 = vdwg.mxu0
        %v2447 = vadd.f32 %v2386, %v2426
        %v2448 = vadd.f32 %v2387, %v2429
        %v2449 = vadd.f32 %v2388, %v2434
        %v2450 = vadd.f32 %v2389, %v2437
        %v2451 = vadd.f32 %v2390, %v2442
        %s2452 = scalar_lea.vmem [#allocation2], 23
        %v2453 = vld [vmem:[%s2452] ss:$2 sm:$0xff]
        %s2454 = scalar_lea.vmem [#allocation2], 39
        %v2455 = vld [vmem:[%s2454] ss:$2 sm:$0xff]
        %s2456 = scalar_lea.vmem [#allocation2], 55
        %v2457 = vld [vmem:[%s2456] ss:$2 sm:$0xff]
        %s2458 = scalar_lea.vmem [#allocation2], 71
        %v2459 = vld [vmem:[%s2458] ss:$2 sm:$0xff]
        %s2460 = scalar_lea.vmem [#allocation2], 87
        %v2461 = vld [vmem:[%s2460] ss:$2 sm:$0xff]
        %v2462 = vpack.c.bf16 %v2455, %v2453
        %v2463 = vpack.c.bf16 %v2459, %v2457
        %v2464 = vpack.c.bf16 %v2461, %v2461
        %v2466 = vsel %vm387, %v2462, 0
        %v2469 = vsel %vm387, %v2463, 0
        %v2472 = vsel %vm387, %v2464, 0
        %2474 = vmatprep.subr.bf16.mxu0 0
        %2475 = vmatpush1.bf16.msra.mxu0 %v1836
        %2476 = vmatprep.subr.bf16.mxu0 0
        %2477 = vmatpush1.bf16.msra.mxu0 %v1837
        %2478 = vmatprep.subr.bf16.mxu0 0
        %2479 = vmatpush1.bf16.msra.mxu0 %v1838
        %2480 = vmatprep.subr.bf16.mxu0 0
        %2481 = vmatpush1.bf16.msra.mxu0 %v1839
        %2482 = vmatprep.subr.bf16.mxu0 0
        %2483 = vmatpush1.bf16.msra.mxu0 0
        %2484 = vmatprep.subr.bf16.mxu0 0
        %2485 = vmatpush1.bf16.msra.mxu0 0
        %2486 = vmatprep.subr.bf16.mxu0 0
        %2487 = vmatpush1.bf16.msra.mxu0 0
        %2488 = vmatprep.subr.bf16.mxu0 0
        %2489 = vmatpush1.bf16.msra.mxu0 0
        %2490 = vmatprep.subr.bf16.mxu0 0
        %2491 = vmatpush1.bf16.msra.mxu0 0
        %2492 = vmatprep.subr.bf16.mxu0 0
        %2493 = vmatpush1.bf16.msra.mxu0 0
        %2494 = vmatprep.subr.bf16.mxu0 0
        %2495 = vmatpush1.bf16.msra.mxu0 0
        %2496 = vmatprep.subr.bf16.mxu0 0
        %2497 = vmatpush1.bf16.msra.mxu0 0
        %2498 = vmatprep.subr.bf16.mxu0 0
        %2499 = vmatpush1.bf16.msra.mxu0 0
        %2500 = vmatprep.subr.bf16.mxu0 0
        %2501 = vmatpush1.bf16.msra.mxu0 0
        %2502 = vmatprep.subr.bf16.mxu0 0
        %2503 = vmatpush1.bf16.msra.mxu0 0
        %2504 = vmatprep.subr.bf16.mxu0 0
        %2505 = vmatpush1.bf16.msra.mxu0 0
        %2506 = vmatprep.mubr.bf16.mxu0 0
        %2507 = vmatmul.mubr.bf16.gmra.mrb[0].mxu0 %v2466
        %v2508 = vpop.f32.mrb[0].mxu0
        %v2509 = vadd.f32 0.0, %v2508
        %v2510 = vpop.f32.mrb[0].mxu0
        %v2511 = vpop.f32.mrb[0].mxu0
        %v2512 = vadd.f32 0.0, %v2511
        %v2513 = vpop.f32.mrb[0].mxu0
        %2514 = vmatprep.mubr.bf16.mxu0 0
        %2515 = vmatmul.mubr.bf16.gmra.mrb[0].mxu0 %v2469
        %v2516 = vpop.f32.mrb[0].mxu0
        %v2517 = vadd.f32 0.0, %v2516
        %v2518 = vpop.f32.mrb[0].mxu0
        %v2519 = vpop.f32.mrb[0].mxu0
        %v2520 = vadd.f32 0.0, %v2519
        %v2521 = vpop.f32.mrb[0].mxu0
        %2522 = vmatprep.mubr.bf16.mxu0 0
        %2523 = vmatmul.mubr.bf16.gmra.mrb[0].mxu0 %v2472
        %v2524 = vpop.f32.mrb[0].mxu0
        %v2525 = vadd.f32 0.0, %v2524
        %v2526 = vpop.f32.mrb[0].mxu0
        %v2527 = vpop.f32.mrb[0].mxu0
        %v2528 = vpop.f32.mrb[0].mxu0
        %2529 = vdwg.mxu0
        %v2530 = vadd.f32 %v2447, %v2509
        %v2531 = vadd.f32 %v2448, %v2512
        %v2532 = vadd.f32 %v2449, %v2517
        %v2533 = vadd.f32 %v2450, %v2520
        %v2534 = vadd.f32 %v2451, %v2525
        %v2535 = vadd.f32 %v2530, %v1918
        %v2536 = vadd.f32 %v2531, %v1918
        %v2537 = vadd.f32 %v2532, %v1918
        %v2538 = vadd.f32 %v2533, %v1918
        %v2539 = vadd.f32 %v2534, %v1918
        %v2540 = vmax.f32 %v2535, 0.0
        %v2541 = vmax.f32 %v2536, 0.0
        %v2542 = vmax.f32 %v2537, 0.0
        %v2543 = vmax.f32 %v2538, 0.0
        %v2544 = vmax.f32 %v2539, 0.0
        %v2545 = vmax.f32 %v1925, %v2540
        %v2546 = vmax.f32 %v1926, %v2541
        %v2547 = vmax.f32 %v1927, %v2542
        %v2548 = vmax.f32 %v1928, %v2543
        %v2549 = vmax.f32 %v1929, %v2544
        %vm2552 = vcmask 1042432
        %v2553 = vrot.slane %v2545, 5
        %v2554 = vrot.slane %v2546, 5
        %v2555 = vsel %vm2552, %v2553, %v2554
        %v2557 = vmax.f32 %v2545, %v2555
        %2558 = vst [vmem:[#allocation3 + $0x7] sm:$0xf] %v2557
        %v2560 = vrot.slane %v2547, 5
        %v2561 = vsel %vm2552, %v2554, %v2560
        %v2563 = vmax.f32 %v2546, %v2561
        %2564 = vst [vmem:[#allocation3 + $0xb] sm:$0x3c] %v2563
        %v2566 = vrot.slane %v2548, 5
        %v2568 = vmax.f32 %v2547, %v2566
        %2569 = vst [vmem:[#allocation3 + $0xf] sm:$0xf0] %v2568
        %v2571 = vrot.slane %v2549, 5
        %v2573 = vmax.f32 %v2548, %v2571
        %v2574 = vmax.f32 %v2549, %v2571
        %2575 = vst [vmem:[#allocation3 + $0x13] sm:$0xc0] %v2573
        %2576 = vst [vmem:[#allocation3 + $0x1b] sm:$0x3] %v2574
        %v2577 = vld [vmem:[%s6] sm:$0x3]
        %v2578 = vld [vmem:[#allocation3] ss:$2 sm:$0xff]
        %s2579 = scalar_lea.vmem [#allocation3], 16
        %v2580 = vld [vmem:[%s2579] ss:$2 sm:$0xf]
        %v2581 = vpack.c.bf16 %v2580, %v2578
        %v2582 = vld [vmem:[%s5] sm:$0xff]
        %v2583 = vld [vmem:[%s5 + $0x8] sm:$0xff]
        %v2584 = vld [vmem:[%s5 + $0x10] sm:$0xff]
        %v2585 = vld [vmem:[%s5 + $0x18] sm:$0xff]
        %v2586 = vld [vmem:[%s5 + $0x20] sm:$0xff]
        %v2587 = vld [vmem:[%s5 + $0x28] sm:$0xff]
        %v2588 = vld [vmem:[%s5 + $0x30] sm:$0xff]
        %v2589 = vld [vmem:[%s5 + $0x38] sm:$0xff]
        %v2590 = vld [vmem:[%s5 + $0x40] sm:$0xff]
        %v2591 = vld [vmem:[%s5 + $0x48] sm:$0xff]
        %v2592 = vld [vmem:[%s5 + $0x50] sm:$0xff]
        %v2593 = vld [vmem:[%s5 + $0x58] sm:$0xff]
        %v2594 = vld [vmem:[%s5 + $0x60] sm:$0xff]
        %v2595 = vld [vmem:[%s5 + $0x68] sm:$0xff]
        %v2596 = vld [vmem:[%s5 + $0x70] sm:$0xff]
        %v2597 = vld [vmem:[%s5 + $0x78] sm:$0xff]
        %s2598 = scalar_lea.vmem [#allocation3], 1
        %v2599 = vld [vmem:[%s2598] ss:$2 sm:$0xff]
        %s2600 = scalar_lea.vmem [#allocation3], 17
        %v2601 = vld [vmem:[%s2600] ss:$2 sm:$0xf]
        %v2602 = vpack.c.bf16 %v2601, %v2599
        %s2603 = scalar_lea.vmem %s5, 128
        %v2604 = vld [vmem:[%s2603] sm:$0xff]
        %v2605 = vld [vmem:[%s2603 + $0x8] sm:$0xff]
        %v2606 = vld [vmem:[%s2603 + $0x10] sm:$0xff]
        %v2607 = vld [vmem:[%s2603 + $0x18] sm:$0xff]
        %v2608 = vld [vmem:[%s2603 + $0x20] sm:$0xff]
        %v2609 = vld [vmem:[%s2603 + $0x28] sm:$0xff]
        %v2610 = vld [vmem:[%s2603 + $0x30] sm:$0xff]
        %v2611 = vld [vmem:[%s2603 + $0x38] sm:$0xff]
        %v2612 = vld [vmem:[%s2603 + $0x40] sm:$0xff]
        %v2613 = vld [vmem:[%s2603 + $0x48] sm:$0xff]
        %v2614 = vld [vmem:[%s2603 + $0x50] sm:$0xff]
        %v2615 = vld [vmem:[%s2603 + $0x58] sm:$0xff]
        %v2616 = vld [vmem:[%s2603 + $0x60] sm:$0xff]
        %v2617 = vld [vmem:[%s2603 + $0x68] sm:$0xff]
        %v2618 = vld [vmem:[%s2603 + $0x70] sm:$0xff]
        %v2619 = vld [vmem:[%s2603 + $0x78] sm:$0xff]
        %v2636 = vunpack.c.l.b16 %v2604
        %v2637 = vunpack.c.h.b16 %v2604
        %v2638 = vunpack.c.l.b16 %v2605
        %v2639 = vunpack.c.h.b16 %v2605
        %v2640 = vunpack.c.l.b16 %v2606
        %v2641 = vunpack.c.h.b16 %v2606
        %v2642 = vunpack.c.l.b16 %v2607
        %v2643 = vunpack.c.h.b16 %v2607
        %v2644 = vunpack.c.l.b16 %v2608
        %v2645 = vunpack.c.h.b16 %v2608
        %v2646 = vunpack.c.l.b16 %v2609
        %v2647 = vunpack.c.h.b16 %v2609
        %v2648 = vunpack.c.l.b16 %v2610
        %v2649 = vunpack.c.h.b16 %v2610
        %v2650 = vunpack.c.l.b16 %v2611
        %v2651 = vunpack.c.h.b16 %v2611
        %v2652 = vunpack.c.l.b16 %v2612
        %v2653 = vunpack.c.h.b16 %v2612
        %v2654 = vunpack.c.l.b16 %v2613
        %v2655 = vunpack.c.h.b16 %v2613
        %v2656 = vunpack.c.l.b16 %v2614
        %v2657 = vunpack.c.h.b16 %v2614
        %v2658 = vunpack.c.l.b16 %v2615
        %v2659 = vunpack.c.h.b16 %v2615
        %v2660 = vunpack.c.l.b16 %v2616
        %v2661 = vunpack.c.h.b16 %v2616
        %v2662 = vunpack.c.l.b16 %v2617
        %v2663 = vunpack.c.h.b16 %v2617
        %v2664 = vunpack.c.l.b16 %v2618
        %v2665 = vunpack.c.h.b16 %v2618
        %v2666 = vunpack.c.l.b16 %v2619
        %v2667 = vunpack.c.h.b16 %v2619
        %v2668 = vpack.c.b16 %v2638, %v2636
        %v2669 = vpack.c.b16 %v2639, %v2637
        %v2670 = vpack.c.b16 %v2642, %v2640
        %v2671 = vpack.c.b16 %v2643, %v2641
        %v2672 = vpack.c.b16 %v2646, %v2644
        %v2673 = vpack.c.b16 %v2647, %v2645
        %v2674 = vpack.c.b16 %v2650, %v2648
        %v2675 = vpack.c.b16 %v2651, %v2649
        %v2676 = vpack.c.b16 %v2654, %v2652
        %v2677 = vpack.c.b16 %v2655, %v2653
        %v2678 = vpack.c.b16 %v2658, %v2656
        %v2679 = vpack.c.b16 %v2659, %v2657
        %v2680 = vpack.c.b16 %v2662, %v2660
        %v2681 = vpack.c.b16 %v2663, %v2661
        %v2682 = vpack.c.b16 %v2666, %v2664
        %v2683 = vpack.c.b16 %v2667, %v2665
        %2700 = vmatprep.subr.bf16.mxu0 %v2669
        %2701 = vmatpush1.bf16.msra.mxu0 %v2668
        %2702 = vmatprep.subr.bf16.mxu0 %v2671
        %2703 = vmatpush1.bf16.msra.mxu0 %v2670
        %2704 = vmatprep.subr.bf16.mxu0 %v2673
        %2705 = vmatpush1.bf16.msra.mxu0 %v2672
        %2706 = vmatprep.subr.bf16.mxu0 %v2675
        %2707 = vmatpush1.bf16.msra.mxu0 %v2674
        %2708 = vmatprep.subr.bf16.mxu0 %v2677
        %2709 = vmatpush1.bf16.msra.mxu0 %v2676
        %2710 = vmatprep.subr.bf16.mxu0 %v2679
        %2711 = vmatpush1.bf16.msra.mxu0 %v2678
        %2712 = vmatprep.subr.bf16.mxu0 %v2681
        %2713 = vmatpush1.bf16.msra.mxu0 %v2680
        %2714 = vmatprep.subr.bf16.mxu0 %v2683
        %2715 = vmatpush1.bf16.msra.mxu0 %v2682
        %2716 = vmatprep.subr.bf16.mxu0 0
        %2717 = vmatpush1.bf16.msra.mxu0 0
        %2718 = vmatprep.subr.bf16.mxu0 0
        %2719 = vmatpush1.bf16.msra.mxu0 0
        %2720 = vmatprep.subr.bf16.mxu0 0
        %2721 = vmatpush1.bf16.msra.mxu0 0
        %2722 = vmatprep.subr.bf16.mxu0 0
        %2723 = vmatpush1.bf16.msra.mxu0 0
        %2724 = vmatprep.subr.bf16.mxu0 0
        %2725 = vmatpush1.bf16.msra.mxu0 0
        %2726 = vmatprep.subr.bf16.mxu0 0
        %2727 = vmatpush1.bf16.msra.mxu0 0
        %2728 = vmatprep.subr.bf16.mxu0 0
        %2729 = vmatpush1.bf16.msra.mxu0 0
        %2730 = vmatprep.subr.bf16.mxu0 0
        %2731 = vmatpush1.bf16.msra.mxu0 0
        %2732 = vmatprep.mubr.bf16.mxu0 0
        %2733 = vmatmul.mubr.bf16.gmra.mrb[0].mxu0 %v2602
        %v2734 = vpop.f32.mrb[0].mxu0
        %v2735 = vadd.f32 0.0, %v2734
        %v2736 = vpop.f32.mrb[0].mxu0
        %v2737 = vadd.f32 0.0, %v2736
        %v2738 = vpop.f32.mrb[0].mxu0
        %v2739 = vadd.f32 0.0, %v2738
        %v2740 = vpop.f32.mrb[0].mxu0
        %v2741 = vadd.f32 0.0, %v2740
        %2742 = vdwg.mxu0
        %v2759 = vunpack.c.l.b16 %v2582
        %v2760 = vunpack.c.h.b16 %v2582
        %v2761 = vunpack.c.l.b16 %v2583
        %v2762 = vunpack.c.h.b16 %v2583
        %v2763 = vunpack.c.l.b16 %v2584
        %v2764 = vunpack.c.h.b16 %v2584
        %v2765 = vunpack.c.l.b16 %v2585
        %v2766 = vunpack.c.h.b16 %v2585
        %v2767 = vunpack.c.l.b16 %v2586
        %v2768 = vunpack.c.h.b16 %v2586
        %v2769 = vunpack.c.l.b16 %v2587
        %v2770 = vunpack.c.h.b16 %v2587
        %v2771 = vunpack.c.l.b16 %v2588
        %v2772 = vunpack.c.h.b16 %v2588
        %v2773 = vunpack.c.l.b16 %v2589
        %v2774 = vunpack.c.h.b16 %v2589
        %v2775 = vunpack.c.l.b16 %v2590
        %v2776 = vunpack.c.h.b16 %v2590
        %v2777 = vunpack.c.l.b16 %v2591
        %v2778 = vunpack.c.h.b16 %v2591
        %v2779 = vunpack.c.l.b16 %v2592
        %v2780 = vunpack.c.h.b16 %v2592
        %v2781 = vunpack.c.l.b16 %v2593
        %v2782 = vunpack.c.h.b16 %v2593
        %v2783 = vunpack.c.l.b16 %v2594
        %v2784 = vunpack.c.h.b16 %v2594
        %v2785 = vunpack.c.l.b16 %v2595
        %v2786 = vunpack.c.h.b16 %v2595
        %v2787 = vunpack.c.l.b16 %v2596
        %v2788 = vunpack.c.h.b16 %v2596
        %v2789 = vunpack.c.l.b16 %v2597
        %v2790 = vunpack.c.h.b16 %v2597
        %v2791 = vpack.c.b16 %v2761, %v2759
        %v2792 = vpack.c.b16 %v2762, %v2760
        %v2793 = vpack.c.b16 %v2765, %v2763
        %v2794 = vpack.c.b16 %v2766, %v2764
        %v2795 = vpack.c.b16 %v2769, %v2767
        %v2796 = vpack.c.b16 %v2770, %v2768
        %v2797 = vpack.c.b16 %v2773, %v2771
        %v2798 = vpack.c.b16 %v2774, %v2772
        %v2799 = vpack.c.b16 %v2777, %v2775
        %v2800 = vpack.c.b16 %v2778, %v2776
        %v2801 = vpack.c.b16 %v2781, %v2779
        %v2802 = vpack.c.b16 %v2782, %v2780
        %v2803 = vpack.c.b16 %v2785, %v2783
        %v2804 = vpack.c.b16 %v2786, %v2784
        %v2805 = vpack.c.b16 %v2789, %v2787
        %v2806 = vpack.c.b16 %v2790, %v2788
        %2823 = vmatprep.subr.bf16.mxu0 %v2792
        %2824 = vmatpush1.bf16.msra.mxu0 %v2791
        %2825 = vmatprep.subr.bf16.mxu0 %v2794
        %2826 = vmatpush1.bf16.msra.mxu0 %v2793
        %2827 = vmatprep.subr.bf16.mxu0 %v2796
        %2828 = vmatpush1.bf16.msra.mxu0 %v2795
        %2829 = vmatprep.subr.bf16.mxu0 %v2798
        %2830 = vmatpush1.bf16.msra.mxu0 %v2797
        %2831 = vmatprep.subr.bf16.mxu0 %v2800
        %2832 = vmatpush1.bf16.msra.mxu0 %v2799
        %2833 = vmatprep.subr.bf16.mxu0 %v2802
        %2834 = vmatpush1.bf16.msra.mxu0 %v2801
        %2835 = vmatprep.subr.bf16.mxu0 %v2804
        %2836 = vmatpush1.bf16.msra.mxu0 %v2803
        %2837 = vmatprep.subr.bf16.mxu0 %v2806
        %2838 = vmatpush1.bf16.msra.mxu0 %v2805
        %2839 = vmatprep.subr.bf16.mxu0 0
        %2840 = vmatpush1.bf16.msra.mxu0 0
        %2841 = vmatprep.subr.bf16.mxu0 0
        %2842 = vmatpush1.bf16.msra.mxu0 0
        %2843 = vmatprep.subr.bf16.mxu0 0
        %2844 = vmatpush1.bf16.msra.mxu0 0
        %2845 = vmatprep.subr.bf16.mxu0 0
        %2846 = vmatpush1.bf16.msra.mxu0 0
        %2847 = vmatprep.subr.bf16.mxu0 0
        %2848 = vmatpush1.bf16.msra.mxu0 0
        %2849 = vmatprep.subr.bf16.mxu0 0
        %2850 = vmatpush1.bf16.msra.mxu0 0
        %2851 = vmatprep.subr.bf16.mxu0 0
        %2852 = vmatpush1.bf16.msra.mxu0 0
        %2853 = vmatprep.subr.bf16.mxu0 0
        %2854 = vmatpush1.bf16.msra.mxu0 0
        %2855 = vmatprep.mubr.bf16.mxu0 0
        %2856 = vmatmul.mubr.bf16.gmra.mrb[0].mxu0 %v2581
        %v2857 = vpop.f32.mrb[0].mxu0
        %v2858 = vadd.f32 %v2735, %v2857
        %v2859 = vpop.f32.mrb[0].mxu0
        %v2860 = vadd.f32 %v2737, %v2859
        %v2861 = vpop.f32.mrb[0].mxu0
        %v2862 = vadd.f32 %v2739, %v2861
        %v2863 = vpop.f32.mrb[0].mxu0
        %v2864 = vadd.f32 %v2741, %v2863
        %2865 = vdwg.mxu0
        %s2866 = scalar_lea.vmem [#allocation3], 2
        %v2867 = vld [vmem:[%s2866] ss:$2 sm:$0xff]
        %s2868 = scalar_lea.vmem [#allocation3], 18
        %v2869 = vld [vmem:[%s2868] ss:$2 sm:$0xf]
        %v2870 = vpack.c.bf16 %v2869, %v2867
        %s2871 = scalar_lea.vmem %s5, 256
        %v2872 = vld [vmem:[%s2871] sm:$0xff]
        %v2873 = vld [vmem:[%s2871 + $0x8] sm:$0xff]
        %v2874 = vld [vmem:[%s2871 + $0x10] sm:$0xff]
        %v2875 = vld [vmem:[%s2871 + $0x18] sm:$0xff]
        %v2876 = vld [vmem:[%s2871 + $0x20] sm:$0xff]
        %v2877 = vld [vmem:[%s2871 + $0x28] sm:$0xff]
        %v2878 = vld [vmem:[%s2871 + $0x30] sm:$0xff]
        %v2879 = vld [vmem:[%s2871 + $0x38] sm:$0xff]
        %v2880 = vld [vmem:[%s2871 + $0x40] sm:$0xff]
        %v2881 = vld [vmem:[%s2871 + $0x48] sm:$0xff]
        %v2882 = vld [vmem:[%s2871 + $0x50] sm:$0xff]
        %v2883 = vld [vmem:[%s2871 + $0x58] sm:$0xff]
        %v2884 = vld [vmem:[%s2871 + $0x60] sm:$0xff]
        %v2885 = vld [vmem:[%s2871 + $0x68] sm:$0xff]
        %v2886 = vld [vmem:[%s2871 + $0x70] sm:$0xff]
        %v2887 = vld [vmem:[%s2871 + $0x78] sm:$0xff]
        %v2904 = vunpack.c.l.b16 %v2872
        %v2905 = vunpack.c.h.b16 %v2872
        %v2906 = vunpack.c.l.b16 %v2873
        %v2907 = vunpack.c.h.b16 %v2873
        %v2908 = vunpack.c.l.b16 %v2874
        %v2909 = vunpack.c.h.b16 %v2874
        %v2910 = vunpack.c.l.b16 %v2875
        %v2911 = vunpack.c.h.b16 %v2875
        %v2912 = vunpack.c.l.b16 %v2876
        %v2913 = vunpack.c.h.b16 %v2876
        %v2914 = vunpack.c.l.b16 %v2877
        %v2915 = vunpack.c.h.b16 %v2877
        %v2916 = vunpack.c.l.b16 %v2878
        %v2917 = vunpack.c.h.b16 %v2878
        %v2918 = vunpack.c.l.b16 %v2879
        %v2919 = vunpack.c.h.b16 %v2879
        %v2920 = vunpack.c.l.b16 %v2880
        %v2921 = vunpack.c.h.b16 %v2880
        %v2922 = vunpack.c.l.b16 %v2881
        %v2923 = vunpack.c.h.b16 %v2881
        %v2924 = vunpack.c.l.b16 %v2882
        %v2925 = vunpack.c.h.b16 %v2882
        %v2926 = vunpack.c.l.b16 %v2883
        %v2927 = vunpack.c.h.b16 %v2883
        %v2928 = vunpack.c.l.b16 %v2884
        %v2929 = vunpack.c.h.b16 %v2884
        %v2930 = vunpack.c.l.b16 %v2885
        %v2931 = vunpack.c.h.b16 %v2885
        %v2932 = vunpack.c.l.b16 %v2886
        %v2933 = vunpack.c.h.b16 %v2886
        %v2934 = vunpack.c.l.b16 %v2887
        %v2935 = vunpack.c.h.b16 %v2887
        %v2936 = vpack.c.b16 %v2906, %v2904
        %v2937 = vpack.c.b16 %v2907, %v2905
        %v2938 = vpack.c.b16 %v2910, %v2908
        %v2939 = vpack.c.b16 %v2911, %v2909
        %v2940 = vpack.c.b16 %v2914, %v2912
        %v2941 = vpack.c.b16 %v2915, %v2913
        %v2942 = vpack.c.b16 %v2918, %v2916
        %v2943 = vpack.c.b16 %v2919, %v2917
        %v2944 = vpack.c.b16 %v2922, %v2920
        %v2945 = vpack.c.b16 %v2923, %v2921
        %v2946 = vpack.c.b16 %v2926, %v2924
        %v2947 = vpack.c.b16 %v2927, %v2925
        %v2948 = vpack.c.b16 %v2930, %v2928
        %v2949 = vpack.c.b16 %v2931, %v2929
        %v2950 = vpack.c.b16 %v2934, %v2932
        %v2951 = vpack.c.b16 %v2935, %v2933
        %2968 = vmatprep.subr.bf16.mxu0 %v2937
        %2969 = vmatpush1.bf16.msra.mxu0 %v2936
        %2970 = vmatprep.subr.bf16.mxu0 %v2939
        %2971 = vmatpush1.bf16.msra.mxu0 %v2938
        %2972 = vmatprep.subr.bf16.mxu0 %v2941
        %2973 = vmatpush1.bf16.msra.mxu0 %v2940
        %2974 = vmatprep.subr.bf16.mxu0 %v2943
        %2975 = vmatpush1.bf16.msra.mxu0 %v2942
        %2976 = vmatprep.subr.bf16.mxu0 %v2945
        %2977 = vmatpush1.bf16.msra.mxu0 %v2944
        %2978 = vmatprep.subr.bf16.mxu0 %v2947
        %2979 = vmatpush1.bf16.msra.mxu0 %v2946
        %2980 = vmatprep.subr.bf16.mxu0 %v2949
        %2981 = vmatpush1.bf16.msra.mxu0 %v2948
        %2982 = vmatprep.subr.bf16.mxu0 %v2951
        %2983 = vmatpush1.bf16.msra.mxu0 %v2950
        %2984 = vmatprep.subr.bf16.mxu0 0
        %2985 = vmatpush1.bf16.msra.mxu0 0
        %2986 = vmatprep.subr.bf16.mxu0 0
        %2987 = vmatpush1.bf16.msra.mxu0 0
        %2988 = vmatprep.subr.bf16.mxu0 0
        %2989 = vmatpush1.bf16.msra.mxu0 0
        %2990 = vmatprep.subr.bf16.mxu0 0
        %2991 = vmatpush1.bf16.msra.mxu0 0
        %2992 = vmatprep.subr.bf16.mxu0 0
        %2993 = vmatpush1.bf16.msra.mxu0 0
        %2994 = vmatprep.subr.bf16.mxu0 0
        %2995 = vmatpush1.bf16.msra.mxu0 0
        %2996 = vmatprep.subr.bf16.mxu0 0
        %2997 = vmatpush1.bf16.msra.mxu0 0
        %2998 = vmatprep.subr.bf16.mxu0 0
        %2999 = vmatpush1.bf16.msra.mxu0 0
        %3000 = vmatprep.mubr.bf16.mxu0 0
        %3001 = vmatmul.mubr.bf16.gmra.mrb[0].mxu0 %v2870
        %v3002 = vpop.f32.mrb[0].mxu0
        %v3003 = vadd.f32 0.0, %v3002
        %v3004 = vpop.f32.mrb[0].mxu0
        %v3005 = vadd.f32 0.0, %v3004
        %v3006 = vpop.f32.mrb[0].mxu0
        %v3007 = vadd.f32 0.0, %v3006
        %v3008 = vpop.f32.mrb[0].mxu0
        %v3009 = vadd.f32 0.0, %v3008
        %3010 = vdwg.mxu0
        %v3011 = vadd.f32 %v2858, %v3003
        %v3012 = vadd.f32 %v2860, %v3005
        %v3013 = vadd.f32 %v2862, %v3007
        %v3014 = vadd.f32 %v2864, %v3009
        %s3015 = scalar_lea.vmem [#allocation3], 6
        %v3016 = vld [vmem:[%s3015] ss:$2 sm:$0xff]
        %s3017 = scalar_lea.vmem [#allocation3], 22
        %v3018 = vld [vmem:[%s3017] ss:$2 sm:$0xf]
        %v3019 = vpack.c.bf16 %v3018, %v3016
        %s3020 = scalar_lea.vmem %s5, 384
        %v3021 = vld [vmem:[%s3020] sm:$0xff]
        %v3022 = vld [vmem:[%s3020 + $0x8] sm:$0xff]
        %v3023 = vld [vmem:[%s3020 + $0x10] sm:$0xff]
        %v3024 = vld [vmem:[%s3020 + $0x18] sm:$0xff]
        %v3025 = vld [vmem:[%s3020 + $0x20] sm:$0xff]
        %v3026 = vld [vmem:[%s3020 + $0x28] sm:$0xff]
        %v3027 = vld [vmem:[%s3020 + $0x30] sm:$0xff]
        %v3028 = vld [vmem:[%s3020 + $0x38] sm:$0xff]
        %v3029 = vld [vmem:[%s3020 + $0x40] sm:$0xff]
        %v3030 = vld [vmem:[%s3020 + $0x48] sm:$0xff]
        %v3031 = vld [vmem:[%s3020 + $0x50] sm:$0xff]
        %v3032 = vld [vmem:[%s3020 + $0x58] sm:$0xff]
        %v3033 = vld [vmem:[%s3020 + $0x60] sm:$0xff]
        %v3034 = vld [vmem:[%s3020 + $0x68] sm:$0xff]
        %v3035 = vld [vmem:[%s3020 + $0x70] sm:$0xff]
        %v3036 = vld [vmem:[%s3020 + $0x78] sm:$0xff]
        %v3053 = vunpack.c.l.b16 %v3021
        %v3054 = vunpack.c.h.b16 %v3021
        %v3055 = vunpack.c.l.b16 %v3022
        %v3056 = vunpack.c.h.b16 %v3022
        %v3057 = vunpack.c.l.b16 %v3023
        %v3058 = vunpack.c.h.b16 %v3023
        %v3059 = vunpack.c.l.b16 %v3024
        %v3060 = vunpack.c.h.b16 %v3024
        %v3061 = vunpack.c.l.b16 %v3025
        %v3062 = vunpack.c.h.b16 %v3025
        %v3063 = vunpack.c.l.b16 %v3026
        %v3064 = vunpack.c.h.b16 %v3026
        %v3065 = vunpack.c.l.b16 %v3027
        %v3066 = vunpack.c.h.b16 %v3027
        %v3067 = vunpack.c.l.b16 %v3028
        %v3068 = vunpack.c.h.b16 %v3028
        %v3069 = vunpack.c.l.b16 %v3029
        %v3070 = vunpack.c.h.b16 %v3029
        %v3071 = vunpack.c.l.b16 %v3030
        %v3072 = vunpack.c.h.b16 %v3030
        %v3073 = vunpack.c.l.b16 %v3031
        %v3074 = vunpack.c.h.b16 %v3031
        %v3075 = vunpack.c.l.b16 %v3032
        %v3076 = vunpack.c.h.b16 %v3032
        %v3077 = vunpack.c.l.b16 %v3033
        %v3078 = vunpack.c.h.b16 %v3033
        %v3079 = vunpack.c.l.b16 %v3034
        %v3080 = vunpack.c.h.b16 %v3034
        %v3081 = vunpack.c.l.b16 %v3035
        %v3082 = vunpack.c.h.b16 %v3035
        %v3083 = vunpack.c.l.b16 %v3036
        %v3084 = vunpack.c.h.b16 %v3036
        %v3085 = vpack.c.b16 %v3055, %v3053
        %v3086 = vpack.c.b16 %v3056, %v3054
        %v3087 = vpack.c.b16 %v3059, %v3057
        %v3088 = vpack.c.b16 %v3060, %v3058
        %v3089 = vpack.c.b16 %v3063, %v3061
        %v3090 = vpack.c.b16 %v3064, %v3062
        %v3091 = vpack.c.b16 %v3067, %v3065
        %v3092 = vpack.c.b16 %v3068, %v3066
        %v3093 = vpack.c.b16 %v3071, %v3069
        %v3094 = vpack.c.b16 %v3072, %v3070
        %v3095 = vpack.c.b16 %v3075, %v3073
        %v3096 = vpack.c.b16 %v3076, %v3074
        %v3097 = vpack.c.b16 %v3079, %v3077
        %v3098 = vpack.c.b16 %v3080, %v3078
        %v3099 = vpack.c.b16 %v3083, %v3081
        %v3100 = vpack.c.b16 %v3084, %v3082
        %3117 = vmatprep.subr.bf16.mxu0 %v3086
        %3118 = vmatpush1.bf16.msra.mxu0 %v3085
        %3119 = vmatprep.subr.bf16.mxu0 %v3088
        %3120 = vmatpush1.bf16.msra.mxu0 %v3087
        %3121 = vmatprep.subr.bf16.mxu0 %v3090
        %3122 = vmatpush1.bf16.msra.mxu0 %v3089
        %3123 = vmatprep.subr.bf16.mxu0 %v3092
        %3124 = vmatpush1.bf16.msra.mxu0 %v3091
        %3125 = vmatprep.subr.bf16.mxu0 %v3094
        %3126 = vmatpush1.bf16.msra.mxu0 %v3093
        %3127 = vmatprep.subr.bf16.mxu0 %v3096
        %3128 = vmatpush1.bf16.msra.mxu0 %v3095
        %3129 = vmatprep.subr.bf16.mxu0 %v3098
        %3130 = vmatpush1.bf16.msra.mxu0 %v3097
        %3131 = vmatprep.subr.bf16.mxu0 %v3100
        %3132 = vmatpush1.bf16.msra.mxu0 %v3099
        %3133 = vmatprep.subr.bf16.mxu0 0
        %3134 = vmatpush1.bf16.msra.mxu0 0
        %3135 = vmatprep.subr.bf16.mxu0 0
        %3136 = vmatpush1.bf16.msra.mxu0 0
        %3137 = vmatprep.subr.bf16.mxu0 0
        %3138 = vmatpush1.bf16.msra.mxu0 0
        %3139 = vmatprep.subr.bf16.mxu0 0
        %3140 = vmatpush1.bf16.msra.mxu0 0
        %3141 = vmatprep.subr.bf16.mxu0 0
        %3142 = vmatpush1.bf16.msra.mxu0 0
        %3143 = vmatprep.subr.bf16.mxu0 0
        %3144 = vmatpush1.bf16.msra.mxu0 0
        %3145 = vmatprep.subr.bf16.mxu0 0
        %3146 = vmatpush1.bf16.msra.mxu0 0
        %3147 = vmatprep.subr.bf16.mxu0 0
        %3148 = vmatpush1.bf16.msra.mxu0 0
        %3149 = vmatprep.mubr.bf16.mxu0 0
        %3150 = vmatmul.mubr.bf16.gmra.mrb[0].mxu0 %v3019
        %v3151 = vpop.f32.mrb[0].mxu0
        %v3152 = vadd.f32 0.0, %v3151
        %v3153 = vpop.f32.mrb[0].mxu0
        %v3154 = vadd.f32 0.0, %v3153
        %v3155 = vpop.f32.mrb[0].mxu0
        %v3156 = vadd.f32 0.0, %v3155
        %v3157 = vpop.f32.mrb[0].mxu0
        %v3158 = vadd.f32 0.0, %v3157
        %3159 = vdwg.mxu0
        %v3160 = vadd.f32 %v3011, %v3152
        %v3161 = vadd.f32 %v3012, %v3154
        %v3162 = vadd.f32 %v3013, %v3156
        %v3163 = vadd.f32 %v3014, %v3158
        %s3164 = scalar_lea.vmem [#allocation3], 7
        %v3165 = vld [vmem:[%s3164] ss:$2 sm:$0xff]
        %s3166 = scalar_lea.vmem [#allocation3], 23
        %v3167 = vld [vmem:[%s3166] ss:$2 sm:$0xf]
        %v3168 = vpack.c.bf16 %v3167, %v3165
        %s3169 = scalar_lea.vmem %s5, 512
        %v3170 = vld [vmem:[%s3169] sm:$0xff]
        %v3171 = vld [vmem:[%s3169 + $0x8] sm:$0xff]
        %v3172 = vld [vmem:[%s3169 + $0x10] sm:$0xff]
        %v3173 = vld [vmem:[%s3169 + $0x18] sm:$0xff]
        %v3174 = vld [vmem:[%s3169 + $0x20] sm:$0xff]
        %v3175 = vld [vmem:[%s3169 + $0x28] sm:$0xff]
        %v3176 = vld [vmem:[%s3169 + $0x30] sm:$0xff]
        %v3177 = vld [vmem:[%s3169 + $0x38] sm:$0xff]
        %v3178 = vld [vmem:[%s3169 + $0x40] sm:$0xff]
        %v3179 = vld [vmem:[%s3169 + $0x48] sm:$0xff]
        %v3180 = vld [vmem:[%s3169 + $0x50] sm:$0xff]
        %v3181 = vld [vmem:[%s3169 + $0x58] sm:$0xff]
        %v3182 = vld [vmem:[%s3169 + $0x60] sm:$0xff]
        %v3183 = vld [vmem:[%s3169 + $0x68] sm:$0xff]
        %v3184 = vld [vmem:[%s3169 + $0x70] sm:$0xff]
        %v3185 = vld [vmem:[%s3169 + $0x78] sm:$0xff]
        %v3202 = vunpack.c.l.b16 %v3170
        %v3203 = vunpack.c.h.b16 %v3170
        %v3204 = vunpack.c.l.b16 %v3171
        %v3205 = vunpack.c.h.b16 %v3171
        %v3206 = vunpack.c.l.b16 %v3172
        %v3207 = vunpack.c.h.b16 %v3172
        %v3208 = vunpack.c.l.b16 %v3173
        %v3209 = vunpack.c.h.b16 %v3173
        %v3210 = vunpack.c.l.b16 %v3174
        %v3211 = vunpack.c.h.b16 %v3174
        %v3212 = vunpack.c.l.b16 %v3175
        %v3213 = vunpack.c.h.b16 %v3175
        %v3214 = vunpack.c.l.b16 %v3176
        %v3215 = vunpack.c.h.b16 %v3176
        %v3216 = vunpack.c.l.b16 %v3177
        %v3217 = vunpack.c.h.b16 %v3177
        %v3218 = vunpack.c.l.b16 %v3178
        %v3219 = vunpack.c.h.b16 %v3178
        %v3220 = vunpack.c.l.b16 %v3179
        %v3221 = vunpack.c.h.b16 %v3179
        %v3222 = vunpack.c.l.b16 %v3180
        %v3223 = vunpack.c.h.b16 %v3180
        %v3224 = vunpack.c.l.b16 %v3181
        %v3225 = vunpack.c.h.b16 %v3181
        %v3226 = vunpack.c.l.b16 %v3182
        %v3227 = vunpack.c.h.b16 %v3182
        %v3228 = vunpack.c.l.b16 %v3183
        %v3229 = vunpack.c.h.b16 %v3183
        %v3230 = vunpack.c.l.b16 %v3184
        %v3231 = vunpack.c.h.b16 %v3184
        %v3232 = vunpack.c.l.b16 %v3185
        %v3233 = vunpack.c.h.b16 %v3185
        %v3234 = vpack.c.b16 %v3204, %v3202
        %v3235 = vpack.c.b16 %v3205, %v3203
        %v3236 = vpack.c.b16 %v3208, %v3206
        %v3237 = vpack.c.b16 %v3209, %v3207
        %v3238 = vpack.c.b16 %v3212, %v3210
        %v3239 = vpack.c.b16 %v3213, %v3211
        %v3240 = vpack.c.b16 %v3216, %v3214
        %v3241 = vpack.c.b16 %v3217, %v3215
        %v3242 = vpack.c.b16 %v3220, %v3218
        %v3243 = vpack.c.b16 %v3221, %v3219
        %v3244 = vpack.c.b16 %v3224, %v3222
        %v3245 = vpack.c.b16 %v3225, %v3223
        %v3246 = vpack.c.b16 %v3228, %v3226
        %v3247 = vpack.c.b16 %v3229, %v3227
        %v3248 = vpack.c.b16 %v3232, %v3230
        %v3249 = vpack.c.b16 %v3233, %v3231
        %3266 = vmatprep.subr.bf16.mxu0 %v3235
        %3267 = vmatpush1.bf16.msra.mxu0 %v3234
        %3268 = vmatprep.subr.bf16.mxu0 %v3237
        %3269 = vmatpush1.bf16.msra.mxu0 %v3236
        %3270 = vmatprep.subr.bf16.mxu0 %v3239
        %3271 = vmatpush1.bf16.msra.mxu0 %v3238
        %3272 = vmatprep.subr.bf16.mxu0 %v3241
        %3273 = vmatpush1.bf16.msra.mxu0 %v3240
        %3274 = vmatprep.subr.bf16.mxu0 %v3243
        %3275 = vmatpush1.bf16.msra.mxu0 %v3242
        %3276 = vmatprep.subr.bf16.mxu0 %v3245
        %3277 = vmatpush1.bf16.msra.mxu0 %v3244
        %3278 = vmatprep.subr.bf16.mxu0 %v3247
        %3279 = vmatpush1.bf16.msra.mxu0 %v3246
        %3280 = vmatprep.subr.bf16.mxu0 %v3249
        %3281 = vmatpush1.bf16.msra.mxu0 %v3248
        %3282 = vmatprep.subr.bf16.mxu0 0
        %3283 = vmatpush1.bf16.msra.mxu0 0
        %3284 = vmatprep.subr.bf16.mxu0 0
        %3285 = vmatpush1.bf16.msra.mxu0 0
        %3286 = vmatprep.subr.bf16.mxu0 0
        %3287 = vmatpush1.bf16.msra.mxu0 0
        %3288 = vmatprep.subr.bf16.mxu0 0
        %3289 = vmatpush1.bf16.msra.mxu0 0
        %3290 = vmatprep.subr.bf16.mxu0 0
        %3291 = vmatpush1.bf16.msra.mxu0 0
        %3292 = vmatprep.subr.bf16.mxu0 0
        %3293 = vmatpush1.bf16.msra.mxu0 0
        %3294 = vmatprep.subr.bf16.mxu0 0
        %3295 = vmatpush1.bf16.msra.mxu0 0
        %3296 = vmatprep.subr.bf16.mxu0 0
        %3297 = vmatpush1.bf16.msra.mxu0 0
        %3298 = vmatprep.mubr.bf16.mxu0 0
        %3299 = vmatmul.mubr.bf16.gmra.mrb[0].mxu0 %v3168
        %v3300 = vpop.f32.mrb[0].mxu0
        %v3301 = vadd.f32 0.0, %v3300
        %v3302 = vpop.f32.mrb[0].mxu0
        %v3303 = vadd.f32 0.0, %v3302
        %v3304 = vpop.f32.mrb[0].mxu0
        %v3305 = vadd.f32 0.0, %v3304
        %v3306 = vpop.f32.mrb[0].mxu0
        %v3307 = vadd.f32 0.0, %v3306
        %3308 = vdwg.mxu0
        %v3309 = vadd.f32 %v3160, %v3301
        %v3310 = vadd.f32 %v3161, %v3303
        %v3311 = vadd.f32 %v3162, %v3305
        %v3312 = vadd.f32 %v3163, %v3307
        %s3313 = scalar_lea.vmem [#allocation3], 8
        %v3314 = vld [vmem:[%s3313] ss:$2 sm:$0xff]
        %s3315 = scalar_lea.vmem [#allocation3], 24
        %v3316 = vld [vmem:[%s3315] ss:$2 sm:$0xf]
        %v3317 = vpack.c.bf16 %v3316, %v3314
        %s3318 = scalar_lea.vmem %s5, 640
        %v3319 = vld [vmem:[%s3318] sm:$0xff]
        %v3320 = vld [vmem:[%s3318 + $0x8] sm:$0xff]
        %v3321 = vld [vmem:[%s3318 + $0x10] sm:$0xff]
        %v3322 = vld [vmem:[%s3318 + $0x18] sm:$0xff]
        %v3323 = vld [vmem:[%s3318 + $0x20] sm:$0xff]
        %v3324 = vld [vmem:[%s3318 + $0x28] sm:$0xff]
        %v3325 = vld [vmem:[%s3318 + $0x30] sm:$0xff]
        %v3326 = vld [vmem:[%s3318 + $0x38] sm:$0xff]
        %v3327 = vld [vmem:[%s3318 + $0x40] sm:$0xff]
        %v3328 = vld [vmem:[%s3318 + $0x48] sm:$0xff]
        %v3329 = vld [vmem:[%s3318 + $0x50] sm:$0xff]
        %v3330 = vld [vmem:[%s3318 + $0x58] sm:$0xff]
        %v3331 = vld [vmem:[%s3318 + $0x60] sm:$0xff]
        %v3332 = vld [vmem:[%s3318 + $0x68] sm:$0xff]
        %v3333 = vld [vmem:[%s3318 + $0x70] sm:$0xff]
        %v3334 = vld [vmem:[%s3318 + $0x78] sm:$0xff]
        %v3351 = vunpack.c.l.b16 %v3319
        %v3352 = vunpack.c.h.b16 %v3319
        %v3353 = vunpack.c.l.b16 %v3320
        %v3354 = vunpack.c.h.b16 %v3320
        %v3355 = vunpack.c.l.b16 %v3321
        %v3356 = vunpack.c.h.b16 %v3321
        %v3357 = vunpack.c.l.b16 %v3322
        %v3358 = vunpack.c.h.b16 %v3322
        %v3359 = vunpack.c.l.b16 %v3323
        %v3360 = vunpack.c.h.b16 %v3323
        %v3361 = vunpack.c.l.b16 %v3324
        %v3362 = vunpack.c.h.b16 %v3324
        %v3363 = vunpack.c.l.b16 %v3325
        %v3364 = vunpack.c.h.b16 %v3325
        %v3365 = vunpack.c.l.b16 %v3326
        %v3366 = vunpack.c.h.b16 %v3326
        %v3367 = vunpack.c.l.b16 %v3327
        %v3368 = vunpack.c.h.b16 %v3327
        %v3369 = vunpack.c.l.b16 %v3328
        %v3370 = vunpack.c.h.b16 %v3328
        %v3371 = vunpack.c.l.b16 %v3329
        %v3372 = vunpack.c.h.b16 %v3329
        %v3373 = vunpack.c.l.b16 %v3330
        %v3374 = vunpack.c.h.b16 %v3330
        %v3375 = vunpack.c.l.b16 %v3331
        %v3376 = vunpack.c.h.b16 %v3331
        %v3377 = vunpack.c.l.b16 %v3332
        %v3378 = vunpack.c.h.b16 %v3332
        %v3379 = vunpack.c.l.b16 %v3333
        %v3380 = vunpack.c.h.b16 %v3333
        %v3381 = vunpack.c.l.b16 %v3334
        %v3382 = vunpack.c.h.b16 %v3334
        %v3383 = vpack.c.b16 %v3353, %v3351
        %v3384 = vpack.c.b16 %v3354, %v3352
        %v3385 = vpack.c.b16 %v3357, %v3355
        %v3386 = vpack.c.b16 %v3358, %v3356
        %v3387 = vpack.c.b16 %v3361, %v3359
        %v3388 = vpack.c.b16 %v3362, %v3360
        %v3389 = vpack.c.b16 %v3365, %v3363
        %v3390 = vpack.c.b16 %v3366, %v3364
        %v3391 = vpack.c.b16 %v3369, %v3367
        %v3392 = vpack.c.b16 %v3370, %v3368
        %v3393 = vpack.c.b16 %v3373, %v3371
        %v3394 = vpack.c.b16 %v3374, %v3372
        %v3395 = vpack.c.b16 %v3377, %v3375
        %v3396 = vpack.c.b16 %v3378, %v3376
        %v3397 = vpack.c.b16 %v3381, %v3379
        %v3398 = vpack.c.b16 %v3382, %v3380
        %3415 = vmatprep.subr.bf16.mxu0 %v3384
        %3416 = vmatpush1.bf16.msra.mxu0 %v3383
        %3417 = vmatprep.subr.bf16.mxu0 %v3386
        %3418 = vmatpush1.bf16.msra.mxu0 %v3385
        %3419 = vmatprep.subr.bf16.mxu0 %v3388
        %3420 = vmatpush1.bf16.msra.mxu0 %v3387
        %3421 = vmatprep.subr.bf16.mxu0 %v3390
        %3422 = vmatpush1.bf16.msra.mxu0 %v3389
        %3423 = vmatprep.subr.bf16.mxu0 %v3392
        %3424 = vmatpush1.bf16.msra.mxu0 %v3391
        %3425 = vmatprep.subr.bf16.mxu0 %v3394
        %3426 = vmatpush1.bf16.msra.mxu0 %v3393
        %3427 = vmatprep.subr.bf16.mxu0 %v3396
        %3428 = vmatpush1.bf16.msra.mxu0 %v3395
        %3429 = vmatprep.subr.bf16.mxu0 %v3398
        %3430 = vmatpush1.bf16.msra.mxu0 %v3397
        %3431 = vmatprep.subr.bf16.mxu0 0
        %3432 = vmatpush1.bf16.msra.mxu0 0
        %3433 = vmatprep.subr.bf16.mxu0 0
        %3434 = vmatpush1.bf16.msra.mxu0 0
        %3435 = vmatprep.subr.bf16.mxu0 0
        %3436 = vmatpush1.bf16.msra.mxu0 0
        %3437 = vmatprep.subr.bf16.mxu0 0
        %3438 = vmatpush1.bf16.msra.mxu0 0
        %3439 = vmatprep.subr.bf16.mxu0 0
        %3440 = vmatpush1.bf16.msra.mxu0 0
        %3441 = vmatprep.subr.bf16.mxu0 0
        %3442 = vmatpush1.bf16.msra.mxu0 0
        %3443 = vmatprep.subr.bf16.mxu0 0
        %3444 = vmatpush1.bf16.msra.mxu0 0
        %3445 = vmatprep.subr.bf16.mxu0 0
        %3446 = vmatpush1.bf16.msra.mxu0 0
        %3447 = vmatprep.mubr.bf16.mxu0 0
        %3448 = vmatmul.mubr.bf16.gmra.mrb[0].mxu0 %v3317
        %v3449 = vpop.f32.mrb[0].mxu0
        %v3450 = vadd.f32 0.0, %v3449
        %v3451 = vpop.f32.mrb[0].mxu0
        %v3452 = vadd.f32 0.0, %v3451
        %v3453 = vpop.f32.mrb[0].mxu0
        %v3454 = vadd.f32 0.0, %v3453
        %v3455 = vpop.f32.mrb[0].mxu0
        %v3456 = vadd.f32 0.0, %v3455
        %3457 = vdwg.mxu0
        %v3458 = vadd.f32 %v3309, %v3450
        %v3459 = vadd.f32 %v3310, %v3452
        %v3460 = vadd.f32 %v3311, %v3454
        %v3461 = vadd.f32 %v3312, %v3456
        %s3462 = scalar_lea.vmem [#allocation3], 12
        %v3463 = vld [vmem:[%s3462] ss:$2 sm:$0xff]
        %s3464 = scalar_lea.vmem [#allocation3], 28
        %v3465 = vld [vmem:[%s3464] ss:$2 sm:$0xf]
        %v3466 = vpack.c.bf16 %v3465, %v3463
        %s3467 = scalar_lea.vmem %s5, 768
        %v3468 = vld [vmem:[%s3467] sm:$0xff]
        %v3469 = vld [vmem:[%s3467 + $0x8] sm:$0xff]
        %v3470 = vld [vmem:[%s3467 + $0x10] sm:$0xff]
        %v3471 = vld [vmem:[%s3467 + $0x18] sm:$0xff]
        %v3472 = vld [vmem:[%s3467 + $0x20] sm:$0xff]
        %v3473 = vld [vmem:[%s3467 + $0x28] sm:$0xff]
        %v3474 = vld [vmem:[%s3467 + $0x30] sm:$0xff]
        %v3475 = vld [vmem:[%s3467 + $0x38] sm:$0xff]
        %v3476 = vld [vmem:[%s3467 + $0x40] sm:$0xff]
        %v3477 = vld [vmem:[%s3467 + $0x48] sm:$0xff]
        %v3478 = vld [vmem:[%s3467 + $0x50] sm:$0xff]
        %v3479 = vld [vmem:[%s3467 + $0x58] sm:$0xff]
        %v3480 = vld [vmem:[%s3467 + $0x60] sm:$0xff]
        %v3481 = vld [vmem:[%s3467 + $0x68] sm:$0xff]
        %v3482 = vld [vmem:[%s3467 + $0x70] sm:$0xff]
        %v3483 = vld [vmem:[%s3467 + $0x78] sm:$0xff]
        %v3500 = vunpack.c.l.b16 %v3468
        %v3501 = vunpack.c.h.b16 %v3468
        %v3502 = vunpack.c.l.b16 %v3469
        %v3503 = vunpack.c.h.b16 %v3469
        %v3504 = vunpack.c.l.b16 %v3470
        %v3505 = vunpack.c.h.b16 %v3470
        %v3506 = vunpack.c.l.b16 %v3471
        %v3507 = vunpack.c.h.b16 %v3471
        %v3508 = vunpack.c.l.b16 %v3472
        %v3509 = vunpack.c.h.b16 %v3472
        %v3510 = vunpack.c.l.b16 %v3473
        %v3511 = vunpack.c.h.b16 %v3473
        %v3512 = vunpack.c.l.b16 %v3474
        %v3513 = vunpack.c.h.b16 %v3474
        %v3514 = vunpack.c.l.b16 %v3475
        %v3515 = vunpack.c.h.b16 %v3475
        %v3516 = vunpack.c.l.b16 %v3476
        %v3517 = vunpack.c.h.b16 %v3476
        %v3518 = vunpack.c.l.b16 %v3477
        %v3519 = vunpack.c.h.b16 %v3477
        %v3520 = vunpack.c.l.b16 %v3478
        %v3521 = vunpack.c.h.b16 %v3478
        %v3522 = vunpack.c.l.b16 %v3479
        %v3523 = vunpack.c.h.b16 %v3479
        %v3524 = vunpack.c.l.b16 %v3480
        %v3525 = vunpack.c.h.b16 %v3480
        %v3526 = vunpack.c.l.b16 %v3481
        %v3527 = vunpack.c.h.b16 %v3481
        %v3528 = vunpack.c.l.b16 %v3482
        %v3529 = vunpack.c.h.b16 %v3482
        %v3530 = vunpack.c.l.b16 %v3483
        %v3531 = vunpack.c.h.b16 %v3483
        %v3532 = vpack.c.b16 %v3502, %v3500
        %v3533 = vpack.c.b16 %v3503, %v3501
        %v3534 = vpack.c.b16 %v3506, %v3504
        %v3535 = vpack.c.b16 %v3507, %v3505
        %v3536 = vpack.c.b16 %v3510, %v3508
        %v3537 = vpack.c.b16 %v3511, %v3509
        %v3538 = vpack.c.b16 %v3514, %v3512
        %v3539 = vpack.c.b16 %v3515, %v3513
        %v3540 = vpack.c.b16 %v3518, %v3516
        %v3541 = vpack.c.b16 %v3519, %v3517
        %v3542 = vpack.c.b16 %v3522, %v3520
        %v3543 = vpack.c.b16 %v3523, %v3521
        %v3544 = vpack.c.b16 %v3526, %v3524
        %v3545 = vpack.c.b16 %v3527, %v3525
        %v3546 = vpack.c.b16 %v3530, %v3528
        %v3547 = vpack.c.b16 %v3531, %v3529
        %3564 = vmatprep.subr.bf16.mxu0 %v3533
        %3565 = vmatpush1.bf16.msra.mxu0 %v3532
        %3566 = vmatprep.subr.bf16.mxu0 %v3535
        %3567 = vmatpush1.bf16.msra.mxu0 %v3534
        %3568 = vmatprep.subr.bf16.mxu0 %v3537
        %3569 = vmatpush1.bf16.msra.mxu0 %v3536
        %3570 = vmatprep.subr.bf16.mxu0 %v3539
        %3571 = vmatpush1.bf16.msra.mxu0 %v3538
        %3572 = vmatprep.subr.bf16.mxu0 %v3541
        %3573 = vmatpush1.bf16.msra.mxu0 %v3540
        %3574 = vmatprep.subr.bf16.mxu0 %v3543
        %3575 = vmatpush1.bf16.msra.mxu0 %v3542
        %3576 = vmatprep.subr.bf16.mxu0 %v3545
        %3577 = vmatpush1.bf16.msra.mxu0 %v3544
        %3578 = vmatprep.subr.bf16.mxu0 %v3547
        %3579 = vmatpush1.bf16.msra.mxu0 %v3546
        %3580 = vmatprep.subr.bf16.mxu0 0
        %3581 = vmatpush1.bf16.msra.mxu0 0
        %3582 = vmatprep.subr.bf16.mxu0 0
        %3583 = vmatpush1.bf16.msra.mxu0 0
        %3584 = vmatprep.subr.bf16.mxu0 0
        %3585 = vmatpush1.bf16.msra.mxu0 0
        %3586 = vmatprep.subr.bf16.mxu0 0
        %3587 = vmatpush1.bf16.msra.mxu0 0
        %3588 = vmatprep.subr.bf16.mxu0 0
        %3589 = vmatpush1.bf16.msra.mxu0 0
        %3590 = vmatprep.subr.bf16.mxu0 0
        %3591 = vmatpush1.bf16.msra.mxu0 0
        %3592 = vmatprep.subr.bf16.mxu0 0
        %3593 = vmatpush1.bf16.msra.mxu0 0
        %3594 = vmatprep.subr.bf16.mxu0 0
        %3595 = vmatpush1.bf16.msra.mxu0 0
        %3596 = vmatprep.mubr.bf16.mxu0 0
        %3597 = vmatmul.mubr.bf16.gmra.mrb[0].mxu0 %v3466
        %v3598 = vpop.f32.mrb[0].mxu0
        %v3599 = vadd.f32 0.0, %v3598
        %v3600 = vpop.f32.mrb[0].mxu0
        %v3601 = vadd.f32 0.0, %v3600
        %v3602 = vpop.f32.mrb[0].mxu0
        %v3603 = vadd.f32 0.0, %v3602
        %v3604 = vpop.f32.mrb[0].mxu0
        %v3605 = vadd.f32 0.0, %v3604
        %3606 = vdwg.mxu0
        %v3607 = vadd.f32 %v3458, %v3599
        %v3608 = vadd.f32 %v3459, %v3601
        %v3609 = vadd.f32 %v3460, %v3603
        %v3610 = vadd.f32 %v3461, %v3605
        %s3611 = scalar_lea.vmem [#allocation3], 13
        %v3612 = vld [vmem:[%s3611] ss:$2 sm:$0xff]
        %s3613 = scalar_lea.vmem [#allocation3], 29
        %v3614 = vld [vmem:[%s3613] ss:$2 sm:$0xf]
        %v3615 = vpack.c.bf16 %v3614, %v3612
        %s3616 = scalar_lea.vmem %s5, 896
        %v3617 = vld [vmem:[%s3616] sm:$0xff]
        %v3618 = vld [vmem:[%s3616 + $0x8] sm:$0xff]
        %v3619 = vld [vmem:[%s3616 + $0x10] sm:$0xff]
        %v3620 = vld [vmem:[%s3616 + $0x18] sm:$0xff]
        %v3621 = vld [vmem:[%s3616 + $0x20] sm:$0xff]
        %v3622 = vld [vmem:[%s3616 + $0x28] sm:$0xff]
        %v3623 = vld [vmem:[%s3616 + $0x30] sm:$0xff]
        %v3624 = vld [vmem:[%s3616 + $0x38] sm:$0xff]
        %v3625 = vld [vmem:[%s3616 + $0x40] sm:$0xff]
        %v3626 = vld [vmem:[%s3616 + $0x48] sm:$0xff]
        %v3627 = vld [vmem:[%s3616 + $0x50] sm:$0xff]
        %v3628 = vld [vmem:[%s3616 + $0x58] sm:$0xff]
        %v3629 = vld [vmem:[%s3616 + $0x60] sm:$0xff]
        %v3630 = vld [vmem:[%s3616 + $0x68] sm:$0xff]
        %v3631 = vld [vmem:[%s3616 + $0x70] sm:$0xff]
        %v3632 = vld [vmem:[%s3616 + $0x78] sm:$0xff]
        %v3649 = vunpack.c.l.b16 %v3617
        %v3650 = vunpack.c.h.b16 %v3617
        %v3651 = vunpack.c.l.b16 %v3618
        %v3652 = vunpack.c.h.b16 %v3618
        %v3653 = vunpack.c.l.b16 %v3619
        %v3654 = vunpack.c.h.b16 %v3619
        %v3655 = vunpack.c.l.b16 %v3620
        %v3656 = vunpack.c.h.b16 %v3620
        %v3657 = vunpack.c.l.b16 %v3621
        %v3658 = vunpack.c.h.b16 %v3621
        %v3659 = vunpack.c.l.b16 %v3622
        %v3660 = vunpack.c.h.b16 %v3622
        %v3661 = vunpack.c.l.b16 %v3623
        %v3662 = vunpack.c.h.b16 %v3623
        %v3663 = vunpack.c.l.b16 %v3624
        %v3664 = vunpack.c.h.b16 %v3624
        %v3665 = vunpack.c.l.b16 %v3625
        %v3666 = vunpack.c.h.b16 %v3625
        %v3667 = vunpack.c.l.b16 %v3626
        %v3668 = vunpack.c.h.b16 %v3626
        %v3669 = vunpack.c.l.b16 %v3627
        %v3670 = vunpack.c.h.b16 %v3627
        %v3671 = vunpack.c.l.b16 %v3628
        %v3672 = vunpack.c.h.b16 %v3628
        %v3673 = vunpack.c.l.b16 %v3629
        %v3674 = vunpack.c.h.b16 %v3629
        %v3675 = vunpack.c.l.b16 %v3630
        %v3676 = vunpack.c.h.b16 %v3630
        %v3677 = vunpack.c.l.b16 %v3631
        %v3678 = vunpack.c.h.b16 %v3631
        %v3679 = vunpack.c.l.b16 %v3632
        %v3680 = vunpack.c.h.b16 %v3632
        %v3681 = vpack.c.b16 %v3651, %v3649
        %v3682 = vpack.c.b16 %v3652, %v3650
        %v3683 = vpack.c.b16 %v3655, %v3653
        %v3684 = vpack.c.b16 %v3656, %v3654
        %v3685 = vpack.c.b16 %v3659, %v3657
        %v3686 = vpack.c.b16 %v3660, %v3658
        %v3687 = vpack.c.b16 %v3663, %v3661
        %v3688 = vpack.c.b16 %v3664, %v3662
        %v3689 = vpack.c.b16 %v3667, %v3665
        %v3690 = vpack.c.b16 %v3668, %v3666
        %v3691 = vpack.c.b16 %v3671, %v3669
        %v3692 = vpack.c.b16 %v3672, %v3670
        %v3693 = vpack.c.b16 %v3675, %v3673
        %v3694 = vpack.c.b16 %v3676, %v3674
        %v3695 = vpack.c.b16 %v3679, %v3677
        %v3696 = vpack.c.b16 %v3680, %v3678
        %3713 = vmatprep.subr.bf16.mxu0 %v3682
        %3714 = vmatpush1.bf16.msra.mxu0 %v3681
        %3715 = vmatprep.subr.bf16.mxu0 %v3684
        %3716 = vmatpush1.bf16.msra.mxu0 %v3683
        %3717 = vmatprep.subr.bf16.mxu0 %v3686
        %3718 = vmatpush1.bf16.msra.mxu0 %v3685
        %3719 = vmatprep.subr.bf16.mxu0 %v3688
        %3720 = vmatpush1.bf16.msra.mxu0 %v3687
        %3721 = vmatprep.subr.bf16.mxu0 %v3690
        %3722 = vmatpush1.bf16.msra.mxu0 %v3689
        %3723 = vmatprep.subr.bf16.mxu0 %v3692
        %3724 = vmatpush1.bf16.msra.mxu0 %v3691
        %3725 = vmatprep.subr.bf16.mxu0 %v3694
        %3726 = vmatpush1.bf16.msra.mxu0 %v3693
        %3727 = vmatprep.subr.bf16.mxu0 %v3696
        %3728 = vmatpush1.bf16.msra.mxu0 %v3695
        %3729 = vmatprep.subr.bf16.mxu0 0
        %3730 = vmatpush1.bf16.msra.mxu0 0
        %3731 = vmatprep.subr.bf16.mxu0 0
        %3732 = vmatpush1.bf16.msra.mxu0 0
        %3733 = vmatprep.subr.bf16.mxu0 0
        %3734 = vmatpush1.bf16.msra.mxu0 0
        %3735 = vmatprep.subr.bf16.mxu0 0
        %3736 = vmatpush1.bf16.msra.mxu0 0
        %3737 = vmatprep.subr.bf16.mxu0 0
        %3738 = vmatpush1.bf16.msra.mxu0 0
        %3739 = vmatprep.subr.bf16.mxu0 0
        %3740 = vmatpush1.bf16.msra.mxu0 0
        %3741 = vmatprep.subr.bf16.mxu0 0
        %3742 = vmatpush1.bf16.msra.mxu0 0
        %3743 = vmatprep.subr.bf16.mxu0 0
        %3744 = vmatpush1.bf16.msra.mxu0 0
        %3745 = vmatprep.mubr.bf16.mxu0 0
        %3746 = vmatmul.mubr.bf16.gmra.mrb[0].mxu0 %v3615
        %v3747 = vpop.f32.mrb[0].mxu0
        %v3748 = vadd.f32 0.0, %v3747
        %v3749 = vpop.f32.mrb[0].mxu0
        %v3750 = vadd.f32 0.0, %v3749
        %v3751 = vpop.f32.mrb[0].mxu0
        %v3752 = vadd.f32 0.0, %v3751
        %v3753 = vpop.f32.mrb[0].mxu0
        %v3754 = vadd.f32 0.0, %v3753
        %3755 = vdwg.mxu0
        %v3756 = vadd.f32 %v3607, %v3748
        %v3757 = vadd.f32 %v3608, %v3750
        %v3758 = vadd.f32 %v3609, %v3752
        %v3759 = vadd.f32 %v3610, %v3754
        %s3760 = scalar_lea.vmem [#allocation3], 14
        %v3761 = vld [vmem:[%s3760] ss:$2 sm:$0xff]
        %s3762 = scalar_lea.vmem [#allocation3], 30
        %v3763 = vld [vmem:[%s3762] ss:$2 sm:$0xf]
        %v3764 = vpack.c.bf16 %v3763, %v3761
        %s3765 = scalar_lea.vmem %s5, 1024
        %v3766 = vld [vmem:[%s3765] sm:$0xff]
        %v3767 = vld [vmem:[%s3765 + $0x8] sm:$0xff]
        %v3768 = vld [vmem:[%s3765 + $0x10] sm:$0xff]
        %v3769 = vld [vmem:[%s3765 + $0x18] sm:$0xff]
        %v3770 = vld [vmem:[%s3765 + $0x20] sm:$0xff]
        %v3771 = vld [vmem:[%s3765 + $0x28] sm:$0xff]
        %v3772 = vld [vmem:[%s3765 + $0x30] sm:$0xff]
        %v3773 = vld [vmem:[%s3765 + $0x38] sm:$0xff]
        %v3774 = vld [vmem:[%s3765 + $0x40] sm:$0xff]
        %v3775 = vld [vmem:[%s3765 + $0x48] sm:$0xff]
        %v3776 = vld [vmem:[%s3765 + $0x50] sm:$0xff]
        %v3777 = vld [vmem:[%s3765 + $0x58] sm:$0xff]
        %v3778 = vld [vmem:[%s3765 + $0x60] sm:$0xff]
        %v3779 = vld [vmem:[%s3765 + $0x68] sm:$0xff]
        %v3780 = vld [vmem:[%s3765 + $0x70] sm:$0xff]
        %v3781 = vld [vmem:[%s3765 + $0x78] sm:$0xff]
        %v3798 = vunpack.c.l.b16 %v3766
        %v3799 = vunpack.c.h.b16 %v3766
        %v3800 = vunpack.c.l.b16 %v3767
        %v3801 = vunpack.c.h.b16 %v3767
        %v3802 = vunpack.c.l.b16 %v3768
        %v3803 = vunpack.c.h.b16 %v3768
        %v3804 = vunpack.c.l.b16 %v3769
        %v3805 = vunpack.c.h.b16 %v3769
        %v3806 = vunpack.c.l.b16 %v3770
        %v3807 = vunpack.c.h.b16 %v3770
        %v3808 = vunpack.c.l.b16 %v3771
        %v3809 = vunpack.c.h.b16 %v3771
        %v3810 = vunpack.c.l.b16 %v3772
        %v3811 = vunpack.c.h.b16 %v3772
        %v3812 = vunpack.c.l.b16 %v3773
        %v3813 = vunpack.c.h.b16 %v3773
        %v3814 = vunpack.c.l.b16 %v3774
        %v3815 = vunpack.c.h.b16 %v3774
        %v3816 = vunpack.c.l.b16 %v3775
        %v3817 = vunpack.c.h.b16 %v3775
        %v3818 = vunpack.c.l.b16 %v3776
        %v3819 = vunpack.c.h.b16 %v3776
        %v3820 = vunpack.c.l.b16 %v3777
        %v3821 = vunpack.c.h.b16 %v3777
        %v3822 = vunpack.c.l.b16 %v3778
        %v3823 = vunpack.c.h.b16 %v3778
        %v3824 = vunpack.c.l.b16 %v3779
        %v3825 = vunpack.c.h.b16 %v3779
        %v3826 = vunpack.c.l.b16 %v3780
        %v3827 = vunpack.c.h.b16 %v3780
        %v3828 = vunpack.c.l.b16 %v3781
        %v3829 = vunpack.c.h.b16 %v3781
        %v3830 = vpack.c.b16 %v3800, %v3798
        %v3831 = vpack.c.b16 %v3801, %v3799
        %v3832 = vpack.c.b16 %v3804, %v3802
        %v3833 = vpack.c.b16 %v3805, %v3803
        %v3834 = vpack.c.b16 %v3808, %v3806
        %v3835 = vpack.c.b16 %v3809, %v3807
        %v3836 = vpack.c.b16 %v3812, %v3810
        %v3837 = vpack.c.b16 %v3813, %v3811
        %v3838 = vpack.c.b16 %v3816, %v3814
        %v3839 = vpack.c.b16 %v3817, %v3815
        %v3840 = vpack.c.b16 %v3820, %v3818
        %v3841 = vpack.c.b16 %v3821, %v3819
        %v3842 = vpack.c.b16 %v3824, %v3822
        %v3843 = vpack.c.b16 %v3825, %v3823
        %v3844 = vpack.c.b16 %v3828, %v3826
        %v3845 = vpack.c.b16 %v3829, %v3827
        %3862 = vmatprep.subr.bf16.mxu0 %v3831
        %3863 = vmatpush1.bf16.msra.mxu0 %v3830
        %3864 = vmatprep.subr.bf16.mxu0 %v3833
        %3865 = vmatpush1.bf16.msra.mxu0 %v3832
        %3866 = vmatprep.subr.bf16.mxu0 %v3835
        %3867 = vmatpush1.bf16.msra.mxu0 %v3834
        %3868 = vmatprep.subr.bf16.mxu0 %v3837
        %3869 = vmatpush1.bf16.msra.mxu0 %v3836
        %3870 = vmatprep.subr.bf16.mxu0 %v3839
        %3871 = vmatpush1.bf16.msra.mxu0 %v3838
        %3872 = vmatprep.subr.bf16.mxu0 %v3841
        %3873 = vmatpush1.bf16.msra.mxu0 %v3840
        %3874 = vmatprep.subr.bf16.mxu0 %v3843
        %3875 = vmatpush1.bf16.msra.mxu0 %v3842
        %3876 = vmatprep.subr.bf16.mxu0 %v3845
        %3877 = vmatpush1.bf16.msra.mxu0 %v3844
        %3878 = vmatprep.subr.bf16.mxu0 0
        %3879 = vmatpush1.bf16.msra.mxu0 0
        %3880 = vmatprep.subr.bf16.mxu0 0
        %3881 = vmatpush1.bf16.msra.mxu0 0
        %3882 = vmatprep.subr.bf16.mxu0 0
        %3883 = vmatpush1.bf16.msra.mxu0 0
        %3884 = vmatprep.subr.bf16.mxu0 0
        %3885 = vmatpush1.bf16.msra.mxu0 0
        %3886 = vmatprep.subr.bf16.mxu0 0
        %3887 = vmatpush1.bf16.msra.mxu0 0
        %3888 = vmatprep.subr.bf16.mxu0 0
        %3889 = vmatpush1.bf16.msra.mxu0 0
        %3890 = vmatprep.subr.bf16.mxu0 0
        %3891 = vmatpush1.bf16.msra.mxu0 0
        %3892 = vmatprep.subr.bf16.mxu0 0
        %3893 = vmatpush1.bf16.msra.mxu0 0
        %3894 = vmatprep.mubr.bf16.mxu0 0
        %3895 = vmatmul.mubr.bf16.gmra.mrb[0].mxu0 %v3764
        %v3896 = vpop.f32.mrb[0].mxu0
        %v3897 = vadd.f32 0.0, %v3896
        %v3898 = vpop.f32.mrb[0].mxu0
        %v3899 = vadd.f32 0.0, %v3898
        %v3900 = vpop.f32.mrb[0].mxu0
        %v3901 = vadd.f32 0.0, %v3900
        %v3902 = vpop.f32.mrb[0].mxu0
        %v3903 = vadd.f32 0.0, %v3902
        %3904 = vdwg.mxu0
        %v3905 = vadd.f32 %v3756, %v3897
        %v3906 = vadd.f32 %v3757, %v3899
        %v3907 = vadd.f32 %v3758, %v3901
        %v3908 = vadd.f32 %v3759, %v3903
        %v3910 = vlaneseq
        %v3911 = vshrl.u32 %v3910, 7
        %v3912 = vsub.s32 0, %v3911
        %v3913 = vrot.slane %v2577, %v3912
        %v3914 = vlaneseq
        %v3915 = vshrl.u32 %v3914, 7
        %v3916 = vsub.s32 1, %v3915
        %v3917 = vrot.slane %v2577, %v3916
        %v3920 = vadd.f32 %v3905, %v3913
        %v3921 = vadd.f32 %v3906, %v3917
        %v3922 = vadd.f32 %v3907, %v3913
        %v3923 = vadd.f32 %v3908, %v3917
        %v3924 = vmax.f32 %v3920, 0.0
        %v3925 = vmax.f32 %v3921, 0.0
        %v3926 = vmax.f32 %v3922, 0.0
        %v3927 = vmax.f32 %v3923, 0.0
        %3928 = vmatprep.subr.bf16.mxu0 %v2669
        %3929 = vmatpush1.bf16.msra.mxu0 %v2668
        %3930 = vmatprep.subr.bf16.mxu0 %v2671
        %3931 = vmatpush1.bf16.msra.mxu0 %v2670
        %3932 = vmatprep.subr.bf16.mxu0 %v2673
        %3933 = vmatpush1.bf16.msra.mxu0 %v2672
        %3934 = vmatprep.subr.bf16.mxu0 %v2675
        %3935 = vmatpush1.bf16.msra.mxu0 %v2674
        %3936 = vmatprep.subr.bf16.mxu0 %v2677
        %3937 = vmatpush1.bf16.msra.mxu0 %v2676
        %3938 = vmatprep.subr.bf16.mxu0 %v2679
        %3939 = vmatpush1.bf16.msra.mxu0 %v2678
        %3940 = vmatprep.subr.bf16.mxu0 %v2681
        %3941 = vmatpush1.bf16.msra.mxu0 %v2680
        %3942 = vmatprep.subr.bf16.mxu0 %v2683
        %3943 = vmatpush1.bf16.msra.mxu0 %v2682
        %3944 = vmatprep.subr.bf16.mxu0 0
        %3945 = vmatpush1.bf16.msra.mxu0 0
        %3946 = vmatprep.subr.bf16.mxu0 0
        %3947 = vmatpush1.bf16.msra.mxu0 0
        %3948 = vmatprep.subr.bf16.mxu0 0
        %3949 = vmatpush1.bf16.msra.mxu0 0
        %3950 = vmatprep.subr.bf16.mxu0 0
        %3951 = vmatpush1.bf16.msra.mxu0 0
        %3952 = vmatprep.subr.bf16.mxu0 0
        %3953 = vmatpush1.bf16.msra.mxu0 0
        %3954 = vmatprep.subr.bf16.mxu0 0
        %3955 = vmatpush1.bf16.msra.mxu0 0
        %3956 = vmatprep.subr.bf16.mxu0 0
        %3957 = vmatpush1.bf16.msra.mxu0 0
        %3958 = vmatprep.subr.bf16.mxu0 0
        %3959 = vmatpush1.bf16.msra.mxu0 0
        %3960 = vmatprep.mubr.bf16.mxu0 0
        %3961 = vmatmul.mubr.bf16.gmra.mrb[0].mxu0 %v2870
        %v3962 = vpop.f32.mrb[0].mxu0
        %v3963 = vadd.f32 0.0, %v3962
        %v3964 = vpop.f32.mrb[0].mxu0
        %v3965 = vadd.f32 0.0, %v3964
        %v3966 = vpop.f32.mrb[0].mxu0
        %v3967 = vadd.f32 0.0, %v3966
        %v3968 = vpop.f32.mrb[0].mxu0
        %v3969 = vadd.f32 0.0, %v3968
        %3970 = vdwg.mxu0
        %3971 = vmatprep.subr.bf16.mxu0 %v2792
        %3972 = vmatpush1.bf16.msra.mxu0 %v2791
        %3973 = vmatprep.subr.bf16.mxu0 %v2794
        %3974 = vmatpush1.bf16.msra.mxu0 %v2793
        %3975 = vmatprep.subr.bf16.mxu0 %v2796
        %3976 = vmatpush1.bf16.msra.mxu0 %v2795
        %3977 = vmatprep.subr.bf16.mxu0 %v2798
        %3978 = vmatpush1.bf16.msra.mxu0 %v2797
        %3979 = vmatprep.subr.bf16.mxu0 %v2800
        %3980 = vmatpush1.bf16.msra.mxu0 %v2799
        %3981 = vmatprep.subr.bf16.mxu0 %v2802
        %3982 = vmatpush1.bf16.msra.mxu0 %v2801
        %3983 = vmatprep.subr.bf16.mxu0 %v2804
        %3984 = vmatpush1.bf16.msra.mxu0 %v2803
        %3985 = vmatprep.subr.bf16.mxu0 %v2806
        %3986 = vmatpush1.bf16.msra.mxu0 %v2805
        %3987 = vmatprep.subr.bf16.mxu0 0
        %3988 = vmatpush1.bf16.msra.mxu0 0
        %3989 = vmatprep.subr.bf16.mxu0 0
        %3990 = vmatpush1.bf16.msra.mxu0 0
        %3991 = vmatprep.subr.bf16.mxu0 0
        %3992 = vmatpush1.bf16.msra.mxu0 0
        %3993 = vmatprep.subr.bf16.mxu0 0
        %3994 = vmatpush1.bf16.msra.mxu0 0
        %3995 = vmatprep.subr.bf16.mxu0 0
        %3996 = vmatpush1.bf16.msra.mxu0 0
        %3997 = vmatprep.subr.bf16.mxu0 0
        %3998 = vmatpush1.bf16.msra.mxu0 0
        %3999 = vmatprep.subr.bf16.mxu0 0
        %4000 = vmatpush1.bf16.msra.mxu0 0
        %4001 = vmatprep.subr.bf16.mxu0 0
        %4002 = vmatpush1.bf16.msra.mxu0 0
        %4003 = vmatprep.mubr.bf16.mxu0 0
        %4004 = vmatmul.mubr.bf16.gmra.mrb[0].mxu0 %v2602
        %v4005 = vpop.f32.mrb[0].mxu0
        %v4006 = vadd.f32 %v3963, %v4005
        %v4007 = vpop.f32.mrb[0].mxu0
        %v4008 = vadd.f32 %v3965, %v4007
        %v4009 = vpop.f32.mrb[0].mxu0
        %v4010 = vadd.f32 %v3967, %v4009
        %v4011 = vpop.f32.mrb[0].mxu0
        %v4012 = vadd.f32 %v3969, %v4011
        %4013 = vdwg.mxu0
        %s4014 = scalar_lea.vmem [#allocation3], 3
        %v4015 = vld [vmem:[%s4014] ss:$2 sm:$0xff]
        %s4016 = scalar_lea.vmem [#allocation3], 19
        %v4017 = vld [vmem:[%s4016] ss:$2 sm:$0xf]
        %v4018 = vpack.c.bf16 %v4017, %v4015
        %4019 = vmatprep.subr.bf16.mxu0 %v2937
        %4020 = vmatpush1.bf16.msra.mxu0 %v2936
        %4021 = vmatprep.subr.bf16.mxu0 %v2939
        %4022 = vmatpush1.bf16.msra.mxu0 %v2938
        %4023 = vmatprep.subr.bf16.mxu0 %v2941
        %4024 = vmatpush1.bf16.msra.mxu0 %v2940
        %4025 = vmatprep.subr.bf16.mxu0 %v2943
        %4026 = vmatpush1.bf16.msra.mxu0 %v2942
        %4027 = vmatprep.subr.bf16.mxu0 %v2945
        %4028 = vmatpush1.bf16.msra.mxu0 %v2944
        %4029 = vmatprep.subr.bf16.mxu0 %v2947
        %4030 = vmatpush1.bf16.msra.mxu0 %v2946
        %4031 = vmatprep.subr.bf16.mxu0 %v2949
        %4032 = vmatpush1.bf16.msra.mxu0 %v2948
        %4033 = vmatprep.subr.bf16.mxu0 %v2951
        %4034 = vmatpush1.bf16.msra.mxu0 %v2950
        %4035 = vmatprep.subr.bf16.mxu0 0
        %4036 = vmatpush1.bf16.msra.mxu0 0
        %4037 = vmatprep.subr.bf16.mxu0 0
        %4038 = vmatpush1.bf16.msra.mxu0 0
        %4039 = vmatprep.subr.bf16.mxu0 0
        %4040 = vmatpush1.bf16.msra.mxu0 0
        %4041 = vmatprep.subr.bf16.mxu0 0
        %4042 = vmatpush1.bf16.msra.mxu0 0
        %4043 = vmatprep.subr.bf16.mxu0 0
        %4044 = vmatpush1.bf16.msra.mxu0 0
        %4045 = vmatprep.subr.bf16.mxu0 0
        %4046 = vmatpush1.bf16.msra.mxu0 0
        %4047 = vmatprep.subr.bf16.mxu0 0
        %4048 = vmatpush1.bf16.msra.mxu0 0
        %4049 = vmatprep.subr.bf16.mxu0 0
        %4050 = vmatpush1.bf16.msra.mxu0 0
        %4051 = vmatprep.mubr.bf16.mxu0 0
        %4052 = vmatmul.mubr.bf16.gmra.mrb[0].mxu0 %v4018
        %v4053 = vpop.f32.mrb[0].mxu0
        %v4054 = vadd.f32 0.0, %v4053
        %v4055 = vpop.f32.mrb[0].mxu0
        %v4056 = vadd.f32 0.0, %v4055
        %v4057 = vpop.f32.mrb[0].mxu0
        %v4058 = vadd.f32 0.0, %v4057
        %v4059 = vpop.f32.mrb[0].mxu0
        %v4060 = vadd.f32 0.0, %v4059
        %4061 = vdwg.mxu0
        %v4062 = vadd.f32 %v4006, %v4054
        %v4063 = vadd.f32 %v4008, %v4056
        %v4064 = vadd.f32 %v4010, %v4058
        %v4065 = vadd.f32 %v4012, %v4060
        %4066 = vmatprep.subr.bf16.mxu0 %v3086
        %4067 = vmatpush1.bf16.msra.mxu0 %v3085
        %4068 = vmatprep.subr.bf16.mxu0 %v3088
        %4069 = vmatpush1.bf16.msra.mxu0 %v3087
        %4070 = vmatprep.subr.bf16.mxu0 %v3090
        %4071 = vmatpush1.bf16.msra.mxu0 %v3089
        %4072 = vmatprep.subr.bf16.mxu0 %v3092
        %4073 = vmatpush1.bf16.msra.mxu0 %v3091
        %4074 = vmatprep.subr.bf16.mxu0 %v3094
        %4075 = vmatpush1.bf16.msra.mxu0 %v3093
        %4076 = vmatprep.subr.bf16.mxu0 %v3096
        %4077 = vmatpush1.bf16.msra.mxu0 %v3095
        %4078 = vmatprep.subr.bf16.mxu0 %v3098
        %4079 = vmatpush1.bf16.msra.mxu0 %v3097
        %4080 = vmatprep.subr.bf16.mxu0 %v3100
        %4081 = vmatpush1.bf16.msra.mxu0 %v3099
        %4082 = vmatprep.subr.bf16.mxu0 0
        %4083 = vmatpush1.bf16.msra.mxu0 0
        %4084 = vmatprep.subr.bf16.mxu0 0
        %4085 = vmatpush1.bf16.msra.mxu0 0
        %4086 = vmatprep.subr.bf16.mxu0 0
        %4087 = vmatpush1.bf16.msra.mxu0 0
        %4088 = vmatprep.subr.bf16.mxu0 0
        %4089 = vmatpush1.bf16.msra.mxu0 0
        %4090 = vmatprep.subr.bf16.mxu0 0
        %4091 = vmatpush1.bf16.msra.mxu0 0
        %4092 = vmatprep.subr.bf16.mxu0 0
        %4093 = vmatpush1.bf16.msra.mxu0 0
        %4094 = vmatprep.subr.bf16.mxu0 0
        %4095 = vmatpush1.bf16.msra.mxu0 0
        %4096 = vmatprep.subr.bf16.mxu0 0
        %4097 = vmatpush1.bf16.msra.mxu0 0
        %4098 = vmatprep.mubr.bf16.mxu0 0
        %4099 = vmatmul.mubr.bf16.gmra.mrb[0].mxu0 %v3168
        %v4100 = vpop.f32.mrb[0].mxu0
        %v4101 = vadd.f32 0.0, %v4100
        %v4102 = vpop.f32.mrb[0].mxu0
        %v4103 = vadd.f32 0.0, %v4102
        %v4104 = vpop.f32.mrb[0].mxu0
        %v4105 = vadd.f32 0.0, %v4104
        %v4106 = vpop.f32.mrb[0].mxu0
        %v4107 = vadd.f32 0.0, %v4106
        %4108 = vdwg.mxu0
        %v4109 = vadd.f32 %v4062, %v4101
        %v4110 = vadd.f32 %v4063, %v4103
        %v4111 = vadd.f32 %v4064, %v4105
        %v4112 = vadd.f32 %v4065, %v4107
        %4113 = vmatprep.subr.bf16.mxu0 %v3235
        %4114 = vmatpush1.bf16.msra.mxu0 %v3234
        %4115 = vmatprep.subr.bf16.mxu0 %v3237
        %4116 = vmatpush1.bf16.msra.mxu0 %v3236
        %4117 = vmatprep.subr.bf16.mxu0 %v3239
        %4118 = vmatpush1.bf16.msra.mxu0 %v3238
        %4119 = vmatprep.subr.bf16.mxu0 %v3241
        %4120 = vmatpush1.bf16.msra.mxu0 %v3240
        %4121 = vmatprep.subr.bf16.mxu0 %v3243
        %4122 = vmatpush1.bf16.msra.mxu0 %v3242
        %4123 = vmatprep.subr.bf16.mxu0 %v3245
        %4124 = vmatpush1.bf16.msra.mxu0 %v3244
        %4125 = vmatprep.subr.bf16.mxu0 %v3247
        %4126 = vmatpush1.bf16.msra.mxu0 %v3246
        %4127 = vmatprep.subr.bf16.mxu0 %v3249
        %4128 = vmatpush1.bf16.msra.mxu0 %v3248
        %4129 = vmatprep.subr.bf16.mxu0 0
        %4130 = vmatpush1.bf16.msra.mxu0 0
        %4131 = vmatprep.subr.bf16.mxu0 0
        %4132 = vmatpush1.bf16.msra.mxu0 0
        %4133 = vmatprep.subr.bf16.mxu0 0
        %4134 = vmatpush1.bf16.msra.mxu0 0
        %4135 = vmatprep.subr.bf16.mxu0 0
        %4136 = vmatpush1.bf16.msra.mxu0 0
        %4137 = vmatprep.subr.bf16.mxu0 0
        %4138 = vmatpush1.bf16.msra.mxu0 0
        %4139 = vmatprep.subr.bf16.mxu0 0
        %4140 = vmatpush1.bf16.msra.mxu0 0
        %4141 = vmatprep.subr.bf16.mxu0 0
        %4142 = vmatpush1.bf16.msra.mxu0 0
        %4143 = vmatprep.subr.bf16.mxu0 0
        %4144 = vmatpush1.bf16.msra.mxu0 0
        %4145 = vmatprep.mubr.bf16.mxu0 0
        %4146 = vmatmul.mubr.bf16.gmra.mrb[0].mxu0 %v3317
        %v4147 = vpop.f32.mrb[0].mxu0
        %v4148 = vadd.f32 0.0, %v4147
        %v4149 = vpop.f32.mrb[0].mxu0
        %v4150 = vadd.f32 0.0, %v4149
        %v4151 = vpop.f32.mrb[0].mxu0
        %v4152 = vadd.f32 0.0, %v4151
        %v4153 = vpop.f32.mrb[0].mxu0
        %v4154 = vadd.f32 0.0, %v4153
        %4155 = vdwg.mxu0
        %v4156 = vadd.f32 %v4109, %v4148
        %v4157 = vadd.f32 %v4110, %v4150
        %v4158 = vadd.f32 %v4111, %v4152
        %v4159 = vadd.f32 %v4112, %v4154
        %s4160 = scalar_lea.vmem [#allocation3], 9
        %v4161 = vld [vmem:[%s4160] ss:$2 sm:$0xff]
        %s4162 = scalar_lea.vmem [#allocation3], 25
        %v4163 = vld [vmem:[%s4162] ss:$2 sm:$0xf]
        %v4164 = vpack.c.bf16 %v4163, %v4161
        %4165 = vmatprep.subr.bf16.mxu0 %v3384
        %4166 = vmatpush1.bf16.msra.mxu0 %v3383
        %4167 = vmatprep.subr.bf16.mxu0 %v3386
        %4168 = vmatpush1.bf16.msra.mxu0 %v3385
        %4169 = vmatprep.subr.bf16.mxu0 %v3388
        %4170 = vmatpush1.bf16.msra.mxu0 %v3387
        %4171 = vmatprep.subr.bf16.mxu0 %v3390
        %4172 = vmatpush1.bf16.msra.mxu0 %v3389
        %4173 = vmatprep.subr.bf16.mxu0 %v3392
        %4174 = vmatpush1.bf16.msra.mxu0 %v3391
        %4175 = vmatprep.subr.bf16.mxu0 %v3394
        %4176 = vmatpush1.bf16.msra.mxu0 %v3393
        %4177 = vmatprep.subr.bf16.mxu0 %v3396
        %4178 = vmatpush1.bf16.msra.mxu0 %v3395
        %4179 = vmatprep.subr.bf16.mxu0 %v3398
        %4180 = vmatpush1.bf16.msra.mxu0 %v3397
        %4181 = vmatprep.subr.bf16.mxu0 0
        %4182 = vmatpush1.bf16.msra.mxu0 0
        %4183 = vmatprep.subr.bf16.mxu0 0
        %4184 = vmatpush1.bf16.msra.mxu0 0
        %4185 = vmatprep.subr.bf16.mxu0 0
        %4186 = vmatpush1.bf16.msra.mxu0 0
        %4187 = vmatprep.subr.bf16.mxu0 0
        %4188 = vmatpush1.bf16.msra.mxu0 0
        %4189 = vmatprep.subr.bf16.mxu0 0
        %4190 = vmatpush1.bf16.msra.mxu0 0
        %4191 = vmatprep.subr.bf16.mxu0 0
        %4192 = vmatpush1.bf16.msra.mxu0 0
        %4193 = vmatprep.subr.bf16.mxu0 0
        %4194 = vmatpush1.bf16.msra.mxu0 0
        %4195 = vmatprep.subr.bf16.mxu0 0
        %4196 = vmatpush1.bf16.msra.mxu0 0
        %4197 = vmatprep.mubr.bf16.mxu0 0
        %4198 = vmatmul.mubr.bf16.gmra.mrb[0].mxu0 %v4164
        %v4199 = vpop.f32.mrb[0].mxu0
        %v4200 = vadd.f32 0.0, %v4199
        %v4201 = vpop.f32.mrb[0].mxu0
        %v4202 = vadd.f32 0.0, %v4201
        %v4203 = vpop.f32.mrb[0].mxu0
        %v4204 = vadd.f32 0.0, %v4203
        %v4205 = vpop.f32.mrb[0].mxu0
        %v4206 = vadd.f32 0.0, %v4205
        %4207 = vdwg.mxu0
        %v4208 = vadd.f32 %v4156, %v4200
        %v4209 = vadd.f32 %v4157, %v4202
        %v4210 = vadd.f32 %v4158, %v4204
        %v4211 = vadd.f32 %v4159, %v4206
        %4212 = vmatprep.subr.bf16.mxu0 %v3533
        %4213 = vmatpush1.bf16.msra.mxu0 %v3532
        %4214 = vmatprep.subr.bf16.mxu0 %v3535
        %4215 = vmatpush1.bf16.msra.mxu0 %v3534
        %4216 = vmatprep.subr.bf16.mxu0 %v3537
        %4217 = vmatpush1.bf16.msra.mxu0 %v3536
        %4218 = vmatprep.subr.bf16.mxu0 %v3539
        %4219 = vmatpush1.bf16.msra.mxu0 %v3538
        %4220 = vmatprep.subr.bf16.mxu0 %v3541
        %4221 = vmatpush1.bf16.msra.mxu0 %v3540
        %4222 = vmatprep.subr.bf16.mxu0 %v3543
        %4223 = vmatpush1.bf16.msra.mxu0 %v3542
        %4224 = vmatprep.subr.bf16.mxu0 %v3545
        %4225 = vmatpush1.bf16.msra.mxu0 %v3544
        %4226 = vmatprep.subr.bf16.mxu0 %v3547
        %4227 = vmatpush1.bf16.msra.mxu0 %v3546
        %4228 = vmatprep.subr.bf16.mxu0 0
        %4229 = vmatpush1.bf16.msra.mxu0 0
        %4230 = vmatprep.subr.bf16.mxu0 0
        %4231 = vmatpush1.bf16.msra.mxu0 0
        %4232 = vmatprep.subr.bf16.mxu0 0
        %4233 = vmatpush1.bf16.msra.mxu0 0
        %4234 = vmatprep.subr.bf16.mxu0 0
        %4235 = vmatpush1.bf16.msra.mxu0 0
        %4236 = vmatprep.subr.bf16.mxu0 0
        %4237 = vmatpush1.bf16.msra.mxu0 0
        %4238 = vmatprep.subr.bf16.mxu0 0
        %4239 = vmatpush1.bf16.msra.mxu0 0
        %4240 = vmatprep.subr.bf16.mxu0 0
        %4241 = vmatpush1.bf16.msra.mxu0 0
        %4242 = vmatprep.subr.bf16.mxu0 0
        %4243 = vmatpush1.bf16.msra.mxu0 0
        %4244 = vmatprep.mubr.bf16.mxu0 0
        %4245 = vmatmul.mubr.bf16.gmra.mrb[0].mxu0 %v3615
        %v4246 = vpop.f32.mrb[0].mxu0
        %v4247 = vadd.f32 0.0, %v4246
        %v4248 = vpop.f32.mrb[0].mxu0
        %v4249 = vadd.f32 0.0, %v4248
        %v4250 = vpop.f32.mrb[0].mxu0
        %v4251 = vadd.f32 0.0, %v4250
        %v4252 = vpop.f32.mrb[0].mxu0
        %v4253 = vadd.f32 0.0, %v4252
        %4254 = vdwg.mxu0
        %v4255 = vadd.f32 %v4208, %v4247
        %v4256 = vadd.f32 %v4209, %v4249
        %v4257 = vadd.f32 %v4210, %v4251
        %v4258 = vadd.f32 %v4211, %v4253
        %4259 = vmatprep.subr.bf16.mxu0 %v3682
        %4260 = vmatpush1.bf16.msra.mxu0 %v3681
        %4261 = vmatprep.subr.bf16.mxu0 %v3684
        %4262 = vmatpush1.bf16.msra.mxu0 %v3683
        %4263 = vmatprep.subr.bf16.mxu0 %v3686
        %4264 = vmatpush1.bf16.msra.mxu0 %v3685
        %4265 = vmatprep.subr.bf16.mxu0 %v3688
        %4266 = vmatpush1.bf16.msra.mxu0 %v3687
        %4267 = vmatprep.subr.bf16.mxu0 %v3690
        %4268 = vmatpush1.bf16.msra.mxu0 %v3689
        %4269 = vmatprep.subr.bf16.mxu0 %v3692
        %4270 = vmatpush1.bf16.msra.mxu0 %v3691
        %4271 = vmatprep.subr.bf16.mxu0 %v3694
        %4272 = vmatpush1.bf16.msra.mxu0 %v3693
        %4273 = vmatprep.subr.bf16.mxu0 %v3696
        %4274 = vmatpush1.bf16.msra.mxu0 %v3695
        %4275 = vmatprep.subr.bf16.mxu0 0
        %4276 = vmatpush1.bf16.msra.mxu0 0
        %4277 = vmatprep.subr.bf16.mxu0 0
        %4278 = vmatpush1.bf16.msra.mxu0 0
        %4279 = vmatprep.subr.bf16.mxu0 0
        %4280 = vmatpush1.bf16.msra.mxu0 0
        %4281 = vmatprep.subr.bf16.mxu0 0
        %4282 = vmatpush1.bf16.msra.mxu0 0
        %4283 = vmatprep.subr.bf16.mxu0 0
        %4284 = vmatpush1.bf16.msra.mxu0 0
        %4285 = vmatprep.subr.bf16.mxu0 0
        %4286 = vmatpush1.bf16.msra.mxu0 0
        %4287 = vmatprep.subr.bf16.mxu0 0
        %4288 = vmatpush1.bf16.msra.mxu0 0
        %4289 = vmatprep.subr.bf16.mxu0 0
        %4290 = vmatpush1.bf16.msra.mxu0 0
        %4291 = vmatprep.mubr.bf16.mxu0 0
        %4292 = vmatmul.mubr.bf16.gmra.mrb[0].mxu0 %v3764
        %v4293 = vpop.f32.mrb[0].mxu0
        %v4294 = vadd.f32 0.0, %v4293
        %v4295 = vpop.f32.mrb[0].mxu0
        %v4296 = vadd.f32 0.0, %v4295
        %v4297 = vpop.f32.mrb[0].mxu0
        %v4298 = vadd.f32 0.0, %v4297
        %v4299 = vpop.f32.mrb[0].mxu0
        %v4300 = vadd.f32 0.0, %v4299
        %4301 = vdwg.mxu0
        %v4302 = vadd.f32 %v4255, %v4294
        %v4303 = vadd.f32 %v4256, %v4296
        %v4304 = vadd.f32 %v4257, %v4298
        %v4305 = vadd.f32 %v4258, %v4300
        %s4306 = scalar_lea.vmem [#allocation3], 15
        %v4307 = vld [vmem:[%s4306] ss:$2 sm:$0xff]
        %s4308 = scalar_lea.vmem [#allocation3], 31
        %v4309 = vld [vmem:[%s4308] ss:$2 sm:$0xf]
        %v4310 = vpack.c.bf16 %v4309, %v4307
        %4311 = vmatprep.subr.bf16.mxu0 %v3831
        %4312 = vmatpush1.bf16.msra.mxu0 %v3830
        %4313 = vmatprep.subr.bf16.mxu0 %v3833
        %4314 = vmatpush1.bf16.msra.mxu0 %v3832
        %4315 = vmatprep.subr.bf16.mxu0 %v3835
        %4316 = vmatpush1.bf16.msra.mxu0 %v3834
        %4317 = vmatprep.subr.bf16.mxu0 %v3837
        %4318 = vmatpush1.bf16.msra.mxu0 %v3836
        %4319 = vmatprep.subr.bf16.mxu0 %v3839
        %4320 = vmatpush1.bf16.msra.mxu0 %v3838
        %4321 = vmatprep.subr.bf16.mxu0 %v3841
        %4322 = vmatpush1.bf16.msra.mxu0 %v3840
        %4323 = vmatprep.subr.bf16.mxu0 %v3843
        %4324 = vmatpush1.bf16.msra.mxu0 %v3842
        %4325 = vmatprep.subr.bf16.mxu0 %v3845
        %4326 = vmatpush1.bf16.msra.mxu0 %v3844
        %4327 = vmatprep.subr.bf16.mxu0 0
        %4328 = vmatpush1.bf16.msra.mxu0 0
        %4329 = vmatprep.subr.bf16.mxu0 0
        %4330 = vmatpush1.bf16.msra.mxu0 0
        %4331 = vmatprep.subr.bf16.mxu0 0
        %4332 = vmatpush1.bf16.msra.mxu0 0
        %4333 = vmatprep.subr.bf16.mxu0 0
        %4334 = vmatpush1.bf16.msra.mxu0 0
        %4335 = vmatprep.subr.bf16.mxu0 0
        %4336 = vmatpush1.bf16.msra.mxu0 0
        %4337 = vmatprep.subr.bf16.mxu0 0
        %4338 = vmatpush1.bf16.msra.mxu0 0
        %4339 = vmatprep.subr.bf16.mxu0 0
        %4340 = vmatpush1.bf16.msra.mxu0 0
        %4341 = vmatprep.subr.bf16.mxu0 0
        %4342 = vmatpush1.bf16.msra.mxu0 0
        %4343 = vmatprep.mubr.bf16.mxu0 0
        %4344 = vmatmul.mubr.bf16.gmra.mrb[0].mxu0 %v4310
        %v4345 = vpop.f32.mrb[0].mxu0
        %v4346 = vadd.f32 0.0, %v4345
        %v4347 = vpop.f32.mrb[0].mxu0
        %v4348 = vadd.f32 0.0, %v4347
        %v4349 = vpop.f32.mrb[0].mxu0
        %v4350 = vadd.f32 0.0, %v4349
        %v4351 = vpop.f32.mrb[0].mxu0
        %v4352 = vadd.f32 0.0, %v4351
        %4353 = vdwg.mxu0
        %v4354 = vadd.f32 %v4302, %v4346
        %v4355 = vadd.f32 %v4303, %v4348
        %v4356 = vadd.f32 %v4304, %v4350
        %v4357 = vadd.f32 %v4305, %v4352
        %v4358 = vadd.f32 %v4354, %v3913
        %v4359 = vadd.f32 %v4355, %v3917
        %v4360 = vadd.f32 %v4356, %v3913
        %v4361 = vadd.f32 %v4357, %v3917
        %v4362 = vmax.f32 %v4358, 0.0
        %v4363 = vmax.f32 %v4359, 0.0
        %v4364 = vmax.f32 %v4360, 0.0
        %v4365 = vmax.f32 %v4361, 0.0
        %v4366 = vmax.f32 %v3924, %v4362
        %v4367 = vmax.f32 %v3925, %v4363
        %v4368 = vmax.f32 %v3926, %v4364
        %v4369 = vmax.f32 %v3927, %v4365
        %v4372 = vrot.slane %v4366, 3
        %v4373 = vrot.slane %v4367, 3
        %v4376 = vmax.f32 %v4366, %v4372
        %v4377 = vmax.f32 %v4367, %v4373
        %v4380 = vrot.slane %v4376, 3
        %v4381 = vrot.slane %v4377, 3
        %4384 = vst [vmem:[#allocation4] sm:$0x60] %v4380
        %4385 = vst [vmem:[#allocation4 + $0x8] sm:$0x60] %v4381
        %v4388 = vrot.slane %v4368, 3
        %v4389 = vrot.slane %v4369, 3
        %v4392 = vmax.f32 %v4366, %v4388
        %v4393 = vmax.f32 %v4367, %v4389
        %v4396 = vrot.slane %v4392, 5
        %v4397 = vrot.slane %v4393, 5
        %4400 = vst [vmem:[#allocation4 + $0x10] sm:$0x6] %v4396
        %4401 = vst [vmem:[#allocation4 + $0x18] sm:$0x6] %v4397
        %v4402 = vld [vmem:[#allocation4] sm:$0xff]
        %v4403 = vld [vmem:[#allocation4 + $0x8] sm:$0xff]
        %v4404 = vpack.c.bf16 %v4402, %v4402
        %v4405 = vpack.c.bf16 %v4403, %v4403
        %v4406 = vld [vmem:[%s7] sm:$0xff]
        %v4407 = vld [vmem:[%s7 + $0x8] sm:$0xff]
        %v4408 = vld [vmem:[%s7 + $0x10] sm:$0xff]
        %v4409 = vld [vmem:[%s7 + $0x18] sm:$0xff]
        %v4410 = vld [vmem:[%s7 + $0x20] sm:$0xff]
        %v4411 = vld [vmem:[%s7 + $0x28] sm:$0xff]
        %v4412 = vld [vmem:[%s7 + $0x30] sm:$0xff]
        %v4413 = vld [vmem:[%s7 + $0x38] sm:$0xff]
        %v4414 = vld [vmem:[%s7 + $0x40] sm:$0xff]
        %v4415 = vld [vmem:[%s7 + $0x48] sm:$0xff]
        %v4416 = vld [vmem:[%s7 + $0x50] sm:$0xff]
        %v4417 = vld [vmem:[%s7 + $0x58] sm:$0xff]
        %v4418 = vld [vmem:[%s7 + $0x60] sm:$0xff]
        %v4419 = vld [vmem:[%s7 + $0x68] sm:$0xff]
        %v4420 = vld [vmem:[%s7 + $0x70] sm:$0xff]
        %v4421 = vld [vmem:[%s7 + $0x78] sm:$0xff]
        %v4422 = vld [vmem:[%s7 + $0x80] sm:$0xff]
        %v4423 = vld [vmem:[%s7 + $0x88] sm:$0xff]
        %v4424 = vld [vmem:[%s7 + $0x90] sm:$0xff]
        %v4425 = vld [vmem:[%s7 + $0x98] sm:$0xff]
        %v4426 = vld [vmem:[%s7 + $0xa0] sm:$0xff]
        %v4427 = vld [vmem:[%s7 + $0xa8] sm:$0xff]
        %v4428 = vld [vmem:[%s7 + $0xb0] sm:$0xff]
        %v4429 = vld [vmem:[%s7 + $0xb8] sm:$0xff]
        %v4430 = vld [vmem:[%s7 + $0xc0] sm:$0xff]
        %v4431 = vld [vmem:[%s7 + $0xc8] sm:$0xff]
        %v4432 = vld [vmem:[%s7 + $0xd0] sm:$0xff]
        %v4433 = vld [vmem:[%s7 + $0xd8] sm:$0xff]
        %v4434 = vld [vmem:[%s7 + $0xe0] sm:$0xff]
        %v4435 = vld [vmem:[%s7 + $0xe8] sm:$0xff]
        %v4436 = vld [vmem:[%s7 + $0xf0] sm:$0xff]
        %v4437 = vld [vmem:[%s7 + $0xf8] sm:$0xff]
        %v4438 = vld [vmem:[%s7 + $0x100] sm:$0xff]
        %v4439 = vld [vmem:[%s7 + $0x108] sm:$0xff]
        %v4440 = vld [vmem:[%s7 + $0x110] sm:$0xff]
        %v4441 = vld [vmem:[%s7 + $0x118] sm:$0xff]
        %v4442 = vld [vmem:[%s7 + $0x120] sm:$0xff]
        %v4443 = vld [vmem:[%s7 + $0x128] sm:$0xff]
        %v4444 = vld [vmem:[%s7 + $0x130] sm:$0xff]
        %v4445 = vld [vmem:[%s7 + $0x138] sm:$0xff]
        %v4446 = vld [vmem:[%s7 + $0x140] sm:$0xff]
        %v4447 = vld [vmem:[%s7 + $0x148] sm:$0xff]
        %v4448 = vld [vmem:[%s7 + $0x150] sm:$0xff]
        %v4449 = vld [vmem:[%s7 + $0x158] sm:$0xff]
        %v4450 = vld [vmem:[%s7 + $0x160] sm:$0xff]
        %v4451 = vld [vmem:[%s7 + $0x168] sm:$0xff]
        %v4452 = vld [vmem:[%s7 + $0x170] sm:$0xff]
        %v4453 = vld [vmem:[%s7 + $0x178] sm:$0xff]
        %v4454 = vld [vmem:[%s7 + $0x180] sm:$0xff]
        %v4455 = vld [vmem:[%s7 + $0x188] sm:$0xff]
        %v4456 = vld [vmem:[%s7 + $0x190] sm:$0xff]
        %v4457 = vld [vmem:[%s7 + $0x198] sm:$0xff]
        %v4458 = vld [vmem:[%s7 + $0x1a0] sm:$0xff]
        %v4459 = vld [vmem:[%s7 + $0x1a8] sm:$0xff]
        %v4460 = vld [vmem:[%s7 + $0x1b0] sm:$0xff]
        %v4461 = vld [vmem:[%s7 + $0x1b8] sm:$0xff]
        %v4462 = vld [vmem:[%s7 + $0x1c0] sm:$0xff]
        %v4463 = vld [vmem:[%s7 + $0x1c8] sm:$0xff]
        %v4464 = vld [vmem:[%s7 + $0x1d0] sm:$0xff]
        %v4465 = vld [vmem:[%s7 + $0x1d8] sm:$0xff]
        %v4466 = vld [vmem:[%s7 + $0x1e0] sm:$0xff]
        %v4467 = vld [vmem:[%s7 + $0x1e8] sm:$0xff]
        %v4468 = vld [vmem:[%s7 + $0x1f0] sm:$0xff]
        %v4469 = vld [vmem:[%s7 + $0x1f8] sm:$0xff]
        %v4470 = vld [vmem:[#allocation4] sm:$0xfe]
        %v4471 = vld [vmem:[#allocation4 + $0x8] sm:$0xfe]
        %v4472 = vld [vmem:[#allocation4 + $0x10] sm:$0x1]
        %v4473 = vld [vmem:[#allocation4 + $0x18] sm:$0x1]
        %v4474 = vpack.c.bf16 %v4472, %v4470
        %v4475 = vpack.c.bf16 %v4473, %v4471
        %s4476 = scalar_lea.vmem %s7, 512
        %v4477 = vld [vmem:[%s4476] sm:$0xff]
        %v4478 = vld [vmem:[%s4476 + $0x8] sm:$0xff]
        %v4479 = vld [vmem:[%s4476 + $0x10] sm:$0xff]
        %v4480 = vld [vmem:[%s4476 + $0x18] sm:$0xff]
        %v4481 = vld [vmem:[%s4476 + $0x20] sm:$0xff]
        %v4482 = vld [vmem:[%s4476 + $0x28] sm:$0xff]
        %v4483 = vld [vmem:[%s4476 + $0x30] sm:$0xff]
        %v4484 = vld [vmem:[%s4476 + $0x38] sm:$0xff]
        %v4485 = vld [vmem:[%s4476 + $0x40] sm:$0xff]
        %v4486 = vld [vmem:[%s4476 + $0x48] sm:$0xff]
        %v4487 = vld [vmem:[%s4476 + $0x50] sm:$0xff]
        %v4488 = vld [vmem:[%s4476 + $0x58] sm:$0xff]
        %v4489 = vld [vmem:[%s4476 + $0x60] sm:$0xff]
        %v4490 = vld [vmem:[%s4476 + $0x68] sm:$0xff]
        %v4491 = vld [vmem:[%s4476 + $0x70] sm:$0xff]
        %v4492 = vld [vmem:[%s4476 + $0x78] sm:$0xff]
        %v4493 = vld [vmem:[%s4476 + $0x80] sm:$0xff]
        %v4494 = vld [vmem:[%s4476 + $0x88] sm:$0xff]
        %v4495 = vld [vmem:[%s4476 + $0x90] sm:$0xff]
        %v4496 = vld [vmem:[%s4476 + $0x98] sm:$0xff]
        %v4497 = vld [vmem:[%s4476 + $0xa0] sm:$0xff]
        %v4498 = vld [vmem:[%s4476 + $0xa8] sm:$0xff]
        %v4499 = vld [vmem:[%s4476 + $0xb0] sm:$0xff]
        %v4500 = vld [vmem:[%s4476 + $0xb8] sm:$0xff]
        %v4501 = vld [vmem:[%s4476 + $0xc0] sm:$0xff]
        %v4502 = vld [vmem:[%s4476 + $0xc8] sm:$0xff]
        %v4503 = vld [vmem:[%s4476 + $0xd0] sm:$0xff]
        %v4504 = vld [vmem:[%s4476 + $0xd8] sm:$0xff]
        %v4505 = vld [vmem:[%s4476 + $0xe0] sm:$0xff]
        %v4506 = vld [vmem:[%s4476 + $0xe8] sm:$0xff]
        %v4507 = vld [vmem:[%s4476 + $0xf0] sm:$0xff]
        %v4508 = vld [vmem:[%s4476 + $0xf8] sm:$0xff]
        %v4509 = vld [vmem:[%s4476 + $0x100] sm:$0xff]
        %v4510 = vld [vmem:[%s4476 + $0x108] sm:$0xff]
        %v4511 = vld [vmem:[%s4476 + $0x110] sm:$0xff]
        %v4512 = vld [vmem:[%s4476 + $0x118] sm:$0xff]
        %v4513 = vld [vmem:[%s4476 + $0x120] sm:$0xff]
        %v4514 = vld [vmem:[%s4476 + $0x128] sm:$0xff]
        %v4515 = vld [vmem:[%s4476 + $0x130] sm:$0xff]
        %v4516 = vld [vmem:[%s4476 + $0x138] sm:$0xff]
        %v4517 = vld [vmem:[%s4476 + $0x140] sm:$0xff]
        %v4518 = vld [vmem:[%s4476 + $0x148] sm:$0xff]
        %v4519 = vld [vmem:[%s4476 + $0x150] sm:$0xff]
        %v4520 = vld [vmem:[%s4476 + $0x158] sm:$0xff]
        %v4521 = vld [vmem:[%s4476 + $0x160] sm:$0xff]
        %v4522 = vld [vmem:[%s4476 + $0x168] sm:$0xff]
        %v4523 = vld [vmem:[%s4476 + $0x170] sm:$0xff]
        %v4524 = vld [vmem:[%s4476 + $0x178] sm:$0xff]
        %v4525 = vld [vmem:[%s4476 + $0x180] sm:$0xff]
        %v4526 = vld [vmem:[%s4476 + $0x188] sm:$0xff]
        %v4527 = vld [vmem:[%s4476 + $0x190] sm:$0xff]
        %v4528 = vld [vmem:[%s4476 + $0x198] sm:$0xff]
        %v4529 = vld [vmem:[%s4476 + $0x1a0] sm:$0xff]
        %v4530 = vld [vmem:[%s4476 + $0x1a8] sm:$0xff]
        %v4531 = vld [vmem:[%s4476 + $0x1b0] sm:$0xff]
        %v4532 = vld [vmem:[%s4476 + $0x1b8] sm:$0xff]
        %v4533 = vld [vmem:[%s4476 + $0x1c0] sm:$0xff]
        %v4534 = vld [vmem:[%s4476 + $0x1c8] sm:$0xff]
        %v4535 = vld [vmem:[%s4476 + $0x1d0] sm:$0xff]
        %v4536 = vld [vmem:[%s4476 + $0x1d8] sm:$0xff]
        %v4537 = vld [vmem:[%s4476 + $0x1e0] sm:$0xff]
        %v4538 = vld [vmem:[%s4476 + $0x1e8] sm:$0xff]
        %v4539 = vld [vmem:[%s4476 + $0x1f0] sm:$0xff]
        %v4540 = vld [vmem:[%s4476 + $0x1f8] sm:$0xff]
        %v4542 = vshrl.u32 %v4474, 16
        %v4544 = vshll.u32 %v4474, 16
        %v4546 = vrot.slane %v4544, 1
        %v4547 = vor.u32 %v4542, %v4546
        %v4549 = vshrl.u32 %v4475, 16
        %v4551 = vshll.u32 %v4475, 16
        %v4553 = vrot.slane %v4551, 1
        %v4554 = vor.u32 %v4549, %v4553
        %v4621 = vunpack.c.l.b16 %v4477
        %v4622 = vunpack.c.h.b16 %v4477
        %v4623 = vunpack.c.l.b16 %v4478
        %v4624 = vunpack.c.h.b16 %v4478
        %v4625 = vunpack.c.l.b16 %v4479
        %v4626 = vunpack.c.h.b16 %v4479
        %v4627 = vunpack.c.l.b16 %v4480
        %v4628 = vunpack.c.h.b16 %v4480
        %v4629 = vunpack.c.l.b16 %v4481
        %v4630 = vunpack.c.h.b16 %v4481
        %v4631 = vunpack.c.l.b16 %v4482
        %v4632 = vunpack.c.h.b16 %v4482
        %v4633 = vunpack.c.l.b16 %v4483
        %v4634 = vunpack.c.h.b16 %v4483
        %v4635 = vunpack.c.l.b16 %v4484
        %v4636 = vunpack.c.h.b16 %v4484
        %v4637 = vunpack.c.l.b16 %v4485
        %v4638 = vunpack.c.h.b16 %v4485
        %v4639 = vunpack.c.l.b16 %v4486
        %v4640 = vunpack.c.h.b16 %v4486
        %v4641 = vunpack.c.l.b16 %v4487
        %v4642 = vunpack.c.h.b16 %v4487
        %v4643 = vunpack.c.l.b16 %v4488
        %v4644 = vunpack.c.h.b16 %v4488
        %v4645 = vunpack.c.l.b16 %v4489
        %v4646 = vunpack.c.h.b16 %v4489
        %v4647 = vunpack.c.l.b16 %v4490
        %v4648 = vunpack.c.h.b16 %v4490
        %v4649 = vunpack.c.l.b16 %v4491
        %v4650 = vunpack.c.h.b16 %v4491
        %v4651 = vunpack.c.l.b16 %v4492
        %v4652 = vunpack.c.h.b16 %v4492
        %v4653 = vunpack.c.l.b16 %v4493
        %v4654 = vunpack.c.h.b16 %v4493
        %v4655 = vunpack.c.l.b16 %v4494
        %v4656 = vunpack.c.h.b16 %v4494
        %v4657 = vunpack.c.l.b16 %v4495
        %v4658 = vunpack.c.h.b16 %v4495
        %v4659 = vunpack.c.l.b16 %v4496
        %v4660 = vunpack.c.h.b16 %v4496
        %v4661 = vunpack.c.l.b16 %v4497
        %v4662 = vunpack.c.h.b16 %v4497
        %v4663 = vunpack.c.l.b16 %v4498
        %v4664 = vunpack.c.h.b16 %v4498
        %v4665 = vunpack.c.l.b16 %v4499
        %v4666 = vunpack.c.h.b16 %v4499
        %v4667 = vunpack.c.l.b16 %v4500
        %v4668 = vunpack.c.h.b16 %v4500
        %v4669 = vunpack.c.l.b16 %v4501
        %v4670 = vunpack.c.h.b16 %v4501
        %v4671 = vunpack.c.l.b16 %v4502
        %v4672 = vunpack.c.h.b16 %v4502
        %v4673 = vunpack.c.l.b16 %v4503
        %v4674 = vunpack.c.h.b16 %v4503
        %v4675 = vunpack.c.l.b16 %v4504
        %v4676 = vunpack.c.h.b16 %v4504
        %v4677 = vunpack.c.l.b16 %v4505
        %v4678 = vunpack.c.h.b16 %v4505
        %v4679 = vunpack.c.l.b16 %v4506
        %v4680 = vunpack.c.h.b16 %v4506
        %v4681 = vunpack.c.l.b16 %v4507
        %v4682 = vunpack.c.h.b16 %v4507
        %v4683 = vunpack.c.l.b16 %v4508
        %v4684 = vunpack.c.h.b16 %v4508
        %v4685 = vunpack.c.l.b16 %v4509
        %v4686 = vunpack.c.h.b16 %v4509
        %v4687 = vunpack.c.l.b16 %v4510
        %v4688 = vunpack.c.h.b16 %v4510
        %v4689 = vunpack.c.l.b16 %v4511
        %v4690 = vunpack.c.h.b16 %v4511
        %v4691 = vunpack.c.l.b16 %v4512
        %v4692 = vunpack.c.h.b16 %v4512
        %v4693 = vunpack.c.l.b16 %v4513
        %v4694 = vunpack.c.h.b16 %v4513
        %v4695 = vunpack.c.l.b16 %v4514
        %v4696 = vunpack.c.h.b16 %v4514
        %v4697 = vunpack.c.l.b16 %v4515
        %v4698 = vunpack.c.h.b16 %v4515
        %v4699 = vunpack.c.l.b16 %v4516
        %v4700 = vunpack.c.h.b16 %v4516
        %v4701 = vunpack.c.l.b16 %v4517
        %v4702 = vunpack.c.h.b16 %v4517
        %v4703 = vunpack.c.l.b16 %v4518
        %v4704 = vunpack.c.h.b16 %v4518
        %v4705 = vunpack.c.l.b16 %v4519
        %v4706 = vunpack.c.h.b16 %v4519
        %v4707 = vunpack.c.l.b16 %v4520
        %v4708 = vunpack.c.h.b16 %v4520
        %v4709 = vunpack.c.l.b16 %v4521
        %v4710 = vunpack.c.h.b16 %v4521
        %v4711 = vunpack.c.l.b16 %v4522
        %v4712 = vunpack.c.h.b16 %v4522
        %v4713 = vunpack.c.l.b16 %v4523
        %v4714 = vunpack.c.h.b16 %v4523
        %v4715 = vunpack.c.l.b16 %v4524
        %v4716 = vunpack.c.h.b16 %v4524
        %v4717 = vunpack.c.l.b16 %v4525
        %v4718 = vunpack.c.h.b16 %v4525
        %v4719 = vunpack.c.l.b16 %v4526
        %v4720 = vunpack.c.h.b16 %v4526
        %v4721 = vunpack.c.l.b16 %v4527
        %v4722 = vunpack.c.h.b16 %v4527
        %v4723 = vunpack.c.l.b16 %v4528
        %v4724 = vunpack.c.h.b16 %v4528
        %v4725 = vunpack.c.l.b16 %v4529
        %v4726 = vunpack.c.h.b16 %v4529
        %v4727 = vunpack.c.l.b16 %v4530
        %v4728 = vunpack.c.h.b16 %v4530
        %v4729 = vunpack.c.l.b16 %v4531
        %v4730 = vunpack.c.h.b16 %v4531
        %v4731 = vunpack.c.l.b16 %v4532
        %v4732 = vunpack.c.h.b16 %v4532
        %v4733 = vunpack.c.l.b16 %v4533
        %v4734 = vunpack.c.h.b16 %v4533
        %v4735 = vunpack.c.l.b16 %v4534
        %v4736 = vunpack.c.h.b16 %v4534
        %v4737 = vunpack.c.l.b16 %v4535
        %v4738 = vunpack.c.h.b16 %v4535
        %v4739 = vunpack.c.l.b16 %v4536
        %v4740 = vunpack.c.h.b16 %v4536
        %v4741 = vunpack.c.l.b16 %v4537
        %v4742 = vunpack.c.h.b16 %v4537
        %v4743 = vunpack.c.l.b16 %v4538
        %v4744 = vunpack.c.h.b16 %v4538
        %v4745 = vunpack.c.l.b16 %v4539
        %v4746 = vunpack.c.h.b16 %v4539
        %v4747 = vunpack.c.l.b16 %v4540
        %v4748 = vunpack.c.h.b16 %v4540
        %v4749 = vpack.c.b16 %v4625, %v4621
        %v4750 = vpack.c.b16 %v4626, %v4622
        %v4751 = vpack.c.b16 %v4627, %v4623
        %v4752 = vpack.c.b16 %v4628, %v4624
        %v4753 = vpack.c.b16 %v4633, %v4629
        %v4754 = vpack.c.b16 %v4634, %v4630
        %v4755 = vpack.c.b16 %v4635, %v4631
        %v4756 = vpack.c.b16 %v4636, %v4632
        %v4757 = vpack.c.b16 %v4641, %v4637
        %v4758 = vpack.c.b16 %v4642, %v4638
        %v4759 = vpack.c.b16 %v4643, %v4639
        %v4760 = vpack.c.b16 %v4644, %v4640
        %v4761 = vpack.c.b16 %v4649, %v4645
        %v4762 = vpack.c.b16 %v4650, %v4646
        %v4763 = vpack.c.b16 %v4651, %v4647
        %v4764 = vpack.c.b16 %v4652, %v4648
        %v4765 = vpack.c.b16 %v4657, %v4653
        %v4766 = vpack.c.b16 %v4658, %v4654
        %v4767 = vpack.c.b16 %v4659, %v4655
        %v4768 = vpack.c.b16 %v4660, %v4656
        %v4769 = vpack.c.b16 %v4665, %v4661
        %v4770 = vpack.c.b16 %v4666, %v4662
        %v4771 = vpack.c.b16 %v4667, %v4663
        %v4772 = vpack.c.b16 %v4668, %v4664
        %v4773 = vpack.c.b16 %v4673, %v4669
        %v4774 = vpack.c.b16 %v4674, %v4670
        %v4775 = vpack.c.b16 %v4675, %v4671
        %v4776 = vpack.c.b16 %v4676, %v4672
        %v4777 = vpack.c.b16 %v4681, %v4677
        %v4778 = vpack.c.b16 %v4682, %v4678
        %v4779 = vpack.c.b16 %v4683, %v4679
        %v4780 = vpack.c.b16 %v4684, %v4680
        %v4781 = vpack.c.b16 %v4689, %v4685
        %v4782 = vpack.c.b16 %v4690, %v4686
        %v4783 = vpack.c.b16 %v4691, %v4687
        %v4784 = vpack.c.b16 %v4692, %v4688
        %v4785 = vpack.c.b16 %v4697, %v4693
        %v4786 = vpack.c.b16 %v4698, %v4694
        %v4787 = vpack.c.b16 %v4699, %v4695
        %v4788 = vpack.c.b16 %v4700, %v4696
        %v4789 = vpack.c.b16 %v4705, %v4701
        %v4790 = vpack.c.b16 %v4706, %v4702
        %v4791 = vpack.c.b16 %v4707, %v4703
        %v4792 = vpack.c.b16 %v4708, %v4704
        %v4793 = vpack.c.b16 %v4713, %v4709
        %v4794 = vpack.c.b16 %v4714, %v4710
        %v4795 = vpack.c.b16 %v4715, %v4711
        %v4796 = vpack.c.b16 %v4716, %v4712
        %v4797 = vpack.c.b16 %v4721, %v4717
        %v4798 = vpack.c.b16 %v4722, %v4718
        %v4799 = vpack.c.b16 %v4723, %v4719
        %v4800 = vpack.c.b16 %v4724, %v4720
        %v4801 = vpack.c.b16 %v4729, %v4725
        %v4802 = vpack.c.b16 %v4730, %v4726
        %v4803 = vpack.c.b16 %v4731, %v4727
        %v4804 = vpack.c.b16 %v4732, %v4728
        %v4805 = vpack.c.b16 %v4737, %v4733
        %v4806 = vpack.c.b16 %v4738, %v4734
        %v4807 = vpack.c.b16 %v4739, %v4735
        %v4808 = vpack.c.b16 %v4740, %v4736
        %v4809 = vpack.c.b16 %v4745, %v4741
        %v4810 = vpack.c.b16 %v4746, %v4742
        %v4811 = vpack.c.b16 %v4747, %v4743
        %v4812 = vpack.c.b16 %v4748, %v4744
        %4877 = vmatprep.subr.bf16.mxu0 %v4750
        %4878 = vmatpush1.bf16.msra.mxu0 %v4749
        %4879 = vmatprep.subr.bf16.mxu0 %v4754
        %4880 = vmatpush1.bf16.msra.mxu0 %v4753
        %4881 = vmatprep.subr.bf16.mxu0 %v4758
        %4882 = vmatpush1.bf16.msra.mxu0 %v4757
        %4883 = vmatprep.subr.bf16.mxu0 %v4762
        %4884 = vmatpush1.bf16.msra.mxu0 %v4761
        %4885 = vmatprep.subr.bf16.mxu0 %v4766
        %4886 = vmatpush1.bf16.msra.mxu0 %v4765
        %4887 = vmatprep.subr.bf16.mxu0 %v4770
        %4888 = vmatpush1.bf16.msra.mxu0 %v4769
        %4889 = vmatprep.subr.bf16.mxu0 %v4774
        %4890 = vmatpush1.bf16.msra.mxu0 %v4773
        %4891 = vmatprep.subr.bf16.mxu0 %v4778
        %4892 = vmatpush1.bf16.msra.mxu0 %v4777
        %4893 = vmatprep.subr.bf16.mxu0 %v4782
        %4894 = vmatpush1.bf16.msra.mxu0 %v4781
        %4895 = vmatprep.subr.bf16.mxu0 %v4786
        %4896 = vmatpush1.bf16.msra.mxu0 %v4785
        %4897 = vmatprep.subr.bf16.mxu0 %v4790
        %4898 = vmatpush1.bf16.msra.mxu0 %v4789
        %4899 = vmatprep.subr.bf16.mxu0 %v4794
        %4900 = vmatpush1.bf16.msra.mxu0 %v4793
        %4901 = vmatprep.subr.bf16.mxu0 %v4798
        %4902 = vmatpush1.bf16.msra.mxu0 %v4797
        %4903 = vmatprep.subr.bf16.mxu0 %v4802
        %4904 = vmatpush1.bf16.msra.mxu0 %v4801
        %4905 = vmatprep.subr.bf16.mxu0 %v4806
        %4906 = vmatpush1.bf16.msra.mxu0 %v4805
        %4907 = vmatprep.subr.bf16.mxu0 %v4810
        %4908 = vmatpush1.bf16.msra.mxu0 %v4809
        %4909 = vmatprep.mubr.bf16.mxu0 %v4554
        %4910 = vmatmul.mubr.bf16.gmra.mrb[0].mxu0 %v4547
        %v4911 = vpop.f32.mrb[0].mxu0
        %v4912 = vadd.f32 0.0, %v4911
        %v4913 = vpop.f32.mrb[0].mxu0
        %v4914 = vadd.f32 0.0, %v4913
        %v4915 = vpop.f32.mrb[0].mxu0
        %v4916 = vpop.f32.mrb[0].mxu0
        %4917 = vdwg.mxu0
        %4918 = vmatprep.subr.bf16.mxu0 %v4752
        %4919 = vmatpush1.bf16.msra.mxu0 %v4751
        %4920 = vmatprep.subr.bf16.mxu0 %v4756
        %4921 = vmatpush1.bf16.msra.mxu0 %v4755
        %4922 = vmatprep.subr.bf16.mxu0 %v4760
        %4923 = vmatpush1.bf16.msra.mxu0 %v4759
        %4924 = vmatprep.subr.bf16.mxu0 %v4764
        %4925 = vmatpush1.bf16.msra.mxu0 %v4763
        %4926 = vmatprep.subr.bf16.mxu0 %v4768
        %4927 = vmatpush1.bf16.msra.mxu0 %v4767
        %4928 = vmatprep.subr.bf16.mxu0 %v4772
        %4929 = vmatpush1.bf16.msra.mxu0 %v4771
        %4930 = vmatprep.subr.bf16.mxu0 %v4776
        %4931 = vmatpush1.bf16.msra.mxu0 %v4775
        %4932 = vmatprep.subr.bf16.mxu0 %v4780
        %4933 = vmatpush1.bf16.msra.mxu0 %v4779
        %4934 = vmatprep.subr.bf16.mxu0 %v4784
        %4935 = vmatpush1.bf16.msra.mxu0 %v4783
        %4936 = vmatprep.subr.bf16.mxu0 %v4788
        %4937 = vmatpush1.bf16.msra.mxu0 %v4787
        %4938 = vmatprep.subr.bf16.mxu0 %v4792
        %4939 = vmatpush1.bf16.msra.mxu0 %v4791
        %4940 = vmatprep.subr.bf16.mxu0 %v4796
        %4941 = vmatpush1.bf16.msra.mxu0 %v4795
        %4942 = vmatprep.subr.bf16.mxu0 %v4800
        %4943 = vmatpush1.bf16.msra.mxu0 %v4799
        %4944 = vmatprep.subr.bf16.mxu0 %v4804
        %4945 = vmatpush1.bf16.msra.mxu0 %v4803
        %4946 = vmatprep.subr.bf16.mxu0 %v4808
        %4947 = vmatpush1.bf16.msra.mxu0 %v4807
        %4948 = vmatprep.subr.bf16.mxu0 %v4812
        %4949 = vmatpush1.bf16.msra.mxu0 %v4811
        %4950 = vmatprep.mubr.bf16.mxu0 %v4554
        %4951 = vmatmul.mubr.bf16.gmra.mrb[0].mxu0 %v4547
        %v4952 = vpop.f32.mrb[0].mxu0
        %v4953 = vadd.f32 0.0, %v4952
        %v4954 = vpop.f32.mrb[0].mxu0
        %v4955 = vadd.f32 0.0, %v4954
        %v4956 = vpop.f32.mrb[0].mxu0
        %v4957 = vpop.f32.mrb[0].mxu0
        %4958 = vdwg.mxu0
        %v5023 = vunpack.c.l.b16 %v4406
        %v5024 = vunpack.c.h.b16 %v4406
        %v5025 = vunpack.c.l.b16 %v4407
        %v5026 = vunpack.c.h.b16 %v4407
        %v5027 = vunpack.c.l.b16 %v4408
        %v5028 = vunpack.c.h.b16 %v4408
        %v5029 = vunpack.c.l.b16 %v4409
        %v5030 = vunpack.c.h.b16 %v4409
        %v5031 = vunpack.c.l.b16 %v4410
        %v5032 = vunpack.c.h.b16 %v4410
        %v5033 = vunpack.c.l.b16 %v4411
        %v5034 = vunpack.c.h.b16 %v4411
        %v5035 = vunpack.c.l.b16 %v4412
        %v5036 = vunpack.c.h.b16 %v4412
        %v5037 = vunpack.c.l.b16 %v4413
        %v5038 = vunpack.c.h.b16 %v4413
        %v5039 = vunpack.c.l.b16 %v4414
        %v5040 = vunpack.c.h.b16 %v4414
        %v5041 = vunpack.c.l.b16 %v4415
        %v5042 = vunpack.c.h.b16 %v4415
        %v5043 = vunpack.c.l.b16 %v4416
        %v5044 = vunpack.c.h.b16 %v4416
        %v5045 = vunpack.c.l.b16 %v4417
        %v5046 = vunpack.c.h.b16 %v4417
        %v5047 = vunpack.c.l.b16 %v4418
        %v5048 = vunpack.c.h.b16 %v4418
        %v5049 = vunpack.c.l.b16 %v4419
        %v5050 = vunpack.c.h.b16 %v4419
        %v5051 = vunpack.c.l.b16 %v4420
        %v5052 = vunpack.c.h.b16 %v4420
        %v5053 = vunpack.c.l.b16 %v4421
        %v5054 = vunpack.c.h.b16 %v4421
        %v5055 = vunpack.c.l.b16 %v4422
        %v5056 = vunpack.c.h.b16 %v4422
        %v5057 = vunpack.c.l.b16 %v4423
        %v5058 = vunpack.c.h.b16 %v4423
        %v5059 = vunpack.c.l.b16 %v4424
        %v5060 = vunpack.c.h.b16 %v4424
        %v5061 = vunpack.c.l.b16 %v4425
        %v5062 = vunpack.c.h.b16 %v4425
        %v5063 = vunpack.c.l.b16 %v4426
        %v5064 = vunpack.c.h.b16 %v4426
        %v5065 = vunpack.c.l.b16 %v4427
        %v5066 = vunpack.c.h.b16 %v4427
        %v5067 = vunpack.c.l.b16 %v4428
        %v5068 = vunpack.c.h.b16 %v4428
        %v5069 = vunpack.c.l.b16 %v4429
        %v5070 = vunpack.c.h.b16 %v4429
        %v5071 = vunpack.c.l.b16 %v4430
        %v5072 = vunpack.c.h.b16 %v4430
        %v5073 = vunpack.c.l.b16 %v4431
        %v5074 = vunpack.c.h.b16 %v4431
        %v5075 = vunpack.c.l.b16 %v4432
        %v5076 = vunpack.c.h.b16 %v4432
        %v5077 = vunpack.c.l.b16 %v4433
        %v5078 = vunpack.c.h.b16 %v4433
        %v5079 = vunpack.c.l.b16 %v4434
        %v5080 = vunpack.c.h.b16 %v4434
        %v5081 = vunpack.c.l.b16 %v4435
        %v5082 = vunpack.c.h.b16 %v4435
        %v5083 = vunpack.c.l.b16 %v4436
        %v5084 = vunpack.c.h.b16 %v4436
        %v5085 = vunpack.c.l.b16 %v4437
        %v5086 = vunpack.c.h.b16 %v4437
        %v5087 = vunpack.c.l.b16 %v4438
        %v5088 = vunpack.c.h.b16 %v4438
        %v5089 = vunpack.c.l.b16 %v4439
        %v5090 = vunpack.c.h.b16 %v4439
        %v5091 = vunpack.c.l.b16 %v4440
        %v5092 = vunpack.c.h.b16 %v4440
        %v5093 = vunpack.c.l.b16 %v4441
        %v5094 = vunpack.c.h.b16 %v4441
        %v5095 = vunpack.c.l.b16 %v4442
        %v5096 = vunpack.c.h.b16 %v4442
        %v5097 = vunpack.c.l.b16 %v4443
        %v5098 = vunpack.c.h.b16 %v4443
        %v5099 = vunpack.c.l.b16 %v4444
        %v5100 = vunpack.c.h.b16 %v4444
        %v5101 = vunpack.c.l.b16 %v4445
        %v5102 = vunpack.c.h.b16 %v4445
        %v5103 = vunpack.c.l.b16 %v4446
        %v5104 = vunpack.c.h.b16 %v4446
        %v5105 = vunpack.c.l.b16 %v4447
        %v5106 = vunpack.c.h.b16 %v4447
        %v5107 = vunpack.c.l.b16 %v4448
        %v5108 = vunpack.c.h.b16 %v4448
        %v5109 = vunpack.c.l.b16 %v4449
        %v5110 = vunpack.c.h.b16 %v4449
        %v5111 = vunpack.c.l.b16 %v4450
        %v5112 = vunpack.c.h.b16 %v4450
        %v5113 = vunpack.c.l.b16 %v4451
        %v5114 = vunpack.c.h.b16 %v4451
        %v5115 = vunpack.c.l.b16 %v4452
        %v5116 = vunpack.c.h.b16 %v4452
        %v5117 = vunpack.c.l.b16 %v4453
        %v5118 = vunpack.c.h.b16 %v4453
        %v5119 = vunpack.c.l.b16 %v4454
        %v5120 = vunpack.c.h.b16 %v4454
        %v5121 = vunpack.c.l.b16 %v4455
        %v5122 = vunpack.c.h.b16 %v4455
        %v5123 = vunpack.c.l.b16 %v4456
        %v5124 = vunpack.c.h.b16 %v4456
        %v5125 = vunpack.c.l.b16 %v4457
        %v5126 = vunpack.c.h.b16 %v4457
        %v5127 = vunpack.c.l.b16 %v4458
        %v5128 = vunpack.c.h.b16 %v4458
        %v5129 = vunpack.c.l.b16 %v4459
        %v5130 = vunpack.c.h.b16 %v4459
        %v5131 = vunpack.c.l.b16 %v4460
        %v5132 = vunpack.c.h.b16 %v4460
        %v5133 = vunpack.c.l.b16 %v4461
        %v5134 = vunpack.c.h.b16 %v4461
        %v5135 = vunpack.c.l.b16 %v4462
        %v5136 = vunpack.c.h.b16 %v4462
        %v5137 = vunpack.c.l.b16 %v4463
        %v5138 = vunpack.c.h.b16 %v4463
        %v5139 = vunpack.c.l.b16 %v4464
        %v5140 = vunpack.c.h.b16 %v4464
        %v5141 = vunpack.c.l.b16 %v4465
        %v5142 = vunpack.c.h.b16 %v4465
        %v5143 = vunpack.c.l.b16 %v4466
        %v5144 = vunpack.c.h.b16 %v4466
        %v5145 = vunpack.c.l.b16 %v4467
        %v5146 = vunpack.c.h.b16 %v4467
        %v5147 = vunpack.c.l.b16 %v4468
        %v5148 = vunpack.c.h.b16 %v4468
        %v5149 = vunpack.c.l.b16 %v4469
        %v5150 = vunpack.c.h.b16 %v4469
        %v5151 = vpack.c.b16 %v5027, %v5023
        %v5152 = vpack.c.b16 %v5028, %v5024
        %v5153 = vpack.c.b16 %v5029, %v5025
        %v5154 = vpack.c.b16 %v5030, %v5026
        %v5155 = vpack.c.b16 %v5035, %v5031
        %v5156 = vpack.c.b16 %v5036, %v5032
        %v5157 = vpack.c.b16 %v5037, %v5033
        %v5158 = vpack.c.b16 %v5038, %v5034
        %v5159 = vpack.c.b16 %v5043, %v5039
        %v5160 = vpack.c.b16 %v5044, %v5040
        %v5161 = vpack.c.b16 %v5045, %v5041
        %v5162 = vpack.c.b16 %v5046, %v5042
        %v5163 = vpack.c.b16 %v5051, %v5047
        %v5164 = vpack.c.b16 %v5052, %v5048
        %v5165 = vpack.c.b16 %v5053, %v5049
        %v5166 = vpack.c.b16 %v5054, %v5050
        %v5167 = vpack.c.b16 %v5059, %v5055
        %v5168 = vpack.c.b16 %v5060, %v5056
        %v5169 = vpack.c.b16 %v5061, %v5057
        %v5170 = vpack.c.b16 %v5062, %v5058
        %v5171 = vpack.c.b16 %v5067, %v5063
        %v5172 = vpack.c.b16 %v5068, %v5064
        %v5173 = vpack.c.b16 %v5069, %v5065
        %v5174 = vpack.c.b16 %v5070, %v5066
        %v5175 = vpack.c.b16 %v5075, %v5071
        %v5176 = vpack.c.b16 %v5076, %v5072
        %v5177 = vpack.c.b16 %v5077, %v5073
        %v5178 = vpack.c.b16 %v5078, %v5074
        %v5179 = vpack.c.b16 %v5083, %v5079
        %v5180 = vpack.c.b16 %v5084, %v5080
        %v5181 = vpack.c.b16 %v5085, %v5081
        %v5182 = vpack.c.b16 %v5086, %v5082
        %v5183 = vpack.c.b16 %v5091, %v5087
        %v5184 = vpack.c.b16 %v5092, %v5088
        %v5185 = vpack.c.b16 %v5093, %v5089
        %v5186 = vpack.c.b16 %v5094, %v5090
        %v5187 = vpack.c.b16 %v5099, %v5095
        %v5188 = vpack.c.b16 %v5100, %v5096
        %v5189 = vpack.c.b16 %v5101, %v5097
        %v5190 = vpack.c.b16 %v5102, %v5098
        %v5191 = vpack.c.b16 %v5107, %v5103
        %v5192 = vpack.c.b16 %v5108, %v5104
        %v5193 = vpack.c.b16 %v5109, %v5105
        %v5194 = vpack.c.b16 %v5110, %v5106
        %v5195 = vpack.c.b16 %v5115, %v5111
        %v5196 = vpack.c.b16 %v5116, %v5112
        %v5197 = vpack.c.b16 %v5117, %v5113
        %v5198 = vpack.c.b16 %v5118, %v5114
        %v5199 = vpack.c.b16 %v5123, %v5119
        %v5200 = vpack.c.b16 %v5124, %v5120
        %v5201 = vpack.c.b16 %v5125, %v5121
        %v5202 = vpack.c.b16 %v5126, %v5122
        %v5203 = vpack.c.b16 %v5131, %v5127
        %v5204 = vpack.c.b16 %v5132, %v5128
        %v5205 = vpack.c.b16 %v5133, %v5129
        %v5206 = vpack.c.b16 %v5134, %v5130
        %v5207 = vpack.c.b16 %v5139, %v5135
        %v5208 = vpack.c.b16 %v5140, %v5136
        %v5209 = vpack.c.b16 %v5141, %v5137
        %v5210 = vpack.c.b16 %v5142, %v5138
        %v5211 = vpack.c.b16 %v5147, %v5143
        %v5212 = vpack.c.b16 %v5148, %v5144
        %v5213 = vpack.c.b16 %v5149, %v5145
        %v5214 = vpack.c.b16 %v5150, %v5146
        %5279 = vmatprep.subr.bf16.mxu0 %v5152
        %5280 = vmatpush1.bf16.msra.mxu0 %v5151
        %5281 = vmatprep.subr.bf16.mxu0 %v5156
        %5282 = vmatpush1.bf16.msra.mxu0 %v5155
        %5283 = vmatprep.subr.bf16.mxu0 %v5160
        %5284 = vmatpush1.bf16.msra.mxu0 %v5159
        %5285 = vmatprep.subr.bf16.mxu0 %v5164
        %5286 = vmatpush1.bf16.msra.mxu0 %v5163
        %5287 = vmatprep.subr.bf16.mxu0 %v5168
        %5288 = vmatpush1.bf16.msra.mxu0 %v5167
        %5289 = vmatprep.subr.bf16.mxu0 %v5172
        %5290 = vmatpush1.bf16.msra.mxu0 %v5171
        %5291 = vmatprep.subr.bf16.mxu0 %v5176
        %5292 = vmatpush1.bf16.msra.mxu0 %v5175
        %5293 = vmatprep.subr.bf16.mxu0 %v5180
        %5294 = vmatpush1.bf16.msra.mxu0 %v5179
        %5295 = vmatprep.subr.bf16.mxu0 %v5184
        %5296 = vmatpush1.bf16.msra.mxu0 %v5183
        %5297 = vmatprep.subr.bf16.mxu0 %v5188
        %5298 = vmatpush1.bf16.msra.mxu0 %v5187
        %5299 = vmatprep.subr.bf16.mxu0 %v5192
        %5300 = vmatpush1.bf16.msra.mxu0 %v5191
        %5301 = vmatprep.subr.bf16.mxu0 %v5196
        %5302 = vmatpush1.bf16.msra.mxu0 %v5195
        %5303 = vmatprep.subr.bf16.mxu0 %v5200
        %5304 = vmatpush1.bf16.msra.mxu0 %v5199
        %5305 = vmatprep.subr.bf16.mxu0 %v5204
        %5306 = vmatpush1.bf16.msra.mxu0 %v5203
        %5307 = vmatprep.subr.bf16.mxu0 %v5208
        %5308 = vmatpush1.bf16.msra.mxu0 %v5207
        %5309 = vmatprep.subr.bf16.mxu0 %v5212
        %5310 = vmatpush1.bf16.msra.mxu0 %v5211
        %5311 = vmatprep.mubr.bf16.mxu0 %v4405
        %5312 = vmatmul.mubr.bf16.gmra.mrb[0].mxu0 %v4404
        %v5313 = vpop.f32.mrb[0].mxu0
        %v5314 = vadd.f32 %v4912, %v5313
        %v5315 = vpop.f32.mrb[0].mxu0
        %v5316 = vadd.f32 %v4914, %v5315
        %v5317 = vpop.f32.mrb[0].mxu0
        %v5318 = vpop.f32.mrb[0].mxu0
        %5319 = vdwg.mxu0
        %5320 = vmatprep.subr.bf16.mxu0 %v5154
        %5321 = vmatpush1.bf16.msra.mxu0 %v5153
        %5322 = vmatprep.subr.bf16.mxu0 %v5158
        %5323 = vmatpush1.bf16.msra.mxu0 %v5157
        %5324 = vmatprep.subr.bf16.mxu0 %v5162
        %5325 = vmatpush1.bf16.msra.mxu0 %v5161
        %5326 = vmatprep.subr.bf16.mxu0 %v5166
        %5327 = vmatpush1.bf16.msra.mxu0 %v5165
        %5328 = vmatprep.subr.bf16.mxu0 %v5170
        %5329 = vmatpush1.bf16.msra.mxu0 %v5169
        %5330 = vmatprep.subr.bf16.mxu0 %v5174
        %5331 = vmatpush1.bf16.msra.mxu0 %v5173
        %5332 = vmatprep.subr.bf16.mxu0 %v5178
        %5333 = vmatpush1.bf16.msra.mxu0 %v5177
        %5334 = vmatprep.subr.bf16.mxu0 %v5182
        %5335 = vmatpush1.bf16.msra.mxu0 %v5181
        %5336 = vmatprep.subr.bf16.mxu0 %v5186
        %5337 = vmatpush1.bf16.msra.mxu0 %v5185
        %5338 = vmatprep.subr.bf16.mxu0 %v5190
        %5339 = vmatpush1.bf16.msra.mxu0 %v5189
        %5340 = vmatprep.subr.bf16.mxu0 %v5194
        %5341 = vmatpush1.bf16.msra.mxu0 %v5193
        %5342 = vmatprep.subr.bf16.mxu0 %v5198
        %5343 = vmatpush1.bf16.msra.mxu0 %v5197
        %5344 = vmatprep.subr.bf16.mxu0 %v5202
        %5345 = vmatpush1.bf16.msra.mxu0 %v5201
        %5346 = vmatprep.subr.bf16.mxu0 %v5206
        %5347 = vmatpush1.bf16.msra.mxu0 %v5205
        %5348 = vmatprep.subr.bf16.mxu0 %v5210
        %5349 = vmatpush1.bf16.msra.mxu0 %v5209
        %5350 = vmatprep.subr.bf16.mxu0 %v5214
        %5351 = vmatpush1.bf16.msra.mxu0 %v5213
        %5352 = vmatprep.mubr.bf16.mxu0 %v4405
        %5353 = vmatmul.mubr.bf16.gmra.mrb[0].mxu0 %v4404
        %v5354 = vpop.f32.mrb[0].mxu0
        %v5355 = vadd.f32 %v4953, %v5354
        %v5356 = vpop.f32.mrb[0].mxu0
        %v5357 = vadd.f32 %v4955, %v5356
        %v5358 = vpop.f32.mrb[0].mxu0
        %v5359 = vpop.f32.mrb[0].mxu0
        %5360 = vdwg.mxu0
        %v5361 = vld [vmem:[#allocation4] sm:$0xfc]
        %v5362 = vld [vmem:[#allocation4 + $0x8] sm:$0xfc]
        %v5363 = vld [vmem:[#allocation4 + $0x10] sm:$0x3]
        %v5364 = vld [vmem:[#allocation4 + $0x18] sm:$0x3]
        %v5365 = vpack.c.bf16 %v5363, %v5361
        %v5366 = vpack.c.bf16 %v5364, %v5362
        %s5367 = scalar_lea.vmem %s7, 1024
        %v5368 = vld [vmem:[%s5367] sm:$0xff]
        %v5369 = vld [vmem:[%s5367 + $0x8] sm:$0xff]
        %v5370 = vld [vmem:[%s5367 + $0x10] sm:$0xff]
        %v5371 = vld [vmem:[%s5367 + $0x18] sm:$0xff]
        %v5372 = vld [vmem:[%s5367 + $0x20] sm:$0xff]
        %v5373 = vld [vmem:[%s5367 + $0x28] sm:$0xff]
        %v5374 = vld [vmem:[%s5367 + $0x30] sm:$0xff]
        %v5375 = vld [vmem:[%s5367 + $0x38] sm:$0xff]
        %v5376 = vld [vmem:[%s5367 + $0x40] sm:$0xff]
        %v5377 = vld [vmem:[%s5367 + $0x48] sm:$0xff]
        %v5378 = vld [vmem:[%s5367 + $0x50] sm:$0xff]
        %v5379 = vld [vmem:[%s5367 + $0x58] sm:$0xff]
        %v5380 = vld [vmem:[%s5367 + $0x60] sm:$0xff]
        %v5381 = vld [vmem:[%s5367 + $0x68] sm:$0xff]
        %v5382 = vld [vmem:[%s5367 + $0x70] sm:$0xff]
        %v5383 = vld [vmem:[%s5367 + $0x78] sm:$0xff]
        %v5384 = vld [vmem:[%s5367 + $0x80] sm:$0xff]
        %v5385 = vld [vmem:[%s5367 + $0x88] sm:$0xff]
        %v5386 = vld [vmem:[%s5367 + $0x90] sm:$0xff]
        %v5387 = vld [vmem:[%s5367 + $0x98] sm:$0xff]
        %v5388 = vld [vmem:[%s5367 + $0xa0] sm:$0xff]
        %v5389 = vld [vmem:[%s5367 + $0xa8] sm:$0xff]
        %v5390 = vld [vmem:[%s5367 + $0xb0] sm:$0xff]
        %v5391 = vld [vmem:[%s5367 + $0xb8] sm:$0xff]
        %v5392 = vld [vmem:[%s5367 + $0xc0] sm:$0xff]
        %v5393 = vld [vmem:[%s5367 + $0xc8] sm:$0xff]
        %v5394 = vld [vmem:[%s5367 + $0xd0] sm:$0xff]
        %v5395 = vld [vmem:[%s5367 + $0xd8] sm:$0xff]
        %v5396 = vld [vmem:[%s5367 + $0xe0] sm:$0xff]
        %v5397 = vld [vmem:[%s5367 + $0xe8] sm:$0xff]
        %v5398 = vld [vmem:[%s5367 + $0xf0] sm:$0xff]
        %v5399 = vld [vmem:[%s5367 + $0xf8] sm:$0xff]
        %v5400 = vld [vmem:[%s5367 + $0x100] sm:$0xff]
        %v5401 = vld [vmem:[%s5367 + $0x108] sm:$0xff]
        %v5402 = vld [vmem:[%s5367 + $0x110] sm:$0xff]
        %v5403 = vld [vmem:[%s5367 + $0x118] sm:$0xff]
        %v5404 = vld [vmem:[%s5367 + $0x120] sm:$0xff]
        %v5405 = vld [vmem:[%s5367 + $0x128] sm:$0xff]
        %v5406 = vld [vmem:[%s5367 + $0x130] sm:$0xff]
        %v5407 = vld [vmem:[%s5367 + $0x138] sm:$0xff]
        %v5408 = vld [vmem:[%s5367 + $0x140] sm:$0xff]
        %v5409 = vld [vmem:[%s5367 + $0x148] sm:$0xff]
        %v5410 = vld [vmem:[%s5367 + $0x150] sm:$0xff]
        %v5411 = vld [vmem:[%s5367 + $0x158] sm:$0xff]
        %v5412 = vld [vmem:[%s5367 + $0x160] sm:$0xff]
        %v5413 = vld [vmem:[%s5367 + $0x168] sm:$0xff]
        %v5414 = vld [vmem:[%s5367 + $0x170] sm:$0xff]
        %v5415 = vld [vmem:[%s5367 + $0x178] sm:$0xff]
        %v5416 = vld [vmem:[%s5367 + $0x180] sm:$0xff]
        %v5417 = vld [vmem:[%s5367 + $0x188] sm:$0xff]
        %v5418 = vld [vmem:[%s5367 + $0x190] sm:$0xff]
        %v5419 = vld [vmem:[%s5367 + $0x198] sm:$0xff]
        %v5420 = vld [vmem:[%s5367 + $0x1a0] sm:$0xff]
        %v5421 = vld [vmem:[%s5367 + $0x1a8] sm:$0xff]
        %v5422 = vld [vmem:[%s5367 + $0x1b0] sm:$0xff]
        %v5423 = vld [vmem:[%s5367 + $0x1b8] sm:$0xff]
        %v5424 = vld [vmem:[%s5367 + $0x1c0] sm:$0xff]
        %v5425 = vld [vmem:[%s5367 + $0x1c8] sm:$0xff]
        %v5426 = vld [vmem:[%s5367 + $0x1d0] sm:$0xff]
        %v5427 = vld [vmem:[%s5367 + $0x1d8] sm:$0xff]
        %v5428 = vld [vmem:[%s5367 + $0x1e0] sm:$0xff]
        %v5429 = vld [vmem:[%s5367 + $0x1e8] sm:$0xff]
        %v5430 = vld [vmem:[%s5367 + $0x1f0] sm:$0xff]
        %v5431 = vld [vmem:[%s5367 + $0x1f8] sm:$0xff]
        %v5434 = vrot.slane %v5365, 1
        %v5435 = vrot.slane %v5366, 1
        %v5502 = vunpack.c.l.b16 %v5368
        %v5503 = vunpack.c.h.b16 %v5368
        %v5504 = vunpack.c.l.b16 %v5369
        %v5505 = vunpack.c.h.b16 %v5369
        %v5506 = vunpack.c.l.b16 %v5370
        %v5507 = vunpack.c.h.b16 %v5370
        %v5508 = vunpack.c.l.b16 %v5371
        %v5509 = vunpack.c.h.b16 %v5371
        %v5510 = vunpack.c.l.b16 %v5372
        %v5511 = vunpack.c.h.b16 %v5372
        %v5512 = vunpack.c.l.b16 %v5373
        %v5513 = vunpack.c.h.b16 %v5373
        %v5514 = vunpack.c.l.b16 %v5374
        %v5515 = vunpack.c.h.b16 %v5374
        %v5516 = vunpack.c.l.b16 %v5375
        %v5517 = vunpack.c.h.b16 %v5375
        %v5518 = vunpack.c.l.b16 %v5376
        %v5519 = vunpack.c.h.b16 %v5376
        %v5520 = vunpack.c.l.b16 %v5377
        %v5521 = vunpack.c.h.b16 %v5377
        %v5522 = vunpack.c.l.b16 %v5378
        %v5523 = vunpack.c.h.b16 %v5378
        %v5524 = vunpack.c.l.b16 %v5379
        %v5525 = vunpack.c.h.b16 %v5379
        %v5526 = vunpack.c.l.b16 %v5380
        %v5527 = vunpack.c.h.b16 %v5380
        %v5528 = vunpack.c.l.b16 %v5381
        %v5529 = vunpack.c.h.b16 %v5381
        %v5530 = vunpack.c.l.b16 %v5382
        %v5531 = vunpack.c.h.b16 %v5382
        %v5532 = vunpack.c.l.b16 %v5383
        %v5533 = vunpack.c.h.b16 %v5383
        %v5534 = vunpack.c.l.b16 %v5384
        %v5535 = vunpack.c.h.b16 %v5384
        %v5536 = vunpack.c.l.b16 %v5385
        %v5537 = vunpack.c.h.b16 %v5385
        %v5538 = vunpack.c.l.b16 %v5386
        %v5539 = vunpack.c.h.b16 %v5386
        %v5540 = vunpack.c.l.b16 %v5387
        %v5541 = vunpack.c.h.b16 %v5387
        %v5542 = vunpack.c.l.b16 %v5388
        %v5543 = vunpack.c.h.b16 %v5388
        %v5544 = vunpack.c.l.b16 %v5389
        %v5545 = vunpack.c.h.b16 %v5389
        %v5546 = vunpack.c.l.b16 %v5390
        %v5547 = vunpack.c.h.b16 %v5390
        %v5548 = vunpack.c.l.b16 %v5391
        %v5549 = vunpack.c.h.b16 %v5391
        %v5550 = vunpack.c.l.b16 %v5392
        %v5551 = vunpack.c.h.b16 %v5392
        %v5552 = vunpack.c.l.b16 %v5393
        %v5553 = vunpack.c.h.b16 %v5393
        %v5554 = vunpack.c.l.b16 %v5394
        %v5555 = vunpack.c.h.b16 %v5394
        %v5556 = vunpack.c.l.b16 %v5395
        %v5557 = vunpack.c.h.b16 %v5395
        %v5558 = vunpack.c.l.b16 %v5396
        %v5559 = vunpack.c.h.b16 %v5396
        %v5560 = vunpack.c.l.b16 %v5397
        %v5561 = vunpack.c.h.b16 %v5397
        %v5562 = vunpack.c.l.b16 %v5398
        %v5563 = vunpack.c.h.b16 %v5398
        %v5564 = vunpack.c.l.b16 %v5399
        %v5565 = vunpack.c.h.b16 %v5399
        %v5566 = vunpack.c.l.b16 %v5400
        %v5567 = vunpack.c.h.b16 %v5400
        %v5568 = vunpack.c.l.b16 %v5401
        %v5569 = vunpack.c.h.b16 %v5401
        %v5570 = vunpack.c.l.b16 %v5402
        %v5571 = vunpack.c.h.b16 %v5402
        %v5572 = vunpack.c.l.b16 %v5403
        %v5573 = vunpack.c.h.b16 %v5403
        %v5574 = vunpack.c.l.b16 %v5404
        %v5575 = vunpack.c.h.b16 %v5404
        %v5576 = vunpack.c.l.b16 %v5405
        %v5577 = vunpack.c.h.b16 %v5405
        %v5578 = vunpack.c.l.b16 %v5406
        %v5579 = vunpack.c.h.b16 %v5406
        %v5580 = vunpack.c.l.b16 %v5407
        %v5581 = vunpack.c.h.b16 %v5407
        %v5582 = vunpack.c.l.b16 %v5408
        %v5583 = vunpack.c.h.b16 %v5408
        %v5584 = vunpack.c.l.b16 %v5409
        %v5585 = vunpack.c.h.b16 %v5409
        %v5586 = vunpack.c.l.b16 %v5410
        %v5587 = vunpack.c.h.b16 %v5410
        %v5588 = vunpack.c.l.b16 %v5411
        %v5589 = vunpack.c.h.b16 %v5411
        %v5590 = vunpack.c.l.b16 %v5412
        %v5591 = vunpack.c.h.b16 %v5412
        %v5592 = vunpack.c.l.b16 %v5413
        %v5593 = vunpack.c.h.b16 %v5413
        %v5594 = vunpack.c.l.b16 %v5414
        %v5595 = vunpack.c.h.b16 %v5414
        %v5596 = vunpack.c.l.b16 %v5415
        %v5597 = vunpack.c.h.b16 %v5415
        %v5598 = vunpack.c.l.b16 %v5416
        %v5599 = vunpack.c.h.b16 %v5416
        %v5600 = vunpack.c.l.b16 %v5417
        %v5601 = vunpack.c.h.b16 %v5417
        %v5602 = vunpack.c.l.b16 %v5418
        %v5603 = vunpack.c.h.b16 %v5418
        %v5604 = vunpack.c.l.b16 %v5419
        %v5605 = vunpack.c.h.b16 %v5419
        %v5606 = vunpack.c.l.b16 %v5420
        %v5607 = vunpack.c.h.b16 %v5420
        %v5608 = vunpack.c.l.b16 %v5421
        %v5609 = vunpack.c.h.b16 %v5421
        %v5610 = vunpack.c.l.b16 %v5422
        %v5611 = vunpack.c.h.b16 %v5422
        %v5612 = vunpack.c.l.b16 %v5423
        %v5613 = vunpack.c.h.b16 %v5423
        %v5614 = vunpack.c.l.b16 %v5424
        %v5615 = vunpack.c.h.b16 %v5424
        %v5616 = vunpack.c.l.b16 %v5425
        %v5617 = vunpack.c.h.b16 %v5425
        %v5618 = vunpack.c.l.b16 %v5426
        %v5619 = vunpack.c.h.b16 %v5426
        %v5620 = vunpack.c.l.b16 %v5427
        %v5621 = vunpack.c.h.b16 %v5427
        %v5622 = vunpack.c.l.b16 %v5428
        %v5623 = vunpack.c.h.b16 %v5428
        %v5624 = vunpack.c.l.b16 %v5429
        %v5625 = vunpack.c.h.b16 %v5429
        %v5626 = vunpack.c.l.b16 %v5430
        %v5627 = vunpack.c.h.b16 %v5430
        %v5628 = vunpack.c.l.b16 %v5431
        %v5629 = vunpack.c.h.b16 %v5431
        %v5630 = vpack.c.b16 %v5506, %v5502
        %v5631 = vpack.c.b16 %v5507, %v5503
        %v5632 = vpack.c.b16 %v5508, %v5504
        %v5633 = vpack.c.b16 %v5509, %v5505
        %v5634 = vpack.c.b16 %v5514, %v5510
        %v5635 = vpack.c.b16 %v5515, %v5511
        %v5636 = vpack.c.b16 %v5516, %v5512
        %v5637 = vpack.c.b16 %v5517, %v5513
        %v5638 = vpack.c.b16 %v5522, %v5518
        %v5639 = vpack.c.b16 %v5523, %v5519
        %v5640 = vpack.c.b16 %v5524, %v5520
        %v5641 = vpack.c.b16 %v5525, %v5521
        %v5642 = vpack.c.b16 %v5530, %v5526
        %v5643 = vpack.c.b16 %v5531, %v5527
        %v5644 = vpack.c.b16 %v5532, %v5528
        %v5645 = vpack.c.b16 %v5533, %v5529
        %v5646 = vpack.c.b16 %v5538, %v5534
        %v5647 = vpack.c.b16 %v5539, %v5535
        %v5648 = vpack.c.b16 %v5540, %v5536
        %v5649 = vpack.c.b16 %v5541, %v5537
        %v5650 = vpack.c.b16 %v5546, %v5542
        %v5651 = vpack.c.b16 %v5547, %v5543
        %v5652 = vpack.c.b16 %v5548, %v5544
        %v5653 = vpack.c.b16 %v5549, %v5545
        %v5654 = vpack.c.b16 %v5554, %v5550
        %v5655 = vpack.c.b16 %v5555, %v5551
        %v5656 = vpack.c.b16 %v5556, %v5552
        %v5657 = vpack.c.b16 %v5557, %v5553
        %v5658 = vpack.c.b16 %v5562, %v5558
        %v5659 = vpack.c.b16 %v5563, %v5559
        %v5660 = vpack.c.b16 %v5564, %v5560
        %v5661 = vpack.c.b16 %v5565, %v5561
        %v5662 = vpack.c.b16 %v5570, %v5566
        %v5663 = vpack.c.b16 %v5571, %v5567
        %v5664 = vpack.c.b16 %v5572, %v5568
        %v5665 = vpack.c.b16 %v5573, %v5569
        %v5666 = vpack.c.b16 %v5578, %v5574
        %v5667 = vpack.c.b16 %v5579, %v5575
        %v5668 = vpack.c.b16 %v5580, %v5576
        %v5669 = vpack.c.b16 %v5581, %v5577
        %v5670 = vpack.c.b16 %v5586, %v5582
        %v5671 = vpack.c.b16 %v5587, %v5583
        %v5672 = vpack.c.b16 %v5588, %v5584
        %v5673 = vpack.c.b16 %v5589, %v5585
        %v5674 = vpack.c.b16 %v5594, %v5590
        %v5675 = vpack.c.b16 %v5595, %v5591
        %v5676 = vpack.c.b16 %v5596, %v5592
        %v5677 = vpack.c.b16 %v5597, %v5593
        %v5678 = vpack.c.b16 %v5602, %v5598
        %v5679 = vpack.c.b16 %v5603, %v5599
        %v5680 = vpack.c.b16 %v5604, %v5600
        %v5681 = vpack.c.b16 %v5605, %v5601
        %v5682 = vpack.c.b16 %v5610, %v5606
        %v5683 = vpack.c.b16 %v5611, %v5607
        %v5684 = vpack.c.b16 %v5612, %v5608
        %v5685 = vpack.c.b16 %v5613, %v5609
        %v5686 = vpack.c.b16 %v5618, %v5614
        %v5687 = vpack.c.b16 %v5619, %v5615
        %v5688 = vpack.c.b16 %v5620, %v5616
        %v5689 = vpack.c.b16 %v5621, %v5617
        %v5690 = vpack.c.b16 %v5626, %v5622
        %v5691 = vpack.c.b16 %v5627, %v5623
        %v5692 = vpack.c.b16 %v5628, %v5624
        %v5693 = vpack.c.b16 %v5629, %v5625
        %5758 = vmatprep.subr.bf16.mxu0 %v5631
        %5759 = vmatpush1.bf16.msra.mxu0 %v5630
        %5760 = vmatprep.subr.bf16.mxu0 %v5635
        %5761 = vmatpush1.bf16.msra.mxu0 %v5634
        %5762 = vmatprep.subr.bf16.mxu0 %v5639
        %5763 = vmatpush1.bf16.msra.mxu0 %v5638
        %5764 = vmatprep.subr.bf16.mxu0 %v5643
        %5765 = vmatpush1.bf16.msra.mxu0 %v5642
        %5766 = vmatprep.subr.bf16.mxu0 %v5647
        %5767 = vmatpush1.bf16.msra.mxu0 %v5646
        %5768 = vmatprep.subr.bf16.mxu0 %v5651
        %5769 = vmatpush1.bf16.msra.mxu0 %v5650
        %5770 = vmatprep.subr.bf16.mxu0 %v5655
        %5771 = vmatpush1.bf16.msra.mxu0 %v5654
        %5772 = vmatprep.subr.bf16.mxu0 %v5659
        %5773 = vmatpush1.bf16.msra.mxu0 %v5658
        %5774 = vmatprep.subr.bf16.mxu0 %v5663
        %5775 = vmatpush1.bf16.msra.mxu0 %v5662
        %5776 = vmatprep.subr.bf16.mxu0 %v5667
        %5777 = vmatpush1.bf16.msra.mxu0 %v5666
        %5778 = vmatprep.subr.bf16.mxu0 %v5671
        %5779 = vmatpush1.bf16.msra.mxu0 %v5670
        %5780 = vmatprep.subr.bf16.mxu0 %v5675
        %5781 = vmatpush1.bf16.msra.mxu0 %v5674
        %5782 = vmatprep.subr.bf16.mxu0 %v5679
        %5783 = vmatpush1.bf16.msra.mxu0 %v5678
        %5784 = vmatprep.subr.bf16.mxu0 %v5683
        %5785 = vmatpush1.bf16.msra.mxu0 %v5682
        %5786 = vmatprep.subr.bf16.mxu0 %v5687
        %5787 = vmatpush1.bf16.msra.mxu0 %v5686
        %5788 = vmatprep.subr.bf16.mxu0 %v5691
        %5789 = vmatpush1.bf16.msra.mxu0 %v5690
        %5790 = vmatprep.mubr.bf16.mxu0 %v5435
        %5791 = vmatmul.mubr.bf16.gmra.mrb[0].mxu0 %v5434
        %v5792 = vpop.f32.mrb[0].mxu0
        %v5793 = vadd.f32 0.0, %v5792
        %v5794 = vpop.f32.mrb[0].mxu0
        %v5795 = vadd.f32 0.0, %v5794
        %v5796 = vpop.f32.mrb[0].mxu0
        %v5797 = vpop.f32.mrb[0].mxu0
        %5798 = vdwg.mxu0
        %5799 = vmatprep.subr.bf16.mxu0 %v5633
        %5800 = vmatpush1.bf16.msra.mxu0 %v5632
        %5801 = vmatprep.subr.bf16.mxu0 %v5637
        %5802 = vmatpush1.bf16.msra.mxu0 %v5636
        %5803 = vmatprep.subr.bf16.mxu0 %v5641
        %5804 = vmatpush1.bf16.msra.mxu0 %v5640
        %5805 = vmatprep.subr.bf16.mxu0 %v5645
        %5806 = vmatpush1.bf16.msra.mxu0 %v5644
        %5807 = vmatprep.subr.bf16.mxu0 %v5649
        %5808 = vmatpush1.bf16.msra.mxu0 %v5648
        %5809 = vmatprep.subr.bf16.mxu0 %v5653
        %5810 = vmatpush1.bf16.msra.mxu0 %v5652
        %5811 = vmatprep.subr.bf16.mxu0 %v5657
        %5812 = vmatpush1.bf16.msra.mxu0 %v5656
        %5813 = vmatprep.subr.bf16.mxu0 %v5661
        %5814 = vmatpush1.bf16.msra.mxu0 %v5660
        %5815 = vmatprep.subr.bf16.mxu0 %v5665
        %5816 = vmatpush1.bf16.msra.mxu0 %v5664
        %5817 = vmatprep.subr.bf16.mxu0 %v5669
        %5818 = vmatpush1.bf16.msra.mxu0 %v5668
        %5819 = vmatprep.subr.bf16.mxu0 %v5673
        %5820 = vmatpush1.bf16.msra.mxu0 %v5672
        %5821 = vmatprep.subr.bf16.mxu0 %v5677
        %5822 = vmatpush1.bf16.msra.mxu0 %v5676
        %5823 = vmatprep.subr.bf16.mxu0 %v5681
        %5824 = vmatpush1.bf16.msra.mxu0 %v5680
        %5825 = vmatprep.subr.bf16.mxu0 %v5685
        %5826 = vmatpush1.bf16.msra.mxu0 %v5684
        %5827 = vmatprep.subr.bf16.mxu0 %v5689
        %5828 = vmatpush1.bf16.msra.mxu0 %v5688
        %5829 = vmatprep.subr.bf16.mxu0 %v5693
        %5830 = vmatpush1.bf16.msra.mxu0 %v5692
        %5831 = vmatprep.mubr.bf16.mxu0 %v5435
        %5832 = vmatmul.mubr.bf16.gmra.mrb[0].mxu0 %v5434
        %v5833 = vpop.f32.mrb[0].mxu0
        %v5834 = vadd.f32 0.0, %v5833
        %v5835 = vpop.f32.mrb[0].mxu0
        %v5836 = vadd.f32 0.0, %v5835
        %v5837 = vpop.f32.mrb[0].mxu0
        %v5838 = vpop.f32.mrb[0].mxu0
        %5839 = vdwg.mxu0
        %v5840 = vadd.f32 %v5314, %v5793
        %v5841 = vadd.f32 %v5316, %v5795
        %v5842 = vadd.f32 %v5355, %v5834
        %v5843 = vadd.f32 %v5357, %v5836
        %v5844 = vld [vmem:[#allocation4] sm:$0xf0]
        %v5845 = vld [vmem:[#allocation4 + $0x8] sm:$0xf0]
        %v5846 = vld [vmem:[#allocation4 + $0x10] sm:$0xf]
        %v5847 = vld [vmem:[#allocation4 + $0x18] sm:$0xf]
        %v5848 = vpack.c.bf16 %v5846, %v5844
        %v5849 = vpack.c.bf16 %v5847, %v5845
        %s5850 = scalar_lea.vmem %s7, 1536
        %v5851 = vld [vmem:[%s5850] sm:$0xff]
        %v5852 = vld [vmem:[%s5850 + $0x8] sm:$0xff]
        %v5853 = vld [vmem:[%s5850 + $0x10] sm:$0xff]
        %v5854 = vld [vmem:[%s5850 + $0x18] sm:$0xff]
        %v5855 = vld [vmem:[%s5850 + $0x20] sm:$0xff]
        %v5856 = vld [vmem:[%s5850 + $0x28] sm:$0xff]
        %v5857 = vld [vmem:[%s5850 + $0x30] sm:$0xff]
        %v5858 = vld [vmem:[%s5850 + $0x38] sm:$0xff]
        %v5859 = vld [vmem:[%s5850 + $0x40] sm:$0xff]
        %v5860 = vld [vmem:[%s5850 + $0x48] sm:$0xff]
        %v5861 = vld [vmem:[%s5850 + $0x50] sm:$0xff]
        %v5862 = vld [vmem:[%s5850 + $0x58] sm:$0xff]
        %v5863 = vld [vmem:[%s5850 + $0x60] sm:$0xff]
        %v5864 = vld [vmem:[%s5850 + $0x68] sm:$0xff]
        %v5865 = vld [vmem:[%s5850 + $0x70] sm:$0xff]
        %v5866 = vld [vmem:[%s5850 + $0x78] sm:$0xff]
        %v5867 = vld [vmem:[%s5850 + $0x80] sm:$0xff]
        %v5868 = vld [vmem:[%s5850 + $0x88] sm:$0xff]
        %v5869 = vld [vmem:[%s5850 + $0x90] sm:$0xff]
        %v5870 = vld [vmem:[%s5850 + $0x98] sm:$0xff]
        %v5871 = vld [vmem:[%s5850 + $0xa0] sm:$0xff]
        %v5872 = vld [vmem:[%s5850 + $0xa8] sm:$0xff]
        %v5873 = vld [vmem:[%s5850 + $0xb0] sm:$0xff]
        %v5874 = vld [vmem:[%s5850 + $0xb8] sm:$0xff]
        %v5875 = vld [vmem:[%s5850 + $0xc0] sm:$0xff]
        %v5876 = vld [vmem:[%s5850 + $0xc8] sm:$0xff]
        %v5877 = vld [vmem:[%s5850 + $0xd0] sm:$0xff]
        %v5878 = vld [vmem:[%s5850 + $0xd8] sm:$0xff]
        %v5879 = vld [vmem:[%s5850 + $0xe0] sm:$0xff]
        %v5880 = vld [vmem:[%s5850 + $0xe8] sm:$0xff]
        %v5881 = vld [vmem:[%s5850 + $0xf0] sm:$0xff]
        %v5882 = vld [vmem:[%s5850 + $0xf8] sm:$0xff]
        %v5883 = vld [vmem:[%s5850 + $0x100] sm:$0xff]
        %v5884 = vld [vmem:[%s5850 + $0x108] sm:$0xff]
        %v5885 = vld [vmem:[%s5850 + $0x110] sm:$0xff]
        %v5886 = vld [vmem:[%s5850 + $0x118] sm:$0xff]
        %v5887 = vld [vmem:[%s5850 + $0x120] sm:$0xff]
        %v5888 = vld [vmem:[%s5850 + $0x128] sm:$0xff]
        %v5889 = vld [vmem:[%s5850 + $0x130] sm:$0xff]
        %v5890 = vld [vmem:[%s5850 + $0x138] sm:$0xff]
        %v5891 = vld [vmem:[%s5850 + $0x140] sm:$0xff]
        %v5892 = vld [vmem:[%s5850 + $0x148] sm:$0xff]
        %v5893 = vld [vmem:[%s5850 + $0x150] sm:$0xff]
        %v5894 = vld [vmem:[%s5850 + $0x158] sm:$0xff]
        %v5895 = vld [vmem:[%s5850 + $0x160] sm:$0xff]
        %v5896 = vld [vmem:[%s5850 + $0x168] sm:$0xff]
        %v5897 = vld [vmem:[%s5850 + $0x170] sm:$0xff]
        %v5898 = vld [vmem:[%s5850 + $0x178] sm:$0xff]
        %v5899 = vld [vmem:[%s5850 + $0x180] sm:$0xff]
        %v5900 = vld [vmem:[%s5850 + $0x188] sm:$0xff]
        %v5901 = vld [vmem:[%s5850 + $0x190] sm:$0xff]
        %v5902 = vld [vmem:[%s5850 + $0x198] sm:$0xff]
        %v5903 = vld [vmem:[%s5850 + $0x1a0] sm:$0xff]
        %v5904 = vld [vmem:[%s5850 + $0x1a8] sm:$0xff]
        %v5905 = vld [vmem:[%s5850 + $0x1b0] sm:$0xff]
        %v5906 = vld [vmem:[%s5850 + $0x1b8] sm:$0xff]
        %v5907 = vld [vmem:[%s5850 + $0x1c0] sm:$0xff]
        %v5908 = vld [vmem:[%s5850 + $0x1c8] sm:$0xff]
        %v5909 = vld [vmem:[%s5850 + $0x1d0] sm:$0xff]
        %v5910 = vld [vmem:[%s5850 + $0x1d8] sm:$0xff]
        %v5911 = vld [vmem:[%s5850 + $0x1e0] sm:$0xff]
        %v5912 = vld [vmem:[%s5850 + $0x1e8] sm:$0xff]
        %v5913 = vld [vmem:[%s5850 + $0x1f0] sm:$0xff]
        %v5914 = vld [vmem:[%s5850 + $0x1f8] sm:$0xff]
        %v5917 = vrot.slane %v5848, 2
        %v5918 = vrot.slane %v5849, 2
        %v5985 = vunpack.c.l.b16 %v5851
        %v5986 = vunpack.c.h.b16 %v5851
        %v5987 = vunpack.c.l.b16 %v5852
        %v5988 = vunpack.c.h.b16 %v5852
        %v5989 = vunpack.c.l.b16 %v5853
        %v5990 = vunpack.c.h.b16 %v5853
        %v5991 = vunpack.c.l.b16 %v5854
        %v5992 = vunpack.c.h.b16 %v5854
        %v5993 = vunpack.c.l.b16 %v5855
        %v5994 = vunpack.c.h.b16 %v5855
        %v5995 = vunpack.c.l.b16 %v5856
        %v5996 = vunpack.c.h.b16 %v5856
        %v5997 = vunpack.c.l.b16 %v5857
        %v5998 = vunpack.c.h.b16 %v5857
        %v5999 = vunpack.c.l.b16 %v5858
        %v6000 = vunpack.c.h.b16 %v5858
        %v6001 = vunpack.c.l.b16 %v5859
        %v6002 = vunpack.c.h.b16 %v5859
        %v6003 = vunpack.c.l.b16 %v5860
        %v6004 = vunpack.c.h.b16 %v5860
        %v6005 = vunpack.c.l.b16 %v5861
        %v6006 = vunpack.c.h.b16 %v5861
        %v6007 = vunpack.c.l.b16 %v5862
        %v6008 = vunpack.c.h.b16 %v5862
        %v6009 = vunpack.c.l.b16 %v5863
        %v6010 = vunpack.c.h.b16 %v5863
        %v6011 = vunpack.c.l.b16 %v5864
        %v6012 = vunpack.c.h.b16 %v5864
        %v6013 = vunpack.c.l.b16 %v5865
        %v6014 = vunpack.c.h.b16 %v5865
        %v6015 = vunpack.c.l.b16 %v5866
        %v6016 = vunpack.c.h.b16 %v5866
        %v6017 = vunpack.c.l.b16 %v5867
        %v6018 = vunpack.c.h.b16 %v5867
        %v6019 = vunpack.c.l.b16 %v5868
        %v6020 = vunpack.c.h.b16 %v5868
        %v6021 = vunpack.c.l.b16 %v5869
        %v6022 = vunpack.c.h.b16 %v5869
        %v6023 = vunpack.c.l.b16 %v5870
        %v6024 = vunpack.c.h.b16 %v5870
        %v6025 = vunpack.c.l.b16 %v5871
        %v6026 = vunpack.c.h.b16 %v5871
        %v6027 = vunpack.c.l.b16 %v5872
        %v6028 = vunpack.c.h.b16 %v5872
        %v6029 = vunpack.c.l.b16 %v5873
        %v6030 = vunpack.c.h.b16 %v5873
        %v6031 = vunpack.c.l.b16 %v5874
        %v6032 = vunpack.c.h.b16 %v5874
        %v6033 = vunpack.c.l.b16 %v5875
        %v6034 = vunpack.c.h.b16 %v5875
        %v6035 = vunpack.c.l.b16 %v5876
        %v6036 = vunpack.c.h.b16 %v5876
        %v6037 = vunpack.c.l.b16 %v5877
        %v6038 = vunpack.c.h.b16 %v5877
        %v6039 = vunpack.c.l.b16 %v5878
        %v6040 = vunpack.c.h.b16 %v5878
        %v6041 = vunpack.c.l.b16 %v5879
        %v6042 = vunpack.c.h.b16 %v5879
        %v6043 = vunpack.c.l.b16 %v5880
        %v6044 = vunpack.c.h.b16 %v5880
        %v6045 = vunpack.c.l.b16 %v5881
        %v6046 = vunpack.c.h.b16 %v5881
        %v6047 = vunpack.c.l.b16 %v5882
        %v6048 = vunpack.c.h.b16 %v5882
        %v6049 = vunpack.c.l.b16 %v5883
        %v6050 = vunpack.c.h.b16 %v5883
        %v6051 = vunpack.c.l.b16 %v5884
        %v6052 = vunpack.c.h.b16 %v5884
        %v6053 = vunpack.c.l.b16 %v5885
        %v6054 = vunpack.c.h.b16 %v5885
        %v6055 = vunpack.c.l.b16 %v5886
        %v6056 = vunpack.c.h.b16 %v5886
        %v6057 = vunpack.c.l.b16 %v5887
        %v6058 = vunpack.c.h.b16 %v5887
        %v6059 = vunpack.c.l.b16 %v5888
        %v6060 = vunpack.c.h.b16 %v5888
        %v6061 = vunpack.c.l.b16 %v5889
        %v6062 = vunpack.c.h.b16 %v5889
        %v6063 = vunpack.c.l.b16 %v5890
        %v6064 = vunpack.c.h.b16 %v5890
        %v6065 = vunpack.c.l.b16 %v5891
        %v6066 = vunpack.c.h.b16 %v5891
        %v6067 = vunpack.c.l.b16 %v5892
        %v6068 = vunpack.c.h.b16 %v5892
        %v6069 = vunpack.c.l.b16 %v5893
        %v6070 = vunpack.c.h.b16 %v5893
        %v6071 = vunpack.c.l.b16 %v5894
        %v6072 = vunpack.c.h.b16 %v5894
        %v6073 = vunpack.c.l.b16 %v5895
        %v6074 = vunpack.c.h.b16 %v5895
        %v6075 = vunpack.c.l.b16 %v5896
        %v6076 = vunpack.c.h.b16 %v5896
        %v6077 = vunpack.c.l.b16 %v5897
        %v6078 = vunpack.c.h.b16 %v5897
        %v6079 = vunpack.c.l.b16 %v5898
        %v6080 = vunpack.c.h.b16 %v5898
        %v6081 = vunpack.c.l.b16 %v5899
        %v6082 = vunpack.c.h.b16 %v5899
        %v6083 = vunpack.c.l.b16 %v5900
        %v6084 = vunpack.c.h.b16 %v5900
        %v6085 = vunpack.c.l.b16 %v5901
        %v6086 = vunpack.c.h.b16 %v5901
        %v6087 = vunpack.c.l.b16 %v5902
        %v6088 = vunpack.c.h.b16 %v5902
        %v6089 = vunpack.c.l.b16 %v5903
        %v6090 = vunpack.c.h.b16 %v5903
        %v6091 = vunpack.c.l.b16 %v5904
        %v6092 = vunpack.c.h.b16 %v5904
        %v6093 = vunpack.c.l.b16 %v5905
        %v6094 = vunpack.c.h.b16 %v5905
        %v6095 = vunpack.c.l.b16 %v5906
        %v6096 = vunpack.c.h.b16 %v5906
        %v6097 = vunpack.c.l.b16 %v5907
        %v6098 = vunpack.c.h.b16 %v5907
        %v6099 = vunpack.c.l.b16 %v5908
        %v6100 = vunpack.c.h.b16 %v5908
        %v6101 = vunpack.c.l.b16 %v5909
        %v6102 = vunpack.c.h.b16 %v5909
        %v6103 = vunpack.c.l.b16 %v5910
        %v6104 = vunpack.c.h.b16 %v5910
        %v6105 = vunpack.c.l.b16 %v5911
        %v6106 = vunpack.c.h.b16 %v5911
        %v6107 = vunpack.c.l.b16 %v5912
        %v6108 = vunpack.c.h.b16 %v5912
        %v6109 = vunpack.c.l.b16 %v5913
        %v6110 = vunpack.c.h.b16 %v5913
        %v6111 = vunpack.c.l.b16 %v5914
        %v6112 = vunpack.c.h.b16 %v5914
        %v6113 = vpack.c.b16 %v5989, %v5985
        %v6114 = vpack.c.b16 %v5990, %v5986
        %v6115 = vpack.c.b16 %v5991, %v5987
        %v6116 = vpack.c.b16 %v5992, %v5988
        %v6117 = vpack.c.b16 %v5997, %v5993
        %v6118 = vpack.c.b16 %v5998, %v5994
        %v6119 = vpack.c.b16 %v5999, %v5995
        %v6120 = vpack.c.b16 %v6000, %v5996
        %v6121 = vpack.c.b16 %v6005, %v6001
        %v6122 = vpack.c.b16 %v6006, %v6002
        %v6123 = vpack.c.b16 %v6007, %v6003
        %v6124 = vpack.c.b16 %v6008, %v6004
        %v6125 = vpack.c.b16 %v6013, %v6009
        %v6126 = vpack.c.b16 %v6014, %v6010
        %v6127 = vpack.c.b16 %v6015, %v6011
        %v6128 = vpack.c.b16 %v6016, %v6012
        %v6129 = vpack.c.b16 %v6021, %v6017
        %v6130 = vpack.c.b16 %v6022, %v6018
        %v6131 = vpack.c.b16 %v6023, %v6019
        %v6132 = vpack.c.b16 %v6024, %v6020
        %v6133 = vpack.c.b16 %v6029, %v6025
        %v6134 = vpack.c.b16 %v6030, %v6026
        %v6135 = vpack.c.b16 %v6031, %v6027
        %v6136 = vpack.c.b16 %v6032, %v6028
        %v6137 = vpack.c.b16 %v6037, %v6033
        %v6138 = vpack.c.b16 %v6038, %v6034
        %v6139 = vpack.c.b16 %v6039, %v6035
        %v6140 = vpack.c.b16 %v6040, %v6036
        %v6141 = vpack.c.b16 %v6045, %v6041
        %v6142 = vpack.c.b16 %v6046, %v6042
        %v6143 = vpack.c.b16 %v6047, %v6043
        %v6144 = vpack.c.b16 %v6048, %v6044
        %v6145 = vpack.c.b16 %v6053, %v6049
        %v6146 = vpack.c.b16 %v6054, %v6050
        %v6147 = vpack.c.b16 %v6055, %v6051
        %v6148 = vpack.c.b16 %v6056, %v6052
        %v6149 = vpack.c.b16 %v6061, %v6057
        %v6150 = vpack.c.b16 %v6062, %v6058
        %v6151 = vpack.c.b16 %v6063, %v6059
        %v6152 = vpack.c.b16 %v6064, %v6060
        %v6153 = vpack.c.b16 %v6069, %v6065
        %v6154 = vpack.c.b16 %v6070, %v6066
        %v6155 = vpack.c.b16 %v6071, %v6067
        %v6156 = vpack.c.b16 %v6072, %v6068
        %v6157 = vpack.c.b16 %v6077, %v6073
        %v6158 = vpack.c.b16 %v6078, %v6074
        %v6159 = vpack.c.b16 %v6079, %v6075
        %v6160 = vpack.c.b16 %v6080, %v6076
        %v6161 = vpack.c.b16 %v6085, %v6081
        %v6162 = vpack.c.b16 %v6086, %v6082
        %v6163 = vpack.c.b16 %v6087, %v6083
        %v6164 = vpack.c.b16 %v6088, %v6084
        %v6165 = vpack.c.b16 %v6093, %v6089
        %v6166 = vpack.c.b16 %v6094, %v6090
        %v6167 = vpack.c.b16 %v6095, %v6091
        %v6168 = vpack.c.b16 %v6096, %v6092
        %v6169 = vpack.c.b16 %v6101, %v6097
        %v6170 = vpack.c.b16 %v6102, %v6098
        %v6171 = vpack.c.b16 %v6103, %v6099
        %v6172 = vpack.c.b16 %v6104, %v6100
        %v6173 = vpack.c.b16 %v6109, %v6105
        %v6174 = vpack.c.b16 %v6110, %v6106
        %v6175 = vpack.c.b16 %v6111, %v6107
        %v6176 = vpack.c.b16 %v6112, %v6108
        %6241 = vmatprep.subr.bf16.mxu0 %v6114
        %6242 = vmatpush1.bf16.msra.mxu0 %v6113
        %6243 = vmatprep.subr.bf16.mxu0 %v6118
        %6244 = vmatpush1.bf16.msra.mxu0 %v6117
        %6245 = vmatprep.subr.bf16.mxu0 %v6122
        %6246 = vmatpush1.bf16.msra.mxu0 %v6121
        %6247 = vmatprep.subr.bf16.mxu0 %v6126
        %6248 = vmatpush1.bf16.msra.mxu0 %v6125
        %6249 = vmatprep.subr.bf16.mxu0 %v6130
        %6250 = vmatpush1.bf16.msra.mxu0 %v6129
        %6251 = vmatprep.subr.bf16.mxu0 %v6134
        %6252 = vmatpush1.bf16.msra.mxu0 %v6133
        %6253 = vmatprep.subr.bf16.mxu0 %v6138
        %6254 = vmatpush1.bf16.msra.mxu0 %v6137
        %6255 = vmatprep.subr.bf16.mxu0 %v6142
        %6256 = vmatpush1.bf16.msra.mxu0 %v6141
        %6257 = vmatprep.subr.bf16.mxu0 %v6146
        %6258 = vmatpush1.bf16.msra.mxu0 %v6145
        %6259 = vmatprep.subr.bf16.mxu0 %v6150
        %6260 = vmatpush1.bf16.msra.mxu0 %v6149
        %6261 = vmatprep.subr.bf16.mxu0 %v6154
        %6262 = vmatpush1.bf16.msra.mxu0 %v6153
        %6263 = vmatprep.subr.bf16.mxu0 %v6158
        %6264 = vmatpush1.bf16.msra.mxu0 %v6157
        %6265 = vmatprep.subr.bf16.mxu0 %v6162
        %6266 = vmatpush1.bf16.msra.mxu0 %v6161
        %6267 = vmatprep.subr.bf16.mxu0 %v6166
        %6268 = vmatpush1.bf16.msra.mxu0 %v6165
        %6269 = vmatprep.subr.bf16.mxu0 %v6170
        %6270 = vmatpush1.bf16.msra.mxu0 %v6169
        %6271 = vmatprep.subr.bf16.mxu0 %v6174
        %6272 = vmatpush1.bf16.msra.mxu0 %v6173
        %6273 = vmatprep.mubr.bf16.mxu0 %v5918
        %6274 = vmatmul.mubr.bf16.gmra.mrb[0].mxu0 %v5917
        %v6275 = vpop.f32.mrb[0].mxu0
        %v6276 = vadd.f32 0.0, %v6275
        %v6277 = vpop.f32.mrb[0].mxu0
        %v6278 = vadd.f32 0.0, %v6277
        %v6279 = vpop.f32.mrb[0].mxu0
        %v6280 = vpop.f32.mrb[0].mxu0
        %6281 = vdwg.mxu0
        %6282 = vmatprep.subr.bf16.mxu0 %v6116
        %6283 = vmatpush1.bf16.msra.mxu0 %v6115
        %6284 = vmatprep.subr.bf16.mxu0 %v6120
        %6285 = vmatpush1.bf16.msra.mxu0 %v6119
        %6286 = vmatprep.subr.bf16.mxu0 %v6124
        %6287 = vmatpush1.bf16.msra.mxu0 %v6123
        %6288 = vmatprep.subr.bf16.mxu0 %v6128
        %6289 = vmatpush1.bf16.msra.mxu0 %v6127
        %6290 = vmatprep.subr.bf16.mxu0 %v6132
        %6291 = vmatpush1.bf16.msra.mxu0 %v6131
        %6292 = vmatprep.subr.bf16.mxu0 %v6136
        %6293 = vmatpush1.bf16.msra.mxu0 %v6135
        %6294 = vmatprep.subr.bf16.mxu0 %v6140
        %6295 = vmatpush1.bf16.msra.mxu0 %v6139
        %6296 = vmatprep.subr.bf16.mxu0 %v6144
        %6297 = vmatpush1.bf16.msra.mxu0 %v6143
        %6298 = vmatprep.subr.bf16.mxu0 %v6148
        %6299 = vmatpush1.bf16.msra.mxu0 %v6147
        %6300 = vmatprep.subr.bf16.mxu0 %v6152
        %6301 = vmatpush1.bf16.msra.mxu0 %v6151
        %6302 = vmatprep.subr.bf16.mxu0 %v6156
        %6303 = vmatpush1.bf16.msra.mxu0 %v6155
        %6304 = vmatprep.subr.bf16.mxu0 %v6160
        %6305 = vmatpush1.bf16.msra.mxu0 %v6159
        %6306 = vmatprep.subr.bf16.mxu0 %v6164
        %6307 = vmatpush1.bf16.msra.mxu0 %v6163
        %6308 = vmatprep.subr.bf16.mxu0 %v6168
        %6309 = vmatpush1.bf16.msra.mxu0 %v6167
        %6310 = vmatprep.subr.bf16.mxu0 %v6172
        %6311 = vmatpush1.bf16.msra.mxu0 %v6171
        %6312 = vmatprep.subr.bf16.mxu0 %v6176
        %6313 = vmatpush1.bf16.msra.mxu0 %v6175
        %6314 = vmatprep.mubr.bf16.mxu0 %v5918
        %6315 = vmatmul.mubr.bf16.gmra.mrb[0].mxu0 %v5917
        %v6316 = vpop.f32.mrb[0].mxu0
        %v6317 = vadd.f32 0.0, %v6316
        %v6318 = vpop.f32.mrb[0].mxu0
        %v6319 = vadd.f32 0.0, %v6318
        %v6320 = vpop.f32.mrb[0].mxu0
        %v6321 = vpop.f32.mrb[0].mxu0
        %6322 = vdwg.mxu0
        %v6323 = vadd.f32 %v5840, %v6276
        %v6324 = vadd.f32 %v5841, %v6278
        %v6325 = vadd.f32 %v5842, %v6317
        %v6326 = vadd.f32 %v5843, %v6319
        %v6327 = vld [vmem:[#allocation4] sm:$0xe0]
        %v6328 = vld [vmem:[#allocation4 + $0x8] sm:$0xe0]
        %v6329 = vld [vmem:[#allocation4 + $0x10] sm:$0x1f]
        %v6330 = vld [vmem:[#allocation4 + $0x18] sm:$0x1f]
        %v6331 = vpack.c.bf16 %v6329, %v6327
        %v6332 = vpack.c.bf16 %v6330, %v6328
        %s6333 = scalar_lea.vmem %s7, 2048
        %v6334 = vld [vmem:[%s6333] sm:$0xff]
        %v6335 = vld [vmem:[%s6333 + $0x8] sm:$0xff]
        %v6336 = vld [vmem:[%s6333 + $0x10] sm:$0xff]
        %v6337 = vld [vmem:[%s6333 + $0x18] sm:$0xff]
        %v6338 = vld [vmem:[%s6333 + $0x20] sm:$0xff]
        %v6339 = vld [vmem:[%s6333 + $0x28] sm:$0xff]
        %v6340 = vld [vmem:[%s6333 + $0x30] sm:$0xff]
        %v6341 = vld [vmem:[%s6333 + $0x38] sm:$0xff]
        %v6342 = vld [vmem:[%s6333 + $0x40] sm:$0xff]
        %v6343 = vld [vmem:[%s6333 + $0x48] sm:$0xff]
        %v6344 = vld [vmem:[%s6333 + $0x50] sm:$0xff]
        %v6345 = vld [vmem:[%s6333 + $0x58] sm:$0xff]
        %v6346 = vld [vmem:[%s6333 + $0x60] sm:$0xff]
        %v6347 = vld [vmem:[%s6333 + $0x68] sm:$0xff]
        %v6348 = vld [vmem:[%s6333 + $0x70] sm:$0xff]
        %v6349 = vld [vmem:[%s6333 + $0x78] sm:$0xff]
        %v6350 = vld [vmem:[%s6333 + $0x80] sm:$0xff]
        %v6351 = vld [vmem:[%s6333 + $0x88] sm:$0xff]
        %v6352 = vld [vmem:[%s6333 + $0x90] sm:$0xff]
        %v6353 = vld [vmem:[%s6333 + $0x98] sm:$0xff]
        %v6354 = vld [vmem:[%s6333 + $0xa0] sm:$0xff]
        %v6355 = vld [vmem:[%s6333 + $0xa8] sm:$0xff]
        %v6356 = vld [vmem:[%s6333 + $0xb0] sm:$0xff]
        %v6357 = vld [vmem:[%s6333 + $0xb8] sm:$0xff]
        %v6358 = vld [vmem:[%s6333 + $0xc0] sm:$0xff]
        %v6359 = vld [vmem:[%s6333 + $0xc8] sm:$0xff]
        %v6360 = vld [vmem:[%s6333 + $0xd0] sm:$0xff]
        %v6361 = vld [vmem:[%s6333 + $0xd8] sm:$0xff]
        %v6362 = vld [vmem:[%s6333 + $0xe0] sm:$0xff]
        %v6363 = vld [vmem:[%s6333 + $0xe8] sm:$0xff]
        %v6364 = vld [vmem:[%s6333 + $0xf0] sm:$0xff]
        %v6365 = vld [vmem:[%s6333 + $0xf8] sm:$0xff]
        %v6366 = vld [vmem:[%s6333 + $0x100] sm:$0xff]
        %v6367 = vld [vmem:[%s6333 + $0x108] sm:$0xff]
        %v6368 = vld [vmem:[%s6333 + $0x110] sm:$0xff]
        %v6369 = vld [vmem:[%s6333 + $0x118] sm:$0xff]
        %v6370 = vld [vmem:[%s6333 + $0x120] sm:$0xff]
        %v6371 = vld [vmem:[%s6333 + $0x128] sm:$0xff]
        %v6372 = vld [vmem:[%s6333 + $0x130] sm:$0xff]
        %v6373 = vld [vmem:[%s6333 + $0x138] sm:$0xff]
        %v6374 = vld [vmem:[%s6333 + $0x140] sm:$0xff]
        %v6375 = vld [vmem:[%s6333 + $0x148] sm:$0xff]
        %v6376 = vld [vmem:[%s6333 + $0x150] sm:$0xff]
        %v6377 = vld [vmem:[%s6333 + $0x158] sm:$0xff]
        %v6378 = vld [vmem:[%s6333 + $0x160] sm:$0xff]
        %v6379 = vld [vmem:[%s6333 + $0x168] sm:$0xff]
        %v6380 = vld [vmem:[%s6333 + $0x170] sm:$0xff]
        %v6381 = vld [vmem:[%s6333 + $0x178] sm:$0xff]
        %v6382 = vld [vmem:[%s6333 + $0x180] sm:$0xff]
        %v6383 = vld [vmem:[%s6333 + $0x188] sm:$0xff]
        %v6384 = vld [vmem:[%s6333 + $0x190] sm:$0xff]
        %v6385 = vld [vmem:[%s6333 + $0x198] sm:$0xff]
        %v6386 = vld [vmem:[%s6333 + $0x1a0] sm:$0xff]
        %v6387 = vld [vmem:[%s6333 + $0x1a8] sm:$0xff]
        %v6388 = vld [vmem:[%s6333 + $0x1b0] sm:$0xff]
        %v6389 = vld [vmem:[%s6333 + $0x1b8] sm:$0xff]
        %v6390 = vld [vmem:[%s6333 + $0x1c0] sm:$0xff]
        %v6391 = vld [vmem:[%s6333 + $0x1c8] sm:$0xff]
        %v6392 = vld [vmem:[%s6333 + $0x1d0] sm:$0xff]
        %v6393 = vld [vmem:[%s6333 + $0x1d8] sm:$0xff]
        %v6394 = vld [vmem:[%s6333 + $0x1e0] sm:$0xff]
        %v6395 = vld [vmem:[%s6333 + $0x1e8] sm:$0xff]
        %v6396 = vld [vmem:[%s6333 + $0x1f0] sm:$0xff]
        %v6397 = vld [vmem:[%s6333 + $0x1f8] sm:$0xff]
        %v6399 = vshrl.u32 %v6331, 16
        %v6401 = vrot.slane %v6399, 2
        %v6402 = vshll.u32 %v6331, 16
        %v6404 = vrot.slane %v6402, 3
        %v6405 = vor.u32 %v6401, %v6404
        %v6407 = vshrl.u32 %v6332, 16
        %v6409 = vrot.slane %v6407, 2
        %v6410 = vshll.u32 %v6332, 16
        %v6412 = vrot.slane %v6410, 3
        %v6413 = vor.u32 %v6409, %v6412
        %v6480 = vunpack.c.l.b16 %v6334
        %v6481 = vunpack.c.h.b16 %v6334
        %v6482 = vunpack.c.l.b16 %v6335
        %v6483 = vunpack.c.h.b16 %v6335
        %v6484 = vunpack.c.l.b16 %v6336
        %v6485 = vunpack.c.h.b16 %v6336
        %v6486 = vunpack.c.l.b16 %v6337
        %v6487 = vunpack.c.h.b16 %v6337
        %v6488 = vunpack.c.l.b16 %v6338
        %v6489 = vunpack.c.h.b16 %v6338
        %v6490 = vunpack.c.l.b16 %v6339
        %v6491 = vunpack.c.h.b16 %v6339
        %v6492 = vunpack.c.l.b16 %v6340
        %v6493 = vunpack.c.h.b16 %v6340
        %v6494 = vunpack.c.l.b16 %v6341
        %v6495 = vunpack.c.h.b16 %v6341
        %v6496 = vunpack.c.l.b16 %v6342
        %v6497 = vunpack.c.h.b16 %v6342
        %v6498 = vunpack.c.l.b16 %v6343
        %v6499 = vunpack.c.h.b16 %v6343
        %v6500 = vunpack.c.l.b16 %v6344
        %v6501 = vunpack.c.h.b16 %v6344
        %v6502 = vunpack.c.l.b16 %v6345
        %v6503 = vunpack.c.h.b16 %v6345
        %v6504 = vunpack.c.l.b16 %v6346
        %v6505 = vunpack.c.h.b16 %v6346
        %v6506 = vunpack.c.l.b16 %v6347
        %v6507 = vunpack.c.h.b16 %v6347
        %v6508 = vunpack.c.l.b16 %v6348
        %v6509 = vunpack.c.h.b16 %v6348
        %v6510 = vunpack.c.l.b16 %v6349
        %v6511 = vunpack.c.h.b16 %v6349
        %v6512 = vunpack.c.l.b16 %v6350
        %v6513 = vunpack.c.h.b16 %v6350
        %v6514 = vunpack.c.l.b16 %v6351
        %v6515 = vunpack.c.h.b16 %v6351
        %v6516 = vunpack.c.l.b16 %v6352
        %v6517 = vunpack.c.h.b16 %v6352
        %v6518 = vunpack.c.l.b16 %v6353
        %v6519 = vunpack.c.h.b16 %v6353
        %v6520 = vunpack.c.l.b16 %v6354
        %v6521 = vunpack.c.h.b16 %v6354
        %v6522 = vunpack.c.l.b16 %v6355
        %v6523 = vunpack.c.h.b16 %v6355
        %v6524 = vunpack.c.l.b16 %v6356
        %v6525 = vunpack.c.h.b16 %v6356
        %v6526 = vunpack.c.l.b16 %v6357
        %v6527 = vunpack.c.h.b16 %v6357
        %v6528 = vunpack.c.l.b16 %v6358
        %v6529 = vunpack.c.h.b16 %v6358
        %v6530 = vunpack.c.l.b16 %v6359
        %v6531 = vunpack.c.h.b16 %v6359
        %v6532 = vunpack.c.l.b16 %v6360
        %v6533 = vunpack.c.h.b16 %v6360
        %v6534 = vunpack.c.l.b16 %v6361
        %v6535 = vunpack.c.h.b16 %v6361
        %v6536 = vunpack.c.l.b16 %v6362
        %v6537 = vunpack.c.h.b16 %v6362
        %v6538 = vunpack.c.l.b16 %v6363
        %v6539 = vunpack.c.h.b16 %v6363
        %v6540 = vunpack.c.l.b16 %v6364
        %v6541 = vunpack.c.h.b16 %v6364
        %v6542 = vunpack.c.l.b16 %v6365
        %v6543 = vunpack.c.h.b16 %v6365
        %v6544 = vunpack.c.l.b16 %v6366
        %v6545 = vunpack.c.h.b16 %v6366
        %v6546 = vunpack.c.l.b16 %v6367
        %v6547 = vunpack.c.h.b16 %v6367
        %v6548 = vunpack.c.l.b16 %v6368
        %v6549 = vunpack.c.h.b16 %v6368
        %v6550 = vunpack.c.l.b16 %v6369
        %v6551 = vunpack.c.h.b16 %v6369
        %v6552 = vunpack.c.l.b16 %v6370
        %v6553 = vunpack.c.h.b16 %v6370
        %v6554 = vunpack.c.l.b16 %v6371
        %v6555 = vunpack.c.h.b16 %v6371
        %v6556 = vunpack.c.l.b16 %v6372
        %v6557 = vunpack.c.h.b16 %v6372
        %v6558 = vunpack.c.l.b16 %v6373
        %v6559 = vunpack.c.h.b16 %v6373
        %v6560 = vunpack.c.l.b16 %v6374
        %v6561 = vunpack.c.h.b16 %v6374
        %v6562 = vunpack.c.l.b16 %v6375
        %v6563 = vunpack.c.h.b16 %v6375
        %v6564 = vunpack.c.l.b16 %v6376
        %v6565 = vunpack.c.h.b16 %v6376
        %v6566 = vunpack.c.l.b16 %v6377
        %v6567 = vunpack.c.h.b16 %v6377
        %v6568 = vunpack.c.l.b16 %v6378
        %v6569 = vunpack.c.h.b16 %v6378
        %v6570 = vunpack.c.l.b16 %v6379
        %v6571 = vunpack.c.h.b16 %v6379
        %v6572 = vunpack.c.l.b16 %v6380
        %v6573 = vunpack.c.h.b16 %v6380
        %v6574 = vunpack.c.l.b16 %v6381
        %v6575 = vunpack.c.h.b16 %v6381
        %v6576 = vunpack.c.l.b16 %v6382
        %v6577 = vunpack.c.h.b16 %v6382
        %v6578 = vunpack.c.l.b16 %v6383
        %v6579 = vunpack.c.h.b16 %v6383
        %v6580 = vunpack.c.l.b16 %v6384
        %v6581 = vunpack.c.h.b16 %v6384
        %v6582 = vunpack.c.l.b16 %v6385
        %v6583 = vunpack.c.h.b16 %v6385
        %v6584 = vunpack.c.l.b16 %v6386
        %v6585 = vunpack.c.h.b16 %v6386
        %v6586 = vunpack.c.l.b16 %v6387
        %v6587 = vunpack.c.h.b16 %v6387
        %v6588 = vunpack.c.l.b16 %v6388
        %v6589 = vunpack.c.h.b16 %v6388
        %v6590 = vunpack.c.l.b16 %v6389
        %v6591 = vunpack.c.h.b16 %v6389
        %v6592 = vunpack.c.l.b16 %v6390
        %v6593 = vunpack.c.h.b16 %v6390
        %v6594 = vunpack.c.l.b16 %v6391
        %v6595 = vunpack.c.h.b16 %v6391
        %v6596 = vunpack.c.l.b16 %v6392
        %v6597 = vunpack.c.h.b16 %v6392
        %v6598 = vunpack.c.l.b16 %v6393
        %v6599 = vunpack.c.h.b16 %v6393
        %v6600 = vunpack.c.l.b16 %v6394
        %v6601 = vunpack.c.h.b16 %v6394
        %v6602 = vunpack.c.l.b16 %v6395
        %v6603 = vunpack.c.h.b16 %v6395
        %v6604 = vunpack.c.l.b16 %v6396
        %v6605 = vunpack.c.h.b16 %v6396
        %v6606 = vunpack.c.l.b16 %v6397
        %v6607 = vunpack.c.h.b16 %v6397
        %v6608 = vpack.c.b16 %v6484, %v6480
        %v6609 = vpack.c.b16 %v6485, %v6481
        %v6610 = vpack.c.b16 %v6486, %v6482
        %v6611 = vpack.c.b16 %v6487, %v6483
        %v6612 = vpack.c.b16 %v6492, %v6488
        %v6613 = vpack.c.b16 %v6493, %v6489
        %v6614 = vpack.c.b16 %v6494, %v6490
        %v6615 = vpack.c.b16 %v6495, %v6491
        %v6616 = vpack.c.b16 %v6500, %v6496
        %v6617 = vpack.c.b16 %v6501, %v6497
        %v6618 = vpack.c.b16 %v6502, %v6498
        %v6619 = vpack.c.b16 %v6503, %v6499
        %v6620 = vpack.c.b16 %v6508, %v6504
        %v6621 = vpack.c.b16 %v6509, %v6505
        %v6622 = vpack.c.b16 %v6510, %v6506
        %v6623 = vpack.c.b16 %v6511, %v6507
        %v6624 = vpack.c.b16 %v6516, %v6512
        %v6625 = vpack.c.b16 %v6517, %v6513
        %v6626 = vpack.c.b16 %v6518, %v6514
        %v6627 = vpack.c.b16 %v6519, %v6515
        %v6628 = vpack.c.b16 %v6524, %v6520
        %v6629 = vpack.c.b16 %v6525, %v6521
        %v6630 = vpack.c.b16 %v6526, %v6522
        %v6631 = vpack.c.b16 %v6527, %v6523
        %v6632 = vpack.c.b16 %v6532, %v6528
        %v6633 = vpack.c.b16 %v6533, %v6529
        %v6634 = vpack.c.b16 %v6534, %v6530
        %v6635 = vpack.c.b16 %v6535, %v6531
        %v6636 = vpack.c.b16 %v6540, %v6536
        %v6637 = vpack.c.b16 %v6541, %v6537
        %v6638 = vpack.c.b16 %v6542, %v6538
        %v6639 = vpack.c.b16 %v6543, %v6539
        %v6640 = vpack.c.b16 %v6548, %v6544
        %v6641 = vpack.c.b16 %v6549, %v6545
        %v6642 = vpack.c.b16 %v6550, %v6546
        %v6643 = vpack.c.b16 %v6551, %v6547
        %v6644 = vpack.c.b16 %v6556, %v6552
        %v6645 = vpack.c.b16 %v6557, %v6553
        %v6646 = vpack.c.b16 %v6558, %v6554
        %v6647 = vpack.c.b16 %v6559, %v6555
        %v6648 = vpack.c.b16 %v6564, %v6560
        %v6649 = vpack.c.b16 %v6565, %v6561
        %v6650 = vpack.c.b16 %v6566, %v6562
        %v6651 = vpack.c.b16 %v6567, %v6563
        %v6652 = vpack.c.b16 %v6572, %v6568
        %v6653 = vpack.c.b16 %v6573, %v6569
        %v6654 = vpack.c.b16 %v6574, %v6570
        %v6655 = vpack.c.b16 %v6575, %v6571
        %v6656 = vpack.c.b16 %v6580, %v6576
        %v6657 = vpack.c.b16 %v6581, %v6577
        %v6658 = vpack.c.b16 %v6582, %v6578
        %v6659 = vpack.c.b16 %v6583, %v6579
        %v6660 = vpack.c.b16 %v6588, %v6584
        %v6661 = vpack.c.b16 %v6589, %v6585
        %v6662 = vpack.c.b16 %v6590, %v6586
        %v6663 = vpack.c.b16 %v6591, %v6587
        %v6664 = vpack.c.b16 %v6596, %v6592
        %v6665 = vpack.c.b16 %v6597, %v6593
        %v6666 = vpack.c.b16 %v6598, %v6594
        %v6667 = vpack.c.b16 %v6599, %v6595
        %v6668 = vpack.c.b16 %v6604, %v6600
        %v6669 = vpack.c.b16 %v6605, %v6601
        %v6670 = vpack.c.b16 %v6606, %v6602
        %v6671 = vpack.c.b16 %v6607, %v6603
        %6736 = vmatprep.subr.bf16.mxu0 %v6609
        %6737 = vmatpush1.bf16.msra.mxu0 %v6608
        %6738 = vmatprep.subr.bf16.mxu0 %v6613
        %6739 = vmatpush1.bf16.msra.mxu0 %v6612
        %6740 = vmatprep.subr.bf16.mxu0 %v6617
        %6741 = vmatpush1.bf16.msra.mxu0 %v6616
        %6742 = vmatprep.subr.bf16.mxu0 %v6621
        %6743 = vmatpush1.bf16.msra.mxu0 %v6620
        %6744 = vmatprep.subr.bf16.mxu0 %v6625
        %6745 = vmatpush1.bf16.msra.mxu0 %v6624
        %6746 = vmatprep.subr.bf16.mxu0 %v6629
        %6747 = vmatpush1.bf16.msra.mxu0 %v6628
        %6748 = vmatprep.subr.bf16.mxu0 %v6633
        %6749 = vmatpush1.bf16.msra.mxu0 %v6632
        %6750 = vmatprep.subr.bf16.mxu0 %v6637
        %6751 = vmatpush1.bf16.msra.mxu0 %v6636
        %6752 = vmatprep.subr.bf16.mxu0 %v6641
        %6753 = vmatpush1.bf16.msra.mxu0 %v6640
        %6754 = vmatprep.subr.bf16.mxu0 %v6645
        %6755 = vmatpush1.bf16.msra.mxu0 %v6644
        %6756 = vmatprep.subr.bf16.mxu0 %v6649
        %6757 = vmatpush1.bf16.msra.mxu0 %v6648
        %6758 = vmatprep.subr.bf16.mxu0 %v6653
        %6759 = vmatpush1.bf16.msra.mxu0 %v6652
        %6760 = vmatprep.subr.bf16.mxu0 %v6657
        %6761 = vmatpush1.bf16.msra.mxu0 %v6656
        %6762 = vmatprep.subr.bf16.mxu0 %v6661
        %6763 = vmatpush1.bf16.msra.mxu0 %v6660
        %6764 = vmatprep.subr.bf16.mxu0 %v6665
        %6765 = vmatpush1.bf16.msra.mxu0 %v6664
        %6766 = vmatprep.subr.bf16.mxu0 %v6669
        %6767 = vmatpush1.bf16.msra.mxu0 %v6668
        %6768 = vmatprep.mubr.bf16.mxu0 %v6413
        %6769 = vmatmul.mubr.bf16.gmra.mrb[0].mxu0 %v6405
        %v6770 = vpop.f32.mrb[0].mxu0
        %v6771 = vadd.f32 0.0, %v6770
        %v6772 = vpop.f32.mrb[0].mxu0
        %v6773 = vadd.f32 0.0, %v6772
        %v6774 = vpop.f32.mrb[0].mxu0
        %v6775 = vpop.f32.mrb[0].mxu0
        %6776 = vdwg.mxu0
        %6777 = vmatprep.subr.bf16.mxu0 %v6611
        %6778 = vmatpush1.bf16.msra.mxu0 %v6610
        %6779 = vmatprep.subr.bf16.mxu0 %v6615
        %6780 = vmatpush1.bf16.msra.mxu0 %v6614
        %6781 = vmatprep.subr.bf16.mxu0 %v6619
        %6782 = vmatpush1.bf16.msra.mxu0 %v6618
        %6783 = vmatprep.subr.bf16.mxu0 %v6623
        %6784 = vmatpush1.bf16.msra.mxu0 %v6622
        %6785 = vmatprep.subr.bf16.mxu0 %v6627
        %6786 = vmatpush1.bf16.msra.mxu0 %v6626
        %6787 = vmatprep.subr.bf16.mxu0 %v6631
        %6788 = vmatpush1.bf16.msra.mxu0 %v6630
        %6789 = vmatprep.subr.bf16.mxu0 %v6635
        %6790 = vmatpush1.bf16.msra.mxu0 %v6634
        %6791 = vmatprep.subr.bf16.mxu0 %v6639
        %6792 = vmatpush1.bf16.msra.mxu0 %v6638
        %6793 = vmatprep.subr.bf16.mxu0 %v6643
        %6794 = vmatpush1.bf16.msra.mxu0 %v6642
        %6795 = vmatprep.subr.bf16.mxu0 %v6647
        %6796 = vmatpush1.bf16.msra.mxu0 %v6646
        %6797 = vmatprep.subr.bf16.mxu0 %v6651
        %6798 = vmatpush1.bf16.msra.mxu0 %v6650
        %6799 = vmatprep.subr.bf16.mxu0 %v6655
        %6800 = vmatpush1.bf16.msra.mxu0 %v6654
        %6801 = vmatprep.subr.bf16.mxu0 %v6659
        %6802 = vmatpush1.bf16.msra.mxu0 %v6658
        %6803 = vmatprep.subr.bf16.mxu0 %v6663
        %6804 = vmatpush1.bf16.msra.mxu0 %v6662
        %6805 = vmatprep.subr.bf16.mxu0 %v6667
        %6806 = vmatpush1.bf16.msra.mxu0 %v6666
        %6807 = vmatprep.subr.bf16.mxu0 %v6671
        %6808 = vmatpush1.bf16.msra.mxu0 %v6670
        %6809 = vmatprep.mubr.bf16.mxu0 %v6413
        %6810 = vmatmul.mubr.bf16.gmra.mrb[0].mxu0 %v6405
        %v6811 = vpop.f32.mrb[0].mxu0
        %v6812 = vadd.f32 0.0, %v6811
        %v6813 = vpop.f32.mrb[0].mxu0
        %v6814 = vadd.f32 0.0, %v6813
        %v6815 = vpop.f32.mrb[0].mxu0
        %v6816 = vpop.f32.mrb[0].mxu0
        %6817 = vdwg.mxu0
        %v6818 = vadd.f32 %v6323, %v6771
        %v6819 = vadd.f32 %v6324, %v6773
        %v6820 = vadd.f32 %v6325, %v6812
        %v6821 = vadd.f32 %v6326, %v6814
        %v6822 = vld [vmem:[#allocation4] sm:$0xc0]
        %v6823 = vld [vmem:[#allocation4 + $0x8] sm:$0xc0]
        %v6824 = vld [vmem:[#allocation4 + $0x10] sm:$0x3f]
        %v6825 = vld [vmem:[#allocation4 + $0x18] sm:$0x3f]
        %v6826 = vpack.c.bf16 %v6824, %v6822
        %v6827 = vpack.c.bf16 %v6825, %v6823
        %s6828 = scalar_lea.vmem %s7, 2560
        %v6829 = vld [vmem:[%s6828] sm:$0xff]
        %v6830 = vld [vmem:[%s6828 + $0x8] sm:$0xff]
        %v6831 = vld [vmem:[%s6828 + $0x10] sm:$0xff]
        %v6832 = vld [vmem:[%s6828 + $0x18] sm:$0xff]
        %v6833 = vld [vmem:[%s6828 + $0x20] sm:$0xff]
        %v6834 = vld [vmem:[%s6828 + $0x28] sm:$0xff]
        %v6835 = vld [vmem:[%s6828 + $0x30] sm:$0xff]
        %v6836 = vld [vmem:[%s6828 + $0x38] sm:$0xff]
        %v6837 = vld [vmem:[%s6828 + $0x40] sm:$0xff]
        %v6838 = vld [vmem:[%s6828 + $0x48] sm:$0xff]
        %v6839 = vld [vmem:[%s6828 + $0x50] sm:$0xff]
        %v6840 = vld [vmem:[%s6828 + $0x58] sm:$0xff]
        %v6841 = vld [vmem:[%s6828 + $0x60] sm:$0xff]
        %v6842 = vld [vmem:[%s6828 + $0x68] sm:$0xff]
        %v6843 = vld [vmem:[%s6828 + $0x70] sm:$0xff]
        %v6844 = vld [vmem:[%s6828 + $0x78] sm:$0xff]
        %v6845 = vld [vmem:[%s6828 + $0x80] sm:$0xff]
        %v6846 = vld [vmem:[%s6828 + $0x88] sm:$0xff]
        %v6847 = vld [vmem:[%s6828 + $0x90] sm:$0xff]
        %v6848 = vld [vmem:[%s6828 + $0x98] sm:$0xff]
        %v6849 = vld [vmem:[%s6828 + $0xa0] sm:$0xff]
        %v6850 = vld [vmem:[%s6828 + $0xa8] sm:$0xff]
        %v6851 = vld [vmem:[%s6828 + $0xb0] sm:$0xff]
        %v6852 = vld [vmem:[%s6828 + $0xb8] sm:$0xff]
        %v6853 = vld [vmem:[%s6828 + $0xc0] sm:$0xff]
        %v6854 = vld [vmem:[%s6828 + $0xc8] sm:$0xff]
        %v6855 = vld [vmem:[%s6828 + $0xd0] sm:$0xff]
        %v6856 = vld [vmem:[%s6828 + $0xd8] sm:$0xff]
        %v6857 = vld [vmem:[%s6828 + $0xe0] sm:$0xff]
        %v6858 = vld [vmem:[%s6828 + $0xe8] sm:$0xff]
        %v6859 = vld [vmem:[%s6828 + $0xf0] sm:$0xff]
        %v6860 = vld [vmem:[%s6828 + $0xf8] sm:$0xff]
        %v6861 = vld [vmem:[%s6828 + $0x100] sm:$0xff]
        %v6862 = vld [vmem:[%s6828 + $0x108] sm:$0xff]
        %v6863 = vld [vmem:[%s6828 + $0x110] sm:$0xff]
        %v6864 = vld [vmem:[%s6828 + $0x118] sm:$0xff]
        %v6865 = vld [vmem:[%s6828 + $0x120] sm:$0xff]
        %v6866 = vld [vmem:[%s6828 + $0x128] sm:$0xff]
        %v6867 = vld [vmem:[%s6828 + $0x130] sm:$0xff]
        %v6868 = vld [vmem:[%s6828 + $0x138] sm:$0xff]
        %v6869 = vld [vmem:[%s6828 + $0x140] sm:$0xff]
        %v6870 = vld [vmem:[%s6828 + $0x148] sm:$0xff]
        %v6871 = vld [vmem:[%s6828 + $0x150] sm:$0xff]
        %v6872 = vld [vmem:[%s6828 + $0x158] sm:$0xff]
        %v6873 = vld [vmem:[%s6828 + $0x160] sm:$0xff]
        %v6874 = vld [vmem:[%s6828 + $0x168] sm:$0xff]
        %v6875 = vld [vmem:[%s6828 + $0x170] sm:$0xff]
        %v6876 = vld [vmem:[%s6828 + $0x178] sm:$0xff]
        %v6877 = vld [vmem:[%s6828 + $0x180] sm:$0xff]
        %v6878 = vld [vmem:[%s6828 + $0x188] sm:$0xff]
        %v6879 = vld [vmem:[%s6828 + $0x190] sm:$0xff]
        %v6880 = vld [vmem:[%s6828 + $0x198] sm:$0xff]
        %v6881 = vld [vmem:[%s6828 + $0x1a0] sm:$0xff]
        %v6882 = vld [vmem:[%s6828 + $0x1a8] sm:$0xff]
        %v6883 = vld [vmem:[%s6828 + $0x1b0] sm:$0xff]
        %v6884 = vld [vmem:[%s6828 + $0x1b8] sm:$0xff]
        %v6885 = vld [vmem:[%s6828 + $0x1c0] sm:$0xff]
        %v6886 = vld [vmem:[%s6828 + $0x1c8] sm:$0xff]
        %v6887 = vld [vmem:[%s6828 + $0x1d0] sm:$0xff]
        %v6888 = vld [vmem:[%s6828 + $0x1d8] sm:$0xff]
        %v6889 = vld [vmem:[%s6828 + $0x1e0] sm:$0xff]
        %v6890 = vld [vmem:[%s6828 + $0x1e8] sm:$0xff]
        %v6891 = vld [vmem:[%s6828 + $0x1f0] sm:$0xff]
        %v6892 = vld [vmem:[%s6828 + $0x1f8] sm:$0xff]
        %v6895 = vrot.slane %v6826, 3
        %v6896 = vrot.slane %v6827, 3
        %v6963 = vunpack.c.l.b16 %v6829
        %v6964 = vunpack.c.h.b16 %v6829
        %v6965 = vunpack.c.l.b16 %v6830
        %v6966 = vunpack.c.h.b16 %v6830
        %v6967 = vunpack.c.l.b16 %v6831
        %v6968 = vunpack.c.h.b16 %v6831
        %v6969 = vunpack.c.l.b16 %v6832
        %v6970 = vunpack.c.h.b16 %v6832
        %v6971 = vunpack.c.l.b16 %v6833
        %v6972 = vunpack.c.h.b16 %v6833
        %v6973 = vunpack.c.l.b16 %v6834
        %v6974 = vunpack.c.h.b16 %v6834
        %v6975 = vunpack.c.l.b16 %v6835
        %v6976 = vunpack.c.h.b16 %v6835
        %v6977 = vunpack.c.l.b16 %v6836
        %v6978 = vunpack.c.h.b16 %v6836
        %v6979 = vunpack.c.l.b16 %v6837
        %v6980 = vunpack.c.h.b16 %v6837
        %v6981 = vunpack.c.l.b16 %v6838
        %v6982 = vunpack.c.h.b16 %v6838
        %v6983 = vunpack.c.l.b16 %v6839
        %v6984 = vunpack.c.h.b16 %v6839
        %v6985 = vunpack.c.l.b16 %v6840
        %v6986 = vunpack.c.h.b16 %v6840
        %v6987 = vunpack.c.l.b16 %v6841
        %v6988 = vunpack.c.h.b16 %v6841
        %v6989 = vunpack.c.l.b16 %v6842
        %v6990 = vunpack.c.h.b16 %v6842
        %v6991 = vunpack.c.l.b16 %v6843
        %v6992 = vunpack.c.h.b16 %v6843
        %v6993 = vunpack.c.l.b16 %v6844
        %v6994 = vunpack.c.h.b16 %v6844
        %v6995 = vunpack.c.l.b16 %v6845
        %v6996 = vunpack.c.h.b16 %v6845
        %v6997 = vunpack.c.l.b16 %v6846
        %v6998 = vunpack.c.h.b16 %v6846
        %v6999 = vunpack.c.l.b16 %v6847
        %v7000 = vunpack.c.h.b16 %v6847
        %v7001 = vunpack.c.l.b16 %v6848
        %v7002 = vunpack.c.h.b16 %v6848
        %v7003 = vunpack.c.l.b16 %v6849
        %v7004 = vunpack.c.h.b16 %v6849
        %v7005 = vunpack.c.l.b16 %v6850
        %v7006 = vunpack.c.h.b16 %v6850
        %v7007 = vunpack.c.l.b16 %v6851
        %v7008 = vunpack.c.h.b16 %v6851
        %v7009 = vunpack.c.l.b16 %v6852
        %v7010 = vunpack.c.h.b16 %v6852
        %v7011 = vunpack.c.l.b16 %v6853
        %v7012 = vunpack.c.h.b16 %v6853
        %v7013 = vunpack.c.l.b16 %v6854
        %v7014 = vunpack.c.h.b16 %v6854
        %v7015 = vunpack.c.l.b16 %v6855
        %v7016 = vunpack.c.h.b16 %v6855
        %v7017 = vunpack.c.l.b16 %v6856
        %v7018 = vunpack.c.h.b16 %v6856
        %v7019 = vunpack.c.l.b16 %v6857
        %v7020 = vunpack.c.h.b16 %v6857
        %v7021 = vunpack.c.l.b16 %v6858
        %v7022 = vunpack.c.h.b16 %v6858
        %v7023 = vunpack.c.l.b16 %v6859
        %v7024 = vunpack.c.h.b16 %v6859
        %v7025 = vunpack.c.l.b16 %v6860
        %v7026 = vunpack.c.h.b16 %v6860
        %v7027 = vunpack.c.l.b16 %v6861
        %v7028 = vunpack.c.h.b16 %v6861
        %v7029 = vunpack.c.l.b16 %v6862
        %v7030 = vunpack.c.h.b16 %v6862
        %v7031 = vunpack.c.l.b16 %v6863
        %v7032 = vunpack.c.h.b16 %v6863
        %v7033 = vunpack.c.l.b16 %v6864
        %v7034 = vunpack.c.h.b16 %v6864
        %v7035 = vunpack.c.l.b16 %v6865
        %v7036 = vunpack.c.h.b16 %v6865
        %v7037 = vunpack.c.l.b16 %v6866
        %v7038 = vunpack.c.h.b16 %v6866
        %v7039 = vunpack.c.l.b16 %v6867
        %v7040 = vunpack.c.h.b16 %v6867
        %v7041 = vunpack.c.l.b16 %v6868
        %v7042 = vunpack.c.h.b16 %v6868
        %v7043 = vunpack.c.l.b16 %v6869
        %v7044 = vunpack.c.h.b16 %v6869
        %v7045 = vunpack.c.l.b16 %v6870
        %v7046 = vunpack.c.h.b16 %v6870
        %v7047 = vunpack.c.l.b16 %v6871
        %v7048 = vunpack.c.h.b16 %v6871
        %v7049 = vunpack.c.l.b16 %v6872
        %v7050 = vunpack.c.h.b16 %v6872
        %v7051 = vunpack.c.l.b16 %v6873
        %v7052 = vunpack.c.h.b16 %v6873
        %v7053 = vunpack.c.l.b16 %v6874
        %v7054 = vunpack.c.h.b16 %v6874
        %v7055 = vunpack.c.l.b16 %v6875
        %v7056 = vunpack.c.h.b16 %v6875
        %v7057 = vunpack.c.l.b16 %v6876
        %v7058 = vunpack.c.h.b16 %v6876
        %v7059 = vunpack.c.l.b16 %v6877
        %v7060 = vunpack.c.h.b16 %v6877
        %v7061 = vunpack.c.l.b16 %v6878
        %v7062 = vunpack.c.h.b16 %v6878
        %v7063 = vunpack.c.l.b16 %v6879
        %v7064 = vunpack.c.h.b16 %v6879
        %v7065 = vunpack.c.l.b16 %v6880
        %v7066 = vunpack.c.h.b16 %v6880
        %v7067 = vunpack.c.l.b16 %v6881
        %v7068 = vunpack.c.h.b16 %v6881
        %v7069 = vunpack.c.l.b16 %v6882
        %v7070 = vunpack.c.h.b16 %v6882
        %v7071 = vunpack.c.l.b16 %v6883
        %v7072 = vunpack.c.h.b16 %v6883
        %v7073 = vunpack.c.l.b16 %v6884
        %v7074 = vunpack.c.h.b16 %v6884
        %v7075 = vunpack.c.l.b16 %v6885
        %v7076 = vunpack.c.h.b16 %v6885
        %v7077 = vunpack.c.l.b16 %v6886
        %v7078 = vunpack.c.h.b16 %v6886
        %v7079 = vunpack.c.l.b16 %v6887
        %v7080 = vunpack.c.h.b16 %v6887
        %v7081 = vunpack.c.l.b16 %v6888
        %v7082 = vunpack.c.h.b16 %v6888
        %v7083 = vunpack.c.l.b16 %v6889
        %v7084 = vunpack.c.h.b16 %v6889
        %v7085 = vunpack.c.l.b16 %v6890
        %v7086 = vunpack.c.h.b16 %v6890
        %v7087 = vunpack.c.l.b16 %v6891
        %v7088 = vunpack.c.h.b16 %v6891
        %v7089 = vunpack.c.l.b16 %v6892
        %v7090 = vunpack.c.h.b16 %v6892
        %v7091 = vpack.c.b16 %v6967, %v6963
        %v7092 = vpack.c.b16 %v6968, %v6964
        %v7093 = vpack.c.b16 %v6969, %v6965
        %v7094 = vpack.c.b16 %v6970, %v6966
        %v7095 = vpack.c.b16 %v6975, %v6971
        %v7096 = vpack.c.b16 %v6976, %v6972
        %v7097 = vpack.c.b16 %v6977, %v6973
        %v7098 = vpack.c.b16 %v6978, %v6974
        %v7099 = vpack.c.b16 %v6983, %v6979
        %v7100 = vpack.c.b16 %v6984, %v6980
        %v7101 = vpack.c.b16 %v6985, %v6981
        %v7102 = vpack.c.b16 %v6986, %v6982
        %v7103 = vpack.c.b16 %v6991, %v6987
        %v7104 = vpack.c.b16 %v6992, %v6988
        %v7105 = vpack.c.b16 %v6993, %v6989
        %v7106 = vpack.c.b16 %v6994, %v6990
        %v7107 = vpack.c.b16 %v6999, %v6995
        %v7108 = vpack.c.b16 %v7000, %v6996
        %v7109 = vpack.c.b16 %v7001, %v6997
        %v7110 = vpack.c.b16 %v7002, %v6998
        %v7111 = vpack.c.b16 %v7007, %v7003
        %v7112 = vpack.c.b16 %v7008, %v7004
        %v7113 = vpack.c.b16 %v7009, %v7005
        %v7114 = vpack.c.b16 %v7010, %v7006
        %v7115 = vpack.c.b16 %v7015, %v7011
        %v7116 = vpack.c.b16 %v7016, %v7012
        %v7117 = vpack.c.b16 %v7017, %v7013
        %v7118 = vpack.c.b16 %v7018, %v7014
        %v7119 = vpack.c.b16 %v7023, %v7019
        %v7120 = vpack.c.b16 %v7024, %v7020
        %v7121 = vpack.c.b16 %v7025, %v7021
        %v7122 = vpack.c.b16 %v7026, %v7022
        %v7123 = vpack.c.b16 %v7031, %v7027
        %v7124 = vpack.c.b16 %v7032, %v7028
        %v7125 = vpack.c.b16 %v7033, %v7029
        %v7126 = vpack.c.b16 %v7034, %v7030
        %v7127 = vpack.c.b16 %v7039, %v7035
        %v7128 = vpack.c.b16 %v7040, %v7036
        %v7129 = vpack.c.b16 %v7041, %v7037
        %v7130 = vpack.c.b16 %v7042, %v7038
        %v7131 = vpack.c.b16 %v7047, %v7043
        %v7132 = vpack.c.b16 %v7048, %v7044
        %v7133 = vpack.c.b16 %v7049, %v7045
        %v7134 = vpack.c.b16 %v7050, %v7046
        %v7135 = vpack.c.b16 %v7055, %v7051
        %v7136 = vpack.c.b16 %v7056, %v7052
        %v7137 = vpack.c.b16 %v7057, %v7053
        %v7138 = vpack.c.b16 %v7058, %v7054
        %v7139 = vpack.c.b16 %v7063, %v7059
        %v7140 = vpack.c.b16 %v7064, %v7060
        %v7141 = vpack.c.b16 %v7065, %v7061
        %v7142 = vpack.c.b16 %v7066, %v7062
        %v7143 = vpack.c.b16 %v7071, %v7067
        %v7144 = vpack.c.b16 %v7072, %v7068
        %v7145 = vpack.c.b16 %v7073, %v7069
        %v7146 = vpack.c.b16 %v7074, %v7070
        %v7147 = vpack.c.b16 %v7079, %v7075
        %v7148 = vpack.c.b16 %v7080, %v7076
        %v7149 = vpack.c.b16 %v7081, %v7077
        %v7150 = vpack.c.b16 %v7082, %v7078
        %v7151 = vpack.c.b16 %v7087, %v7083
        %v7152 = vpack.c.b16 %v7088, %v7084
        %v7153 = vpack.c.b16 %v7089, %v7085
        %v7154 = vpack.c.b16 %v7090, %v7086
        %7219 = vmatprep.subr.bf16.mxu0 %v7092
        %7220 = vmatpush1.bf16.msra.mxu0 %v7091
        %7221 = vmatprep.subr.bf16.mxu0 %v7096
        %7222 = vmatpush1.bf16.msra.mxu0 %v7095
        %7223 = vmatprep.subr.bf16.mxu0 %v7100
        %7224 = vmatpush1.bf16.msra.mxu0 %v7099
        %7225 = vmatprep.subr.bf16.mxu0 %v7104
        %7226 = vmatpush1.bf16.msra.mxu0 %v7103
        %7227 = vmatprep.subr.bf16.mxu0 %v7108
        %7228 = vmatpush1.bf16.msra.mxu0 %v7107
        %7229 = vmatprep.subr.bf16.mxu0 %v7112
        %7230 = vmatpush1.bf16.msra.mxu0 %v7111
        %7231 = vmatprep.subr.bf16.mxu0 %v7116
        %7232 = vmatpush1.bf16.msra.mxu0 %v7115
        %7233 = vmatprep.subr.bf16.mxu0 %v7120
        %7234 = vmatpush1.bf16.msra.mxu0 %v7119
        %7235 = vmatprep.subr.bf16.mxu0 %v7124
        %7236 = vmatpush1.bf16.msra.mxu0 %v7123
        %7237 = vmatprep.subr.bf16.mxu0 %v7128
        %7238 = vmatpush1.bf16.msra.mxu0 %v7127
        %7239 = vmatprep.subr.bf16.mxu0 %v7132
        %7240 = vmatpush1.bf16.msra.mxu0 %v7131
        %7241 = vmatprep.subr.bf16.mxu0 %v7136
        %7242 = vmatpush1.bf16.msra.mxu0 %v7135
        %7243 = vmatprep.subr.bf16.mxu0 %v7140
        %7244 = vmatpush1.bf16.msra.mxu0 %v7139
        %7245 = vmatprep.subr.bf16.mxu0 %v7144
        %7246 = vmatpush1.bf16.msra.mxu0 %v7143
        %7247 = vmatprep.subr.bf16.mxu0 %v7148
        %7248 = vmatpush1.bf16.msra.mxu0 %v7147
        %7249 = vmatprep.subr.bf16.mxu0 %v7152
        %7250 = vmatpush1.bf16.msra.mxu0 %v7151
        %7251 = vmatprep.mubr.bf16.mxu0 %v6896
        %7252 = vmatmul.mubr.bf16.gmra.mrb[0].mxu0 %v6895
        %v7253 = vpop.f32.mrb[0].mxu0
        %v7254 = vadd.f32 0.0, %v7253
        %v7255 = vpop.f32.mrb[0].mxu0
        %v7256 = vadd.f32 0.0, %v7255
        %v7257 = vpop.f32.mrb[0].mxu0
        %v7258 = vpop.f32.mrb[0].mxu0
        %7259 = vdwg.mxu0
        %7260 = vmatprep.subr.bf16.mxu0 %v7094
        %7261 = vmatpush1.bf16.msra.mxu0 %v7093
        %7262 = vmatprep.subr.bf16.mxu0 %v7098
        %7263 = vmatpush1.bf16.msra.mxu0 %v7097
        %7264 = vmatprep.subr.bf16.mxu0 %v7102
        %7265 = vmatpush1.bf16.msra.mxu0 %v7101
        %7266 = vmatprep.subr.bf16.mxu0 %v7106
        %7267 = vmatpush1.bf16.msra.mxu0 %v7105
        %7268 = vmatprep.subr.bf16.mxu0 %v7110
        %7269 = vmatpush1.bf16.msra.mxu0 %v7109
        %7270 = vmatprep.subr.bf16.mxu0 %v7114
        %7271 = vmatpush1.bf16.msra.mxu0 %v7113
        %7272 = vmatprep.subr.bf16.mxu0 %v7118
        %7273 = vmatpush1.bf16.msra.mxu0 %v7117
        %7274 = vmatprep.subr.bf16.mxu0 %v7122
        %7275 = vmatpush1.bf16.msra.mxu0 %v7121
        %7276 = vmatprep.subr.bf16.mxu0 %v7126
        %7277 = vmatpush1.bf16.msra.mxu0 %v7125
        %7278 = vmatprep.subr.bf16.mxu0 %v7130
        %7279 = vmatpush1.bf16.msra.mxu0 %v7129
        %7280 = vmatprep.subr.bf16.mxu0 %v7134
        %7281 = vmatpush1.bf16.msra.mxu0 %v7133
        %7282 = vmatprep.subr.bf16.mxu0 %v7138
        %7283 = vmatpush1.bf16.msra.mxu0 %v7137
        %7284 = vmatprep.subr.bf16.mxu0 %v7142
        %7285 = vmatpush1.bf16.msra.mxu0 %v7141
        %7286 = vmatprep.subr.bf16.mxu0 %v7146
        %7287 = vmatpush1.bf16.msra.mxu0 %v7145
        %7288 = vmatprep.subr.bf16.mxu0 %v7150
        %7289 = vmatpush1.bf16.msra.mxu0 %v7149
        %7290 = vmatprep.subr.bf16.mxu0 %v7154
        %7291 = vmatpush1.bf16.msra.mxu0 %v7153
        %7292 = vmatprep.mubr.bf16.mxu0 %v6896
        %7293 = vmatmul.mubr.bf16.gmra.mrb[0].mxu0 %v6895
        %v7294 = vpop.f32.mrb[0].mxu0
        %v7295 = vadd.f32 0.0, %v7294
        %v7296 = vpop.f32.mrb[0].mxu0
        %v7297 = vadd.f32 0.0, %v7296
        %v7298 = vpop.f32.mrb[0].mxu0
        %v7299 = vpop.f32.mrb[0].mxu0
        %7300 = vdwg.mxu0
        %v7301 = vadd.f32 %v6818, %v7254
        %v7302 = vadd.f32 %v6819, %v7256
        %v7303 = vadd.f32 %v6820, %v7295
        %v7304 = vadd.f32 %v6821, %v7297
        %v7305 = vld [vmem:[#allocation4 + $0x10] sm:$0xff]
        %v7306 = vld [vmem:[#allocation4 + $0x18] sm:$0xff]
        %v7307 = vpack.c.bf16 %v7305, %v7305
        %v7308 = vpack.c.bf16 %v7306, %v7306
        %s7309 = scalar_lea.vmem %s7, 3072
        %v7310 = vld [vmem:[%s7309] sm:$0xff]
        %v7311 = vld [vmem:[%s7309 + $0x8] sm:$0xff]
        %v7312 = vld [vmem:[%s7309 + $0x10] sm:$0xff]
        %v7313 = vld [vmem:[%s7309 + $0x18] sm:$0xff]
        %v7314 = vld [vmem:[%s7309 + $0x20] sm:$0xff]
        %v7315 = vld [vmem:[%s7309 + $0x28] sm:$0xff]
        %v7316 = vld [vmem:[%s7309 + $0x30] sm:$0xff]
        %v7317 = vld [vmem:[%s7309 + $0x38] sm:$0xff]
        %v7318 = vld [vmem:[%s7309 + $0x40] sm:$0xff]
        %v7319 = vld [vmem:[%s7309 + $0x48] sm:$0xff]
        %v7320 = vld [vmem:[%s7309 + $0x50] sm:$0xff]
        %v7321 = vld [vmem:[%s7309 + $0x58] sm:$0xff]
        %v7322 = vld [vmem:[%s7309 + $0x60] sm:$0xff]
        %v7323 = vld [vmem:[%s7309 + $0x68] sm:$0xff]
        %v7324 = vld [vmem:[%s7309 + $0x70] sm:$0xff]
        %v7325 = vld [vmem:[%s7309 + $0x78] sm:$0xff]
        %v7326 = vld [vmem:[%s7309 + $0x80] sm:$0xff]
        %v7327 = vld [vmem:[%s7309 + $0x88] sm:$0xff]
        %v7328 = vld [vmem:[%s7309 + $0x90] sm:$0xff]
        %v7329 = vld [vmem:[%s7309 + $0x98] sm:$0xff]
        %v7330 = vld [vmem:[%s7309 + $0xa0] sm:$0xff]
        %v7331 = vld [vmem:[%s7309 + $0xa8] sm:$0xff]
        %v7332 = vld [vmem:[%s7309 + $0xb0] sm:$0xff]
        %v7333 = vld [vmem:[%s7309 + $0xb8] sm:$0xff]
        %v7334 = vld [vmem:[%s7309 + $0xc0] sm:$0xff]
        %v7335 = vld [vmem:[%s7309 + $0xc8] sm:$0xff]
        %v7336 = vld [vmem:[%s7309 + $0xd0] sm:$0xff]
        %v7337 = vld [vmem:[%s7309 + $0xd8] sm:$0xff]
        %v7338 = vld [vmem:[%s7309 + $0xe0] sm:$0xff]
        %v7339 = vld [vmem:[%s7309 + $0xe8] sm:$0xff]
        %v7340 = vld [vmem:[%s7309 + $0xf0] sm:$0xff]
        %v7341 = vld [vmem:[%s7309 + $0xf8] sm:$0xff]
        %v7342 = vld [vmem:[%s7309 + $0x100] sm:$0xff]
        %v7343 = vld [vmem:[%s7309 + $0x108] sm:$0xff]
        %v7344 = vld [vmem:[%s7309 + $0x110] sm:$0xff]
        %v7345 = vld [vmem:[%s7309 + $0x118] sm:$0xff]
        %v7346 = vld [vmem:[%s7309 + $0x120] sm:$0xff]
        %v7347 = vld [vmem:[%s7309 + $0x128] sm:$0xff]
        %v7348 = vld [vmem:[%s7309 + $0x130] sm:$0xff]
        %v7349 = vld [vmem:[%s7309 + $0x138] sm:$0xff]
        %v7350 = vld [vmem:[%s7309 + $0x140] sm:$0xff]
        %v7351 = vld [vmem:[%s7309 + $0x148] sm:$0xff]
        %v7352 = vld [vmem:[%s7309 + $0x150] sm:$0xff]
        %v7353 = vld [vmem:[%s7309 + $0x158] sm:$0xff]
        %v7354 = vld [vmem:[%s7309 + $0x160] sm:$0xff]
        %v7355 = vld [vmem:[%s7309 + $0x168] sm:$0xff]
        %v7356 = vld [vmem:[%s7309 + $0x170] sm:$0xff]
        %v7357 = vld [vmem:[%s7309 + $0x178] sm:$0xff]
        %v7358 = vld [vmem:[%s7309 + $0x180] sm:$0xff]
        %v7359 = vld [vmem:[%s7309 + $0x188] sm:$0xff]
        %v7360 = vld [vmem:[%s7309 + $0x190] sm:$0xff]
        %v7361 = vld [vmem:[%s7309 + $0x198] sm:$0xff]
        %v7362 = vld [vmem:[%s7309 + $0x1a0] sm:$0xff]
        %v7363 = vld [vmem:[%s7309 + $0x1a8] sm:$0xff]
        %v7364 = vld [vmem:[%s7309 + $0x1b0] sm:$0xff]
        %v7365 = vld [vmem:[%s7309 + $0x1b8] sm:$0xff]
        %v7366 = vld [vmem:[%s7309 + $0x1c0] sm:$0xff]
        %v7367 = vld [vmem:[%s7309 + $0x1c8] sm:$0xff]
        %v7368 = vld [vmem:[%s7309 + $0x1d0] sm:$0xff]
        %v7369 = vld [vmem:[%s7309 + $0x1d8] sm:$0xff]
        %v7370 = vld [vmem:[%s7309 + $0x1e0] sm:$0xff]
        %v7371 = vld [vmem:[%s7309 + $0x1e8] sm:$0xff]
        %v7372 = vld [vmem:[%s7309 + $0x1f0] sm:$0xff]
        %v7373 = vld [vmem:[%s7309 + $0x1f8] sm:$0xff]
        %v7438 = vunpack.c.l.b16 %v7310
        %v7439 = vunpack.c.h.b16 %v7310
        %v7440 = vunpack.c.l.b16 %v7311
        %v7441 = vunpack.c.h.b16 %v7311
        %v7442 = vunpack.c.l.b16 %v7312
        %v7443 = vunpack.c.h.b16 %v7312
        %v7444 = vunpack.c.l.b16 %v7313
        %v7445 = vunpack.c.h.b16 %v7313
        %v7446 = vunpack.c.l.b16 %v7314
        %v7447 = vunpack.c.h.b16 %v7314
        %v7448 = vunpack.c.l.b16 %v7315
        %v7449 = vunpack.c.h.b16 %v7315
        %v7450 = vunpack.c.l.b16 %v7316
        %v7451 = vunpack.c.h.b16 %v7316
        %v7452 = vunpack.c.l.b16 %v7317
        %v7453 = vunpack.c.h.b16 %v7317
        %v7454 = vunpack.c.l.b16 %v7318
        %v7455 = vunpack.c.h.b16 %v7318
        %v7456 = vunpack.c.l.b16 %v7319
        %v7457 = vunpack.c.h.b16 %v7319
        %v7458 = vunpack.c.l.b16 %v7320
        %v7459 = vunpack.c.h.b16 %v7320
        %v7460 = vunpack.c.l.b16 %v7321
        %v7461 = vunpack.c.h.b16 %v7321
        %v7462 = vunpack.c.l.b16 %v7322
        %v7463 = vunpack.c.h.b16 %v7322
        %v7464 = vunpack.c.l.b16 %v7323
        %v7465 = vunpack.c.h.b16 %v7323
        %v7466 = vunpack.c.l.b16 %v7324
        %v7467 = vunpack.c.h.b16 %v7324
        %v7468 = vunpack.c.l.b16 %v7325
        %v7469 = vunpack.c.h.b16 %v7325
        %v7470 = vunpack.c.l.b16 %v7326
        %v7471 = vunpack.c.h.b16 %v7326
        %v7472 = vunpack.c.l.b16 %v7327
        %v7473 = vunpack.c.h.b16 %v7327
        %v7474 = vunpack.c.l.b16 %v7328
        %v7475 = vunpack.c.h.b16 %v7328
        %v7476 = vunpack.c.l.b16 %v7329
        %v7477 = vunpack.c.h.b16 %v7329
        %v7478 = vunpack.c.l.b16 %v7330
        %v7479 = vunpack.c.h.b16 %v7330
        %v7480 = vunpack.c.l.b16 %v7331
        %v7481 = vunpack.c.h.b16 %v7331
        %v7482 = vunpack.c.l.b16 %v7332
        %v7483 = vunpack.c.h.b16 %v7332
        %v7484 = vunpack.c.l.b16 %v7333
        %v7485 = vunpack.c.h.b16 %v7333
        %v7486 = vunpack.c.l.b16 %v7334
        %v7487 = vunpack.c.h.b16 %v7334
        %v7488 = vunpack.c.l.b16 %v7335
        %v7489 = vunpack.c.h.b16 %v7335
        %v7490 = vunpack.c.l.b16 %v7336
        %v7491 = vunpack.c.h.b16 %v7336
        %v7492 = vunpack.c.l.b16 %v7337
        %v7493 = vunpack.c.h.b16 %v7337
        %v7494 = vunpack.c.l.b16 %v7338
        %v7495 = vunpack.c.h.b16 %v7338
        %v7496 = vunpack.c.l.b16 %v7339
        %v7497 = vunpack.c.h.b16 %v7339
        %v7498 = vunpack.c.l.b16 %v7340
        %v7499 = vunpack.c.h.b16 %v7340
        %v7500 = vunpack.c.l.b16 %v7341
        %v7501 = vunpack.c.h.b16 %v7341
        %v7502 = vunpack.c.l.b16 %v7342
        %v7503 = vunpack.c.h.b16 %v7342
        %v7504 = vunpack.c.l.b16 %v7343
        %v7505 = vunpack.c.h.b16 %v7343
        %v7506 = vunpack.c.l.b16 %v7344
        %v7507 = vunpack.c.h.b16 %v7344
        %v7508 = vunpack.c.l.b16 %v7345
        %v7509 = vunpack.c.h.b16 %v7345
        %v7510 = vunpack.c.l.b16 %v7346
        %v7511 = vunpack.c.h.b16 %v7346
        %v7512 = vunpack.c.l.b16 %v7347
        %v7513 = vunpack.c.h.b16 %v7347
        %v7514 = vunpack.c.l.b16 %v7348
        %v7515 = vunpack.c.h.b16 %v7348
        %v7516 = vunpack.c.l.b16 %v7349
        %v7517 = vunpack.c.h.b16 %v7349
        %v7518 = vunpack.c.l.b16 %v7350
        %v7519 = vunpack.c.h.b16 %v7350
        %v7520 = vunpack.c.l.b16 %v7351
        %v7521 = vunpack.c.h.b16 %v7351
        %v7522 = vunpack.c.l.b16 %v7352
        %v7523 = vunpack.c.h.b16 %v7352
        %v7524 = vunpack.c.l.b16 %v7353
        %v7525 = vunpack.c.h.b16 %v7353
        %v7526 = vunpack.c.l.b16 %v7354
        %v7527 = vunpack.c.h.b16 %v7354
        %v7528 = vunpack.c.l.b16 %v7355
        %v7529 = vunpack.c.h.b16 %v7355
        %v7530 = vunpack.c.l.b16 %v7356
        %v7531 = vunpack.c.h.b16 %v7356
        %v7532 = vunpack.c.l.b16 %v7357
        %v7533 = vunpack.c.h.b16 %v7357
        %v7534 = vunpack.c.l.b16 %v7358
        %v7535 = vunpack.c.h.b16 %v7358
        %v7536 = vunpack.c.l.b16 %v7359
        %v7537 = vunpack.c.h.b16 %v7359
        %v7538 = vunpack.c.l.b16 %v7360
        %v7539 = vunpack.c.h.b16 %v7360
        %v7540 = vunpack.c.l.b16 %v7361
        %v7541 = vunpack.c.h.b16 %v7361
        %v7542 = vunpack.c.l.b16 %v7362
        %v7543 = vunpack.c.h.b16 %v7362
        %v7544 = vunpack.c.l.b16 %v7363
        %v7545 = vunpack.c.h.b16 %v7363
        %v7546 = vunpack.c.l.b16 %v7364
        %v7547 = vunpack.c.h.b16 %v7364
        %v7548 = vunpack.c.l.b16 %v7365
        %v7549 = vunpack.c.h.b16 %v7365
        %v7550 = vunpack.c.l.b16 %v7366
        %v7551 = vunpack.c.h.b16 %v7366
        %v7552 = vunpack.c.l.b16 %v7367
        %v7553 = vunpack.c.h.b16 %v7367
        %v7554 = vunpack.c.l.b16 %v7368
        %v7555 = vunpack.c.h.b16 %v7368
        %v7556 = vunpack.c.l.b16 %v7369
        %v7557 = vunpack.c.h.b16 %v7369
        %v7558 = vunpack.c.l.b16 %v7370
        %v7559 = vunpack.c.h.b16 %v7370
        %v7560 = vunpack.c.l.b16 %v7371
        %v7561 = vunpack.c.h.b16 %v7371
        %v7562 = vunpack.c.l.b16 %v7372
        %v7563 = vunpack.c.h.b16 %v7372
        %v7564 = vunpack.c.l.b16 %v7373
        %v7565 = vunpack.c.h.b16 %v7373
        %v7566 = vpack.c.b16 %v7442, %v7438
        %v7567 = vpack.c.b16 %v7443, %v7439
        %v7568 = vpack.c.b16 %v7444, %v7440
        %v7569 = vpack.c.b16 %v7445, %v7441
        %v7570 = vpack.c.b16 %v7450, %v7446
        %v7571 = vpack.c.b16 %v7451, %v7447
        %v7572 = vpack.c.b16 %v7452, %v7448
        %v7573 = vpack.c.b16 %v7453, %v7449
        %v7574 = vpack.c.b16 %v7458, %v7454
        %v7575 = vpack.c.b16 %v7459, %v7455
        %v7576 = vpack.c.b16 %v7460, %v7456
        %v7577 = vpack.c.b16 %v7461, %v7457
        %v7578 = vpack.c.b16 %v7466, %v7462
        %v7579 = vpack.c.b16 %v7467, %v7463
        %v7580 = vpack.c.b16 %v7468, %v7464
        %v7581 = vpack.c.b16 %v7469, %v7465
        %v7582 = vpack.c.b16 %v7474, %v7470
        %v7583 = vpack.c.b16 %v7475, %v7471
        %v7584 = vpack.c.b16 %v7476, %v7472
        %v7585 = vpack.c.b16 %v7477, %v7473
        %v7586 = vpack.c.b16 %v7482, %v7478
        %v7587 = vpack.c.b16 %v7483, %v7479
        %v7588 = vpack.c.b16 %v7484, %v7480
        %v7589 = vpack.c.b16 %v7485, %v7481
        %v7590 = vpack.c.b16 %v7490, %v7486
        %v7591 = vpack.c.b16 %v7491, %v7487
        %v7592 = vpack.c.b16 %v7492, %v7488
        %v7593 = vpack.c.b16 %v7493, %v7489
        %v7594 = vpack.c.b16 %v7498, %v7494
        %v7595 = vpack.c.b16 %v7499, %v7495
        %v7596 = vpack.c.b16 %v7500, %v7496
        %v7597 = vpack.c.b16 %v7501, %v7497
        %v7598 = vpack.c.b16 %v7506, %v7502
        %v7599 = vpack.c.b16 %v7507, %v7503
        %v7600 = vpack.c.b16 %v7508, %v7504
        %v7601 = vpack.c.b16 %v7509, %v7505
        %v7602 = vpack.c.b16 %v7514, %v7510
        %v7603 = vpack.c.b16 %v7515, %v7511
        %v7604 = vpack.c.b16 %v7516, %v7512
        %v7605 = vpack.c.b16 %v7517, %v7513
        %v7606 = vpack.c.b16 %v7522, %v7518
        %v7607 = vpack.c.b16 %v7523, %v7519
        %v7608 = vpack.c.b16 %v7524, %v7520
        %v7609 = vpack.c.b16 %v7525, %v7521
        %v7610 = vpack.c.b16 %v7530, %v7526
        %v7611 = vpack.c.b16 %v7531, %v7527
        %v7612 = vpack.c.b16 %v7532, %v7528
        %v7613 = vpack.c.b16 %v7533, %v7529
        %v7614 = vpack.c.b16 %v7538, %v7534
        %v7615 = vpack.c.b16 %v7539, %v7535
        %v7616 = vpack.c.b16 %v7540, %v7536
        %v7617 = vpack.c.b16 %v7541, %v7537
        %v7618 = vpack.c.b16 %v7546, %v7542
        %v7619 = vpack.c.b16 %v7547, %v7543
        %v7620 = vpack.c.b16 %v7548, %v7544
        %v7621 = vpack.c.b16 %v7549, %v7545
        %v7622 = vpack.c.b16 %v7554, %v7550
        %v7623 = vpack.c.b16 %v7555, %v7551
        %v7624 = vpack.c.b16 %v7556, %v7552
        %v7625 = vpack.c.b16 %v7557, %v7553
        %v7626 = vpack.c.b16 %v7562, %v7558
        %v7627 = vpack.c.b16 %v7563, %v7559
        %v7628 = vpack.c.b16 %v7564, %v7560
        %v7629 = vpack.c.b16 %v7565, %v7561
        %7694 = vmatprep.subr.bf16.mxu0 %v7567
        %7695 = vmatpush1.bf16.msra.mxu0 %v7566
        %7696 = vmatprep.subr.bf16.mxu0 %v7571
        %7697 = vmatpush1.bf16.msra.mxu0 %v7570
        %7698 = vmatprep.subr.bf16.mxu0 %v7575
        %7699 = vmatpush1.bf16.msra.mxu0 %v7574
        %7700 = vmatprep.subr.bf16.mxu0 %v7579
        %7701 = vmatpush1.bf16.msra.mxu0 %v7578
        %7702 = vmatprep.subr.bf16.mxu0 %v7583
        %7703 = vmatpush1.bf16.msra.mxu0 %v7582
        %7704 = vmatprep.subr.bf16.mxu0 %v7587
        %7705 = vmatpush1.bf16.msra.mxu0 %v7586
        %7706 = vmatprep.subr.bf16.mxu0 %v7591
        %7707 = vmatpush1.bf16.msra.mxu0 %v7590
        %7708 = vmatprep.subr.bf16.mxu0 %v7595
        %7709 = vmatpush1.bf16.msra.mxu0 %v7594
        %7710 = vmatprep.subr.bf16.mxu0 %v7599
        %7711 = vmatpush1.bf16.msra.mxu0 %v7598
        %7712 = vmatprep.subr.bf16.mxu0 %v7603
        %7713 = vmatpush1.bf16.msra.mxu0 %v7602
        %7714 = vmatprep.subr.bf16.mxu0 %v7607
        %7715 = vmatpush1.bf16.msra.mxu0 %v7606
        %7716 = vmatprep.subr.bf16.mxu0 %v7611
        %7717 = vmatpush1.bf16.msra.mxu0 %v7610
        %7718 = vmatprep.subr.bf16.mxu0 %v7615
        %7719 = vmatpush1.bf16.msra.mxu0 %v7614
        %7720 = vmatprep.subr.bf16.mxu0 %v7619
        %7721 = vmatpush1.bf16.msra.mxu0 %v7618
        %7722 = vmatprep.subr.bf16.mxu0 %v7623
        %7723 = vmatpush1.bf16.msra.mxu0 %v7622
        %7724 = vmatprep.subr.bf16.mxu0 %v7627
        %7725 = vmatpush1.bf16.msra.mxu0 %v7626
        %7726 = vmatprep.mubr.bf16.mxu0 %v7308
        %7727 = vmatmul.mubr.bf16.gmra.mrb[0].mxu0 %v7307
        %v7728 = vpop.f32.mrb[0].mxu0
        %v7729 = vadd.f32 0.0, %v7728
        %v7730 = vpop.f32.mrb[0].mxu0
        %v7731 = vadd.f32 0.0, %v7730
        %v7732 = vpop.f32.mrb[0].mxu0
        %v7733 = vpop.f32.mrb[0].mxu0
        %7734 = vdwg.mxu0
        %7735 = vmatprep.subr.bf16.mxu0 %v7569
        %7736 = vmatpush1.bf16.msra.mxu0 %v7568
        %7737 = vmatprep.subr.bf16.mxu0 %v7573
        %7738 = vmatpush1.bf16.msra.mxu0 %v7572
        %7739 = vmatprep.subr.bf16.mxu0 %v7577
        %7740 = vmatpush1.bf16.msra.mxu0 %v7576
        %7741 = vmatprep.subr.bf16.mxu0 %v7581
        %7742 = vmatpush1.bf16.msra.mxu0 %v7580
        %7743 = vmatprep.subr.bf16.mxu0 %v7585
        %7744 = vmatpush1.bf16.msra.mxu0 %v7584
        %7745 = vmatprep.subr.bf16.mxu0 %v7589
        %7746 = vmatpush1.bf16.msra.mxu0 %v7588
        %7747 = vmatprep.subr.bf16.mxu0 %v7593
        %7748 = vmatpush1.bf16.msra.mxu0 %v7592
        %7749 = vmatprep.subr.bf16.mxu0 %v7597
        %7750 = vmatpush1.bf16.msra.mxu0 %v7596
        %7751 = vmatprep.subr.bf16.mxu0 %v7601
        %7752 = vmatpush1.bf16.msra.mxu0 %v7600
        %7753 = vmatprep.subr.bf16.mxu0 %v7605
        %7754 = vmatpush1.bf16.msra.mxu0 %v7604
        %7755 = vmatprep.subr.bf16.mxu0 %v7609
        %7756 = vmatpush1.bf16.msra.mxu0 %v7608
        %7757 = vmatprep.subr.bf16.mxu0 %v7613
        %7758 = vmatpush1.bf16.msra.mxu0 %v7612
        %7759 = vmatprep.subr.bf16.mxu0 %v7617
        %7760 = vmatpush1.bf16.msra.mxu0 %v7616
        %7761 = vmatprep.subr.bf16.mxu0 %v7621
        %7762 = vmatpush1.bf16.msra.mxu0 %v7620
        %7763 = vmatprep.subr.bf16.mxu0 %v7625
        %7764 = vmatpush1.bf16.msra.mxu0 %v7624
        %7765 = vmatprep.subr.bf16.mxu0 %v7629
        %7766 = vmatpush1.bf16.msra.mxu0 %v7628
        %7767 = vmatprep.mubr.bf16.mxu0 %v7308
        %7768 = vmatmul.mubr.bf16.gmra.mrb[0].mxu0 %v7307
        %v7769 = vpop.f32.mrb[0].mxu0
        %v7770 = vadd.f32 0.0, %v7769
        %v7771 = vpop.f32.mrb[0].mxu0
        %v7772 = vadd.f32 0.0, %v7771
        %v7773 = vpop.f32.mrb[0].mxu0
        %v7774 = vpop.f32.mrb[0].mxu0
        %7775 = vdwg.mxu0
        %v7776 = vadd.f32 %v7301, %v7729
        %v7777 = vadd.f32 %v7302, %v7731
        %v7778 = vadd.f32 %v7303, %v7770
        %v7779 = vadd.f32 %v7304, %v7772
        %v7780 = vld [vmem:[#allocation4 + $0x10] sm:$0xfe]
        %v7781 = vld [vmem:[#allocation4 + $0x18] sm:$0xfe]
        %v7782 = vld [vmem:[#allocation4 + $0x20] sm:$0x1]
        %v7783 = vld [vmem:[#allocation4 + $0x28] sm:$0x1]
        %v7784 = vpack.c.bf16 %v7782, %v7780
        %v7785 = vpack.c.bf16 %v7783, %v7781
        %s7786 = scalar_lea.vmem %s7, 3584
        %v7787 = vld [vmem:[%s7786] sm:$0xff]
        %v7788 = vld [vmem:[%s7786 + $0x8] sm:$0xff]
        %v7789 = vld [vmem:[%s7786 + $0x10] sm:$0xff]
        %v7790 = vld [vmem:[%s7786 + $0x18] sm:$0xff]
        %v7791 = vld [vmem:[%s7786 + $0x20] sm:$0xff]
        %v7792 = vld [vmem:[%s7786 + $0x28] sm:$0xff]
        %v7793 = vld [vmem:[%s7786 + $0x30] sm:$0xff]
        %v7794 = vld [vmem:[%s7786 + $0x38] sm:$0xff]
        %v7795 = vld [vmem:[%s7786 + $0x40] sm:$0xff]
        %v7796 = vld [vmem:[%s7786 + $0x48] sm:$0xff]
        %v7797 = vld [vmem:[%s7786 + $0x50] sm:$0xff]
        %v7798 = vld [vmem:[%s7786 + $0x58] sm:$0xff]
        %v7799 = vld [vmem:[%s7786 + $0x60] sm:$0xff]
        %v7800 = vld [vmem:[%s7786 + $0x68] sm:$0xff]
        %v7801 = vld [vmem:[%s7786 + $0x70] sm:$0xff]
        %v7802 = vld [vmem:[%s7786 + $0x78] sm:$0xff]
        %v7803 = vld [vmem:[%s7786 + $0x80] sm:$0xff]
        %v7804 = vld [vmem:[%s7786 + $0x88] sm:$0xff]
        %v7805 = vld [vmem:[%s7786 + $0x90] sm:$0xff]
        %v7806 = vld [vmem:[%s7786 + $0x98] sm:$0xff]
        %v7807 = vld [vmem:[%s7786 + $0xa0] sm:$0xff]
        %v7808 = vld [vmem:[%s7786 + $0xa8] sm:$0xff]
        %v7809 = vld [vmem:[%s7786 + $0xb0] sm:$0xff]
        %v7810 = vld [vmem:[%s7786 + $0xb8] sm:$0xff]
        %v7811 = vld [vmem:[%s7786 + $0xc0] sm:$0xff]
        %v7812 = vld [vmem:[%s7786 + $0xc8] sm:$0xff]
        %v7813 = vld [vmem:[%s7786 + $0xd0] sm:$0xff]
        %v7814 = vld [vmem:[%s7786 + $0xd8] sm:$0xff]
        %v7815 = vld [vmem:[%s7786 + $0xe0] sm:$0xff]
        %v7816 = vld [vmem:[%s7786 + $0xe8] sm:$0xff]
        %v7817 = vld [vmem:[%s7786 + $0xf0] sm:$0xff]
        %v7818 = vld [vmem:[%s7786 + $0xf8] sm:$0xff]
        %v7819 = vld [vmem:[%s7786 + $0x100] sm:$0xff]
        %v7820 = vld [vmem:[%s7786 + $0x108] sm:$0xff]
        %v7821 = vld [vmem:[%s7786 + $0x110] sm:$0xff]
        %v7822 = vld [vmem:[%s7786 + $0x118] sm:$0xff]
        %v7823 = vld [vmem:[%s7786 + $0x120] sm:$0xff]
        %v7824 = vld [vmem:[%s7786 + $0x128] sm:$0xff]
        %v7825 = vld [vmem:[%s7786 + $0x130] sm:$0xff]
        %v7826 = vld [vmem:[%s7786 + $0x138] sm:$0xff]
        %v7827 = vld [vmem:[%s7786 + $0x140] sm:$0xff]
        %v7828 = vld [vmem:[%s7786 + $0x148] sm:$0xff]
        %v7829 = vld [vmem:[%s7786 + $0x150] sm:$0xff]
        %v7830 = vld [vmem:[%s7786 + $0x158] sm:$0xff]
        %v7831 = vld [vmem:[%s7786 + $0x160] sm:$0xff]
        %v7832 = vld [vmem:[%s7786 + $0x168] sm:$0xff]
        %v7833 = vld [vmem:[%s7786 + $0x170] sm:$0xff]
        %v7834 = vld [vmem:[%s7786 + $0x178] sm:$0xff]
        %v7835 = vld [vmem:[%s7786 + $0x180] sm:$0xff]
        %v7836 = vld [vmem:[%s7786 + $0x188] sm:$0xff]
        %v7837 = vld [vmem:[%s7786 + $0x190] sm:$0xff]
        %v7838 = vld [vmem:[%s7786 + $0x198] sm:$0xff]
        %v7839 = vld [vmem:[%s7786 + $0x1a0] sm:$0xff]
        %v7840 = vld [vmem:[%s7786 + $0x1a8] sm:$0xff]
        %v7841 = vld [vmem:[%s7786 + $0x1b0] sm:$0xff]
        %v7842 = vld [vmem:[%s7786 + $0x1b8] sm:$0xff]
        %v7843 = vld [vmem:[%s7786 + $0x1c0] sm:$0xff]
        %v7844 = vld [vmem:[%s7786 + $0x1c8] sm:$0xff]
        %v7845 = vld [vmem:[%s7786 + $0x1d0] sm:$0xff]
        %v7846 = vld [vmem:[%s7786 + $0x1d8] sm:$0xff]
        %v7847 = vld [vmem:[%s7786 + $0x1e0] sm:$0xff]
        %v7848 = vld [vmem:[%s7786 + $0x1e8] sm:$0xff]
        %v7849 = vld [vmem:[%s7786 + $0x1f0] sm:$0xff]
        %v7850 = vld [vmem:[%s7786 + $0x1f8] sm:$0xff]
        %v7852 = vshrl.u32 %v7784, 16
        %v7854 = vshll.u32 %v7784, 16
        %v7856 = vrot.slane %v7854, 1
        %v7857 = vor.u32 %v7852, %v7856
        %v7859 = vshrl.u32 %v7785, 16
        %v7861 = vshll.u32 %v7785, 16
        %v7863 = vrot.slane %v7861, 1
        %v7864 = vor.u32 %v7859, %v7863
        %v7931 = vunpack.c.l.b16 %v7787
        %v7932 = vunpack.c.h.b16 %v7787
        %v7933 = vunpack.c.l.b16 %v7788
        %v7934 = vunpack.c.h.b16 %v7788
        %v7935 = vunpack.c.l.b16 %v7789
        %v7936 = vunpack.c.h.b16 %v7789
        %v7937 = vunpack.c.l.b16 %v7790
        %v7938 = vunpack.c.h.b16 %v7790
        %v7939 = vunpack.c.l.b16 %v7791
        %v7940 = vunpack.c.h.b16 %v7791
        %v7941 = vunpack.c.l.b16 %v7792
        %v7942 = vunpack.c.h.b16 %v7792
        %v7943 = vunpack.c.l.b16 %v7793
        %v7944 = vunpack.c.h.b16 %v7793
        %v7945 = vunpack.c.l.b16 %v7794
        %v7946 = vunpack.c.h.b16 %v7794
        %v7947 = vunpack.c.l.b16 %v7795
        %v7948 = vunpack.c.h.b16 %v7795
        %v7949 = vunpack.c.l.b16 %v7796
        %v7950 = vunpack.c.h.b16 %v7796
        %v7951 = vunpack.c.l.b16 %v7797
        %v7952 = vunpack.c.h.b16 %v7797
        %v7953 = vunpack.c.l.b16 %v7798
        %v7954 = vunpack.c.h.b16 %v7798
        %v7955 = vunpack.c.l.b16 %v7799
        %v7956 = vunpack.c.h.b16 %v7799
        %v7957 = vunpack.c.l.b16 %v7800
        %v7958 = vunpack.c.h.b16 %v7800
        %v7959 = vunpack.c.l.b16 %v7801
        %v7960 = vunpack.c.h.b16 %v7801
        %v7961 = vunpack.c.l.b16 %v7802
        %v7962 = vunpack.c.h.b16 %v7802
        %v7963 = vunpack.c.l.b16 %v7803
        %v7964 = vunpack.c.h.b16 %v7803
        %v7965 = vunpack.c.l.b16 %v7804
        %v7966 = vunpack.c.h.b16 %v7804
        %v7967 = vunpack.c.l.b16 %v7805
        %v7968 = vunpack.c.h.b16 %v7805
        %v7969 = vunpack.c.l.b16 %v7806
        %v7970 = vunpack.c.h.b16 %v7806
        %v7971 = vunpack.c.l.b16 %v7807
        %v7972 = vunpack.c.h.b16 %v7807
        %v7973 = vunpack.c.l.b16 %v7808
        %v7974 = vunpack.c.h.b16 %v7808
        %v7975 = vunpack.c.l.b16 %v7809
        %v7976 = vunpack.c.h.b16 %v7809
        %v7977 = vunpack.c.l.b16 %v7810
        %v7978 = vunpack.c.h.b16 %v7810
        %v7979 = vunpack.c.l.b16 %v7811
        %v7980 = vunpack.c.h.b16 %v7811
        %v7981 = vunpack.c.l.b16 %v7812
        %v7982 = vunpack.c.h.b16 %v7812
        %v7983 = vunpack.c.l.b16 %v7813
        %v7984 = vunpack.c.h.b16 %v7813
        %v7985 = vunpack.c.l.b16 %v7814
        %v7986 = vunpack.c.h.b16 %v7814
        %v7987 = vunpack.c.l.b16 %v7815
        %v7988 = vunpack.c.h.b16 %v7815
        %v7989 = vunpack.c.l.b16 %v7816
        %v7990 = vunpack.c.h.b16 %v7816
        %v7991 = vunpack.c.l.b16 %v7817
        %v7992 = vunpack.c.h.b16 %v7817
        %v7993 = vunpack.c.l.b16 %v7818
        %v7994 = vunpack.c.h.b16 %v7818
        %v7995 = vunpack.c.l.b16 %v7819
        %v7996 = vunpack.c.h.b16 %v7819
        %v7997 = vunpack.c.l.b16 %v7820
        %v7998 = vunpack.c.h.b16 %v7820
        %v7999 = vunpack.c.l.b16 %v7821
        %v8000 = vunpack.c.h.b16 %v7821
        %v8001 = vunpack.c.l.b16 %v7822
        %v8002 = vunpack.c.h.b16 %v7822
        %v8003 = vunpack.c.l.b16 %v7823
        %v8004 = vunpack.c.h.b16 %v7823
        %v8005 = vunpack.c.l.b16 %v7824
        %v8006 = vunpack.c.h.b16 %v7824
        %v8007 = vunpack.c.l.b16 %v7825
        %v8008 = vunpack.c.h.b16 %v7825
        %v8009 = vunpack.c.l.b16 %v7826
        %v8010 = vunpack.c.h.b16 %v7826
        %v8011 = vunpack.c.l.b16 %v7827
        %v8012 = vunpack.c.h.b16 %v7827
        %v8013 = vunpack.c.l.b16 %v7828
        %v8014 = vunpack.c.h.b16 %v7828
        %v8015 = vunpack.c.l.b16 %v7829
        %v8016 = vunpack.c.h.b16 %v7829
        %v8017 = vunpack.c.l.b16 %v7830
        %v8018 = vunpack.c.h.b16 %v7830
        %v8019 = vunpack.c.l.b16 %v7831
        %v8020 = vunpack.c.h.b16 %v7831
        %v8021 = vunpack.c.l.b16 %v7832
        %v8022 = vunpack.c.h.b16 %v7832
        %v8023 = vunpack.c.l.b16 %v7833
        %v8024 = vunpack.c.h.b16 %v7833
        %v8025 = vunpack.c.l.b16 %v7834
        %v8026 = vunpack.c.h.b16 %v7834
        %v8027 = vunpack.c.l.b16 %v7835
        %v8028 = vunpack.c.h.b16 %v7835
        %v8029 = vunpack.c.l.b16 %v7836
        %v8030 = vunpack.c.h.b16 %v7836
        %v8031 = vunpack.c.l.b16 %v7837
        %v8032 = vunpack.c.h.b16 %v7837
        %v8033 = vunpack.c.l.b16 %v7838
        %v8034 = vunpack.c.h.b16 %v7838
        %v8035 = vunpack.c.l.b16 %v7839
        %v8036 = vunpack.c.h.b16 %v7839
        %v8037 = vunpack.c.l.b16 %v7840
        %v8038 = vunpack.c.h.b16 %v7840
        %v8039 = vunpack.c.l.b16 %v7841
        %v8040 = vunpack.c.h.b16 %v7841
        %v8041 = vunpack.c.l.b16 %v7842
        %v8042 = vunpack.c.h.b16 %v7842
        %v8043 = vunpack.c.l.b16 %v7843
        %v8044 = vunpack.c.h.b16 %v7843
        %v8045 = vunpack.c.l.b16 %v7844
        %v8046 = vunpack.c.h.b16 %v7844
        %v8047 = vunpack.c.l.b16 %v7845
        %v8048 = vunpack.c.h.b16 %v7845
        %v8049 = vunpack.c.l.b16 %v7846
        %v8050 = vunpack.c.h.b16 %v7846
        %v8051 = vunpack.c.l.b16 %v7847
        %v8052 = vunpack.c.h.b16 %v7847
        %v8053 = vunpack.c.l.b16 %v7848
        %v8054 = vunpack.c.h.b16 %v7848
        %v8055 = vunpack.c.l.b16 %v7849
        %v8056 = vunpack.c.h.b16 %v7849
        %v8057 = vunpack.c.l.b16 %v7850
        %v8058 = vunpack.c.h.b16 %v7850
        %v8059 = vpack.c.b16 %v7935, %v7931
        %v8060 = vpack.c.b16 %v7936, %v7932
        %v8061 = vpack.c.b16 %v7937, %v7933
        %v8062 = vpack.c.b16 %v7938, %v7934
        %v8063 = vpack.c.b16 %v7943, %v7939
        %v8064 = vpack.c.b16 %v7944, %v7940
        %v8065 = vpack.c.b16 %v7945, %v7941
        %v8066 = vpack.c.b16 %v7946, %v7942
        %v8067 = vpack.c.b16 %v7951, %v7947
        %v8068 = vpack.c.b16 %v7952, %v7948
        %v8069 = vpack.c.b16 %v7953, %v7949
        %v8070 = vpack.c.b16 %v7954, %v7950
        %v8071 = vpack.c.b16 %v7959, %v7955
        %v8072 = vpack.c.b16 %v7960, %v7956
        %v8073 = vpack.c.b16 %v7961, %v7957
        %v8074 = vpack.c.b16 %v7962, %v7958
        %v8075 = vpack.c.b16 %v7967, %v7963
        %v8076 = vpack.c.b16 %v7968, %v7964
        %v8077 = vpack.c.b16 %v7969, %v7965
        %v8078 = vpack.c.b16 %v7970, %v7966
        %v8079 = vpack.c.b16 %v7975, %v7971
        %v8080 = vpack.c.b16 %v7976, %v7972
        %v8081 = vpack.c.b16 %v7977, %v7973
        %v8082 = vpack.c.b16 %v7978, %v7974
        %v8083 = vpack.c.b16 %v7983, %v7979
        %v8084 = vpack.c.b16 %v7984, %v7980
        %v8085 = vpack.c.b16 %v7985, %v7981
        %v8086 = vpack.c.b16 %v7986, %v7982
        %v8087 = vpack.c.b16 %v7991, %v7987
        %v8088 = vpack.c.b16 %v7992, %v7988
        %v8089 = vpack.c.b16 %v7993, %v7989
        %v8090 = vpack.c.b16 %v7994, %v7990
        %v8091 = vpack.c.b16 %v7999, %v7995
        %v8092 = vpack.c.b16 %v8000, %v7996
        %v8093 = vpack.c.b16 %v8001, %v7997
        %v8094 = vpack.c.b16 %v8002, %v7998
        %v8095 = vpack.c.b16 %v8007, %v8003
        %v8096 = vpack.c.b16 %v8008, %v8004
        %v8097 = vpack.c.b16 %v8009, %v8005
        %v8098 = vpack.c.b16 %v8010, %v8006
        %v8099 = vpack.c.b16 %v8015, %v8011
        %v8100 = vpack.c.b16 %v8016, %v8012
        %v8101 = vpack.c.b16 %v8017, %v8013
        %v8102 = vpack.c.b16 %v8018, %v8014
        %v8103 = vpack.c.b16 %v8023, %v8019
        %v8104 = vpack.c.b16 %v8024, %v8020
        %v8105 = vpack.c.b16 %v8025, %v8021
        %v8106 = vpack.c.b16 %v8026, %v8022
        %v8107 = vpack.c.b16 %v8031, %v8027
        %v8108 = vpack.c.b16 %v8032, %v8028
        %v8109 = vpack.c.b16 %v8033, %v8029
        %v8110 = vpack.c.b16 %v8034, %v8030
        %v8111 = vpack.c.b16 %v8039, %v8035
        %v8112 = vpack.c.b16 %v8040, %v8036
        %v8113 = vpack.c.b16 %v8041, %v8037
        %v8114 = vpack.c.b16 %v8042, %v8038
        %v8115 = vpack.c.b16 %v8047, %v8043
        %v8116 = vpack.c.b16 %v8048, %v8044
        %v8117 = vpack.c.b16 %v8049, %v8045
        %v8118 = vpack.c.b16 %v8050, %v8046
        %v8119 = vpack.c.b16 %v8055, %v8051
        %v8120 = vpack.c.b16 %v8056, %v8052
        %v8121 = vpack.c.b16 %v8057, %v8053
        %v8122 = vpack.c.b16 %v8058, %v8054
        %8187 = vmatprep.subr.bf16.mxu0 %v8060
        %8188 = vmatpush1.bf16.msra.mxu0 %v8059
        %8189 = vmatprep.subr.bf16.mxu0 %v8064
        %8190 = vmatpush1.bf16.msra.mxu0 %v8063
        %8191 = vmatprep.subr.bf16.mxu0 %v8068
        %8192 = vmatpush1.bf16.msra.mxu0 %v8067
        %8193 = vmatprep.subr.bf16.mxu0 %v8072
        %8194 = vmatpush1.bf16.msra.mxu0 %v8071
        %8195 = vmatprep.subr.bf16.mxu0 %v8076
        %8196 = vmatpush1.bf16.msra.mxu0 %v8075
        %8197 = vmatprep.subr.bf16.mxu0 %v8080
        %8198 = vmatpush1.bf16.msra.mxu0 %v8079
        %8199 = vmatprep.subr.bf16.mxu0 %v8084
        %8200 = vmatpush1.bf16.msra.mxu0 %v8083
        %8201 = vmatprep.subr.bf16.mxu0 %v8088
        %8202 = vmatpush1.bf16.msra.mxu0 %v8087
        %8203 = vmatprep.subr.bf16.mxu0 %v8092
        %8204 = vmatpush1.bf16.msra.mxu0 %v8091
        %8205 = vmatprep.subr.bf16.mxu0 %v8096
        %8206 = vmatpush1.bf16.msra.mxu0 %v8095
        %8207 = vmatprep.subr.bf16.mxu0 %v8100
        %8208 = vmatpush1.bf16.msra.mxu0 %v8099
        %8209 = vmatprep.subr.bf16.mxu0 %v8104
        %8210 = vmatpush1.bf16.msra.mxu0 %v8103
        %8211 = vmatprep.subr.bf16.mxu0 %v8108
        %8212 = vmatpush1.bf16.msra.mxu0 %v8107
        %8213 = vmatprep.subr.bf16.mxu0 %v8112
        %8214 = vmatpush1.bf16.msra.mxu0 %v8111
        %8215 = vmatprep.subr.bf16.mxu0 %v8116
        %8216 = vmatpush1.bf16.msra.mxu0 %v8115
        %8217 = vmatprep.subr.bf16.mxu0 %v8120
        %8218 = vmatpush1.bf16.msra.mxu0 %v8119
        %8219 = vmatprep.mubr.bf16.mxu0 %v7864
        %8220 = vmatmul.mubr.bf16.gmra.mrb[0].mxu0 %v7857
        %v8221 = vpop.f32.mrb[0].mxu0
        %v8222 = vadd.f32 0.0, %v8221
        %v8223 = vpop.f32.mrb[0].mxu0
        %v8224 = vadd.f32 0.0, %v8223
        %v8225 = vpop.f32.mrb[0].mxu0
        %v8226 = vpop.f32.mrb[0].mxu0
        %8227 = vdwg.mxu0
        %8228 = vmatprep.subr.bf16.mxu0 %v8062
        %8229 = vmatpush1.bf16.msra.mxu0 %v8061
        %8230 = vmatprep.subr.bf16.mxu0 %v8066
        %8231 = vmatpush1.bf16.msra.mxu0 %v8065
        %8232 = vmatprep.subr.bf16.mxu0 %v8070
        %8233 = vmatpush1.bf16.msra.mxu0 %v8069
        %8234 = vmatprep.subr.bf16.mxu0 %v8074
        %8235 = vmatpush1.bf16.msra.mxu0 %v8073
        %8236 = vmatprep.subr.bf16.mxu0 %v8078
        %8237 = vmatpush1.bf16.msra.mxu0 %v8077
        %8238 = vmatprep.subr.bf16.mxu0 %v8082
        %8239 = vmatpush1.bf16.msra.mxu0 %v8081
        %8240 = vmatprep.subr.bf16.mxu0 %v8086
        %8241 = vmatpush1.bf16.msra.mxu0 %v8085
        %8242 = vmatprep.subr.bf16.mxu0 %v8090
        %8243 = vmatpush1.bf16.msra.mxu0 %v8089
        %8244 = vmatprep.subr.bf16.mxu0 %v8094
        %8245 = vmatpush1.bf16.msra.mxu0 %v8093
        %8246 = vmatprep.subr.bf16.mxu0 %v8098
        %8247 = vmatpush1.bf16.msra.mxu0 %v8097
        %8248 = vmatprep.subr.bf16.mxu0 %v8102
        %8249 = vmatpush1.bf16.msra.mxu0 %v8101
        %8250 = vmatprep.subr.bf16.mxu0 %v8106
        %8251 = vmatpush1.bf16.msra.mxu0 %v8105
        %8252 = vmatprep.subr.bf16.mxu0 %v8110
        %8253 = vmatpush1.bf16.msra.mxu0 %v8109
        %8254 = vmatprep.subr.bf16.mxu0 %v8114
        %8255 = vmatpush1.bf16.msra.mxu0 %v8113
        %8256 = vmatprep.subr.bf16.mxu0 %v8118
        %8257 = vmatpush1.bf16.msra.mxu0 %v8117
        %8258 = vmatprep.subr.bf16.mxu0 %v8122
        %8259 = vmatpush1.bf16.msra.mxu0 %v8121
        %8260 = vmatprep.mubr.bf16.mxu0 %v7864
        %8261 = vmatmul.mubr.bf16.gmra.mrb[0].mxu0 %v7857
        %v8262 = vpop.f32.mrb[0].mxu0
        %v8263 = vadd.f32 0.0, %v8262
        %v8264 = vpop.f32.mrb[0].mxu0
        %v8265 = vadd.f32 0.0, %v8264
        %v8266 = vpop.f32.mrb[0].mxu0
        %v8267 = vpop.f32.mrb[0].mxu0
        %8268 = vdwg.mxu0
        %v8269 = vadd.f32 %v7776, %v8222
        %v8270 = vadd.f32 %v7777, %v8224
        %v8271 = vadd.f32 %v7778, %v8263
        %v8272 = vadd.f32 %v7779, %v8265
        %v8273 = vld [vmem:[#allocation4 + $0x10] sm:$0xfc]
        %v8274 = vld [vmem:[#allocation4 + $0x18] sm:$0xfc]
        %v8275 = vld [vmem:[#allocation4 + $0x20] sm:$0x3]
        %v8276 = vld [vmem:[#allocation4 + $0x28] sm:$0x3]
        %v8277 = vpack.c.bf16 %v8275, %v8273
        %v8278 = vpack.c.bf16 %v8276, %v8274
        %s8279 = scalar_lea.vmem %s7, 4096
        %v8280 = vld [vmem:[%s8279] sm:$0xff]
        %v8281 = vld [vmem:[%s8279 + $0x8] sm:$0xff]
        %v8282 = vld [vmem:[%s8279 + $0x10] sm:$0xff]
        %v8283 = vld [vmem:[%s8279 + $0x18] sm:$0xff]
        %v8284 = vld [vmem:[%s8279 + $0x20] sm:$0xff]
        %v8285 = vld [vmem:[%s8279 + $0x28] sm:$0xff]
        %v8286 = vld [vmem:[%s8279 + $0x30] sm:$0xff]
        %v8287 = vld [vmem:[%s8279 + $0x38] sm:$0xff]
        %v8288 = vld [vmem:[%s8279 + $0x40] sm:$0xff]
        %v8289 = vld [vmem:[%s8279 + $0x48] sm:$0xff]
        %v8290 = vld [vmem:[%s8279 + $0x50] sm:$0xff]
        %v8291 = vld [vmem:[%s8279 + $0x58] sm:$0xff]
        %v8292 = vld [vmem:[%s8279 + $0x60] sm:$0xff]
        %v8293 = vld [vmem:[%s8279 + $0x68] sm:$0xff]
        %v8294 = vld [vmem:[%s8279 + $0x70] sm:$0xff]
        %v8295 = vld [vmem:[%s8279 + $0x78] sm:$0xff]
        %v8296 = vld [vmem:[%s8279 + $0x80] sm:$0xff]
        %v8297 = vld [vmem:[%s8279 + $0x88] sm:$0xff]
        %v8298 = vld [vmem:[%s8279 + $0x90] sm:$0xff]
        %v8299 = vld [vmem:[%s8279 + $0x98] sm:$0xff]
        %v8300 = vld [vmem:[%s8279 + $0xa0] sm:$0xff]
        %v8301 = vld [vmem:[%s8279 + $0xa8] sm:$0xff]
        %v8302 = vld [vmem:[%s8279 + $0xb0] sm:$0xff]
        %v8303 = vld [vmem:[%s8279 + $0xb8] sm:$0xff]
        %v8304 = vld [vmem:[%s8279 + $0xc0] sm:$0xff]
        %v8305 = vld [vmem:[%s8279 + $0xc8] sm:$0xff]
        %v8306 = vld [vmem:[%s8279 + $0xd0] sm:$0xff]
        %v8307 = vld [vmem:[%s8279 + $0xd8] sm:$0xff]
        %v8308 = vld [vmem:[%s8279 + $0xe0] sm:$0xff]
        %v8309 = vld [vmem:[%s8279 + $0xe8] sm:$0xff]
        %v8310 = vld [vmem:[%s8279 + $0xf0] sm:$0xff]
        %v8311 = vld [vmem:[%s8279 + $0xf8] sm:$0xff]
        %v8312 = vld [vmem:[%s8279 + $0x100] sm:$0xff]
        %v8313 = vld [vmem:[%s8279 + $0x108] sm:$0xff]
        %v8314 = vld [vmem:[%s8279 + $0x110] sm:$0xff]
        %v8315 = vld [vmem:[%s8279 + $0x118] sm:$0xff]
        %v8316 = vld [vmem:[%s8279 + $0x120] sm:$0xff]
        %v8317 = vld [vmem:[%s8279 + $0x128] sm:$0xff]
        %v8318 = vld [vmem:[%s8279 + $0x130] sm:$0xff]
        %v8319 = vld [vmem:[%s8279 + $0x138] sm:$0xff]
        %v8320 = vld [vmem:[%s8279 + $0x140] sm:$0xff]
        %v8321 = vld [vmem:[%s8279 + $0x148] sm:$0xff]
        %v8322 = vld [vmem:[%s8279 + $0x150] sm:$0xff]
        %v8323 = vld [vmem:[%s8279 + $0x158] sm:$0xff]
        %v8324 = vld [vmem:[%s8279 + $0x160] sm:$0xff]
        %v8325 = vld [vmem:[%s8279 + $0x168] sm:$0xff]
        %v8326 = vld [vmem:[%s8279 + $0x170] sm:$0xff]
        %v8327 = vld [vmem:[%s8279 + $0x178] sm:$0xff]
        %v8328 = vld [vmem:[%s8279 + $0x180] sm:$0xff]
        %v8329 = vld [vmem:[%s8279 + $0x188] sm:$0xff]
        %v8330 = vld [vmem:[%s8279 + $0x190] sm:$0xff]
        %v8331 = vld [vmem:[%s8279 + $0x198] sm:$0xff]
        %v8332 = vld [vmem:[%s8279 + $0x1a0] sm:$0xff]
        %v8333 = vld [vmem:[%s8279 + $0x1a8] sm:$0xff]
        %v8334 = vld [vmem:[%s8279 + $0x1b0] sm:$0xff]
        %v8335 = vld [vmem:[%s8279 + $0x1b8] sm:$0xff]
        %v8336 = vld [vmem:[%s8279 + $0x1c0] sm:$0xff]
        %v8337 = vld [vmem:[%s8279 + $0x1c8] sm:$0xff]
        %v8338 = vld [vmem:[%s8279 + $0x1d0] sm:$0xff]
        %v8339 = vld [vmem:[%s8279 + $0x1d8] sm:$0xff]
        %v8340 = vld [vmem:[%s8279 + $0x1e0] sm:$0xff]
        %v8341 = vld [vmem:[%s8279 + $0x1e8] sm:$0xff]
        %v8342 = vld [vmem:[%s8279 + $0x1f0] sm:$0xff]
        %v8343 = vld [vmem:[%s8279 + $0x1f8] sm:$0xff]
        %v8346 = vrot.slane %v8277, 1
        %v8347 = vrot.slane %v8278, 1
        %v8414 = vunpack.c.l.b16 %v8280
        %v8415 = vunpack.c.h.b16 %v8280
        %v8416 = vunpack.c.l.b16 %v8281
        %v8417 = vunpack.c.h.b16 %v8281
        %v8418 = vunpack.c.l.b16 %v8282
        %v8419 = vunpack.c.h.b16 %v8282
        %v8420 = vunpack.c.l.b16 %v8283
        %v8421 = vunpack.c.h.b16 %v8283
        %v8422 = vunpack.c.l.b16 %v8284
        %v8423 = vunpack.c.h.b16 %v8284
        %v8424 = vunpack.c.l.b16 %v8285
        %v8425 = vunpack.c.h.b16 %v8285
        %v8426 = vunpack.c.l.b16 %v8286
        %v8427 = vunpack.c.h.b16 %v8286
        %v8428 = vunpack.c.l.b16 %v8287
        %v8429 = vunpack.c.h.b16 %v8287
        %v8430 = vunpack.c.l.b16 %v8288
        %v8431 = vunpack.c.h.b16 %v8288
        %v8432 = vunpack.c.l.b16 %v8289
        %v8433 = vunpack.c.h.b16 %v8289
        %v8434 = vunpack.c.l.b16 %v8290
        %v8435 = vunpack.c.h.b16 %v8290
        %v8436 = vunpack.c.l.b16 %v8291
        %v8437 = vunpack.c.h.b16 %v8291
        %v8438 = vunpack.c.l.b16 %v8292
        %v8439 = vunpack.c.h.b16 %v8292
        %v8440 = vunpack.c.l.b16 %v8293
        %v8441 = vunpack.c.h.b16 %v8293
        %v8442 = vunpack.c.l.b16 %v8294
        %v8443 = vunpack.c.h.b16 %v8294
        %v8444 = vunpack.c.l.b16 %v8295
        %v8445 = vunpack.c.h.b16 %v8295
        %v8446 = vunpack.c.l.b16 %v8296
        %v8447 = vunpack.c.h.b16 %v8296
        %v8448 = vunpack.c.l.b16 %v8297
        %v8449 = vunpack.c.h.b16 %v8297
        %v8450 = vunpack.c.l.b16 %v8298
        %v8451 = vunpack.c.h.b16 %v8298
        %v8452 = vunpack.c.l.b16 %v8299
        %v8453 = vunpack.c.h.b16 %v8299
        %v8454 = vunpack.c.l.b16 %v8300
        %v8455 = vunpack.c.h.b16 %v8300
        %v8456 = vunpack.c.l.b16 %v8301
        %v8457 = vunpack.c.h.b16 %v8301
        %v8458 = vunpack.c.l.b16 %v8302
        %v8459 = vunpack.c.h.b16 %v8302
        %v8460 = vunpack.c.l.b16 %v8303
        %v8461 = vunpack.c.h.b16 %v8303
        %v8462 = vunpack.c.l.b16 %v8304
        %v8463 = vunpack.c.h.b16 %v8304
        %v8464 = vunpack.c.l.b16 %v8305
        %v8465 = vunpack.c.h.b16 %v8305
        %v8466 = vunpack.c.l.b16 %v8306
        %v8467 = vunpack.c.h.b16 %v8306
        %v8468 = vunpack.c.l.b16 %v8307
        %v8469 = vunpack.c.h.b16 %v8307
        %v8470 = vunpack.c.l.b16 %v8308
        %v8471 = vunpack.c.h.b16 %v8308
        %v8472 = vunpack.c.l.b16 %v8309
        %v8473 = vunpack.c.h.b16 %v8309
        %v8474 = vunpack.c.l.b16 %v8310
        %v8475 = vunpack.c.h.b16 %v8310
        %v8476 = vunpack.c.l.b16 %v8311
        %v8477 = vunpack.c.h.b16 %v8311
        %v8478 = vunpack.c.l.b16 %v8312
        %v8479 = vunpack.c.h.b16 %v8312
        %v8480 = vunpack.c.l.b16 %v8313
        %v8481 = vunpack.c.h.b16 %v8313
        %v8482 = vunpack.c.l.b16 %v8314
        %v8483 = vunpack.c.h.b16 %v8314
        %v8484 = vunpack.c.l.b16 %v8315
        %v8485 = vunpack.c.h.b16 %v8315
        %v8486 = vunpack.c.l.b16 %v8316
        %v8487 = vunpack.c.h.b16 %v8316
        %v8488 = vunpack.c.l.b16 %v8317
        %v8489 = vunpack.c.h.b16 %v8317
        %v8490 = vunpack.c.l.b16 %v8318
        %v8491 = vunpack.c.h.b16 %v8318
        %v8492 = vunpack.c.l.b16 %v8319
        %v8493 = vunpack.c.h.b16 %v8319
        %v8494 = vunpack.c.l.b16 %v8320
        %v8495 = vunpack.c.h.b16 %v8320
        %v8496 = vunpack.c.l.b16 %v8321
        %v8497 = vunpack.c.h.b16 %v8321
        %v8498 = vunpack.c.l.b16 %v8322
        %v8499 = vunpack.c.h.b16 %v8322
        %v8500 = vunpack.c.l.b16 %v8323
        %v8501 = vunpack.c.h.b16 %v8323
        %v8502 = vunpack.c.l.b16 %v8324
        %v8503 = vunpack.c.h.b16 %v8324
        %v8504 = vunpack.c.l.b16 %v8325
        %v8505 = vunpack.c.h.b16 %v8325
        %v8506 = vunpack.c.l.b16 %v8326
        %v8507 = vunpack.c.h.b16 %v8326
        %v8508 = vunpack.c.l.b16 %v8327
        %v8509 = vunpack.c.h.b16 %v8327
        %v8510 = vunpack.c.l.b16 %v8328
        %v8511 = vunpack.c.h.b16 %v8328
        %v8512 = vunpack.c.l.b16 %v8329
        %v8513 = vunpack.c.h.b16 %v8329
        %v8514 = vunpack.c.l.b16 %v8330
        %v8515 = vunpack.c.h.b16 %v8330
        %v8516 = vunpack.c.l.b16 %v8331
        %v8517 = vunpack.c.h.b16 %v8331
        %v8518 = vunpack.c.l.b16 %v8332
        %v8519 = vunpack.c.h.b16 %v8332
        %v8520 = vunpack.c.l.b16 %v8333
        %v8521 = vunpack.c.h.b16 %v8333
        %v8522 = vunpack.c.l.b16 %v8334
        %v8523 = vunpack.c.h.b16 %v8334
        %v8524 = vunpack.c.l.b16 %v8335
        %v8525 = vunpack.c.h.b16 %v8335
        %v8526 = vunpack.c.l.b16 %v8336
        %v8527 = vunpack.c.h.b16 %v8336
        %v8528 = vunpack.c.l.b16 %v8337
        %v8529 = vunpack.c.h.b16 %v8337
        %v8530 = vunpack.c.l.b16 %v8338
        %v8531 = vunpack.c.h.b16 %v8338
        %v8532 = vunpack.c.l.b16 %v8339
        %v8533 = vunpack.c.h.b16 %v8339
        %v8534 = vunpack.c.l.b16 %v8340
        %v8535 = vunpack.c.h.b16 %v8340
        %v8536 = vunpack.c.l.b16 %v8341
        %v8537 = vunpack.c.h.b16 %v8341
        %v8538 = vunpack.c.l.b16 %v8342
        %v8539 = vunpack.c.h.b16 %v8342
        %v8540 = vunpack.c.l.b16 %v8343
        %v8541 = vunpack.c.h.b16 %v8343
        %v8542 = vpack.c.b16 %v8418, %v8414
        %v8543 = vpack.c.b16 %v8419, %v8415
        %v8544 = vpack.c.b16 %v8420, %v8416
        %v8545 = vpack.c.b16 %v8421, %v8417
        %v8546 = vpack.c.b16 %v8426, %v8422
        %v8547 = vpack.c.b16 %v8427, %v8423
        %v8548 = vpack.c.b16 %v8428, %v8424
        %v8549 = vpack.c.b16 %v8429, %v8425
        %v8550 = vpack.c.b16 %v8434, %v8430
        %v8551 = vpack.c.b16 %v8435, %v8431
        %v8552 = vpack.c.b16 %v8436, %v8432
        %v8553 = vpack.c.b16 %v8437, %v8433
        %v8554 = vpack.c.b16 %v8442, %v8438
        %v8555 = vpack.c.b16 %v8443, %v8439
        %v8556 = vpack.c.b16 %v8444, %v8440
        %v8557 = vpack.c.b16 %v8445, %v8441
        %v8558 = vpack.c.b16 %v8450, %v8446
        %v8559 = vpack.c.b16 %v8451, %v8447
        %v8560 = vpack.c.b16 %v8452, %v8448
        %v8561 = vpack.c.b16 %v8453, %v8449
        %v8562 = vpack.c.b16 %v8458, %v8454
        %v8563 = vpack.c.b16 %v8459, %v8455
        %v8564 = vpack.c.b16 %v8460, %v8456
        %v8565 = vpack.c.b16 %v8461, %v8457
        %v8566 = vpack.c.b16 %v8466, %v8462
        %v8567 = vpack.c.b16 %v8467, %v8463
        %v8568 = vpack.c.b16 %v8468, %v8464
        %v8569 = vpack.c.b16 %v8469, %v8465
        %v8570 = vpack.c.b16 %v8474, %v8470
        %v8571 = vpack.c.b16 %v8475, %v8471
        %v8572 = vpack.c.b16 %v8476, %v8472
        %v8573 = vpack.c.b16 %v8477, %v8473
        %v8574 = vpack.c.b16 %v8482, %v8478
        %v8575 = vpack.c.b16 %v8483, %v8479
        %v8576 = vpack.c.b16 %v8484, %v8480
        %v8577 = vpack.c.b16 %v8485, %v8481
        %v8578 = vpack.c.b16 %v8490, %v8486
        %v8579 = vpack.c.b16 %v8491, %v8487
        %v8580 = vpack.c.b16 %v8492, %v8488
        %v8581 = vpack.c.b16 %v8493, %v8489
        %v8582 = vpack.c.b16 %v8498, %v8494
        %v8583 = vpack.c.b16 %v8499, %v8495
        %v8584 = vpack.c.b16 %v8500, %v8496
        %v8585 = vpack.c.b16 %v8501, %v8497
        %v8586 = vpack.c.b16 %v8506, %v8502
        %v8587 = vpack.c.b16 %v8507, %v8503
        %v8588 = vpack.c.b16 %v8508, %v8504
        %v8589 = vpack.c.b16 %v8509, %v8505
        %v8590 = vpack.c.b16 %v8514, %v8510
        %v8591 = vpack.c.b16 %v8515, %v8511
        %v8592 = vpack.c.b16 %v8516, %v8512
        %v8593 = vpack.c.b16 %v8517, %v8513
        %v8594 = vpack.c.b16 %v8522, %v8518
        %v8595 = vpack.c.b16 %v8523, %v8519
        %v8596 = vpack.c.b16 %v8524, %v8520
        %v8597 = vpack.c.b16 %v8525, %v8521
        %v8598 = vpack.c.b16 %v8530, %v8526
        %v8599 = vpack.c.b16 %v8531, %v8527
        %v8600 = vpack.c.b16 %v8532, %v8528
        %v8601 = vpack.c.b16 %v8533, %v8529
        %v8602 = vpack.c.b16 %v8538, %v8534
        %v8603 = vpack.c.b16 %v8539, %v8535
        %v8604 = vpack.c.b16 %v8540, %v8536
        %v8605 = vpack.c.b16 %v8541, %v8537
        %8670 = vmatprep.subr.bf16.mxu0 %v8543
        %8671 = vmatpush1.bf16.msra.mxu0 %v8542
        %8672 = vmatprep.subr.bf16.mxu0 %v8547
        %8673 = vmatpush1.bf16.msra.mxu0 %v8546
        %8674 = vmatprep.subr.bf16.mxu0 %v8551
        %8675 = vmatpush1.bf16.msra.mxu0 %v8550
        %8676 = vmatprep.subr.bf16.mxu0 %v8555
        %8677 = vmatpush1.bf16.msra.mxu0 %v8554
        %8678 = vmatprep.subr.bf16.mxu0 %v8559
        %8679 = vmatpush1.bf16.msra.mxu0 %v8558
        %8680 = vmatprep.subr.bf16.mxu0 %v8563
        %8681 = vmatpush1.bf16.msra.mxu0 %v8562
        %8682 = vmatprep.subr.bf16.mxu0 %v8567
        %8683 = vmatpush1.bf16.msra.mxu0 %v8566
        %8684 = vmatprep.subr.bf16.mxu0 %v8571
        %8685 = vmatpush1.bf16.msra.mxu0 %v8570
        %8686 = vmatprep.subr.bf16.mxu0 %v8575
        %8687 = vmatpush1.bf16.msra.mxu0 %v8574
        %8688 = vmatprep.subr.bf16.mxu0 %v8579
        %8689 = vmatpush1.bf16.msra.mxu0 %v8578
        %8690 = vmatprep.subr.bf16.mxu0 %v8583
        %8691 = vmatpush1.bf16.msra.mxu0 %v8582
        %8692 = vmatprep.subr.bf16.mxu0 %v8587
        %8693 = vmatpush1.bf16.msra.mxu0 %v8586
        %8694 = vmatprep.subr.bf16.mxu0 %v8591
        %8695 = vmatpush1.bf16.msra.mxu0 %v8590
        %8696 = vmatprep.subr.bf16.mxu0 %v8595
        %8697 = vmatpush1.bf16.msra.mxu0 %v8594
        %8698 = vmatprep.subr.bf16.mxu0 %v8599
        %8699 = vmatpush1.bf16.msra.mxu0 %v8598
        %8700 = vmatprep.subr.bf16.mxu0 %v8603
        %8701 = vmatpush1.bf16.msra.mxu0 %v8602
        %8702 = vmatprep.mubr.bf16.mxu0 %v8347
        %8703 = vmatmul.mubr.bf16.gmra.mrb[0].mxu0 %v8346
        %v8704 = vpop.f32.mrb[0].mxu0
        %v8705 = vadd.f32 0.0, %v8704
        %v8706 = vpop.f32.mrb[0].mxu0
        %v8707 = vadd.f32 0.0, %v8706
        %v8708 = vpop.f32.mrb[0].mxu0
        %v8709 = vpop.f32.mrb[0].mxu0
        %8710 = vdwg.mxu0
        %8711 = vmatprep.subr.bf16.mxu0 %v8545
        %8712 = vmatpush1.bf16.msra.mxu0 %v8544
        %8713 = vmatprep.subr.bf16.mxu0 %v8549
        %8714 = vmatpush1.bf16.msra.mxu0 %v8548
        %8715 = vmatprep.subr.bf16.mxu0 %v8553
        %8716 = vmatpush1.bf16.msra.mxu0 %v8552
        %8717 = vmatprep.subr.bf16.mxu0 %v8557
        %8718 = vmatpush1.bf16.msra.mxu0 %v8556
        %8719 = vmatprep.subr.bf16.mxu0 %v8561
        %8720 = vmatpush1.bf16.msra.mxu0 %v8560
        %8721 = vmatprep.subr.bf16.mxu0 %v8565
        %8722 = vmatpush1.bf16.msra.mxu0 %v8564
        %8723 = vmatprep.subr.bf16.mxu0 %v8569
        %8724 = vmatpush1.bf16.msra.mxu0 %v8568
        %8725 = vmatprep.subr.bf16.mxu0 %v8573
        %8726 = vmatpush1.bf16.msra.mxu0 %v8572
        %8727 = vmatprep.subr.bf16.mxu0 %v8577
        %8728 = vmatpush1.bf16.msra.mxu0 %v8576
        %8729 = vmatprep.subr.bf16.mxu0 %v8581
        %8730 = vmatpush1.bf16.msra.mxu0 %v8580
        %8731 = vmatprep.subr.bf16.mxu0 %v8585
        %8732 = vmatpush1.bf16.msra.mxu0 %v8584
        %8733 = vmatprep.subr.bf16.mxu0 %v8589
        %8734 = vmatpush1.bf16.msra.mxu0 %v8588
        %8735 = vmatprep.subr.bf16.mxu0 %v8593
        %8736 = vmatpush1.bf16.msra.mxu0 %v8592
        %8737 = vmatprep.subr.bf16.mxu0 %v8597
        %8738 = vmatpush1.bf16.msra.mxu0 %v8596
        %8739 = vmatprep.subr.bf16.mxu0 %v8601
        %8740 = vmatpush1.bf16.msra.mxu0 %v8600
        %8741 = vmatprep.subr.bf16.mxu0 %v8605
        %8742 = vmatpush1.bf16.msra.mxu0 %v8604
        %8743 = vmatprep.mubr.bf16.mxu0 %v8347
        %8744 = vmatmul.mubr.bf16.gmra.mrb[0].mxu0 %v8346
        %v8745 = vpop.f32.mrb[0].mxu0
        %v8746 = vadd.f32 0.0, %v8745
        %v8747 = vpop.f32.mrb[0].mxu0
        %v8748 = vadd.f32 0.0, %v8747
        %v8749 = vpop.f32.mrb[0].mxu0
        %v8750 = vpop.f32.mrb[0].mxu0
        %8751 = vdwg.mxu0
        %v8752 = vadd.f32 %v8269, %v8705
        %v8753 = vadd.f32 %v8270, %v8707
        %v8754 = vadd.f32 %v8271, %v8746
        %v8755 = vadd.f32 %v8272, %v8748
        %v8756 = vld [vmem:[%s8] sm:$0xf]
        %v8758 = vlaneseq
        %v8759 = vshrl.u32 %v8758, 7
        %v8760 = vsub.s32 0, %v8759
        %v8761 = vrot.slane %v8756, %v8760
        %v8762 = vlaneseq
        %v8763 = vshrl.u32 %v8762, 7
        %v8764 = vsub.s32 1, %v8763
        %v8765 = vrot.slane %v8756, %v8764
        %v8766 = vlaneseq
        %v8767 = vshrl.u32 %v8766, 7
        %v8768 = vsub.s32 2, %v8767
        %v8769 = vrot.slane %v8756, %v8768
        %v8770 = vlaneseq
        %v8771 = vshrl.u32 %v8770, 7
        %v8772 = vsub.s32 3, %v8771
        %v8773 = vrot.slane %v8756, %v8772
        %v8778 = vadd.f32 %v8752, %v8761
        %v8779 = vadd.f32 %v8753, %v8765
        %v8780 = vadd.f32 %v8754, %v8769
        %v8781 = vadd.f32 %v8755, %v8773
        %v8782 = vmax.f32 %v8778, 0.0
        %v8783 = vmax.f32 %v8779, 0.0
        %v8784 = vmax.f32 %v8780, 0.0
        %v8785 = vmax.f32 %v8781, 0.0
        %v8786 = vlaneseq
        %v8787 = vshrl.u32 %v8786, 7
        %vm8788 = vcmp.lt.s32.totalorder %v8787, 0
        %v8789 = vsub.s32 0, %v8787
        %v8790 = vsel %vm8788, %v8789, %v8787
        %v8791 = vshrl.u32 %v8790, 2
        %v8792 = vand.u32 %v8790, 3
        %v8793 = vsub.s32 0, %v8792
        %v8794 = vsel %vm8788, %v8793, %v8792
        %vm8795 = vcmp.ne.s32.totalorder %v8794, 0
        %vm8796 = vcmp.lt.s32.totalorder %v8794, 0
        %vm8797 = vmand %vm8796, %vm8795
        %v8798 = vadd.s32 %v8794, 4
        %v8799 = vsel %vm8797, %v8798, %v8794
        %vm8800 = vcmp.lt.s32.totalorder %v8799, 2
        %v8801 = vsel %vm8800, 1, 0
        %vm8802 = vcmp.eq.s32.totalorder %v8801, 1
        %v8803 = vsel %vm8802, %v8782, 0.0
        %v8804 = vsel %vm8802, %v8783, 0.0
        %v8805 = vsel %vm8802, %v8784, 0.0
        %v8806 = vsel %vm8802, %v8785, 0.0
        %v8807 = vrot.slane %v8803, 4
        %v8808 = vadd.f32 %v8803, %v8807
        %v8809 = vrot.slane %v8808, 2
        %v8810 = vadd.f32 %v8808, %v8809
        %v8811 = vrot.slane %v8810, 1
        %v8812 = vadd.f32 %v8810, %v8811
        %v8813 = vrot.slane %v8804, 4
        %v8814 = vadd.f32 %v8804, %v8813
        %v8815 = vrot.slane %v8814, 2
        %v8816 = vadd.f32 %v8814, %v8815
        %v8817 = vrot.slane %v8816, 1
        %v8818 = vadd.f32 %v8816, %v8817
        %v8819 = vrot.slane %v8805, 4
        %v8820 = vadd.f32 %v8805, %v8819
        %v8821 = vrot.slane %v8820, 2
        %v8822 = vadd.f32 %v8820, %v8821
        %v8823 = vrot.slane %v8822, 1
        %v8824 = vadd.f32 %v8822, %v8823
        %v8825 = vrot.slane %v8806, 4
        %v8826 = vadd.f32 %v8806, %v8825
        %v8827 = vrot.slane %v8826, 2
        %v8828 = vadd.f32 %v8826, %v8827
        %v8829 = vrot.slane %v8828, 1
        %v8830 = vadd.f32 %v8828, %v8829
        %v8831 = vmul.f32 %v8812, 0.25
        %v8832 = vmul.f32 %v8818, 0.25
        %v8833 = vmul.f32 %v8824, 0.25
        %v8834 = vmul.f32 %v8830, 0.25
        %v8835 = vpack.c.bf16 %v8831, %v8831
        %v8836 = vpack.c.bf16 %v8832, %v8832
        %v8837 = vpack.c.bf16 %v8833, %v8833
        %v8838 = vpack.c.bf16 %v8834, %v8834
        %v8839 = vld [vmem:[%s9] sm:$0xf]
        %v8840 = vld [vmem:[%s9 + $0x4] sm:$0xf]
        %v8841 = vld [vmem:[%s9 + $0x8] sm:$0xf]
        %v8842 = vld [vmem:[%s9 + $0xc] sm:$0xf]
        %v8843 = vld [vmem:[%s9 + $0x10] sm:$0xf]
        %v8844 = vld [vmem:[%s9 + $0x14] sm:$0xf]
        %v8845 = vld [vmem:[%s9 + $0x18] sm:$0xf]
        %v8846 = vld [vmem:[%s9 + $0x1c] sm:$0xf]
        %v8847 = vld [vmem:[%s9 + $0x20] sm:$0xf]
        %v8848 = vld [vmem:[%s9 + $0x24] sm:$0xf]
        %v8849 = vld [vmem:[%s9 + $0x28] sm:$0xf]
        %v8850 = vld [vmem:[%s9 + $0x2c] sm:$0xf]
        %v8851 = vld [vmem:[%s9 + $0x30] sm:$0xf]
        %v8852 = vld [vmem:[%s9 + $0x34] sm:$0xf]
        %v8853 = vld [vmem:[%s9 + $0x38] sm:$0xf]
        %v8854 = vld [vmem:[%s9 + $0x3c] sm:$0xf]
        %v8855 = vld [vmem:[%s9 + $0x40] sm:$0xf]
        %v8856 = vld [vmem:[%s9 + $0x44] sm:$0xf]
        %v8857 = vld [vmem:[%s9 + $0x48] sm:$0xf]
        %v8858 = vld [vmem:[%s9 + $0x4c] sm:$0xf]
        %v8859 = vld [vmem:[%s9 + $0x50] sm:$0xf]
        %v8860 = vld [vmem:[%s9 + $0x54] sm:$0xf]
        %v8861 = vld [vmem:[%s9 + $0x58] sm:$0xf]
        %v8862 = vld [vmem:[%s9 + $0x5c] sm:$0xf]
        %v8863 = vld [vmem:[%s9 + $0x60] sm:$0xf]
        %v8864 = vld [vmem:[%s9 + $0x64] sm:$0xf]
        %v8865 = vld [vmem:[%s9 + $0x68] sm:$0xf]
        %v8866 = vld [vmem:[%s9 + $0x6c] sm:$0xf]
        %v8867 = vld [vmem:[%s9 + $0x70] sm:$0xf]
        %v8868 = vld [vmem:[%s9 + $0x74] sm:$0xf]
        %v8869 = vld [vmem:[%s9 + $0x78] sm:$0xf]
        %v8870 = vld [vmem:[%s9 + $0x7c] sm:$0xf]
        %v8871 = vld [vmem:[%s9 + $0x80] sm:$0xf]
        %v8872 = vld [vmem:[%s9 + $0x84] sm:$0xf]
        %v8873 = vld [vmem:[%s9 + $0x88] sm:$0xf]
        %v8874 = vld [vmem:[%s9 + $0x8c] sm:$0xf]
        %v8875 = vld [vmem:[%s9 + $0x90] sm:$0xf]
        %v8876 = vld [vmem:[%s9 + $0x94] sm:$0xf]
        %v8877 = vld [vmem:[%s9 + $0x98] sm:$0xf]
        %v8878 = vld [vmem:[%s9 + $0x9c] sm:$0xf]
        %v8879 = vld [vmem:[%s9 + $0xa0] sm:$0xf]
        %v8880 = vld [vmem:[%s9 + $0xa4] sm:$0xf]
        %v8881 = vld [vmem:[%s9 + $0xa8] sm:$0xf]
        %v8882 = vld [vmem:[%s9 + $0xac] sm:$0xf]
        %v8883 = vld [vmem:[%s9 + $0xb0] sm:$0xf]
        %v8884 = vld [vmem:[%s9 + $0xb4] sm:$0xf]
        %v8885 = vld [vmem:[%s9 + $0xb8] sm:$0xf]
        %v8886 = vld [vmem:[%s9 + $0xbc] sm:$0xf]
        %v8887 = vld [vmem:[%s9 + $0xc0] sm:$0xf]
        %v8888 = vld [vmem:[%s9 + $0xc4] sm:$0xf]
        %v8889 = vld [vmem:[%s9 + $0xc8] sm:$0xf]
        %v8890 = vld [vmem:[%s9 + $0xcc] sm:$0xf]
        %v8891 = vld [vmem:[%s9 + $0xd0] sm:$0xf]
        %v8892 = vld [vmem:[%s9 + $0xd4] sm:$0xf]
        %v8893 = vld [vmem:[%s9 + $0xd8] sm:$0xf]
        %v8894 = vld [vmem:[%s9 + $0xdc] sm:$0xf]
        %v8895 = vld [vmem:[%s9 + $0xe0] sm:$0xf]
        %v8896 = vld [vmem:[%s9 + $0xe4] sm:$0xf]
        %v8897 = vld [vmem:[%s9 + $0xe8] sm:$0xf]
        %v8898 = vld [vmem:[%s9 + $0xec] sm:$0xf]
        %v8899 = vld [vmem:[%s9 + $0xf0] sm:$0xf]
        %v8900 = vld [vmem:[%s9 + $0xf4] sm:$0xf]
        %v8901 = vld [vmem:[%s9 + $0xf8] sm:$0xf]
        %v8902 = vld [vmem:[%s9 + $0xfc] sm:$0xf]
        %v8903 = vld [vmem:[%s10] sm:$0x1]
        %v8968 = vunpack.c.l.b16 %v8839
        %v8969 = vunpack.c.l.b16 %v8840
        %v8970 = vunpack.c.l.b16 %v8841
        %v8971 = vunpack.c.l.b16 %v8842
        %v8972 = vunpack.c.l.b16 %v8843
        %v8973 = vunpack.c.l.b16 %v8844
        %v8974 = vunpack.c.l.b16 %v8845
        %v8975 = vunpack.c.l.b16 %v8846
        %v8976 = vunpack.c.l.b16 %v8847
        %v8977 = vunpack.c.l.b16 %v8848
        %v8978 = vunpack.c.l.b16 %v8849
        %v8979 = vunpack.c.l.b16 %v8850
        %v8980 = vunpack.c.l.b16 %v8851
        %v8981 = vunpack.c.l.b16 %v8852
        %v8982 = vunpack.c.l.b16 %v8853
        %v8983 = vunpack.c.l.b16 %v8854
        %v8984 = vunpack.c.l.b16 %v8855
        %v8985 = vunpack.c.l.b16 %v8856
        %v8986 = vunpack.c.l.b16 %v8857
        %v8987 = vunpack.c.l.b16 %v8858
        %v8988 = vunpack.c.l.b16 %v8859
        %v8989 = vunpack.c.l.b16 %v8860
        %v8990 = vunpack.c.l.b16 %v8861
        %v8991 = vunpack.c.l.b16 %v8862
        %v8992 = vunpack.c.l.b16 %v8863
        %v8993 = vunpack.c.l.b16 %v8864
        %v8994 = vunpack.c.l.b16 %v8865
        %v8995 = vunpack.c.l.b16 %v8866
        %v8996 = vunpack.c.l.b16 %v8867
        %v8997 = vunpack.c.l.b16 %v8868
        %v8998 = vunpack.c.l.b16 %v8869
        %v8999 = vunpack.c.l.b16 %v8870
        %v9000 = vunpack.c.l.b16 %v8871
        %v9001 = vunpack.c.l.b16 %v8872
        %v9002 = vunpack.c.l.b16 %v8873
        %v9003 = vunpack.c.l.b16 %v8874
        %v9004 = vunpack.c.l.b16 %v8875
        %v9005 = vunpack.c.l.b16 %v8876
        %v9006 = vunpack.c.l.b16 %v8877
        %v9007 = vunpack.c.l.b16 %v8878
        %v9008 = vunpack.c.l.b16 %v8879
        %v9009 = vunpack.c.l.b16 %v8880
        %v9010 = vunpack.c.l.b16 %v8881
        %v9011 = vunpack.c.l.b16 %v8882
        %v9012 = vunpack.c.l.b16 %v8883
        %v9013 = vunpack.c.l.b16 %v8884
        %v9014 = vunpack.c.l.b16 %v8885
        %v9015 = vunpack.c.l.b16 %v8886
        %v9016 = vunpack.c.l.b16 %v8887
        %v9017 = vunpack.c.l.b16 %v8888
        %v9018 = vunpack.c.l.b16 %v8889
        %v9019 = vunpack.c.l.b16 %v8890
        %v9020 = vunpack.c.l.b16 %v8891
        %v9021 = vunpack.c.l.b16 %v8892
        %v9022 = vunpack.c.l.b16 %v8893
        %v9023 = vunpack.c.l.b16 %v8894
        %v9024 = vunpack.c.l.b16 %v8895
        %v9025 = vunpack.c.l.b16 %v8896
        %v9026 = vunpack.c.l.b16 %v8897
        %v9027 = vunpack.c.l.b16 %v8898
        %v9028 = vunpack.c.l.b16 %v8899
        %v9029 = vunpack.c.l.b16 %v8900
        %v9030 = vunpack.c.l.b16 %v8901
        %v9031 = vunpack.c.l.b16 %v8902
        %v9032 = vpack.c.b16 %v8969, %v8968
        %v9033 = vpack.c.b16 %v8971, %v8970
        %v9034 = vpack.c.b16 %v8973, %v8972
        %v9035 = vpack.c.b16 %v8975, %v8974
        %v9036 = vpack.c.b16 %v8977, %v8976
        %v9037 = vpack.c.b16 %v8979, %v8978
        %v9038 = vpack.c.b16 %v8981, %v8980
        %v9039 = vpack.c.b16 %v8983, %v8982
        %v9040 = vpack.c.b16 %v8985, %v8984
        %v9041 = vpack.c.b16 %v8987, %v8986
        %v9042 = vpack.c.b16 %v8989, %v8988
        %v9043 = vpack.c.b16 %v8991, %v8990
        %v9044 = vpack.c.b16 %v8993, %v8992
        %v9045 = vpack.c.b16 %v8995, %v8994
        %v9046 = vpack.c.b16 %v8997, %v8996
        %v9047 = vpack.c.b16 %v8999, %v8998
        %v9048 = vpack.c.b16 %v9001, %v9000
        %v9049 = vpack.c.b16 %v9003, %v9002
        %v9050 = vpack.c.b16 %v9005, %v9004
        %v9051 = vpack.c.b16 %v9007, %v9006
        %v9052 = vpack.c.b16 %v9009, %v9008
        %v9053 = vpack.c.b16 %v9011, %v9010
        %v9054 = vpack.c.b16 %v9013, %v9012
        %v9055 = vpack.c.b16 %v9015, %v9014
        %v9056 = vpack.c.b16 %v9017, %v9016
        %v9057 = vpack.c.b16 %v9019, %v9018
        %v9058 = vpack.c.b16 %v9021, %v9020
        %v9059 = vpack.c.b16 %v9023, %v9022
        %v9060 = vpack.c.b16 %v9025, %v9024
        %v9061 = vpack.c.b16 %v9027, %v9026
        %v9062 = vpack.c.b16 %v9029, %v9028
        %v9063 = vpack.c.b16 %v9031, %v9030
        %9096 = vmatprep.subr.bf16.mxu0 0
        %9097 = vmatpush1.bf16.msra.mxu0 %v9032
        %9098 = vmatprep.subr.bf16.mxu0 0
        %9099 = vmatpush1.bf16.msra.mxu0 %v9033
        %9100 = vmatprep.subr.bf16.mxu0 0
        %9101 = vmatpush1.bf16.msra.mxu0 %v9034
        %9102 = vmatprep.subr.bf16.mxu0 0
        %9103 = vmatpush1.bf16.msra.mxu0 %v9035
        %9104 = vmatprep.subr.bf16.mxu0 0
        %9105 = vmatpush1.bf16.msra.mxu0 %v9036
        %9106 = vmatprep.subr.bf16.mxu0 0
        %9107 = vmatpush1.bf16.msra.mxu0 %v9037
        %9108 = vmatprep.subr.bf16.mxu0 0
        %9109 = vmatpush1.bf16.msra.mxu0 %v9038
        %9110 = vmatprep.subr.bf16.mxu0 0
        %9111 = vmatpush1.bf16.msra.mxu0 %v9039
        %9112 = vmatprep.subr.bf16.mxu0 0
        %9113 = vmatpush1.bf16.msra.mxu0 %v9040
        %9114 = vmatprep.subr.bf16.mxu0 0
        %9115 = vmatpush1.bf16.msra.mxu0 %v9041
        %9116 = vmatprep.subr.bf16.mxu0 0
        %9117 = vmatpush1.bf16.msra.mxu0 %v9042
        %9118 = vmatprep.subr.bf16.mxu0 0
        %9119 = vmatpush1.bf16.msra.mxu0 %v9043
        %9120 = vmatprep.subr.bf16.mxu0 0
        %9121 = vmatpush1.bf16.msra.mxu0 %v9044
        %9122 = vmatprep.subr.bf16.mxu0 0
        %9123 = vmatpush1.bf16.msra.mxu0 %v9045
        %9124 = vmatprep.subr.bf16.mxu0 0
        %9125 = vmatpush1.bf16.msra.mxu0 %v9046
        %9126 = vmatprep.subr.bf16.mxu0 0
        %9127 = vmatpush1.bf16.msra.mxu0 %v9047
        %9128 = vmatprep.mubr.bf16.mxu0 %v8836
        %9129 = vmatmul.mubr.bf16.gmra.mrb[0].mxu0 %v8835
        %v9130 = vpop.f32.mrb[0].mxu0
        %v9131 = vadd.f32 %v8903, %v9130
        %v9132 = vpop.f32.mrb[0].mxu0
        %v9133 = vpop.f32.mrb[0].mxu0
        %v9134 = vpop.f32.mrb[0].mxu0
        %9135 = vdwg.mxu0
        %9136 = vmatprep.subr.bf16.mxu0 0
        %9137 = vmatpush1.bf16.msra.mxu0 %v9048
        %9138 = vmatprep.subr.bf16.mxu0 0
        %9139 = vmatpush1.bf16.msra.mxu0 %v9049
        %9140 = vmatprep.subr.bf16.mxu0 0
        %9141 = vmatpush1.bf16.msra.mxu0 %v9050
        %9142 = vmatprep.subr.bf16.mxu0 0
        %9143 = vmatpush1.bf16.msra.mxu0 %v9051
        %9144 = vmatprep.subr.bf16.mxu0 0
        %9145 = vmatpush1.bf16.msra.mxu0 %v9052
        %9146 = vmatprep.subr.bf16.mxu0 0
        %9147 = vmatpush1.bf16.msra.mxu0 %v9053
        %9148 = vmatprep.subr.bf16.mxu0 0
        %9149 = vmatpush1.bf16.msra.mxu0 %v9054
        %9150 = vmatprep.subr.bf16.mxu0 0
        %9151 = vmatpush1.bf16.msra.mxu0 %v9055
        %9152 = vmatprep.subr.bf16.mxu0 0
        %9153 = vmatpush1.bf16.msra.mxu0 %v9056
        %9154 = vmatprep.subr.bf16.mxu0 0
        %9155 = vmatpush1.bf16.msra.mxu0 %v9057
        %9156 = vmatprep.subr.bf16.mxu0 0
        %9157 = vmatpush1.bf16.msra.mxu0 %v9058
        %9158 = vmatprep.subr.bf16.mxu0 0
        %9159 = vmatpush1.bf16.msra.mxu0 %v9059
        %9160 = vmatprep.subr.bf16.mxu0 0
        %9161 = vmatpush1.bf16.msra.mxu0 %v9060
        %9162 = vmatprep.subr.bf16.mxu0 0
        %9163 = vmatpush1.bf16.msra.mxu0 %v9061
        %9164 = vmatprep.subr.bf16.mxu0 0
        %9165 = vmatpush1.bf16.msra.mxu0 %v9062
        %9166 = vmatprep.subr.bf16.mxu0 0
        %9167 = vmatpush1.bf16.msra.mxu0 %v9063
        %9168 = vmatprep.mubr.bf16.mxu0 %v8838
        %9169 = vmatmul.mubr.bf16.gmra.mrb[0].mxu0 %v8837
        %v9170 = vpop.f32.mrb[0].mxu0
        %v9171 = vadd.f32 %v9131, %v9170
        %v9172 = vpop.f32.mrb[0].mxu0
        %v9173 = vpop.f32.mrb[0].mxu0
        %v9174 = vpop.f32.mrb[0].mxu0
        %9175 = vdwg.mxu0
        %9176 = vst [vmem:[%s379] sm:$0x1] %v9171
        %s9177 = sand.u32 %s269, 1
        %s9178 = scalar_lea.sflag [#allocation6], %s9177
        %s9179 = sand.u32 %s269, 1
        %s9180 = scalar_lea.vmem [#allocation5], %s9179
        // Predicated region
        $region65: #{basic_cnn_forward.1} parent=63 // pred_check
          %p9181 = pneg %p279
        $region66: #{basic_cnn_forward.1} parent=63 // pred_check_branch
          %9183 = sbr.rel (%p9181) target = $region68
        $region67: #{basic_cnn_forward.1} parent=63 // pred_region
          %s9185 = ssub.s32 16, 16
          %9186 = vsyncadd %s9178, %s9185
          %s9187 = smul.addr %s25, 16
          %s9188 = scalar_lea.hbm %s11, %s9187
          %s9190 = sshll.u32 %s9180, 4
          %s9191 = int_to_ptr.vmem [resolvable:$true] %s9190
          %9193 = dma.vmem_to_hbm [thread:$0]  %s9191, 16, %s9188, %s9178
        $region68: #{basic_cnn_forward.1} parent=63 // pred_fallthru
          _
      $region64: #{basic_cnn_forward.1} parent=5 // pred_fallthru
        _
      %p9194 = scmp.le.s32.totalorder 2, %s20
      // Predicated region
      $region69: #{basic_cnn_forward.1} parent=5 // pred_check
        %p9195 = pneg %p9194
      $region70: #{basic_cnn_forward.1} parent=5 // pred_check_branch
        %9197 = sbr.rel (%p9195) target = $region72
      $region71: #{basic_cnn_forward.1} parent=5 // pred_region
        %s9198 = ssub.s32 %s20, 2
        // Predicated region
        $region73: #{basic_cnn_forward.1} parent=71 // pred_check
          %p9199 = pneg %p285
        $region74: #{basic_cnn_forward.1} parent=71 // pred_check_branch
          %9201 = sbr.rel (%p9199) target = $region76
        $region75: #{basic_cnn_forward.1} parent=71 // pred_region
          %s9202 = sand.u32 %s270, 1
          %s9203 = scalar_lea.sflag [#allocation6], %s9202
          %s9204 = sand.u32 %s270, 1
          %s9205 = scalar_lea.vmem [#allocation5], %s9204
          %9206 = dma.done %s9203, 16
        $region76: #{basic_cnn_forward.1} parent=71 // pred_fallthru
          _
      $region72: #{basic_cnn_forward.1} parent=5 // pred_fallthru
        _
    $region6: #{basic_cnn_forward.1} parent=1 // loop_footer
      %s24 = sadd.s32 1, %s20
    $region7: #{basic_cnn_forward.1} parent=1 // loop_footer_branch
      %19 = sbr.rel target = $region3
    $region8: #{basic_cnn_forward.1} parent=1 // loop_exit
      _
    %9207 = vsyncpa [#allocation6], 1
    %s9208 = scalar_lea.sflag [#allocation6], 1
    %9209 = vsyncpa %s9208, 1

</llo_original>
